<compile_context>
chip_gen: v5e
topology: v5e:2x2
jax: 0.10.0
libtpu: 0.0.40
codegen_flags: <defaults>
</compile_context>

<pallas_src>
import math

import jax
import jax.numpy as jnp
import numpy as np
from jax import lax
from jax.experimental import pallas as pl
from jax.experimental.pallas import tpu as pltpu

D_MODEL = 32
N_HEADS = 4
HEAD_DIM = D_MODEL // N_HEADS
D_FFN = 64
NUM_LAYERS = 2
LN_EPS = 1e-5

# Row layout of the packed "smalls" array (each row = 128 lanes, zero padded).
SV_ROWS_PER_LAYER = 8
SV_BQK, SV_BOVO, SV_LN1W, SV_LN1B, SV_B1, SV_B2, SV_LN2W, SV_LN2B = range(8)


def _layernorm(x, w, b):
    mu = jnp.mean(x, axis=-1, keepdims=True)
    var = jnp.mean((x - mu) ** 2, axis=-1, keepdims=True)
    return (x - mu) * lax.rsqrt(var + LN_EPS) * w + b


# ---------------------------------------------------------------------------
# Kernel body helpers (operate on the (B*Sp, D) batch-folded slab)
# ---------------------------------------------------------------------------
def _attention(x, pos, negs, wqk, wvo, bqk, bovo, B, Sp):
    """MHSA with Wv@Wo pre-fused into wvo (D, H*D).  Q/K take x+pos (scale folded into
    wqk), V/output path is one lane-dense projection vo = x @ wvo; per head the output
    is p_h @ vo[:, h*D:(h+1)*D], accumulated over heads, plus bovo (= bo + bv @ wo)."""
    qk_in = (x + pos).astype(jnp.bfloat16)
    qk = (jnp.dot(qk_in, wqk, preferred_element_type=jnp.float32) + bqk).astype(jnp.bfloat16)
    vo = jnp.dot(x.astype(jnp.bfloat16), wvo,
                 preferred_element_type=jnp.float32).astype(jnp.bfloat16)   # (B*Sp, H*D)

    outs = []
    for b in range(B):                      # static loop: attention never crosses batch
        r0 = b * Sp
        qk_b = qk[r0:r0 + Sp]
        vo_b = vo[r0:r0 + Sp]
        neg_b = negs[b]
        acc = None
        for h in range(N_HEADS):            # static head loop (K=8 is inherent to hd=8)
            lo = h * HEAD_DIM
            qh = qk_b[:, lo:lo + HEAD_DIM]                                  # scaled Q
            kh = qk_b[:, D_MODEL + lo:D_MODEL + lo + HEAD_DIM]
            s = lax.dot_general(qh, kh, (((1,), (1,)), ((), ())),
                                preferred_element_type=jnp.float32) + neg_b  # (Sp, Sp)
            s = s - jnp.max(s, axis=-1, keepdims=True)
            p = jnp.exp(s)
            p = (p * pl.reciprocal(jnp.sum(p, axis=-1, keepdims=True),
                                   approx=True)).astype(jnp.bfloat16)
            o = jnp.dot(p, vo_b[:, h * D_MODEL:(h + 1) * D_MODEL],
                        preferred_element_type=jnp.float32)                  # K=Sp, N=D
            acc = o if acc is None else acc + o
        outs.append(acc)
    out = outs[0] if B == 1 else jnp.concatenate(outs, axis=0)               # (B*Sp, D)
    return out + bovo


def _encoder_layer(x, pos, negs, wqk, wvo, w1, w2,
                   bqk, bovo, ln1w, ln1b, b1, b2, ln2w, ln2b, B, Sp):
    attn = _attention(x, pos, negs, wqk, wvo, bqk, bovo, B, Sp)
    x = _layernorm(x + attn, ln1w, ln1b)
    h1 = jnp.maximum(jnp.dot(x.astype(jnp.bfloat16), w1,
                             preferred_element_type=jnp.float32) + b1, 0.0)
    h2 = jnp.dot(h1.astype(jnp.bfloat16), w2, preferred_element_type=jnp.float32) + b2
    return _layernorm(x + h2, ln2w, ln2b)


def make_fused_encoder_kernel(B, Sp):
    """2 encoder layers + final LayerNorm; B batch elements (batch folded into rows)."""
    def kernel(src_ref, pos_ref, neg_ref,
               wqk_ref, wvo_ref, w1_ref, w2_ref, small_ref, out_ref):
        x = src_ref[...]                    # (B*Sp, D) f32 slab
        pos = pos_ref[...]
        sv = small_ref[...]                 # (rows, 128) packed biases / LN params (f32)
        # Hoisted additive key-padding mask: one (Sp, Sp) broadcast per batch element,
        # reused across all layers and heads.
        negs = [jnp.broadcast_to(neg_ref[b], (Sp, Sp)) for b in range(B)]

        for l in range(NUM_LAYERS):         # static unroll over layers, all fused
            r = l * SV_ROWS_PER_LAYER
            x = _encoder_layer(
                x, pos, negs,
                wqk_ref[l], wvo_ref[l], w1_ref[l], w2_ref[l],
                sv[r + SV_BQK:r + SV_BQK + 1, :2 * D_MODEL],
                sv[r + SV_BOVO:r + SV_BOVO + 1, :D_MODEL],
                sv[r + SV_LN1W:r + SV_LN1W + 1, :D_MODEL],
                sv[r + SV_LN1B:r + SV_LN1B + 1, :D_MODEL],
                sv[r + SV_B1:r + SV_B1 + 1, :D_FFN],
                sv[r + SV_B2:r + SV_B2 + 1, :D_MODEL],
                sv[r + SV_LN2W:r + SV_LN2W + 1, :D_MODEL],
                sv[r + SV_LN2B:r + SV_LN2B + 1, :D_MODEL],
                B, Sp)

        nr = NUM_LAYERS * SV_ROWS_PER_LAYER
        out_ref[...] = _layernorm(x, sv[nr:nr + 1, :D_MODEL], sv[nr + 1:nr + 2, :D_MODEL])
    return kernel


# ---------------------------------------------------------------------------
# One-time parameter preparation (call once at init, OUTSIDE the jitted forward)
# ---------------------------------------------------------------------------
def prepare_fused_params(params):
    scale = 1.0 / math.sqrt(HEAD_DIM)

    def pad_row(v):
        v = jnp.asarray(v, jnp.float32).reshape(-1)
        return jnp.pad(v, (0, 128 - v.shape[0]))

    wqk, wvo, w1, w2, rows = [], [], [], [], []
    for lp in params["layers"]:
        # fused, pre-scaled Q|K projection: (D, 2D)
        wqk.append(jnp.concatenate([lp["wq"] * scale, lp["wk"]], axis=1))
        # per-head Wv @ Wo fusion -> lane-dense (D, H*D)
        wvo.append(jnp.concatenate(
            [lp["wv"][:, h * HEAD_DIM:(h + 1) * HEAD_DIM]
             @ lp["wo"][h * HEAD_DIM:(h + 1) * HEAD_DIM, :] for h in range(N_HEADS)],
            axis=1))
        w1.append(lp["w1"])
        w2.append(lp["w2"])
        rows += [pad_row(jnp.concatenate([lp["bq"] * scale, lp["bk"]], axis=1)),
                 pad_row(lp["bo"] + lp["bv"] @ lp["wo"]),       # exact: sum_h bv_h@wo_h
                 pad_row(lp["ln1w"]), pad_row(lp["ln1b"]),
                 pad_row(lp["b1"]), pad_row(lp["b2"]),
                 pad_row(lp["ln2w"]), pad_row(lp["ln2b"])]
    rows += [pad_row(params["norm_w"]), pad_row(params["norm_b"])]
    rows += [jnp.zeros((128,), jnp.float32)] * ((-len(rows)) % 8)

    return dict(
        wqk=jnp.stack(wqk).astype(jnp.bfloat16),   # (L, D, 2D)   bf16 MXU feed
        wvo=jnp.stack(wvo).astype(jnp.bfloat16),   # (L, D, H*D)
        w1=jnp.stack(w1).astype(jnp.bfloat16),     # (L, D, Dffn)
        w2=jnp.stack(w2).astype(jnp.bfloat16),     # (L, Dffn, D)
        smalls=jnp.stack(rows))                    # (rows, 128) f32 packed vectors


# ---------------------------------------------------------------------------
# Chip detection: keep batch-parallel grid only where there are >=2 TensorCores.
# ---------------------------------------------------------------------------
def _has_multiple_tensorcores():
    try:
        kind = (jax.devices()[0].device_kind or "").lower()
    except Exception:
        return False
    return any(t in kind for t in ("v7", "7x", "tpu7", "v4", "v5p"))


_MULTI_TC = _has_multiple_tensorcores()


# ---------------------------------------------------------------------------
# Wrapper: mirrors TransformerEncoder.forward (non-deformable, two_stage_type='no',
# ref_token_index=None). Returns (output, None, None).
# ---------------------------------------------------------------------------
def transformer_encoder_forward(src, pos, spatial_shapes, level_start_index,
                                valid_ratios, key_padding_mask, fused_params):
    # Non-deformable path: spatial_shapes / level_start_index / valid_ratios only feed
    # get_reference_points for the deformable encoder, which is not exercised here.
    del spatial_shapes, level_start_index, valid_ratios
    bs, S, D = src.shape
    Sp = ((S + 127) // 128) * 128          # pad seq to a lane-dense multiple of 128
    padn = Sp - S

    if padn:
        src = jnp.pad(src, ((0, 0), (0, padn), (0, 0)))
        pos = jnp.pad(pos, ((0, 0), (0, padn), (0, 0)))
        key_padding_mask = jnp.pad(key_padding_mask, ((0, 0), (0, padn)),
                                   constant_values=True)

    # additive key mask (0 valid / -1e9 padded), shape (bs, 1, Sp)
    neg = jnp.where(key_padding_mask, jnp.float32(-1e9), jnp.float32(0.0))[:, None, :]
    # fold batch into the row dim: every projection/FFN/LN runs on one (bs*Sp, D) slab
    src2 = src.reshape(bs * Sp, D).astype(jnp.float32)
    pos2 = pos.reshape(bs * Sp, D).astype(jnp.float32)

    # v5e/v6e (single TC): one grid step over the whole batch.
    # v7x (2 TCs): one batch element per "parallel" grid step.
    b_blk = 1 if (_MULTI_TC and bs > 1) else bs
    n_steps = bs // b_blk

    weights = [fused_params[k] for k in ("wqk", "wvo", "w1", "w2", "smalls")]
    data_specs = [
        pl.BlockSpec((b_blk * Sp, D), lambda i: (i, 0)),
        pl.BlockSpec((b_blk * Sp, D), lambda i: (i, 0)),
        pl.BlockSpec((b_blk, 1, Sp), lambda i: (i, 0, 0)),
    ]
    w_specs = [pl.BlockSpec(w.shape, (lambda i, nd=w.ndim: (0,) * nd)) for w in weights]

    out2 = pl.pallas_call(
        make_fused_encoder_kernel(b_blk, Sp),
        out_shape=jax.ShapeDtypeStruct((bs * Sp, D), jnp.float32),
        grid=(n_steps,),
        in_specs=data_specs + w_specs,
        out_specs=pl.BlockSpec((b_blk * Sp, D), lambda i: (i, 0)),
        compiler_params=pltpu.CompilerParams(dimension_semantics=("parallel",)),
    )(src2, pos2, neg, *weights)

    return out2.reshape(bs, Sp, D)[:, :S, :], None, None


# ---------------------------------------------------------------------------
# Deterministic synthetic parameters (linear weights stored as (in, out): y = x @ W + b)
# ---------------------------------------------------------------------------
def init_params(key):
    def dense(k, shape, scale=0.05):
        return (scale * jax.random.normal(k, shape)).astype(jnp.float32)

    layer_keys = jax.random.split(key, NUM_LAYERS)
    layers = []
    for lk in layer_keys:
        ks = jax.random.split(lk, 8)
        layers.append(dict(
            wq=dense(ks[0], (D_MODEL, D_MODEL)), bq=jnp.zeros((1, D_MODEL), jnp.float32),
            wk=dense(ks[1], (D_MODEL, D_MODEL)), bk=jnp.zeros((1, D_MODEL), jnp.float32),
            wv=dense(ks[2], (D_MODEL, D_MODEL)), bv=jnp.zeros((1, D_MODEL), jnp.float32),
            wo=dense(ks[3], (D_MODEL, D_MODEL)), bo=jnp.zeros((1, D_MODEL), jnp.float32),
            ln1w=jnp.ones((1, D_MODEL), jnp.float32), ln1b=jnp.zeros((1, D_MODEL), jnp.float32),
            w1=dense(ks[4], (D_MODEL, D_FFN)), b1=dense(ks[5], (1, D_FFN)),
            w2=dense(ks[6], (D_FFN, D_MODEL)), b2=dense(ks[7], (1, D_MODEL)),
            ln2w=jnp.ones((1, D_MODEL), jnp.float32), ln2b=jnp.zeros((1, D_MODEL), jnp.float32),
        ))
    return dict(layers=layers,
                norm_w=jnp.ones((1, D_MODEL), jnp.float32),
                norm_b=jnp.zeros((1, D_MODEL), jnp.float32))


# ---------------------------------------------------------------------------
# Pure-JAX f32 reference (independent path: unfused Q/K/V, concat heads, no padding)
# ---------------------------------------------------------------------------
def ref_layer(x, pos, mask_bool, p):
    bs, S, D = x.shape
    qk_in = x + pos
    q = qk_in @ p["wq"] + p["bq"]
    k = qk_in @ p["wk"] + p["bk"]
    v = x @ p["wv"] + p["bv"]
    q = q.reshape(bs, S, N_HEADS, HEAD_DIM).transpose(0, 2, 1, 3) / math.sqrt(HEAD_DIM)
    k = k.reshape(bs, S, N_HEADS, HEAD_DIM).transpose(0, 2, 1, 3)
    v = v.reshape(bs, S, N_HEADS, HEAD_DIM).transpose(0, 2, 1, 3)
    s = jnp.einsum("bhqd,bhkd->bhqk", q, k)
    s = s + jnp.where(mask_bool[:, None, None, :], -1e9, 0.0)
    a = jax.nn.softmax(s, axis=-1)
    o = jnp.einsum("bhqk,bhkd->bhqd", a, v).transpose(0, 2, 1, 3).reshape(bs, S, D)
    o = o @ p["wo"] + p["bo"]
    x = _layernorm(x + o, p["ln1w"], p["ln1b"])
    h = jnp.maximum(x @ p["w1"] + p["b1"], 0.0) @ p["w2"] + p["b2"]
    return _layernorm(x + h, p["ln2w"], p["ln2b"])


def ref_forward(src, pos, key_padding_mask, params):
    out = src
    for lp in params["layers"]:
        out = ref_layer(out, pos, key_padding_mask, lp)
    return _layernorm(out, params["norm_w"], params["norm_b"])


# ---------------------------------------------------------------------------
if __name__ == "__main__":
    key = jax.random.PRNGKey(0)
    k_src, k_pos, k_par = jax.random.split(key, 3)

    bs = 2
    spatial_shapes = jnp.array([[8, 8], [4, 4]], dtype=jnp.int32)     # two feature levels
    S = int(np.sum(np.asarray(spatial_shapes)[:, 0] * np.asarray(spatial_shapes)[:, 1]))  # 80
    level_start_index = jnp.array([0, 64], dtype=jnp.int32)
    valid_ratios = jnp.ones((bs, 2, 2), dtype=jnp.float32)

    src = jax.random.normal(k_src, (bs, S, D_MODEL), dtype=jnp.float32)
    pos = jax.random.normal(k_pos, (bs, S, D_MODEL), dtype=jnp.float32)
    key_padding_mask = jnp.zeros((bs, S), dtype=bool).at[1, 72:].set(True)  # pad tail of batch 1

    params = init_params(k_par)
    fused_params = prepare_fused_params(params)   # one-time prep, hoisted out of forward

    fwd = jax.jit(transformer_encoder_forward)
    out, inter_out, inter_ref = fwd(
        src, pos, spatial_shapes, level_start_index, valid_ratios,
        key_padding_mask, fused_params)
    out = jax.block_until_ready(out)

    ref = ref_forward(src, pos, key_padding_mask, params)
    assert out.shape == (bs, S, D_MODEL)
    assert inter_out is None and inter_ref is None
    # 2e-2 tolerance: intentional numerical deviations from the f32 reference are the
    # bf16 MXU operands (weights + activations at the matmul call sites) and the EUP
    # approximate reciprocal in the softmax; everything else (LN, softmax stats,
    # accumulation) stays f32.  Typical max-abs error observed is well below 1e-2.
    assert np.allclose(np.asarray(out), np.asarray(ref), atol=2e-2, rtol=2e-2), (
        float(np.max(np.abs(np.asarray(out) - np.asarray(ref)))))

    print("KERNEL_OK")
</pallas_src>

<mosaic_0001>
module attributes {stable_mosaic.version = 11 : i64} {
  func.func @kernel(%arg0: i32, %arg1: memref<256x32xf32, #tpu.memory_space<vmem>>, %arg2: memref<256x32xf32, #tpu.memory_space<vmem>>, %arg3: memref<2x1x128xf32, #tpu.memory_space<vmem>>, %arg4: memref<2x32x64xbf16, #tpu.memory_space<vmem>>, %arg5: memref<2x32x128xbf16, #tpu.memory_space<vmem>>, %arg6: memref<2x32x64xbf16, #tpu.memory_space<vmem>>, %arg7: memref<2x64x32xbf16, #tpu.memory_space<vmem>>, %arg8: memref<24x128xf32, #tpu.memory_space<vmem>>, %arg9: memref<256x32xf32, #tpu.memory_space<vmem>>) attributes {dimension_semantics = [#tpu.dimension_semantics<parallel>], iteration_bounds = array<i64: 1>, scalar_prefetch = 0 : i64, scratch_operands = 0 : i64, tpu.core_type = #tpu.core_type<tc>, window_params = [{transform_indices = @transform_0, window_bounds = array<i64: 256, 32>}, {transform_indices = @transform_1, window_bounds = array<i64: 256, 32>}, {transform_indices = @transform_2, window_bounds = array<i64: 2, 1, 128>}, {pipeline_mode = #tpu.pipeline_mode<synchronous>, transform_indices = @transform_3, window_bounds = array<i64: 2, 32, 64>}, {pipeline_mode = #tpu.pipeline_mode<synchronous>, transform_indices = @transform_4, window_bounds = array<i64: 2, 32, 128>}, {pipeline_mode = #tpu.pipeline_mode<synchronous>, transform_indices = @transform_5, window_bounds = array<i64: 2, 32, 64>}, {pipeline_mode = #tpu.pipeline_mode<synchronous>, transform_indices = @transform_6, window_bounds = array<i64: 2, 64, 32>}, {pipeline_mode = #tpu.pipeline_mode<synchronous>, transform_indices = @transform_7, window_bounds = array<i64: 24, 128>}, {transform_indices = @transform_8, window_bounds = array<i64: 256, 32>}]} {
    %c0 = arith.constant 0 : index
    %c0_0 = arith.constant 0 : index
    %0 = vector.load %arg1[%c0, %c0_0] : memref<256x32xf32, #tpu.memory_space<vmem>>, vector<256x32xf32>
    %c0_1 = arith.constant 0 : index
    %c0_2 = arith.constant 0 : index
    %1 = vector.load %arg2[%c0_1, %c0_2] : memref<256x32xf32, #tpu.memory_space<vmem>>, vector<256x32xf32>
    %c0_3 = arith.constant 0 : index
    %c0_4 = arith.constant 0 : index
    %2 = vector.load %arg8[%c0_3, %c0_4] : memref<24x128xf32, #tpu.memory_space<vmem>>, vector<24x128xf32>
    %c0_5 = arith.constant 0 : index
    %c0_6 = arith.constant 0 : index
    %c0_7 = arith.constant 0 : index
    %3 = vector.load %arg3[%c0_5, %c0_6, %c0_7] : memref<2x1x128xf32, #tpu.memory_space<vmem>>, vector<1x1x128xf32>
    %4 = vector.shape_cast %3 : vector<1x1x128xf32> to vector<1x128xf32>
    %5 = vector.shape_cast %4 : vector<1x128xf32> to vector<1x128xf32>
    %6 = vector.broadcast %5 : vector<1x128xf32> to vector<128x128xf32>
    %c1 = arith.constant 1 : index
    %c0_8 = arith.constant 0 : index
    %c0_9 = arith.constant 0 : index
    %7 = vector.load %arg3[%c1, %c0_8, %c0_9] : memref<2x1x128xf32, #tpu.memory_space<vmem>>, vector<1x1x128xf32>
    %8 = vector.shape_cast %7 : vector<1x1x128xf32> to vector<1x128xf32>
    %9 = vector.shape_cast %8 : vector<1x128xf32> to vector<1x128xf32>
    %10 = vector.broadcast %9 : vector<1x128xf32> to vector<128x128xf32>
    %c0_10 = arith.constant 0 : index
    %c0_11 = arith.constant 0 : index
    %c0_12 = arith.constant 0 : index
    %11 = vector.load %arg4[%c0_10, %c0_11, %c0_12] : memref<2x32x64xbf16, #tpu.memory_space<vmem>>, vector<1x32x64xbf16>
    %12 = vector.shape_cast %11 : vector<1x32x64xbf16> to vector<32x64xbf16>
    %c0_13 = arith.constant 0 : index
    %c0_14 = arith.constant 0 : index
    %c0_15 = arith.constant 0 : index
    %13 = vector.load %arg5[%c0_13, %c0_14, %c0_15] : memref<2x32x128xbf16, #tpu.memory_space<vmem>>, vector<1x32x128xbf16>
    %14 = vector.shape_cast %13 : vector<1x32x128xbf16> to vector<32x128xbf16>
    %c0_16 = arith.constant 0 : index
    %c0_17 = arith.constant 0 : index
    %c0_18 = arith.constant 0 : index
    %15 = vector.load %arg6[%c0_16, %c0_17, %c0_18] : memref<2x32x64xbf16, #tpu.memory_space<vmem>>, vector<1x32x64xbf16>
    %16 = vector.shape_cast %15 : vector<1x32x64xbf16> to vector<32x64xbf16>
    %c0_19 = arith.constant 0 : index
    %c0_20 = arith.constant 0 : index
    %c0_21 = arith.constant 0 : index
    %17 = vector.load %arg7[%c0_19, %c0_20, %c0_21] : memref<2x64x32xbf16, #tpu.memory_space<vmem>>, vector<1x64x32xbf16>
    %18 = vector.shape_cast %17 : vector<1x64x32xbf16> to vector<64x32xbf16>
    %19 = vector.extract_strided_slice %2 {offsets = [0, 0], sizes = [1, 64], strides = [1, 1]} : vector<24x128xf32> to vector<1x64xf32>
    %20 = vector.extract_strided_slice %2 {offsets = [1, 0], sizes = [1, 32], strides = [1, 1]} : vector<24x128xf32> to vector<1x32xf32>
    %21 = vector.extract_strided_slice %2 {offsets = [2, 0], sizes = [1, 32], strides = [1, 1]} : vector<24x128xf32> to vector<1x32xf32>
    %22 = vector.extract_strided_slice %2 {offsets = [3, 0], sizes = [1, 32], strides = [1, 1]} : vector<24x128xf32> to vector<1x32xf32>
    %23 = vector.extract_strided_slice %2 {offsets = [4, 0], sizes = [1, 64], strides = [1, 1]} : vector<24x128xf32> to vector<1x64xf32>
    %24 = vector.extract_strided_slice %2 {offsets = [5, 0], sizes = [1, 32], strides = [1, 1]} : vector<24x128xf32> to vector<1x32xf32>
    %25 = vector.extract_strided_slice %2 {offsets = [6, 0], sizes = [1, 32], strides = [1, 1]} : vector<24x128xf32> to vector<1x32xf32>
    %26 = vector.extract_strided_slice %2 {offsets = [7, 0], sizes = [1, 32], strides = [1, 1]} : vector<24x128xf32> to vector<1x32xf32>
    %27 = arith.addf %0, %1 : vector<256x32xf32>
    %28 = arith.truncf %27 : vector<256x32xf32> to vector<256x32xbf16>
    %cst = arith.constant dense<0.000000e+00> : vector<256x64xf32>
    %29 = tpu.matmul %28, %12, %cst {dimension_numbers = #tpu.dot_dimension_numbers<[1], [0], [0], [1], [0, 0, 1, 1], [], []>} : vector<256x32xbf16>, vector<32x64xbf16>, vector<256x64xf32> -> vector<256x64xf32>
    %30 = vector.broadcast %19 : vector<1x64xf32> to vector<256x64xf32>
    %31 = arith.addf %29, %30 : vector<256x64xf32>
    %32 = arith.truncf %31 : vector<256x64xf32> to vector<256x64xbf16>
    %33 = arith.truncf %0 : vector<256x32xf32> to vector<256x32xbf16>
    %cst_22 = arith.constant dense<0.000000e+00> : vector<256x128xf32>
    %34 = tpu.matmul %33, %14, %cst_22 {dimension_numbers = #tpu.dot_dimension_numbers<[1], [0], [0], [1], [0, 0, 1, 1], [], []>} : vector<256x32xbf16>, vector<32x128xbf16>, vector<256x128xf32> -> vector<256x128xf32>
    %35 = arith.truncf %34 : vector<256x128xf32> to vector<256x128xbf16>
    %36 = vector.extract_strided_slice %32 {offsets = [0, 0], sizes = [128, 64], strides = [1, 1]} : vector<256x64xbf16> to vector<128x64xbf16>
    %37 = vector.extract_strided_slice %35 {offsets = [0, 0], sizes = [128, 128], strides = [1, 1]} : vector<256x128xbf16> to vector<128x128xbf16>
    %38 = vector.extract_strided_slice %36 {offsets = [0, 0], sizes = [128, 8], strides = [1, 1]} : vector<128x64xbf16> to vector<128x8xbf16>
    %39 = vector.extract_strided_slice %36 {offsets = [0, 32], sizes = [128, 8], strides = [1, 1]} : vector<128x64xbf16> to vector<128x8xbf16>
    %cst_23 = arith.constant dense<0.000000e+00> : vector<128x128xf32>
    %40 = tpu.matmul %38, %39, %cst_23 {dimension_numbers = #tpu.dot_dimension_numbers<[1], [1], [0], [0], [0, 0, 1, 0], [], []>} : vector<128x8xbf16>, vector<128x8xbf16>, vector<128x128xf32> -> vector<128x128xf32>
    %41 = arith.addf %40, %6 : vector<128x128xf32>
    %cst_24 = arith.constant dense<0xFF800000> : vector<128xf32>
    %42 = vector.multi_reduction <maximumf>, %41, %cst_24 [1] : vector<128x128xf32> to vector<128xf32>
    %43 = vector.shape_cast %42 : vector<128xf32> to vector<128x1xf32>
    %44 = vector.broadcast %43 : vector<128x1xf32> to vector<128x128xf32>
    %45 = arith.subf %41, %44 : vector<128x128xf32>
    %46 = math.exp %45 : vector<128x128xf32>
    %cst_25 = arith.constant dense<0.000000e+00> : vector<128xf32>
    %47 = vector.multi_reduction <add>, %46, %cst_25 [1] : vector<128x128xf32> to vector<128xf32>
    %48 = vector.shape_cast %47 : vector<128xf32> to vector<128x1xf32>
    %49 = tpu.reciprocal %48 {approx = true} : vector<128x1xf32> -> vector<128x1xf32>
    %50 = vector.broadcast %49 : vector<128x1xf32> to vector<128x128xf32>
    %51 = arith.mulf %46, %50 : vector<128x128xf32>
    %52 = arith.truncf %51 : vector<128x128xf32> to vector<128x128xbf16>
    %53 = vector.extract_strided_slice %37 {offsets = [0, 0], sizes = [128, 32], strides = [1, 1]} : vector<128x128xbf16> to vector<128x32xbf16>
    %cst_26 = arith.constant dense<0.000000e+00> : vector<128x32xf32>
    %54 = tpu.matmul %52, %53, %cst_26 {dimension_numbers = #tpu.dot_dimension_numbers<[1], [0], [0], [1], [0, 0, 1, 1], [], []>} : vector<128x128xbf16>, vector<128x32xbf16>, vector<128x32xf32> -> vector<128x32xf32>
    %55 = vector.extract_strided_slice %36 {offsets = [0, 8], sizes = [128, 8], strides = [1, 1]} : vector<128x64xbf16> to vector<128x8xbf16>
    %56 = vector.extract_strided_slice %36 {offsets = [0, 40], sizes = [128, 8], strides = [1, 1]} : vector<128x64xbf16> to vector<128x8xbf16>
    %cst_27 = arith.constant dense<0.000000e+00> : vector<128x128xf32>
    %57 = tpu.matmul %55, %56, %cst_27 {dimension_numbers = #tpu.dot_dimension_numbers<[1], [1], [0], [0], [0, 0, 1, 0], [], []>} : vector<128x8xbf16>, vector<128x8xbf16>, vector<128x128xf32> -> vector<128x128xf32>
    %58 = arith.addf %57, %6 : vector<128x128xf32>
    %cst_28 = arith.constant dense<0xFF800000> : vector<128xf32>
    %59 = vector.multi_reduction <maximumf>, %58, %cst_28 [1] : vector<128x128xf32> to vector<128xf32>
    %60 = vector.shape_cast %59 : vector<128xf32> to vector<128x1xf32>
    %61 = vector.broadcast %60 : vector<128x1xf32> to vector<128x128xf32>
    %62 = arith.subf %58, %61 : vector<128x128xf32>
    %63 = math.exp %62 : vector<128x128xf32>
    %cst_29 = arith.constant dense<0.000000e+00> : vector<128xf32>
    %64 = vector.multi_reduction <add>, %63, %cst_29 [1] : vector<128x128xf32> to vector<128xf32>
    %65 = vector.shape_cast %64 : vector<128xf32> to vector<128x1xf32>
    %66 = tpu.reciprocal %65 {approx = true} : vector<128x1xf32> -> vector<128x1xf32>
    %67 = vector.broadcast %66 : vector<128x1xf32> to vector<128x128xf32>
    %68 = arith.mulf %63, %67 : vector<128x128xf32>
    %69 = arith.truncf %68 : vector<128x128xf32> to vector<128x128xbf16>
    %70 = vector.extract_strided_slice %37 {offsets = [0, 32], sizes = [128, 32], strides = [1, 1]} : vector<128x128xbf16> to vector<128x32xbf16>
    %cst_30 = arith.constant dense<0.000000e+00> : vector<128x32xf32>
    %71 = tpu.matmul %69, %70, %cst_30 {dimension_numbers = #tpu.dot_dimension_numbers<[1], [0], [0], [1], [0, 0, 1, 1], [], []>} : vector<128x128xbf16>, vector<128x32xbf16>, vector<128x32xf32> -> vector<128x32xf32>
    %72 = arith.addf %54, %71 : vector<128x32xf32>
    %73 = vector.extract_strided_slice %36 {offsets = [0, 16], sizes = [128, 8], strides = [1, 1]} : vector<128x64xbf16> to vector<128x8xbf16>
    %74 = vector.extract_strided_slice %36 {offsets = [0, 48], sizes = [128, 8], strides = [1, 1]} : vector<128x64xbf16> to vector<128x8xbf16>
    %cst_31 = arith.constant dense<0.000000e+00> : vector<128x128xf32>
    %75 = tpu.matmul %73, %74, %cst_31 {dimension_numbers = #tpu.dot_dimension_numbers<[1], [1], [0], [0], [0, 0, 1, 0], [], []>} : vector<128x8xbf16>, vector<128x8xbf16>, vector<128x128xf32> -> vector<128x128xf32>
    %76 = arith.addf %75, %6 : vector<128x128xf32>
    %cst_32 = arith.constant dense<0xFF800000> : vector<128xf32>
    %77 = vector.multi_reduction <maximumf>, %76, %cst_32 [1] : vector<128x128xf32> to vector<128xf32>
    %78 = vector.shape_cast %77 : vector<128xf32> to vector<128x1xf32>
    %79 = vector.broadcast %78 : vector<128x1xf32> to vector<128x128xf32>
    %80 = arith.subf %76, %79 : vector<128x128xf32>
    %81 = math.exp %80 : vector<128x128xf32>
    %cst_33 = arith.constant dense<0.000000e+00> : vector<128xf32>
    %82 = vector.multi_reduction <add>, %81, %cst_33 [1] : vector<128x128xf32> to vector<128xf32>
    %83 = vector.shape_cast %82 : vector<128xf32> to vector<128x1xf32>
    %84 = tpu.reciprocal %83 {approx = true} : vector<128x1xf32> -> vector<128x1xf32>
    %85 = vector.broadcast %84 : vector<128x1xf32> to vector<128x128xf32>
    %86 = arith.mulf %81, %85 : vector<128x128xf32>
    %87 = arith.truncf %86 : vector<128x128xf32> to vector<128x128xbf16>
    %88 = vector.extract_strided_slice %37 {offsets = [0, 64], sizes = [128, 32], strides = [1, 1]} : vector<128x128xbf16> to vector<128x32xbf16>
    %cst_34 = arith.constant dense<0.000000e+00> : vector<128x32xf32>
    %89 = tpu.matmul %87, %88, %cst_34 {dimension_numbers = #tpu.dot_dimension_numbers<[1], [0], [0], [1], [0, 0, 1, 1], [], []>} : vector<128x128xbf16>, vector<128x32xbf16>, vector<128x32xf32> -> vector<128x32xf32>
    %90 = arith.addf %72, %89 : vector<128x32xf32>
    %91 = vector.extract_strided_slice %36 {offsets = [0, 24], sizes = [128, 8], strides = [1, 1]} : vector<128x64xbf16> to vector<128x8xbf16>
    %92 = vector.extract_strided_slice %36 {offsets = [0, 56], sizes = [128, 8], strides = [1, 1]} : vector<128x64xbf16> to vector<128x8xbf16>
    %cst_35 = arith.constant dense<0.000000e+00> : vector<128x128xf32>
    %93 = tpu.matmul %91, %92, %cst_35 {dimension_numbers = #tpu.dot_dimension_numbers<[1], [1], [0], [0], [0, 0, 1, 0], [], []>} : vector<128x8xbf16>, vector<128x8xbf16>, vector<128x128xf32> -> vector<128x128xf32>
    %94 = arith.addf %93, %6 : vector<128x128xf32>
    %cst_36 = arith.constant dense<0xFF800000> : vector<128xf32>
    %95 = vector.multi_reduction <maximumf>, %94, %cst_36 [1] : vector<128x128xf32> to vector<128xf32>
    %96 = vector.shape_cast %95 : vector<128xf32> to vector<128x1xf32>
    %97 = vector.broadcast %96 : vector<128x1xf32> to vector<128x128xf32>
    %98 = arith.subf %94, %97 : vector<128x128xf32>
    %99 = math.exp %98 : vector<128x128xf32>
    %cst_37 = arith.constant dense<0.000000e+00> : vector<128xf32>
    %100 = vector.multi_reduction <add>, %99, %cst_37 [1] : vector<128x128xf32> to vector<128xf32>
    %101 = vector.shape_cast %100 : vector<128xf32> to vector<128x1xf32>
    %102 = tpu.reciprocal %101 {approx = true} : vector<128x1xf32> -> vector<128x1xf32>
    %103 = vector.broadcast %102 : vector<128x1xf32> to vector<128x128xf32>
    %104 = arith.mulf %99, %103 : vector<128x128xf32>
    %105 = arith.truncf %104 : vector<128x128xf32> to vector<128x128xbf16>
    %106 = vector.extract_strided_slice %37 {offsets = [0, 96], sizes = [128, 32], strides = [1, 1]} : vector<128x128xbf16> to vector<128x32xbf16>
    %cst_38 = arith.constant dense<0.000000e+00> : vector<128x32xf32>
    %107 = tpu.matmul %105, %106, %cst_38 {dimension_numbers = #tpu.dot_dimension_numbers<[1], [0], [0], [1], [0, 0, 1, 1], [], []>} : vector<128x128xbf16>, vector<128x32xbf16>, vector<128x32xf32> -> vector<128x32xf32>
    %108 = arith.addf %90, %107 : vector<128x32xf32>
    %109 = vector.extract_strided_slice %32 {offsets = [128, 0], sizes = [128, 64], strides = [1, 1]} : vector<256x64xbf16> to vector<128x64xbf16>
    %110 = vector.extract_strided_slice %35 {offsets = [128, 0], sizes = [128, 128], strides = [1, 1]} : vector<256x128xbf16> to vector<128x128xbf16>
    %111 = vector.extract_strided_slice %109 {offsets = [0, 0], sizes = [128, 8], strides = [1, 1]} : vector<128x64xbf16> to vector<128x8xbf16>
    %112 = vector.extract_strided_slice %109 {offsets = [0, 32], sizes = [128, 8], strides = [1, 1]} : vector<128x64xbf16> to vector<128x8xbf16>
    %cst_39 = arith.constant dense<0.000000e+00> : vector<128x128xf32>
    %113 = tpu.matmul %111, %112, %cst_39 {dimension_numbers = #tpu.dot_dimension_numbers<[1], [1], [0], [0], [0, 0, 1, 0], [], []>} : vector<128x8xbf16>, vector<128x8xbf16>, vector<128x128xf32> -> vector<128x128xf32>
    %114 = arith.addf %113, %10 : vector<128x128xf32>
    %cst_40 = arith.constant dense<0xFF800000> : vector<128xf32>
    %115 = vector.multi_reduction <maximumf>, %114, %cst_40 [1] : vector<128x128xf32> to vector<128xf32>
    %116 = vector.shape_cast %115 : vector<128xf32> to vector<128x1xf32>
    %117 = vector.broadcast %116 : vector<128x1xf32> to vector<128x128xf32>
    %118 = arith.subf %114, %117 : vector<128x128xf32>
    %119 = math.exp %118 : vector<128x128xf32>
    %cst_41 = arith.constant dense<0.000000e+00> : vector<128xf32>
    %120 = vector.multi_reduction <add>, %119, %cst_41 [1] : vector<128x128xf32> to vector<128xf32>
    %121 = vector.shape_cast %120 : vector<128xf32> to vector<128x1xf32>
    %122 = tpu.reciprocal %121 {approx = true} : vector<128x1xf32> -> vector<128x1xf32>
    %123 = vector.broadcast %122 : vector<128x1xf32> to vector<128x128xf32>
    %124 = arith.mulf %119, %123 : vector<128x128xf32>
    %125 = arith.truncf %124 : vector<128x128xf32> to vector<128x128xbf16>
    %126 = vector.extract_strided_slice %110 {offsets = [0, 0], sizes = [128, 32], strides = [1, 1]} : vector<128x128xbf16> to vector<128x32xbf16>
    %cst_42 = arith.constant dense<0.000000e+00> : vector<128x32xf32>
    %127 = tpu.matmul %125, %126, %cst_42 {dimension_numbers = #tpu.dot_dimension_numbers<[1], [0], [0], [1], [0, 0, 1, 1], [], []>} : vector<128x128xbf16>, vector<128x32xbf16>, vector<128x32xf32> -> vector<128x32xf32>
    %128 = vector.extract_strided_slice %109 {offsets = [0, 8], sizes = [128, 8], strides = [1, 1]} : vector<128x64xbf16> to vector<128x8xbf16>
    %129 = vector.extract_strided_slice %109 {offsets = [0, 40], sizes = [128, 8], strides = [1, 1]} : vector<128x64xbf16> to vector<128x8xbf16>
    %cst_43 = arith.constant dense<0.000000e+00> : vector<128x128xf32>
    %130 = tpu.matmul %128, %129, %cst_43 {dimension_numbers = #tpu.dot_dimension_numbers<[1], [1], [0], [0], [0, 0, 1, 0], [], []>} : vector<128x8xbf16>, vector<128x8xbf16>, vector<128x128xf32> -> vector<128x128xf32>
    %131 = arith.addf %130, %10 : vector<128x128xf32>
    %cst_44 = arith.constant dense<0xFF800000> : vector<128xf32>
    %132 = vector.multi_reduction <maximumf>, %131, %cst_44 [1] : vector<128x128xf32> to vector<128xf32>
    %133 = vector.shape_cast %132 : vector<128xf32> to vector<128x1xf32>
    %134 = vector.broadcast %133 : vector<128x1xf32> to vector<128x128xf32>
    %135 = arith.subf %131, %134 : vector<128x128xf32>
    %136 = math.exp %135 : vector<128x128xf32>
    %cst_45 = arith.constant dense<0.000000e+00> : vector<128xf32>
    %137 = vector.multi_reduction <add>, %136, %cst_45 [1] : vector<128x128xf32> to vector<128xf32>
    %138 = vector.shape_cast %137 : vector<128xf32> to vector<128x1xf32>
    %139 = tpu.reciprocal %138 {approx = true} : vector<128x1xf32> -> vector<128x1xf32>
    %140 = vector.broadcast %139 : vector<128x1xf32> to vector<128x128xf32>
    %141 = arith.mulf %136, %140 : vector<128x128xf32>
    %142 = arith.truncf %141 : vector<128x128xf32> to vector<128x128xbf16>
    %143 = vector.extract_strided_slice %110 {offsets = [0, 32], sizes = [128, 32], strides = [1, 1]} : vector<128x128xbf16> to vector<128x32xbf16>
    %cst_46 = arith.constant dense<0.000000e+00> : vector<128x32xf32>
    %144 = tpu.matmul %142, %143, %cst_46 {dimension_numbers = #tpu.dot_dimension_numbers<[1], [0], [0], [1], [0, 0, 1, 1], [], []>} : vector<128x128xbf16>, vector<128x32xbf16>, vector<128x32xf32> -> vector<128x32xf32>
    %145 = arith.addf %127, %144 : vector<128x32xf32>
    %146 = vector.extract_strided_slice %109 {offsets = [0, 16], sizes = [128, 8], strides = [1, 1]} : vector<128x64xbf16> to vector<128x8xbf16>
    %147 = vector.extract_strided_slice %109 {offsets = [0, 48], sizes = [128, 8], strides = [1, 1]} : vector<128x64xbf16> to vector<128x8xbf16>
    %cst_47 = arith.constant dense<0.000000e+00> : vector<128x128xf32>
    %148 = tpu.matmul %146, %147, %cst_47 {dimension_numbers = #tpu.dot_dimension_numbers<[1], [1], [0], [0], [0, 0, 1, 0], [], []>} : vector<128x8xbf16>, vector<128x8xbf16>, vector<128x128xf32> -> vector<128x128xf32>
    %149 = arith.addf %148, %10 : vector<128x128xf32>
    %cst_48 = arith.constant dense<0xFF800000> : vector<128xf32>
    %150 = vector.multi_reduction <maximumf>, %149, %cst_48 [1] : vector<128x128xf32> to vector<128xf32>
    %151 = vector.shape_cast %150 : vector<128xf32> to vector<128x1xf32>
    %152 = vector.broadcast %151 : vector<128x1xf32> to vector<128x128xf32>
    %153 = arith.subf %149, %152 : vector<128x128xf32>
    %154 = math.exp %153 : vector<128x128xf32>
    %cst_49 = arith.constant dense<0.000000e+00> : vector<128xf32>
    %155 = vector.multi_reduction <add>, %154, %cst_49 [1] : vector<128x128xf32> to vector<128xf32>
    %156 = vector.shape_cast %155 : vector<128xf32> to vector<128x1xf32>
    %157 = tpu.reciprocal %156 {approx = true} : vector<128x1xf32> -> vector<128x1xf32>
    %158 = vector.broadcast %157 : vector<128x1xf32> to vector<128x128xf32>
    %159 = arith.mulf %154, %158 : vector<128x128xf32>
    %160 = arith.truncf %159 : vector<128x128xf32> to vector<128x128xbf16>
    %161 = vector.extract_strided_slice %110 {offsets = [0, 64], sizes = [128, 32], strides = [1, 1]} : vector<128x128xbf16> to vector<128x32xbf16>
    %cst_50 = arith.constant dense<0.000000e+00> : vector<128x32xf32>
    %162 = tpu.matmul %160, %161, %cst_50 {dimension_numbers = #tpu.dot_dimension_numbers<[1], [0], [0], [1], [0, 0, 1, 1], [], []>} : vector<128x128xbf16>, vector<128x32xbf16>, vector<128x32xf32> -> vector<128x32xf32>
    %163 = arith.addf %145, %162 : vector<128x32xf32>
    %164 = vector.extract_strided_slice %109 {offsets = [0, 24], sizes = [128, 8], strides = [1, 1]} : vector<128x64xbf16> to vector<128x8xbf16>
    %165 = vector.extract_strided_slice %109 {offsets = [0, 56], sizes = [128, 8], strides = [1, 1]} : vector<128x64xbf16> to vector<128x8xbf16>
    %cst_51 = arith.constant dense<0.000000e+00> : vector<128x128xf32>
    %166 = tpu.matmul %164, %165, %cst_51 {dimension_numbers = #tpu.dot_dimension_numbers<[1], [1], [0], [0], [0, 0, 1, 0], [], []>} : vector<128x8xbf16>, vector<128x8xbf16>, vector<128x128xf32> -> vector<128x128xf32>
    %167 = arith.addf %166, %10 : vector<128x128xf32>
    %cst_52 = arith.constant dense<0xFF800000> : vector<128xf32>
    %168 = vector.multi_reduction <maximumf>, %167, %cst_52 [1] : vector<128x128xf32> to vector<128xf32>
    %169 = vector.shape_cast %168 : vector<128xf32> to vector<128x1xf32>
    %170 = vector.broadcast %169 : vector<128x1xf32> to vector<128x128xf32>
    %171 = arith.subf %167, %170 : vector<128x128xf32>
    %172 = math.exp %171 : vector<128x128xf32>
    %cst_53 = arith.constant dense<0.000000e+00> : vector<128xf32>
    %173 = vector.multi_reduction <add>, %172, %cst_53 [1] : vector<128x128xf32> to vector<128xf32>
    %174 = vector.shape_cast %173 : vector<128xf32> to vector<128x1xf32>
    %175 = tpu.reciprocal %174 {approx = true} : vector<128x1xf32> -> vector<128x1xf32>
    %176 = vector.broadcast %175 : vector<128x1xf32> to vector<128x128xf32>
    %177 = arith.mulf %172, %176 : vector<128x128xf32>
    %178 = arith.truncf %177 : vector<128x128xf32> to vector<128x128xbf16>
    %179 = vector.extract_strided_slice %110 {offsets = [0, 96], sizes = [128, 32], strides = [1, 1]} : vector<128x128xbf16> to vector<128x32xbf16>
    %cst_54 = arith.constant dense<0.000000e+00> : vector<128x32xf32>
    %180 = tpu.matmul %178, %179, %cst_54 {dimension_numbers = #tpu.dot_dimension_numbers<[1], [0], [0], [1], [0, 0, 1, 1], [], []>} : vector<128x128xbf16>, vector<128x32xbf16>, vector<128x32xf32> -> vector<128x32xf32>
    %181 = arith.addf %163, %180 : vector<128x32xf32>
    %182 = tpu.concatenate %108, %181 in 0 : vector<128x32xf32>, vector<128x32xf32> -> vector<256x32xf32>
    %183 = vector.broadcast %20 : vector<1x32xf32> to vector<256x32xf32>
    %184 = arith.addf %182, %183 : vector<256x32xf32>
    %185 = arith.addf %0, %184 : vector<256x32xf32>
    %cst_55 = arith.constant dense<0.000000e+00> : vector<256xf32>
    %186 = vector.multi_reduction <add>, %185, %cst_55 [1] : vector<256x32xf32> to vector<256xf32>
    %187 = vector.shape_cast %186 : vector<256xf32> to vector<256x1xf32>
    %cst_56 = arith.constant 3.200000e+01 : f32
    %188 = vector.broadcast %cst_56 : f32 to vector<256x1xf32>
    %189 = arith.divf %187, %188 : vector<256x1xf32>
    %190 = vector.broadcast %189 : vector<256x1xf32> to vector<256x32xf32>
    %191 = arith.subf %185, %190 : vector<256x32xf32>
    %192 = arith.mulf %191, %191 : vector<256x32xf32>
    %cst_57 = arith.constant dense<0.000000e+00> : vector<256xf32>
    %193 = vector.multi_reduction <add>, %192, %cst_57 [1] : vector<256x32xf32> to vector<256xf32>
    %194 = vector.shape_cast %193 : vector<256xf32> to vector<256x1xf32>
    %cst_58 = arith.constant 3.200000e+01 : f32
    %195 = vector.broadcast %cst_58 : f32 to vector<256x1xf32>
    %196 = arith.divf %194, %195 : vector<256x1xf32>
    %197 = vector.broadcast %189 : vector<256x1xf32> to vector<256x32xf32>
    %198 = arith.subf %185, %197 : vector<256x32xf32>
    %cst_59 = arith.constant 9.99999974E-6 : f32
    %199 = vector.broadcast %cst_59 : f32 to vector<256x1xf32>
    %200 = arith.addf %196, %199 : vector<256x1xf32>
    %201 = math.rsqrt %200 : vector<256x1xf32>
    %202 = vector.broadcast %201 : vector<256x1xf32> to vector<256x32xf32>
    %203 = arith.mulf %198, %202 : vector<256x32xf32>
    %204 = vector.broadcast %21 : vector<1x32xf32> to vector<256x32xf32>
    %205 = arith.mulf %203, %204 : vector<256x32xf32>
    %206 = vector.broadcast %22 : vector<1x32xf32> to vector<256x32xf32>
    %207 = arith.addf %205, %206 : vector<256x32xf32>
    %208 = arith.truncf %207 : vector<256x32xf32> to vector<256x32xbf16>
    %cst_60 = arith.constant dense<0.000000e+00> : vector<256x64xf32>
    %209 = tpu.matmul %208, %16, %cst_60 {dimension_numbers = #tpu.dot_dimension_numbers<[1], [0], [0], [1], [0, 0, 1, 1], [], []>} : vector<256x32xbf16>, vector<32x64xbf16>, vector<256x64xf32> -> vector<256x64xf32>
    %210 = vector.broadcast %23 : vector<1x64xf32> to vector<256x64xf32>
    %211 = arith.addf %209, %210 : vector<256x64xf32>
    %cst_61 = arith.constant 0.000000e+00 : f32
    %212 = vector.broadcast %cst_61 : f32 to vector<256x64xf32>
    %213 = arith.maximumf %211, %212 : vector<256x64xf32>
    %214 = arith.truncf %213 : vector<256x64xf32> to vector<256x64xbf16>
    %cst_62 = arith.constant dense<0.000000e+00> : vector<256x32xf32>
    %215 = tpu.matmul %214, %18, %cst_62 {dimension_numbers = #tpu.dot_dimension_numbers<[1], [0], [0], [1], [0, 0, 1, 1], [], []>} : vector<256x64xbf16>, vector<64x32xbf16>, vector<256x32xf32> -> vector<256x32xf32>
    %216 = vector.broadcast %24 : vector<1x32xf32> to vector<256x32xf32>
    %217 = arith.addf %215, %216 : vector<256x32xf32>
    %218 = arith.addf %207, %217 : vector<256x32xf32>
    %cst_63 = arith.constant dense<0.000000e+00> : vector<256xf32>
    %219 = vector.multi_reduction <add>, %218, %cst_63 [1] : vector<256x32xf32> to vector<256xf32>
    %220 = vector.shape_cast %219 : vector<256xf32> to vector<256x1xf32>
    %cst_64 = arith.constant 3.200000e+01 : f32
    %221 = vector.broadcast %cst_64 : f32 to vector<256x1xf32>
    %222 = arith.divf %220, %221 : vector<256x1xf32>
    %223 = vector.broadcast %222 : vector<256x1xf32> to vector<256x32xf32>
    %224 = arith.subf %218, %223 : vector<256x32xf32>
    %225 = arith.mulf %224, %224 : vector<256x32xf32>
    %cst_65 = arith.constant dense<0.000000e+00> : vector<256xf32>
    %226 = vector.multi_reduction <add>, %225, %cst_65 [1] : vector<256x32xf32> to vector<256xf32>
    %227 = vector.shape_cast %226 : vector<256xf32> to vector<256x1xf32>
    %cst_66 = arith.constant 3.200000e+01 : f32
    %228 = vector.broadcast %cst_66 : f32 to vector<256x1xf32>
    %229 = arith.divf %227, %228 : vector<256x1xf32>
    %230 = vector.broadcast %222 : vector<256x1xf32> to vector<256x32xf32>
    %231 = arith.subf %218, %230 : vector<256x32xf32>
    %cst_67 = arith.constant 9.99999974E-6 : f32
    %232 = vector.broadcast %cst_67 : f32 to vector<256x1xf32>
    %233 = arith.addf %229, %232 : vector<256x1xf32>
    %234 = math.rsqrt %233 : vector<256x1xf32>
    %235 = vector.broadcast %234 : vector<256x1xf32> to vector<256x32xf32>
    %236 = arith.mulf %231, %235 : vector<256x32xf32>
    %237 = vector.broadcast %25 : vector<1x32xf32> to vector<256x32xf32>
    %238 = arith.mulf %236, %237 : vector<256x32xf32>
    %239 = vector.broadcast %26 : vector<1x32xf32> to vector<256x32xf32>
    %240 = arith.addf %238, %239 : vector<256x32xf32>
    %c1_68 = arith.constant 1 : index
    %c0_69 = arith.constant 0 : index
    %c0_70 = arith.constant 0 : index
    %241 = vector.load %arg4[%c1_68, %c0_69, %c0_70] : memref<2x32x64xbf16, #tpu.memory_space<vmem>>, vector<1x32x64xbf16>
    %242 = vector.shape_cast %241 : vector<1x32x64xbf16> to vector<32x64xbf16>
    %c1_71 = arith.constant 1 : index
    %c0_72 = arith.constant 0 : index
    %c0_73 = arith.constant 0 : index
    %243 = vector.load %arg5[%c1_71, %c0_72, %c0_73] : memref<2x32x128xbf16, #tpu.memory_space<vmem>>, vector<1x32x128xbf16>
    %244 = vector.shape_cast %243 : vector<1x32x128xbf16> to vector<32x128xbf16>
    %c1_74 = arith.constant 1 : index
    %c0_75 = arith.constant 0 : index
    %c0_76 = arith.constant 0 : index
    %245 = vector.load %arg6[%c1_74, %c0_75, %c0_76] : memref<2x32x64xbf16, #tpu.memory_space<vmem>>, vector<1x32x64xbf16>
    %246 = vector.shape_cast %245 : vector<1x32x64xbf16> to vector<32x64xbf16>
    %c1_77 = arith.constant 1 : index
    %c0_78 = arith.constant 0 : index
    %c0_79 = arith.constant 0 : index
    %247 = vector.load %arg7[%c1_77, %c0_78, %c0_79] : memref<2x64x32xbf16, #tpu.memory_space<vmem>>, vector<1x64x32xbf16>
    %248 = vector.shape_cast %247 : vector<1x64x32xbf16> to vector<64x32xbf16>
    %249 = vector.extract_strided_slice %2 {offsets = [8, 0], sizes = [1, 64], strides = [1, 1]} : vector<24x128xf32> to vector<1x64xf32>
    %250 = vector.extract_strided_slice %2 {offsets = [9, 0], sizes = [1, 32], strides = [1, 1]} : vector<24x128xf32> to vector<1x32xf32>
    %251 = vector.extract_strided_slice %2 {offsets = [10, 0], sizes = [1, 32], strides = [1, 1]} : vector<24x128xf32> to vector<1x32xf32>
    %252 = vector.extract_strided_slice %2 {offsets = [11, 0], sizes = [1, 32], strides = [1, 1]} : vector<24x128xf32> to vector<1x32xf32>
    %253 = vector.extract_strided_slice %2 {offsets = [12, 0], sizes = [1, 64], strides = [1, 1]} : vector<24x128xf32> to vector<1x64xf32>
    %254 = vector.extract_strided_slice %2 {offsets = [13, 0], sizes = [1, 32], strides = [1, 1]} : vector<24x128xf32> to vector<1x32xf32>
    %255 = vector.extract_strided_slice %2 {offsets = [14, 0], sizes = [1, 32], strides = [1, 1]} : vector<24x128xf32> to vector<1x32xf32>
    %256 = vector.extract_strided_slice %2 {offsets = [15, 0], sizes = [1, 32], strides = [1, 1]} : vector<24x128xf32> to vector<1x32xf32>
    %257 = arith.addf %240, %1 : vector<256x32xf32>
    %258 = arith.truncf %257 : vector<256x32xf32> to vector<256x32xbf16>
    %cst_80 = arith.constant dense<0.000000e+00> : vector<256x64xf32>
    %259 = tpu.matmul %258, %242, %cst_80 {dimension_numbers = #tpu.dot_dimension_numbers<[1], [0], [0], [1], [0, 0, 1, 1], [], []>} : vector<256x32xbf16>, vector<32x64xbf16>, vector<256x64xf32> -> vector<256x64xf32>
    %260 = vector.broadcast %249 : vector<1x64xf32> to vector<256x64xf32>
    %261 = arith.addf %259, %260 : vector<256x64xf32>
    %262 = arith.truncf %261 : vector<256x64xf32> to vector<256x64xbf16>
    %263 = arith.truncf %240 : vector<256x32xf32> to vector<256x32xbf16>
    %cst_81 = arith.constant dense<0.000000e+00> : vector<256x128xf32>
    %264 = tpu.matmul %263, %244, %cst_81 {dimension_numbers = #tpu.dot_dimension_numbers<[1], [0], [0], [1], [0, 0, 1, 1], [], []>} : vector<256x32xbf16>, vector<32x128xbf16>, vector<256x128xf32> -> vector<256x128xf32>
    %265 = arith.truncf %264 : vector<256x128xf32> to vector<256x128xbf16>
    %266 = vector.extract_strided_slice %262 {offsets = [0, 0], sizes = [128, 64], strides = [1, 1]} : vector<256x64xbf16> to vector<128x64xbf16>
    %267 = vector.extract_strided_slice %265 {offsets = [0, 0], sizes = [128, 128], strides = [1, 1]} : vector<256x128xbf16> to vector<128x128xbf16>
    %268 = vector.extract_strided_slice %266 {offsets = [0, 0], sizes = [128, 8], strides = [1, 1]} : vector<128x64xbf16> to vector<128x8xbf16>
    %269 = vector.extract_strided_slice %266 {offsets = [0, 32], sizes = [128, 8], strides = [1, 1]} : vector<128x64xbf16> to vector<128x8xbf16>
    %cst_82 = arith.constant dense<0.000000e+00> : vector<128x128xf32>
    %270 = tpu.matmul %268, %269, %cst_82 {dimension_numbers = #tpu.dot_dimension_numbers<[1], [1], [0], [0], [0, 0, 1, 0], [], []>} : vector<128x8xbf16>, vector<128x8xbf16>, vector<128x128xf32> -> vector<128x128xf32>
    %271 = arith.addf %270, %6 : vector<128x128xf32>
    %cst_83 = arith.constant dense<0xFF800000> : vector<128xf32>
    %272 = vector.multi_reduction <maximumf>, %271, %cst_83 [1] : vector<128x128xf32> to vector<128xf32>
    %273 = vector.shape_cast %272 : vector<128xf32> to vector<128x1xf32>
    %274 = vector.broadcast %273 : vector<128x1xf32> to vector<128x128xf32>
    %275 = arith.subf %271, %274 : vector<128x128xf32>
    %276 = math.exp %275 : vector<128x128xf32>
    %cst_84 = arith.constant dense<0.000000e+00> : vector<128xf32>
    %277 = vector.multi_reduction <add>, %276, %cst_84 [1] : vector<128x128xf32> to vector<128xf32>
    %278 = vector.shape_cast %277 : vector<128xf32> to vector<128x1xf32>
    %279 = tpu.reciprocal %278 {approx = true} : vector<128x1xf32> -> vector<128x1xf32>
    %280 = vector.broadcast %279 : vector<128x1xf32> to vector<128x128xf32>
    %281 = arith.mulf %276, %280 : vector<128x128xf32>
    %282 = arith.truncf %281 : vector<128x128xf32> to vector<128x128xbf16>
    %283 = vector.extract_strided_slice %267 {offsets = [0, 0], sizes = [128, 32], strides = [1, 1]} : vector<128x128xbf16> to vector<128x32xbf16>
    %cst_85 = arith.constant dense<0.000000e+00> : vector<128x32xf32>
    %284 = tpu.matmul %282, %283, %cst_85 {dimension_numbers = #tpu.dot_dimension_numbers<[1], [0], [0], [1], [0, 0, 1, 1], [], []>} : vector<128x128xbf16>, vector<128x32xbf16>, vector<128x32xf32> -> vector<128x32xf32>
    %285 = vector.extract_strided_slice %266 {offsets = [0, 8], sizes = [128, 8], strides = [1, 1]} : vector<128x64xbf16> to vector<128x8xbf16>
    %286 = vector.extract_strided_slice %266 {offsets = [0, 40], sizes = [128, 8], strides = [1, 1]} : vector<128x64xbf16> to vector<128x8xbf16>
    %cst_86 = arith.constant dense<0.000000e+00> : vector<128x128xf32>
    %287 = tpu.matmul %285, %286, %cst_86 {dimension_numbers = #tpu.dot_dimension_numbers<[1], [1], [0], [0], [0, 0, 1, 0], [], []>} : vector<128x8xbf16>, vector<128x8xbf16>, vector<128x128xf32> -> vector<128x128xf32>
    %288 = arith.addf %287, %6 : vector<128x128xf32>
    %cst_87 = arith.constant dense<0xFF800000> : vector<128xf32>
    %289 = vector.multi_reduction <maximumf>, %288, %cst_87 [1] : vector<128x128xf32> to vector<128xf32>
    %290 = vector.shape_cast %289 : vector<128xf32> to vector<128x1xf32>
    %291 = vector.broadcast %290 : vector<128x1xf32> to vector<128x128xf32>
    %292 = arith.subf %288, %291 : vector<128x128xf32>
    %293 = math.exp %292 : vector<128x128xf32>
    %cst_88 = arith.constant dense<0.000000e+00> : vector<128xf32>
    %294 = vector.multi_reduction <add>, %293, %cst_88 [1] : vector<128x128xf32> to vector<128xf32>
    %295 = vector.shape_cast %294 : vector<128xf32> to vector<128x1xf32>
    %296 = tpu.reciprocal %295 {approx = true} : vector<128x1xf32> -> vector<128x1xf32>
    %297 = vector.broadcast %296 : vector<128x1xf32> to vector<128x128xf32>
    %298 = arith.mulf %293, %297 : vector<128x128xf32>
    %299 = arith.truncf %298 : vector<128x128xf32> to vector<128x128xbf16>
    %300 = vector.extract_strided_slice %267 {offsets = [0, 32], sizes = [128, 32], strides = [1, 1]} : vector<128x128xbf16> to vector<128x32xbf16>
    %cst_89 = arith.constant dense<0.000000e+00> : vector<128x32xf32>
    %301 = tpu.matmul %299, %300, %cst_89 {dimension_numbers = #tpu.dot_dimension_numbers<[1], [0], [0], [1], [0, 0, 1, 1], [], []>} : vector<128x128xbf16>, vector<128x32xbf16>, vector<128x32xf32> -> vector<128x32xf32>
    %302 = arith.addf %284, %301 : vector<128x32xf32>
    %303 = vector.extract_strided_slice %266 {offsets = [0, 16], sizes = [128, 8], strides = [1, 1]} : vector<128x64xbf16> to vector<128x8xbf16>
    %304 = vector.extract_strided_slice %266 {offsets = [0, 48], sizes = [128, 8], strides = [1, 1]} : vector<128x64xbf16> to vector<128x8xbf16>
    %cst_90 = arith.constant dense<0.000000e+00> : vector<128x128xf32>
    %305 = tpu.matmul %303, %304, %cst_90 {dimension_numbers = #tpu.dot_dimension_numbers<[1], [1], [0], [0], [0, 0, 1, 0], [], []>} : vector<128x8xbf16>, vector<128x8xbf16>, vector<128x128xf32> -> vector<128x128xf32>
    %306 = arith.addf %305, %6 : vector<128x128xf32>
    %cst_91 = arith.constant dense<0xFF800000> : vector<128xf32>
    %307 = vector.multi_reduction <maximumf>, %306, %cst_91 [1] : vector<128x128xf32> to vector<128xf32>
    %308 = vector.shape_cast %307 : vector<128xf32> to vector<128x1xf32>
    %309 = vector.broadcast %308 : vector<128x1xf32> to vector<128x128xf32>
    %310 = arith.subf %306, %309 : vector<128x128xf32>
    %311 = math.exp %310 : vector<128x128xf32>
    %cst_92 = arith.constant dense<0.000000e+00> : vector<128xf32>
    %312 = vector.multi_reduction <add>, %311, %cst_92 [1] : vector<128x128xf32> to vector<128xf32>
    %313 = vector.shape_cast %312 : vector<128xf32> to vector<128x1xf32>
    %314 = tpu.reciprocal %313 {approx = true} : vector<128x1xf32> -> vector<128x1xf32>
    %315 = vector.broadcast %314 : vector<128x1xf32> to vector<128x128xf32>
    %316 = arith.mulf %311, %315 : vector<128x128xf32>
    %317 = arith.truncf %316 : vector<128x128xf32> to vector<128x128xbf16>
    %318 = vector.extract_strided_slice %267 {offsets = [0, 64], sizes = [128, 32], strides = [1, 1]} : vector<128x128xbf16> to vector<128x32xbf16>
    %cst_93 = arith.constant dense<0.000000e+00> : vector<128x32xf32>
    %319 = tpu.matmul %317, %318, %cst_93 {dimension_numbers = #tpu.dot_dimension_numbers<[1], [0], [0], [1], [0, 0, 1, 1], [], []>} : vector<128x128xbf16>, vector<128x32xbf16>, vector<128x32xf32> -> vector<128x32xf32>
    %320 = arith.addf %302, %319 : vector<128x32xf32>
    %321 = vector.extract_strided_slice %266 {offsets = [0, 24], sizes = [128, 8], strides = [1, 1]} : vector<128x64xbf16> to vector<128x8xbf16>
    %322 = vector.extract_strided_slice %266 {offsets = [0, 56], sizes = [128, 8], strides = [1, 1]} : vector<128x64xbf16> to vector<128x8xbf16>
    %cst_94 = arith.constant dense<0.000000e+00> : vector<128x128xf32>
    %323 = tpu.matmul %321, %322, %cst_94 {dimension_numbers = #tpu.dot_dimension_numbers<[1], [1], [0], [0], [0, 0, 1, 0], [], []>} : vector<128x8xbf16>, vector<128x8xbf16>, vector<128x128xf32> -> vector<128x128xf32>
    %324 = arith.addf %323, %6 : vector<128x128xf32>
    %cst_95 = arith.constant dense<0xFF800000> : vector<128xf32>
    %325 = vector.multi_reduction <maximumf>, %324, %cst_95 [1] : vector<128x128xf32> to vector<128xf32>
    %326 = vector.shape_cast %325 : vector<128xf32> to vector<128x1xf32>
    %327 = vector.broadcast %326 : vector<128x1xf32> to vector<128x128xf32>
    %328 = arith.subf %324, %327 : vector<128x128xf32>
    %329 = math.exp %328 : vector<128x128xf32>
    %cst_96 = arith.constant dense<0.000000e+00> : vector<128xf32>
    %330 = vector.multi_reduction <add>, %329, %cst_96 [1] : vector<128x128xf32> to vector<128xf32>
    %331 = vector.shape_cast %330 : vector<128xf32> to vector<128x1xf32>
    %332 = tpu.reciprocal %331 {approx = true} : vector<128x1xf32> -> vector<128x1xf32>
    %333 = vector.broadcast %332 : vector<128x1xf32> to vector<128x128xf32>
    %334 = arith.mulf %329, %333 : vector<128x128xf32>
    %335 = arith.truncf %334 : vector<128x128xf32> to vector<128x128xbf16>
    %336 = vector.extract_strided_slice %267 {offsets = [0, 96], sizes = [128, 32], strides = [1, 1]} : vector<128x128xbf16> to vector<128x32xbf16>
    %cst_97 = arith.constant dense<0.000000e+00> : vector<128x32xf32>
    %337 = tpu.matmul %335, %336, %cst_97 {dimension_numbers = #tpu.dot_dimension_numbers<[1], [0], [0], [1], [0, 0, 1, 1], [], []>} : vector<128x128xbf16>, vector<128x32xbf16>, vector<128x32xf32> -> vector<128x32xf32>
    %338 = arith.addf %320, %337 : vector<128x32xf32>
    %339 = vector.extract_strided_slice %262 {offsets = [128, 0], sizes = [128, 64], strides = [1, 1]} : vector<256x64xbf16> to vector<128x64xbf16>
    %340 = vector.extract_strided_slice %265 {offsets = [128, 0], sizes = [128, 128], strides = [1, 1]} : vector<256x128xbf16> to vector<128x128xbf16>
    %341 = vector.extract_strided_slice %339 {offsets = [0, 0], sizes = [128, 8], strides = [1, 1]} : vector<128x64xbf16> to vector<128x8xbf16>
    %342 = vector.extract_strided_slice %339 {offsets = [0, 32], sizes = [128, 8], strides = [1, 1]} : vector<128x64xbf16> to vector<128x8xbf16>
    %cst_98 = arith.constant dense<0.000000e+00> : vector<128x128xf32>
    %343 = tpu.matmul %341, %342, %cst_98 {dimension_numbers = #tpu.dot_dimension_numbers<[1], [1], [0], [0], [0, 0, 1, 0], [], []>} : vector<128x8xbf16>, vector<128x8xbf16>, vector<128x128xf32> -> vector<128x128xf32>
    %344 = arith.addf %343, %10 : vector<128x128xf32>
    %cst_99 = arith.constant dense<0xFF800000> : vector<128xf32>
    %345 = vector.multi_reduction <maximumf>, %344, %cst_99 [1] : vector<128x128xf32> to vector<128xf32>
    %346 = vector.shape_cast %345 : vector<128xf32> to vector<128x1xf32>
    %347 = vector.broadcast %346 : vector<128x1xf32> to vector<128x128xf32>
    %348 = arith.subf %344, %347 : vector<128x128xf32>
    %349 = math.exp %348 : vector<128x128xf32>
    %cst_100 = arith.constant dense<0.000000e+00> : vector<128xf32>
    %350 = vector.multi_reduction <add>, %349, %cst_100 [1] : vector<128x128xf32> to vector<128xf32>
    %351 = vector.shape_cast %350 : vector<128xf32> to vector<128x1xf32>
    %352 = tpu.reciprocal %351 {approx = true} : vector<128x1xf32> -> vector<128x1xf32>
    %353 = vector.broadcast %352 : vector<128x1xf32> to vector<128x128xf32>
    %354 = arith.mulf %349, %353 : vector<128x128xf32>
    %355 = arith.truncf %354 : vector<128x128xf32> to vector<128x128xbf16>
    %356 = vector.extract_strided_slice %340 {offsets = [0, 0], sizes = [128, 32], strides = [1, 1]} : vector<128x128xbf16> to vector<128x32xbf16>
    %cst_101 = arith.constant dense<0.000000e+00> : vector<128x32xf32>
    %357 = tpu.matmul %355, %356, %cst_101 {dimension_numbers = #tpu.dot_dimension_numbers<[1], [0], [0], [1], [0, 0, 1, 1], [], []>} : vector<128x128xbf16>, vector<128x32xbf16>, vector<128x32xf32> -> vector<128x32xf32>
    %358 = vector.extract_strided_slice %339 {offsets = [0, 8], sizes = [128, 8], strides = [1, 1]} : vector<128x64xbf16> to vector<128x8xbf16>
    %359 = vector.extract_strided_slice %339 {offsets = [0, 40], sizes = [128, 8], strides = [1, 1]} : vector<128x64xbf16> to vector<128x8xbf16>
    %cst_102 = arith.constant dense<0.000000e+00> : vector<128x128xf32>
    %360 = tpu.matmul %358, %359, %cst_102 {dimension_numbers = #tpu.dot_dimension_numbers<[1], [1], [0], [0], [0, 0, 1, 0], [], []>} : vector<128x8xbf16>, vector<128x8xbf16>, vector<128x128xf32> -> vector<128x128xf32>
    %361 = arith.addf %360, %10 : vector<128x128xf32>
    %cst_103 = arith.constant dense<0xFF800000> : vector<128xf32>
    %362 = vector.multi_reduction <maximumf>, %361, %cst_103 [1] : vector<128x128xf32> to vector<128xf32>
    %363 = vector.shape_cast %362 : vector<128xf32> to vector<128x1xf32>
    %364 = vector.broadcast %363 : vector<128x1xf32> to vector<128x128xf32>
    %365 = arith.subf %361, %364 : vector<128x128xf32>
    %366 = math.exp %365 : vector<128x128xf32>
    %cst_104 = arith.constant dense<0.000000e+00> : vector<128xf32>
    %367 = vector.multi_reduction <add>, %366, %cst_104 [1] : vector<128x128xf32> to vector<128xf32>
    %368 = vector.shape_cast %367 : vector<128xf32> to vector<128x1xf32>
    %369 = tpu.reciprocal %368 {approx = true} : vector<128x1xf32> -> vector<128x1xf32>
    %370 = vector.broadcast %369 : vector<128x1xf32> to vector<128x128xf32>
    %371 = arith.mulf %366, %370 : vector<128x128xf32>
    %372 = arith.truncf %371 : vector<128x128xf32> to vector<128x128xbf16>
    %373 = vector.extract_strided_slice %340 {offsets = [0, 32], sizes = [128, 32], strides = [1, 1]} : vector<128x128xbf16> to vector<128x32xbf16>
    %cst_105 = arith.constant dense<0.000000e+00> : vector<128x32xf32>
    %374 = tpu.matmul %372, %373, %cst_105 {dimension_numbers = #tpu.dot_dimension_numbers<[1], [0], [0], [1], [0, 0, 1, 1], [], []>} : vector<128x128xbf16>, vector<128x32xbf16>, vector<128x32xf32> -> vector<128x32xf32>
    %375 = arith.addf %357, %374 : vector<128x32xf32>
    %376 = vector.extract_strided_slice %339 {offsets = [0, 16], sizes = [128, 8], strides = [1, 1]} : vector<128x64xbf16> to vector<128x8xbf16>
    %377 = vector.extract_strided_slice %339 {offsets = [0, 48], sizes = [128, 8], strides = [1, 1]} : vector<128x64xbf16> to vector<128x8xbf16>
    %cst_106 = arith.constant dense<0.000000e+00> : vector<128x128xf32>
    %378 = tpu.matmul %376, %377, %cst_106 {dimension_numbers = #tpu.dot_dimension_numbers<[1], [1], [0], [0], [0, 0, 1, 0], [], []>} : vector<128x8xbf16>, vector<128x8xbf16>, vector<128x128xf32> -> vector<128x128xf32>
    %379 = arith.addf %378, %10 : vector<128x128xf32>
    %cst_107 = arith.constant dense<0xFF800000> : vector<128xf32>
    %380 = vector.multi_reduction <maximumf>, %379, %cst_107 [1] : vector<128x128xf32> to vector<128xf32>
    %381 = vector.shape_cast %380 : vector<128xf32> to vector<128x1xf32>
    %382 = vector.broadcast %381 : vector<128x1xf32> to vector<128x128xf32>
    %383 = arith.subf %379, %382 : vector<128x128xf32>
    %384 = math.exp %383 : vector<128x128xf32>
    %cst_108 = arith.constant dense<0.000000e+00> : vector<128xf32>
    %385 = vector.multi_reduction <add>, %384, %cst_108 [1] : vector<128x128xf32> to vector<128xf32>
    %386 = vector.shape_cast %385 : vector<128xf32> to vector<128x1xf32>
    %387 = tpu.reciprocal %386 {approx = true} : vector<128x1xf32> -> vector<128x1xf32>
    %388 = vector.broadcast %387 : vector<128x1xf32> to vector<128x128xf32>
    %389 = arith.mulf %384, %388 : vector<128x128xf32>
    %390 = arith.truncf %389 : vector<128x128xf32> to vector<128x128xbf16>
    %391 = vector.extract_strided_slice %340 {offsets = [0, 64], sizes = [128, 32], strides = [1, 1]} : vector<128x128xbf16> to vector<128x32xbf16>
    %cst_109 = arith.constant dense<0.000000e+00> : vector<128x32xf32>
    %392 = tpu.matmul %390, %391, %cst_109 {dimension_numbers = #tpu.dot_dimension_numbers<[1], [0], [0], [1], [0, 0, 1, 1], [], []>} : vector<128x128xbf16>, vector<128x32xbf16>, vector<128x32xf32> -> vector<128x32xf32>
    %393 = arith.addf %375, %392 : vector<128x32xf32>
    %394 = vector.extract_strided_slice %339 {offsets = [0, 24], sizes = [128, 8], strides = [1, 1]} : vector<128x64xbf16> to vector<128x8xbf16>
    %395 = vector.extract_strided_slice %339 {offsets = [0, 56], sizes = [128, 8], strides = [1, 1]} : vector<128x64xbf16> to vector<128x8xbf16>
    %cst_110 = arith.constant dense<0.000000e+00> : vector<128x128xf32>
    %396 = tpu.matmul %394, %395, %cst_110 {dimension_numbers = #tpu.dot_dimension_numbers<[1], [1], [0], [0], [0, 0, 1, 0], [], []>} : vector<128x8xbf16>, vector<128x8xbf16>, vector<128x128xf32> -> vector<128x128xf32>
    %397 = arith.addf %396, %10 : vector<128x128xf32>
    %cst_111 = arith.constant dense<0xFF800000> : vector<128xf32>
    %398 = vector.multi_reduction <maximumf>, %397, %cst_111 [1] : vector<128x128xf32> to vector<128xf32>
    %399 = vector.shape_cast %398 : vector<128xf32> to vector<128x1xf32>
    %400 = vector.broadcast %399 : vector<128x1xf32> to vector<128x128xf32>
    %401 = arith.subf %397, %400 : vector<128x128xf32>
    %402 = math.exp %401 : vector<128x128xf32>
    %cst_112 = arith.constant dense<0.000000e+00> : vector<128xf32>
    %403 = vector.multi_reduction <add>, %402, %cst_112 [1] : vector<128x128xf32> to vector<128xf32>
    %404 = vector.shape_cast %403 : vector<128xf32> to vector<128x1xf32>
    %405 = tpu.reciprocal %404 {approx = true} : vector<128x1xf32> -> vector<128x1xf32>
    %406 = vector.broadcast %405 : vector<128x1xf32> to vector<128x128xf32>
    %407 = arith.mulf %402, %406 : vector<128x128xf32>
    %408 = arith.truncf %407 : vector<128x128xf32> to vector<128x128xbf16>
    %409 = vector.extract_strided_slice %340 {offsets = [0, 96], sizes = [128, 32], strides = [1, 1]} : vector<128x128xbf16> to vector<128x32xbf16>
    %cst_113 = arith.constant dense<0.000000e+00> : vector<128x32xf32>
    %410 = tpu.matmul %408, %409, %cst_113 {dimension_numbers = #tpu.dot_dimension_numbers<[1], [0], [0], [1], [0, 0, 1, 1], [], []>} : vector<128x128xbf16>, vector<128x32xbf16>, vector<128x32xf32> -> vector<128x32xf32>
    %411 = arith.addf %393, %410 : vector<128x32xf32>
    %412 = tpu.concatenate %338, %411 in 0 : vector<128x32xf32>, vector<128x32xf32> -> vector<256x32xf32>
    %413 = vector.broadcast %250 : vector<1x32xf32> to vector<256x32xf32>
    %414 = arith.addf %412, %413 : vector<256x32xf32>
    %415 = arith.addf %240, %414 : vector<256x32xf32>
    %cst_114 = arith.constant dense<0.000000e+00> : vector<256xf32>
    %416 = vector.multi_reduction <add>, %415, %cst_114 [1] : vector<256x32xf32> to vector<256xf32>
    %417 = vector.shape_cast %416 : vector<256xf32> to vector<256x1xf32>
    %cst_115 = arith.constant 3.200000e+01 : f32
    %418 = vector.broadcast %cst_115 : f32 to vector<256x1xf32>
    %419 = arith.divf %417, %418 : vector<256x1xf32>
    %420 = vector.broadcast %419 : vector<256x1xf32> to vector<256x32xf32>
    %421 = arith.subf %415, %420 : vector<256x32xf32>
    %422 = arith.mulf %421, %421 : vector<256x32xf32>
    %cst_116 = arith.constant dense<0.000000e+00> : vector<256xf32>
    %423 = vector.multi_reduction <add>, %422, %cst_116 [1] : vector<256x32xf32> to vector<256xf32>
    %424 = vector.shape_cast %423 : vector<256xf32> to vector<256x1xf32>
    %cst_117 = arith.constant 3.200000e+01 : f32
    %425 = vector.broadcast %cst_117 : f32 to vector<256x1xf32>
    %426 = arith.divf %424, %425 : vector<256x1xf32>
    %427 = vector.broadcast %419 : vector<256x1xf32> to vector<256x32xf32>
    %428 = arith.subf %415, %427 : vector<256x32xf32>
    %cst_118 = arith.constant 9.99999974E-6 : f32
    %429 = vector.broadcast %cst_118 : f32 to vector<256x1xf32>
    %430 = arith.addf %426, %429 : vector<256x1xf32>
    %431 = math.rsqrt %430 : vector<256x1xf32>
    %432 = vector.broadcast %431 : vector<256x1xf32> to vector<256x32xf32>
    %433 = arith.mulf %428, %432 : vector<256x32xf32>
    %434 = vector.broadcast %251 : vector<1x32xf32> to vector<256x32xf32>
    %435 = arith.mulf %433, %434 : vector<256x32xf32>
    %436 = vector.broadcast %252 : vector<1x32xf32> to vector<256x32xf32>
    %437 = arith.addf %435, %436 : vector<256x32xf32>
    %438 = arith.truncf %437 : vector<256x32xf32> to vector<256x32xbf16>
    %cst_119 = arith.constant dense<0.000000e+00> : vector<256x64xf32>
    %439 = tpu.matmul %438, %246, %cst_119 {dimension_numbers = #tpu.dot_dimension_numbers<[1], [0], [0], [1], [0, 0, 1, 1], [], []>} : vector<256x32xbf16>, vector<32x64xbf16>, vector<256x64xf32> -> vector<256x64xf32>
    %440 = vector.broadcast %253 : vector<1x64xf32> to vector<256x64xf32>
    %441 = arith.addf %439, %440 : vector<256x64xf32>
    %cst_120 = arith.constant 0.000000e+00 : f32
    %442 = vector.broadcast %cst_120 : f32 to vector<256x64xf32>
    %443 = arith.maximumf %441, %442 : vector<256x64xf32>
    %444 = arith.truncf %443 : vector<256x64xf32> to vector<256x64xbf16>
    %cst_121 = arith.constant dense<0.000000e+00> : vector<256x32xf32>
    %445 = tpu.matmul %444, %248, %cst_121 {dimension_numbers = #tpu.dot_dimension_numbers<[1], [0], [0], [1], [0, 0, 1, 1], [], []>} : vector<256x64xbf16>, vector<64x32xbf16>, vector<256x32xf32> -> vector<256x32xf32>
    %446 = vector.broadcast %254 : vector<1x32xf32> to vector<256x32xf32>
    %447 = arith.addf %445, %446 : vector<256x32xf32>
    %448 = arith.addf %437, %447 : vector<256x32xf32>
    %cst_122 = arith.constant dense<0.000000e+00> : vector<256xf32>
    %449 = vector.multi_reduction <add>, %448, %cst_122 [1] : vector<256x32xf32> to vector<256xf32>
    %450 = vector.shape_cast %449 : vector<256xf32> to vector<256x1xf32>
    %cst_123 = arith.constant 3.200000e+01 : f32
    %451 = vector.broadcast %cst_123 : f32 to vector<256x1xf32>
    %452 = arith.divf %450, %451 : vector<256x1xf32>
    %453 = vector.broadcast %452 : vector<256x1xf32> to vector<256x32xf32>
    %454 = arith.subf %448, %453 : vector<256x32xf32>
    %455 = arith.mulf %454, %454 : vector<256x32xf32>
    %cst_124 = arith.constant dense<0.000000e+00> : vector<256xf32>
    %456 = vector.multi_reduction <add>, %455, %cst_124 [1] : vector<256x32xf32> to vector<256xf32>
    %457 = vector.shape_cast %456 : vector<256xf32> to vector<256x1xf32>
    %cst_125 = arith.constant 3.200000e+01 : f32
    %458 = vector.broadcast %cst_125 : f32 to vector<256x1xf32>
    %459 = arith.divf %457, %458 : vector<256x1xf32>
    %460 = vector.broadcast %452 : vector<256x1xf32> to vector<256x32xf32>
    %461 = arith.subf %448, %460 : vector<256x32xf32>
    %cst_126 = arith.constant 9.99999974E-6 : f32
    %462 = vector.broadcast %cst_126 : f32 to vector<256x1xf32>
    %463 = arith.addf %459, %462 : vector<256x1xf32>
    %464 = math.rsqrt %463 : vector<256x1xf32>
    %465 = vector.broadcast %464 : vector<256x1xf32> to vector<256x32xf32>
    %466 = arith.mulf %461, %465 : vector<256x32xf32>
    %467 = vector.broadcast %255 : vector<1x32xf32> to vector<256x32xf32>
    %468 = arith.mulf %466, %467 : vector<256x32xf32>
    %469 = vector.broadcast %256 : vector<1x32xf32> to vector<256x32xf32>
    %470 = arith.addf %468, %469 : vector<256x32xf32>
    %471 = vector.extract_strided_slice %2 {offsets = [16, 0], sizes = [1, 32], strides = [1, 1]} : vector<24x128xf32> to vector<1x32xf32>
    %472 = vector.extract_strided_slice %2 {offsets = [17, 0], sizes = [1, 32], strides = [1, 1]} : vector<24x128xf32> to vector<1x32xf32>
    %cst_127 = arith.constant dense<0.000000e+00> : vector<256xf32>
    %473 = vector.multi_reduction <add>, %470, %cst_127 [1] : vector<256x32xf32> to vector<256xf32>
    %474 = vector.shape_cast %473 : vector<256xf32> to vector<256x1xf32>
    %cst_128 = arith.constant 3.200000e+01 : f32
    %475 = vector.broadcast %cst_128 : f32 to vector<256x1xf32>
    %476 = arith.divf %474, %475 : vector<256x1xf32>
    %477 = vector.broadcast %476 : vector<256x1xf32> to vector<256x32xf32>
    %478 = arith.subf %470, %477 : vector<256x32xf32>
    %479 = arith.mulf %478, %478 : vector<256x32xf32>
    %cst_129 = arith.constant dense<0.000000e+00> : vector<256xf32>
    %480 = vector.multi_reduction <add>, %479, %cst_129 [1] : vector<256x32xf32> to vector<256xf32>
    %481 = vector.shape_cast %480 : vector<256xf32> to vector<256x1xf32>
    %cst_130 = arith.constant 3.200000e+01 : f32
    %482 = vector.broadcast %cst_130 : f32 to vector<256x1xf32>
    %483 = arith.divf %481, %482 : vector<256x1xf32>
    %484 = vector.broadcast %476 : vector<256x1xf32> to vector<256x32xf32>
    %485 = arith.subf %470, %484 : vector<256x32xf32>
    %cst_131 = arith.constant 9.99999974E-6 : f32
    %486 = vector.broadcast %cst_131 : f32 to vector<256x1xf32>
    %487 = arith.addf %483, %486 : vector<256x1xf32>
    %488 = math.rsqrt %487 : vector<256x1xf32>
    %489 = vector.broadcast %488 : vector<256x1xf32> to vector<256x32xf32>
    %490 = arith.mulf %485, %489 : vector<256x32xf32>
    %491 = vector.broadcast %471 : vector<1x32xf32> to vector<256x32xf32>
    %492 = arith.mulf %490, %491 : vector<256x32xf32>
    %493 = vector.broadcast %472 : vector<1x32xf32> to vector<256x32xf32>
    %494 = arith.addf %492, %493 : vector<256x32xf32>
    %c0_132 = arith.constant 0 : index
    %c0_133 = arith.constant 0 : index
    %495 = vector.load %arg9[%c0_132, %c0_133] : memref<256x32xf32, #tpu.memory_space<vmem>>, vector<256x32xf32>
    tpu.vector_store %arg9[%c0_132, %c0_133], %494 {strides = array<i32>} : memref<256x32xf32, #tpu.memory_space<vmem>>, vector<256x32xf32>,
    return
  }
  func.func @transform_0(%arg0: i32) -> (i32, i32) {
    %c0_i32 = arith.constant 0 : i32
    %c0_i32_0 = arith.constant 0 : i32
    return %arg0, %c0_i32 : i32, i32
  }
  func.func @transform_1(%arg0: i32) -> (i32, i32) {
    %c0_i32 = arith.constant 0 : i32
    %c0_i32_0 = arith.constant 0 : i32
    return %arg0, %c0_i32 : i32, i32
  }
  func.func @transform_2(%arg0: i32) -> (i32, i32, i32) {
    %c0_i32 = arith.constant 0 : i32
    %c0_i32_0 = arith.constant 0 : i32
    %c0_i32_1 = arith.constant 0 : i32
    return %arg0, %c0_i32, %c0_i32_0 : i32, i32, i32
  }
  func.func @transform_3(%arg0: i32) -> (i32, i32, i32) {
    %c0_i32 = arith.constant 0 : i32
    %c0_i32_0 = arith.constant 0 : i32
    %c0_i32_1 = arith.constant 0 : i32
    %c0_i32_2 = arith.constant 0 : i32
    return %c0_i32, %c0_i32_0, %c0_i32_1 : i32, i32, i32
  }
  func.func @transform_4(%arg0: i32) -> (i32, i32, i32) {
    %c0_i32 = arith.constant 0 : i32
    %c0_i32_0 = arith.constant 0 : i32
    %c0_i32_1 = arith.constant 0 : i32
    %c0_i32_2 = arith.constant 0 : i32
    return %c0_i32, %c0_i32_0, %c0_i32_1 : i32, i32, i32
  }
  func.func @transform_5(%arg0: i32) -> (i32, i32, i32) {
    %c0_i32 = arith.constant 0 : i32
    %c0_i32_0 = arith.constant 0 : i32
    %c0_i32_1 = arith.constant 0 : i32
    %c0_i32_2 = arith.constant 0 : i32
    return %c0_i32, %c0_i32_0, %c0_i32_1 : i32, i32, i32
  }
  func.func @transform_6(%arg0: i32) -> (i32, i32, i32) {
    %c0_i32 = arith.constant 0 : i32
    %c0_i32_0 = arith.constant 0 : i32
    %c0_i32_1 = arith.constant 0 : i32
    %c0_i32_2 = arith.constant 0 : i32
    return %c0_i32, %c0_i32_0, %c0_i32_1 : i32, i32, i32
  }
  func.func @transform_7(%arg0: i32) -> (i32, i32) {
    %c0_i32 = arith.constant 0 : i32
    %c0_i32_0 = arith.constant 0 : i32
    %c0_i32_1 = arith.constant 0 : i32
    return %c0_i32, %c0_i32_0 : i32, i32
  }
  func.func @transform_8(%arg0: i32) -> (i32, i32) {
    %c0_i32 = arith.constant 0 : i32
    %c0_i32_0 = arith.constant 0 : i32
    return %arg0, %c0_i32 : i32, i32
  }
}

</mosaic_0001>

<llo_original>
// kernel: transformer_encoder_forward.1
$region0: #{transformer_encoder_forward.1}
  #allocation0 [shape = 'u32[]', space=smem, size = 0x4, offset = 0x4, fixed_abs, tag = 'smem constant byte address 0x4 - core index']
  #allocation1 [shape = 'u32[72,128]{1,0:T(1,128)}', space=vmem, size = 0x9000, scoped, tag = 'internal scratch']
  %s0 = inlined_call_operand.vmem [shape: f32[256,32], index: 0, kind: input, shape index: {}]
  %s1 = inlined_call_operand.vmem [shape: f32[256,32], index: 1, kind: input, shape index: {}]
  %s2 = inlined_call_operand.vmem [shape: f32[2,1,128], index: 2, kind: input, shape index: {}]
  %s3 = inlined_call_operand.vmem [shape: bf16[2,32,64], index: 3, kind: input, shape index: {}]
  %s4 = inlined_call_operand.vmem [shape: bf16[2,32,128], index: 4, kind: input, shape index: {}]
  %s5 = inlined_call_operand.vmem [shape: bf16[2,32,64], index: 5, kind: input, shape index: {}]
  %s6 = inlined_call_operand.vmem [shape: bf16[2,64,32], index: 6, kind: input, shape index: {}]
  %s7 = inlined_call_operand.vmem [shape: f32[24,128], index: 7, kind: input, shape index: {}]
  %s8 = inlined_call_operand.vmem [shape: f32[256,32], index: 8, kind: output, shape index: {}]
  %s9 = sld [smem:[#allocation0]]
  $region42: #{transformer_encoder_forward.1} parent=0
    _
  %s11 = ssub.s32 1, %s9
  %s12 = scalar_select 0, %s11, %s9
  // Predicated region
  $region2: #{transformer_encoder_forward.1} parent=0 // pred_check
    _
  $region3: #{transformer_encoder_forward.1} parent=0 // pred_check_branch
    %14 = sbr.rel (0) target = $region5
  $region4: #{transformer_encoder_forward.1} parent=0 // pred_region
    _
  $region5: #{transformer_encoder_forward.1} parent=0 // pred_fallthru
    _
  // Predicated region
  $region6: #{transformer_encoder_forward.1} parent=0 // pred_check
    _
  $region7: #{transformer_encoder_forward.1} parent=0 // pred_check_branch
    %16 = sbr.rel (0) target = $region9
  $region8: #{transformer_encoder_forward.1} parent=0 // pred_region
    _
  $region9: #{transformer_encoder_forward.1} parent=0 // pred_fallthru
    _
  // Predicated region
  $region10: #{transformer_encoder_forward.1} parent=0 // pred_check
    _
  $region11: #{transformer_encoder_forward.1} parent=0 // pred_check_branch
    %18 = sbr.rel (0) target = $region13
  $region12: #{transformer_encoder_forward.1} parent=0 // pred_region
    _
  $region13: #{transformer_encoder_forward.1} parent=0 // pred_fallthru
    _
  // Predicated region
  $region14: #{transformer_encoder_forward.1} parent=0 // pred_check
    _
  $region15: #{transformer_encoder_forward.1} parent=0 // pred_check_branch
    %20 = sbr.rel (0) target = $region17
  $region16: #{transformer_encoder_forward.1} parent=0 // pred_region
    _
  $region17: #{transformer_encoder_forward.1} parent=0 // pred_fallthru
    _
  // Predicated region
  $region18: #{transformer_encoder_forward.1} parent=0 // pred_check
    _
  $region19: #{transformer_encoder_forward.1} parent=0 // pred_check_branch
    %22 = sbr.rel (0) target = $region21
  $region20: #{transformer_encoder_forward.1} parent=0 // pred_region
    _
  $region21: #{transformer_encoder_forward.1} parent=0 // pred_fallthru
    _
  // Predicated region
  $region22: #{transformer_encoder_forward.1} parent=0 // pred_check
    _
  $region23: #{transformer_encoder_forward.1} parent=0 // pred_check_branch
    %24 = sbr.rel (0) target = $region25
  $region24: #{transformer_encoder_forward.1} parent=0 // pred_region
    _
  $region25: #{transformer_encoder_forward.1} parent=0 // pred_fallthru
    _
  // Predicated region
  $region26: #{transformer_encoder_forward.1} parent=0 // pred_check
    _
  $region27: #{transformer_encoder_forward.1} parent=0 // pred_check_branch
    %26 = sbr.rel (0) target = $region29
  $region28: #{transformer_encoder_forward.1} parent=0 // pred_region
    _
  $region29: #{transformer_encoder_forward.1} parent=0 // pred_fallthru
    _
  // Predicated region
  $region30: #{transformer_encoder_forward.1} parent=0 // pred_check
    _
  $region31: #{transformer_encoder_forward.1} parent=0 // pred_check_branch
    %28 = sbr.rel (0) target = $region33
  $region32: #{transformer_encoder_forward.1} parent=0 // pred_region
    _
  $region33: #{transformer_encoder_forward.1} parent=0 // pred_fallthru
    _
  %v30 = vld [vmem:[%s0] sm:$0xff]
  %v31 = vld [vmem:[%s0 + $0x8] sm:$0xff]
  %v32 = vld [vmem:[%s0 + $0x10] sm:$0xff]
  %v33 = vld [vmem:[%s0 + $0x18] sm:$0xff]
  %v34 = vld [vmem:[%s0 + $0x20] sm:$0xff]
  %v35 = vld [vmem:[%s0 + $0x28] sm:$0xff]
  %v36 = vld [vmem:[%s0 + $0x30] sm:$0xff]
  %v37 = vld [vmem:[%s0 + $0x38] sm:$0xff]
  %v38 = vld [vmem:[%s0 + $0x40] sm:$0xff]
  %v39 = vld [vmem:[%s0 + $0x48] sm:$0xff]
  %v40 = vld [vmem:[%s0 + $0x50] sm:$0xff]
  %v41 = vld [vmem:[%s0 + $0x58] sm:$0xff]
  %v42 = vld [vmem:[%s0 + $0x60] sm:$0xff]
  %v43 = vld [vmem:[%s0 + $0x68] sm:$0xff]
  %v44 = vld [vmem:[%s0 + $0x70] sm:$0xff]
  %v45 = vld [vmem:[%s0 + $0x78] sm:$0xff]
  %v46 = vld [vmem:[%s0 + $0x80] sm:$0xff]
  %v47 = vld [vmem:[%s0 + $0x88] sm:$0xff]
  %v48 = vld [vmem:[%s0 + $0x90] sm:$0xff]
  %v49 = vld [vmem:[%s0 + $0x98] sm:$0xff]
  %v50 = vld [vmem:[%s0 + $0xa0] sm:$0xff]
  %v51 = vld [vmem:[%s0 + $0xa8] sm:$0xff]
  %v52 = vld [vmem:[%s0 + $0xb0] sm:$0xff]
  %v53 = vld [vmem:[%s0 + $0xb8] sm:$0xff]
  %v54 = vld [vmem:[%s0 + $0xc0] sm:$0xff]
  %v55 = vld [vmem:[%s0 + $0xc8] sm:$0xff]
  %v56 = vld [vmem:[%s0 + $0xd0] sm:$0xff]
  %v57 = vld [vmem:[%s0 + $0xd8] sm:$0xff]
  %v58 = vld [vmem:[%s0 + $0xe0] sm:$0xff]
  %v59 = vld [vmem:[%s0 + $0xe8] sm:$0xff]
  %v60 = vld [vmem:[%s0 + $0xf0] sm:$0xff]
  %v61 = vld [vmem:[%s0 + $0xf8] sm:$0xff]
  %v62 = vld [vmem:[%s1] sm:$0xff]
  %v63 = vld [vmem:[%s1 + $0x8] sm:$0xff]
  %v64 = vld [vmem:[%s1 + $0x10] sm:$0xff]
  %v65 = vld [vmem:[%s1 + $0x18] sm:$0xff]
  %v66 = vld [vmem:[%s1 + $0x20] sm:$0xff]
  %v67 = vld [vmem:[%s1 + $0x28] sm:$0xff]
  %v68 = vld [vmem:[%s1 + $0x30] sm:$0xff]
  %v69 = vld [vmem:[%s1 + $0x38] sm:$0xff]
  %v70 = vld [vmem:[%s1 + $0x40] sm:$0xff]
  %v71 = vld [vmem:[%s1 + $0x48] sm:$0xff]
  %v72 = vld [vmem:[%s1 + $0x50] sm:$0xff]
  %v73 = vld [vmem:[%s1 + $0x58] sm:$0xff]
  %v74 = vld [vmem:[%s1 + $0x60] sm:$0xff]
  %v75 = vld [vmem:[%s1 + $0x68] sm:$0xff]
  %v76 = vld [vmem:[%s1 + $0x70] sm:$0xff]
  %v77 = vld [vmem:[%s1 + $0x78] sm:$0xff]
  %v78 = vld [vmem:[%s1 + $0x80] sm:$0xff]
  %v79 = vld [vmem:[%s1 + $0x88] sm:$0xff]
  %v80 = vld [vmem:[%s1 + $0x90] sm:$0xff]
  %v81 = vld [vmem:[%s1 + $0x98] sm:$0xff]
  %v82 = vld [vmem:[%s1 + $0xa0] sm:$0xff]
  %v83 = vld [vmem:[%s1 + $0xa8] sm:$0xff]
  %v84 = vld [vmem:[%s1 + $0xb0] sm:$0xff]
  %v85 = vld [vmem:[%s1 + $0xb8] sm:$0xff]
  %v86 = vld [vmem:[%s1 + $0xc0] sm:$0xff]
  %v87 = vld [vmem:[%s1 + $0xc8] sm:$0xff]
  %v88 = vld [vmem:[%s1 + $0xd0] sm:$0xff]
  %v89 = vld [vmem:[%s1 + $0xd8] sm:$0xff]
  %v90 = vld [vmem:[%s1 + $0xe0] sm:$0xff]
  %v91 = vld [vmem:[%s1 + $0xe8] sm:$0xff]
  %v92 = vld [vmem:[%s1 + $0xf0] sm:$0xff]
  %v93 = vld [vmem:[%s1 + $0xf8] sm:$0xff]
  %v94 = vld [vmem:[%s7] sm:$0xff]
  %v95 = vld [vmem:[%s7 + $0x8] sm:$0xff]
  %v96 = vld [vmem:[%s7 + $0x10] sm:$0xff]
  %v97 = vld [vmem:[%s2] sm:$0x1]
  %v99 = vperm.slane %v97, 0
  %s101 = scalar_lea.vmem %s2, 1
  %v102 = vld [vmem:[%s101] sm:$0x1]
  %v104 = vperm.slane %v102, 0
  %v106 = vld [vmem:[%s3] sm:$0xf]
  %v107 = vld [vmem:[%s3 + $0x4] sm:$0xf]
  %v108 = vld [vmem:[%s3 + $0x8] sm:$0xf]
  %v109 = vld [vmem:[%s3 + $0xc] sm:$0xf]
  %v110 = vld [vmem:[%s4] sm:$0xf]
  %v111 = vld [vmem:[%s4 + $0x4] sm:$0xf]
  %v112 = vld [vmem:[%s4 + $0x8] sm:$0xf]
  %v113 = vld [vmem:[%s4 + $0xc] sm:$0xf]
  %v114 = vld [vmem:[%s5] sm:$0xf]
  %v115 = vld [vmem:[%s5 + $0x4] sm:$0xf]
  %v116 = vld [vmem:[%s5 + $0x8] sm:$0xf]
  %v117 = vld [vmem:[%s5 + $0xc] sm:$0xf]
  %v118 = vld [vmem:[%s6] sm:$0xf]
  %v119 = vld [vmem:[%s6 + $0x4] sm:$0xf]
  %v120 = vld [vmem:[%s6 + $0x8] sm:$0xf]
  %v121 = vld [vmem:[%s6 + $0xc] sm:$0xf]
  %v122 = vld [vmem:[%s6 + $0x10] sm:$0xf]
  %v123 = vld [vmem:[%s6 + $0x14] sm:$0xf]
  %v124 = vld [vmem:[%s6 + $0x18] sm:$0xf]
  %v125 = vld [vmem:[%s6 + $0x1c] sm:$0xf]
  %v126 = vadd.f32 %v30, %v62
  %v127 = vadd.f32 %v31, %v63
  %v128 = vadd.f32 %v32, %v64
  %v129 = vadd.f32 %v33, %v65
  %v130 = vadd.f32 %v34, %v66
  %v131 = vadd.f32 %v35, %v67
  %v132 = vadd.f32 %v36, %v68
  %v133 = vadd.f32 %v37, %v69
  %v134 = vadd.f32 %v38, %v70
  %v135 = vadd.f32 %v39, %v71
  %v136 = vadd.f32 %v40, %v72
  %v137 = vadd.f32 %v41, %v73
  %v138 = vadd.f32 %v42, %v74
  %v139 = vadd.f32 %v43, %v75
  %v140 = vadd.f32 %v44, %v76
  %v141 = vadd.f32 %v45, %v77
  %v142 = vadd.f32 %v46, %v78
  %v143 = vadd.f32 %v47, %v79
  %v144 = vadd.f32 %v48, %v80
  %v145 = vadd.f32 %v49, %v81
  %v146 = vadd.f32 %v50, %v82
  %v147 = vadd.f32 %v51, %v83
  %v148 = vadd.f32 %v52, %v84
  %v149 = vadd.f32 %v53, %v85
  %v150 = vadd.f32 %v54, %v86
  %v151 = vadd.f32 %v55, %v87
  %v152 = vadd.f32 %v56, %v88
  %v153 = vadd.f32 %v57, %v89
  %v154 = vadd.f32 %v58, %v90
  %v155 = vadd.f32 %v59, %v91
  %v156 = vadd.f32 %v60, %v92
  %v157 = vadd.f32 %v61, %v93
  %v158 = vpack.c.bf16 %v127, %v126
  %v159 = vpack.c.bf16 %v129, %v128
  %v160 = vpack.c.bf16 %v131, %v130
  %v161 = vpack.c.bf16 %v133, %v132
  %v162 = vpack.c.bf16 %v135, %v134
  %v163 = vpack.c.bf16 %v137, %v136
  %v164 = vpack.c.bf16 %v139, %v138
  %v165 = vpack.c.bf16 %v141, %v140
  %v166 = vpack.c.bf16 %v143, %v142
  %v167 = vpack.c.bf16 %v145, %v144
  %v168 = vpack.c.bf16 %v147, %v146
  %v169 = vpack.c.bf16 %v149, %v148
  %v170 = vpack.c.bf16 %v151, %v150
  %v171 = vpack.c.bf16 %v153, %v152
  %v172 = vpack.c.bf16 %v155, %v154
  %v173 = vpack.c.bf16 %v157, %v156
  %v174 = vperm.slane %v94, 0
  %v179 = vunpack.c.l.b16 %v106
  %v180 = vunpack.c.l.b16 %v107
  %v181 = vunpack.c.l.b16 %v108
  %v182 = vunpack.c.l.b16 %v109
  %v183 = vpack.c.b16 %v180, %v179
  %v184 = vpack.c.b16 %v182, %v181
  %vm187 = vcmask 261120
  %v189 = vsel %vm187, %v158, 0
  %v192 = vsel %vm187, %v159, 0
  %v195 = vsel %vm187, %v160, 0
  %v198 = vsel %vm187, %v161, 0
  %v201 = vsel %vm187, %v162, 0
  %v204 = vsel %vm187, %v163, 0
  %v207 = vsel %vm187, %v164, 0
  %v210 = vsel %vm187, %v165, 0
  %v213 = vsel %vm187, %v166, 0
  %v216 = vsel %vm187, %v167, 0
  %v219 = vsel %vm187, %v168, 0
  %v222 = vsel %vm187, %v169, 0
  %v225 = vsel %vm187, %v170, 0
  %v228 = vsel %vm187, %v171, 0
  %v231 = vsel %vm187, %v172, 0
  %v234 = vsel %vm187, %v173, 0
  %236 = vmatpush.bf16.msra.mxu0 0
  %237 = vmatpush.bf16.msra.mxu0 0
  %238 = vmatpush.bf16.msra.mxu0 0
  %239 = vmatpush.bf16.msra.mxu0 0
  %240 = vmatpush.bf16.msra.mxu0 0
  %241 = vmatpush.bf16.msra.mxu0 0
  %242 = vmatpush.bf16.msra.mxu0 %v184
  %243 = vmatpush.bf16.msra.mxu0 %v183
  %244 = vmatmul.bf16.gmra.mxu0 %v189
  %v245 = vpop.f32.mrf.mxu0
  %v246 = vadd.f32 %v174, %v245
  %v247 = vpop.f32.mrf.mxu0
  %v248 = vadd.f32 %v174, %v247
  %249 = vmatmul.bf16.gmra.mxu0 %v192
  %v250 = vpop.f32.mrf.mxu0
  %v251 = vadd.f32 %v174, %v250
  %v252 = vpop.f32.mrf.mxu0
  %v253 = vadd.f32 %v174, %v252
  %254 = vmatmul.bf16.gmra.mxu0 %v195
  %v255 = vpop.f32.mrf.mxu0
  %v256 = vadd.f32 %v174, %v255
  %v257 = vpop.f32.mrf.mxu0
  %v258 = vadd.f32 %v174, %v257
  %259 = vmatmul.bf16.gmra.mxu0 %v198
  %v260 = vpop.f32.mrf.mxu0
  %v261 = vadd.f32 %v174, %v260
  %v262 = vpop.f32.mrf.mxu0
  %v263 = vadd.f32 %v174, %v262
  %264 = vmatmul.bf16.gmra.mxu0 %v201
  %v265 = vpop.f32.mrf.mxu0
  %v266 = vadd.f32 %v174, %v265
  %v267 = vpop.f32.mrf.mxu0
  %v268 = vadd.f32 %v174, %v267
  %269 = vmatmul.bf16.gmra.mxu0 %v204
  %v270 = vpop.f32.mrf.mxu0
  %v271 = vadd.f32 %v174, %v270
  %v272 = vpop.f32.mrf.mxu0
  %v273 = vadd.f32 %v174, %v272
  %274 = vmatmul.bf16.gmra.mxu0 %v207
  %v275 = vpop.f32.mrf.mxu0
  %v276 = vadd.f32 %v174, %v275
  %v277 = vpop.f32.mrf.mxu0
  %v278 = vadd.f32 %v174, %v277
  %279 = vmatmul.bf16.gmra.mxu0 %v210
  %v280 = vpop.f32.mrf.mxu0
  %v281 = vadd.f32 %v174, %v280
  %v282 = vpop.f32.mrf.mxu0
  %v283 = vadd.f32 %v174, %v282
  %284 = vmatmul.bf16.gmra.mxu0 %v213
  %v285 = vpop.f32.mrf.mxu0
  %v286 = vadd.f32 %v174, %v285
  %v287 = vpop.f32.mrf.mxu0
  %v288 = vadd.f32 %v174, %v287
  %289 = vmatmul.bf16.gmra.mxu0 %v216
  %v290 = vpop.f32.mrf.mxu0
  %v291 = vadd.f32 %v174, %v290
  %v292 = vpop.f32.mrf.mxu0
  %v293 = vadd.f32 %v174, %v292
  %294 = vmatmul.bf16.gmra.mxu0 %v219
  %v295 = vpop.f32.mrf.mxu0
  %v296 = vadd.f32 %v174, %v295
  %v297 = vpop.f32.mrf.mxu0
  %v298 = vadd.f32 %v174, %v297
  %299 = vmatmul.bf16.gmra.mxu0 %v222
  %v300 = vpop.f32.mrf.mxu0
  %v301 = vadd.f32 %v174, %v300
  %v302 = vpop.f32.mrf.mxu0
  %v303 = vadd.f32 %v174, %v302
  %304 = vmatmul.bf16.gmra.mxu0 %v225
  %v305 = vpop.f32.mrf.mxu0
  %v306 = vadd.f32 %v174, %v305
  %v307 = vpop.f32.mrf.mxu0
  %v308 = vadd.f32 %v174, %v307
  %309 = vmatmul.bf16.gmra.mxu0 %v228
  %v310 = vpop.f32.mrf.mxu0
  %v311 = vadd.f32 %v174, %v310
  %v312 = vpop.f32.mrf.mxu0
  %v313 = vadd.f32 %v174, %v312
  %314 = vmatmul.bf16.gmra.mxu0 %v231
  %v315 = vpop.f32.mrf.mxu0
  %v316 = vadd.f32 %v174, %v315
  %v317 = vpop.f32.mrf.mxu0
  %v318 = vadd.f32 %v174, %v317
  %319 = vmatmul.bf16.gmra.mxu0 %v234
  %v320 = vpop.f32.mrf.mxu0
  %v321 = vadd.f32 %v174, %v320
  %v322 = vpop.f32.mrf.mxu0
  %v323 = vadd.f32 %v174, %v322
  %324 = vdwg.mxu0
  %v325 = vpack.c.bf16 %v246, %v246
  %v326 = vpack.c.bf16 %v248, %v248
  %v327 = vpack.c.bf16 %v251, %v251
  %v328 = vpack.c.bf16 %v253, %v253
  %v329 = vpack.c.bf16 %v256, %v256
  %v330 = vpack.c.bf16 %v258, %v258
  %v331 = vpack.c.bf16 %v261, %v261
  %v332 = vpack.c.bf16 %v263, %v263
  %v333 = vpack.c.bf16 %v266, %v266
  %v334 = vpack.c.bf16 %v268, %v268
  %v335 = vpack.c.bf16 %v271, %v271
  %v336 = vpack.c.bf16 %v273, %v273
  %v337 = vpack.c.bf16 %v276, %v276
  %v338 = vpack.c.bf16 %v278, %v278
  %v339 = vpack.c.bf16 %v281, %v281
  %v340 = vpack.c.bf16 %v283, %v283
  %v341 = vpack.c.bf16 %v286, %v286
  %v342 = vpack.c.bf16 %v288, %v288
  %v343 = vpack.c.bf16 %v291, %v291
  %v344 = vpack.c.bf16 %v293, %v293
  %v345 = vpack.c.bf16 %v296, %v296
  %v346 = vpack.c.bf16 %v298, %v298
  %v347 = vpack.c.bf16 %v301, %v301
  %v348 = vpack.c.bf16 %v303, %v303
  %v349 = vpack.c.bf16 %v306, %v306
  %v350 = vpack.c.bf16 %v308, %v308
  %v351 = vpack.c.bf16 %v311, %v311
  %v352 = vpack.c.bf16 %v313, %v313
  %v353 = vpack.c.bf16 %v316, %v316
  %v354 = vpack.c.bf16 %v318, %v318
  %v355 = vpack.c.bf16 %v321, %v321
  %v356 = vpack.c.bf16 %v323, %v323
  %v357 = vpack.c.bf16 %v31, %v30
  %v358 = vpack.c.bf16 %v33, %v32
  %v359 = vpack.c.bf16 %v35, %v34
  %v360 = vpack.c.bf16 %v37, %v36
  %v361 = vpack.c.bf16 %v39, %v38
  %v362 = vpack.c.bf16 %v41, %v40
  %v363 = vpack.c.bf16 %v43, %v42
  %v364 = vpack.c.bf16 %v45, %v44
  %v365 = vpack.c.bf16 %v47, %v46
  %v366 = vpack.c.bf16 %v49, %v48
  %v367 = vpack.c.bf16 %v51, %v50
  %v368 = vpack.c.bf16 %v53, %v52
  %v369 = vpack.c.bf16 %v55, %v54
  %v370 = vpack.c.bf16 %v57, %v56
  %v371 = vpack.c.bf16 %v59, %v58
  %v372 = vpack.c.bf16 %v61, %v60
  %v377 = vunpack.c.l.b16 %v110
  %v378 = vunpack.c.l.b16 %v111
  %v379 = vunpack.c.l.b16 %v112
  %v380 = vunpack.c.l.b16 %v113
  %v381 = vpack.c.b16 %v378, %v377
  %v382 = vpack.c.b16 %v380, %v379
  %v386 = vsel %vm187, %v357, 0
  %v389 = vsel %vm187, %v358, 0
  %v392 = vsel %vm187, %v359, 0
  %v395 = vsel %vm187, %v360, 0
  %v398 = vsel %vm187, %v361, 0
  %v401 = vsel %vm187, %v362, 0
  %v404 = vsel %vm187, %v363, 0
  %v407 = vsel %vm187, %v364, 0
  %v410 = vsel %vm187, %v365, 0
  %v413 = vsel %vm187, %v366, 0
  %v416 = vsel %vm187, %v367, 0
  %v419 = vsel %vm187, %v368, 0
  %v422 = vsel %vm187, %v369, 0
  %v425 = vsel %vm187, %v370, 0
  %v428 = vsel %vm187, %v371, 0
  %v431 = vsel %vm187, %v372, 0
  %433 = vmatpush.bf16.msra.mxu0 0
  %434 = vmatpush.bf16.msra.mxu0 0
  %435 = vmatpush.bf16.msra.mxu0 0
  %436 = vmatpush.bf16.msra.mxu0 0
  %437 = vmatpush.bf16.msra.mxu0 0
  %438 = vmatpush.bf16.msra.mxu0 0
  %439 = vmatpush.bf16.msra.mxu0 %v382
  %440 = vmatpush.bf16.msra.mxu0 %v381
  %441 = vmatmul.bf16.gmra.mxu0 %v386
  %v442 = vpop.f32.mrf.mxu0
  %v443 = vadd.f32 0.0, %v442
  %v444 = vpop.f32.mrf.mxu0
  %v445 = vadd.f32 0.0, %v444
  %446 = vmatmul.bf16.gmra.mxu0 %v389
  %v447 = vpop.f32.mrf.mxu0
  %v448 = vadd.f32 0.0, %v447
  %v449 = vpop.f32.mrf.mxu0
  %v450 = vadd.f32 0.0, %v449
  %451 = vmatmul.bf16.gmra.mxu0 %v392
  %v452 = vpop.f32.mrf.mxu0
  %v453 = vadd.f32 0.0, %v452
  %v454 = vpop.f32.mrf.mxu0
  %v455 = vadd.f32 0.0, %v454
  %456 = vmatmul.bf16.gmra.mxu0 %v395
  %v457 = vpop.f32.mrf.mxu0
  %v458 = vadd.f32 0.0, %v457
  %v459 = vpop.f32.mrf.mxu0
  %v460 = vadd.f32 0.0, %v459
  %461 = vmatmul.bf16.gmra.mxu0 %v398
  %v462 = vpop.f32.mrf.mxu0
  %v463 = vadd.f32 0.0, %v462
  %v464 = vpop.f32.mrf.mxu0
  %v465 = vadd.f32 0.0, %v464
  %466 = vmatmul.bf16.gmra.mxu0 %v401
  %v467 = vpop.f32.mrf.mxu0
  %v468 = vadd.f32 0.0, %v467
  %v469 = vpop.f32.mrf.mxu0
  %v470 = vadd.f32 0.0, %v469
  %471 = vmatmul.bf16.gmra.mxu0 %v404
  %v472 = vpop.f32.mrf.mxu0
  %v473 = vadd.f32 0.0, %v472
  %v474 = vpop.f32.mrf.mxu0
  %v475 = vadd.f32 0.0, %v474
  %476 = vmatmul.bf16.gmra.mxu0 %v407
  %v477 = vpop.f32.mrf.mxu0
  %v478 = vadd.f32 0.0, %v477
  %v479 = vpop.f32.mrf.mxu0
  %v480 = vadd.f32 0.0, %v479
  %481 = vmatmul.bf16.gmra.mxu0 %v410
  %v482 = vpop.f32.mrf.mxu0
  %v483 = vadd.f32 0.0, %v482
  %v484 = vpop.f32.mrf.mxu0
  %v485 = vadd.f32 0.0, %v484
  %486 = vmatmul.bf16.gmra.mxu0 %v413
  %v487 = vpop.f32.mrf.mxu0
  %v488 = vadd.f32 0.0, %v487
  %v489 = vpop.f32.mrf.mxu0
  %v490 = vadd.f32 0.0, %v489
  %491 = vmatmul.bf16.gmra.mxu0 %v416
  %v492 = vpop.f32.mrf.mxu0
  %v493 = vadd.f32 0.0, %v492
  %v494 = vpop.f32.mrf.mxu0
  %v495 = vadd.f32 0.0, %v494
  %496 = vmatmul.bf16.gmra.mxu0 %v419
  %v497 = vpop.f32.mrf.mxu0
  %v498 = vadd.f32 0.0, %v497
  %v499 = vpop.f32.mrf.mxu0
  %v500 = vadd.f32 0.0, %v499
  %501 = vmatmul.bf16.gmra.mxu0 %v422
  %v502 = vpop.f32.mrf.mxu0
  %v503 = vadd.f32 0.0, %v502
  %v504 = vpop.f32.mrf.mxu0
  %v505 = vadd.f32 0.0, %v504
  %506 = vmatmul.bf16.gmra.mxu0 %v425
  %v507 = vpop.f32.mrf.mxu0
  %v508 = vadd.f32 0.0, %v507
  %v509 = vpop.f32.mrf.mxu0
  %v510 = vadd.f32 0.0, %v509
  %511 = vmatmul.bf16.gmra.mxu0 %v428
  %v512 = vpop.f32.mrf.mxu0
  %v513 = vadd.f32 0.0, %v512
  %v514 = vpop.f32.mrf.mxu0
  %v515 = vadd.f32 0.0, %v514
  %516 = vmatmul.bf16.gmra.mxu0 %v431
  %v517 = vpop.f32.mrf.mxu0
  %v518 = vadd.f32 0.0, %v517
  %v519 = vpop.f32.mrf.mxu0
  %v520 = vadd.f32 0.0, %v519
  %521 = vdwg.mxu0
  %v522 = vpack.c.bf16 %v443, %v443
  %v523 = vpack.c.bf16 %v445, %v445
  %v524 = vpack.c.bf16 %v448, %v448
  %v525 = vpack.c.bf16 %v450, %v450
  %v526 = vpack.c.bf16 %v453, %v453
  %v527 = vpack.c.bf16 %v455, %v455
  %v528 = vpack.c.bf16 %v458, %v458
  %v529 = vpack.c.bf16 %v460, %v460
  %v530 = vpack.c.bf16 %v463, %v463
  %v531 = vpack.c.bf16 %v465, %v465
  %v532 = vpack.c.bf16 %v468, %v468
  %v533 = vpack.c.bf16 %v470, %v470
  %v534 = vpack.c.bf16 %v473, %v473
  %v535 = vpack.c.bf16 %v475, %v475
  %v536 = vpack.c.bf16 %v478, %v478
  %v537 = vpack.c.bf16 %v480, %v480
  %v538 = vpack.c.bf16 %v483, %v483
  %v539 = vpack.c.bf16 %v485, %v485
  %v540 = vpack.c.bf16 %v488, %v488
  %v541 = vpack.c.bf16 %v490, %v490
  %v542 = vpack.c.bf16 %v493, %v493
  %v543 = vpack.c.bf16 %v495, %v495
  %v544 = vpack.c.bf16 %v498, %v498
  %v545 = vpack.c.bf16 %v500, %v500
  %v546 = vpack.c.bf16 %v503, %v503
  %v547 = vpack.c.bf16 %v505, %v505
  %v548 = vpack.c.bf16 %v508, %v508
  %v549 = vpack.c.bf16 %v510, %v510
  %v550 = vpack.c.bf16 %v513, %v513
  %v551 = vpack.c.bf16 %v515, %v515
  %v552 = vpack.c.bf16 %v518, %v518
  %v553 = vpack.c.bf16 %v520, %v520
  %v570 = vunpack.c.l.b16 %v325
  %v571 = vunpack.c.l.b16 %v326
  %v572 = vunpack.c.l.b16 %v327
  %v573 = vunpack.c.l.b16 %v328
  %v574 = vunpack.c.l.b16 %v329
  %v575 = vunpack.c.l.b16 %v330
  %v576 = vunpack.c.l.b16 %v331
  %v577 = vunpack.c.l.b16 %v332
  %v578 = vunpack.c.l.b16 %v333
  %v579 = vunpack.c.l.b16 %v334
  %v580 = vunpack.c.l.b16 %v335
  %v581 = vunpack.c.l.b16 %v336
  %v582 = vunpack.c.l.b16 %v337
  %v583 = vunpack.c.l.b16 %v338
  %v584 = vunpack.c.l.b16 %v339
  %v585 = vunpack.c.l.b16 %v340
  %v586 = vpack.c.b16 %v571, %v570
  %v587 = vpack.c.b16 %v573, %v572
  %v588 = vpack.c.b16 %v575, %v574
  %v589 = vpack.c.b16 %v577, %v576
  %v590 = vpack.c.b16 %v579, %v578
  %v591 = vpack.c.b16 %v581, %v580
  %v592 = vpack.c.b16 %v583, %v582
  %v593 = vpack.c.b16 %v585, %v584
  %594 = vrot.lane.b32.xlu0 %v586, 96
  %v595 = vpop.permute.xlu0 %594
  %596 = vrot.lane.b32.xlu0 %v587, 96
  %v597 = vpop.permute.xlu0 %596
  %598 = vrot.lane.b32.xlu0 %v588, 96
  %v599 = vpop.permute.xlu0 %598
  %600 = vrot.lane.b32.xlu0 %v589, 96
  %v601 = vpop.permute.xlu0 %600
  %602 = vrot.lane.b32.xlu0 %v590, 96
  %v603 = vpop.permute.xlu0 %602
  %604 = vrot.lane.b32.xlu0 %v591, 96
  %v605 = vpop.permute.xlu0 %604
  %606 = vrot.lane.b32.xlu0 %v592, 96
  %v607 = vpop.permute.xlu0 %606
  %608 = vrot.lane.b32.xlu0 %v593, 96
  %v609 = vpop.permute.xlu0 %608
  %vm610 = vcmask 64512
  %v612 = vsel %vm610, %v586, 0
  %v615 = vsel %vm610, %v587, 0
  %v618 = vsel %vm610, %v588, 0
  %v621 = vsel %vm610, %v589, 0
  %v624 = vsel %vm610, %v590, 0
  %v627 = vsel %vm610, %v591, 0
  %v630 = vsel %vm610, %v592, 0
  %v633 = vsel %vm610, %v593, 0
  %v636 = vsel %vm610, %v595, 0
  %v639 = vsel %vm610, %v597, 0
  %v642 = vsel %vm610, %v599, 0
  %v645 = vsel %vm610, %v601, 0
  %v648 = vsel %vm610, %v603, 0
  %v651 = vsel %vm610, %v605, 0
  %v654 = vsel %vm610, %v607, 0
  %v657 = vsel %vm610, %v609, 0
  %659 = vmatpush.bf16.xpose.msra.mxu0 %v657
  %660 = vmatpush.bf16.xpose.msra.mxu0 %v654
  %661 = vmatpush.bf16.xpose.msra.mxu0 %v651
  %662 = vmatpush.bf16.xpose.msra.mxu0 %v648
  %663 = vmatpush.bf16.xpose.msra.mxu0 %v645
  %664 = vmatpush.bf16.xpose.msra.mxu0 %v642
  %665 = vmatpush.bf16.xpose.msra.mxu0 %v639
  %666 = vmatpush.bf16.xpose.msra.mxu0 %v636
  %667 = vmatmul.bf16.gmra.mxu0 %v612
  %v668 = vpop.f32.mrf.mxu0
  %v669 = vadd.f32 %v99, %v668
  %v670 = vpop.f32.mrf.mxu0
  %v671 = vadd.f32 %v99, %v670
  %672 = vmatmul.bf16.gmra.mxu0 %v615
  %v673 = vpop.f32.mrf.mxu0
  %v674 = vadd.f32 %v99, %v673
  %v675 = vpop.f32.mrf.mxu0
  %v676 = vadd.f32 %v99, %v675
  %677 = vmatmul.bf16.gmra.mxu0 %v618
  %v678 = vpop.f32.mrf.mxu0
  %v679 = vadd.f32 %v99, %v678
  %v680 = vpop.f32.mrf.mxu0
  %v681 = vadd.f32 %v99, %v680
  %682 = vmatmul.bf16.gmra.mxu0 %v621
  %v683 = vpop.f32.mrf.mxu0
  %v684 = vadd.f32 %v99, %v683
  %v685 = vpop.f32.mrf.mxu0
  %v686 = vadd.f32 %v99, %v685
  %687 = vmatmul.bf16.gmra.mxu0 %v624
  %v688 = vpop.f32.mrf.mxu0
  %v689 = vadd.f32 %v99, %v688
  %v690 = vpop.f32.mrf.mxu0
  %v691 = vadd.f32 %v99, %v690
  %692 = vmatmul.bf16.gmra.mxu0 %v627
  %v693 = vpop.f32.mrf.mxu0
  %v694 = vadd.f32 %v99, %v693
  %v695 = vpop.f32.mrf.mxu0
  %v696 = vadd.f32 %v99, %v695
  %697 = vmatmul.bf16.gmra.mxu0 %v630
  %v698 = vpop.f32.mrf.mxu0
  %v699 = vadd.f32 %v99, %v698
  %v700 = vpop.f32.mrf.mxu0
  %v701 = vadd.f32 %v99, %v700
  %702 = vmatmul.bf16.gmra.mxu0 %v633
  %v703 = vpop.f32.mrf.mxu0
  %v704 = vadd.f32 %v99, %v703
  %v705 = vpop.f32.mrf.mxu0
  %v706 = vadd.f32 %v99, %v705
  %707 = vdwg.mxu0
  %708 = vmax.xlane.f32.xlu0 %v669
  %v709 = vpop.xlane.xlu0 %708
  %710 = vmax.xlane.f32.xlu0 %v671
  %v711 = vpop.xlane.xlu0 %710
  %712 = vmax.xlane.f32.xlu0 %v674
  %v713 = vpop.xlane.xlu0 %712
  %714 = vmax.xlane.f32.xlu0 %v676
  %v715 = vpop.xlane.xlu0 %714
  %716 = vmax.xlane.f32.xlu0 %v679
  %v717 = vpop.xlane.xlu0 %716
  %718 = vmax.xlane.f32.xlu0 %v681
  %v719 = vpop.xlane.xlu0 %718
  %720 = vmax.xlane.f32.xlu0 %v684
  %v721 = vpop.xlane.xlu0 %720
  %722 = vmax.xlane.f32.xlu0 %v686
  %v723 = vpop.xlane.xlu0 %722
  %724 = vmax.xlane.f32.xlu0 %v689
  %v725 = vpop.xlane.xlu0 %724
  %726 = vmax.xlane.f32.xlu0 %v691
  %v727 = vpop.xlane.xlu0 %726
  %728 = vmax.xlane.f32.xlu0 %v694
  %v729 = vpop.xlane.xlu0 %728
  %730 = vmax.xlane.f32.xlu0 %v696
  %v731 = vpop.xlane.xlu0 %730
  %732 = vmax.xlane.f32.xlu0 %v699
  %v733 = vpop.xlane.xlu0 %732
  %734 = vmax.xlane.f32.xlu0 %v701
  %v735 = vpop.xlane.xlu0 %734
  %736 = vmax.xlane.f32.xlu0 %v704
  %v737 = vpop.xlane.xlu0 %736
  %738 = vmax.xlane.f32.xlu0 %v706
  %v739 = vpop.xlane.xlu0 %738
  %v740 = vsub.f32 %v669, %v709
  %v741 = vsub.f32 %v671, %v711
  %v742 = vsub.f32 %v674, %v713
  %v743 = vsub.f32 %v676, %v715
  %v744 = vsub.f32 %v679, %v717
  %v745 = vsub.f32 %v681, %v719
  %v746 = vsub.f32 %v684, %v721
  %v747 = vsub.f32 %v686, %v723
  %v748 = vsub.f32 %v689, %v725
  %v749 = vsub.f32 %v691, %v727
  %v750 = vsub.f32 %v694, %v729
  %v751 = vsub.f32 %v696, %v731
  %v752 = vsub.f32 %v699, %v733
  %v753 = vsub.f32 %v701, %v735
  %v754 = vsub.f32 %v704, %v737
  %v755 = vsub.f32 %v706, %v739
  %v756 = vmul.f32 %v740, 1.442695
  %v757 = vpow.pop %v756
  %v758 = vmul.f32 %v741, 1.442695
  %v759 = vpow.pop %v758
  %v760 = vmul.f32 %v742, 1.442695
  %v761 = vpow.pop %v760
  %v762 = vmul.f32 %v743, 1.442695
  %v763 = vpow.pop %v762
  %v764 = vmul.f32 %v744, 1.442695
  %v765 = vpow.pop %v764
  %v766 = vmul.f32 %v745, 1.442695
  %v767 = vpow.pop %v766
  %v768 = vmul.f32 %v746, 1.442695
  %v769 = vpow.pop %v768
  %v770 = vmul.f32 %v747, 1.442695
  %v771 = vpow.pop %v770
  %v772 = vmul.f32 %v748, 1.442695
  %v773 = vpow.pop %v772
  %v774 = vmul.f32 %v749, 1.442695
  %v775 = vpow.pop %v774
  %v776 = vmul.f32 %v750, 1.442695
  %v777 = vpow.pop %v776
  %v778 = vmul.f32 %v751, 1.442695
  %v779 = vpow.pop %v778
  %v780 = vmul.f32 %v752, 1.442695
  %v781 = vpow.pop %v780
  %v782 = vmul.f32 %v753, 1.442695
  %v783 = vpow.pop %v782
  %v784 = vmul.f32 %v754, 1.442695
  %v785 = vpow.pop %v784
  %v786 = vmul.f32 %v755, 1.442695
  %v787 = vpow.pop %v786
  %788 = vadd.xlane.f32.xlu0 %v757
  %v789 = vpop.xlane.xlu0 %788
  %790 = vadd.xlane.f32.xlu0 %v759
  %v791 = vpop.xlane.xlu0 %790
  %792 = vadd.xlane.f32.xlu0 %v761
  %v793 = vpop.xlane.xlu0 %792
  %794 = vadd.xlane.f32.xlu0 %v763
  %v795 = vpop.xlane.xlu0 %794
  %796 = vadd.xlane.f32.xlu0 %v765
  %v797 = vpop.xlane.xlu0 %796
  %798 = vadd.xlane.f32.xlu0 %v767
  %v799 = vpop.xlane.xlu0 %798
  %800 = vadd.xlane.f32.xlu0 %v769
  %v801 = vpop.xlane.xlu0 %800
  %802 = vadd.xlane.f32.xlu0 %v771
  %v803 = vpop.xlane.xlu0 %802
  %804 = vadd.xlane.f32.xlu0 %v773
  %v805 = vpop.xlane.xlu0 %804
  %806 = vadd.xlane.f32.xlu0 %v775
  %v807 = vpop.xlane.xlu0 %806
  %808 = vadd.xlane.f32.xlu0 %v777
  %v809 = vpop.xlane.xlu0 %808
  %810 = vadd.xlane.f32.xlu0 %v779
  %v811 = vpop.xlane.xlu0 %810
  %812 = vadd.xlane.f32.xlu0 %v781
  %v813 = vpop.xlane.xlu0 %812
  %814 = vadd.xlane.f32.xlu0 %v783
  %v815 = vpop.xlane.xlu0 %814
  %816 = vadd.xlane.f32.xlu0 %v785
  %v817 = vpop.xlane.xlu0 %816
  %818 = vadd.xlane.f32.xlu0 %v787
  %v819 = vpop.xlane.xlu0 %818
  %v820 = vrcp.pop %v789
  %v821 = vrcp.pop %v791
  %v822 = vrcp.pop %v793
  %v823 = vrcp.pop %v795
  %v824 = vrcp.pop %v797
  %v825 = vrcp.pop %v799
  %v826 = vrcp.pop %v801
  %v827 = vrcp.pop %v803
  %v828 = vrcp.pop %v805
  %v829 = vrcp.pop %v807
  %v830 = vrcp.pop %v809
  %v831 = vrcp.pop %v811
  %v832 = vrcp.pop %v813
  %v833 = vrcp.pop %v815
  %v834 = vrcp.pop %v817
  %v835 = vrcp.pop %v819
  %v836 = vmul.f32 %v757, %v820
  %v837 = vmul.f32 %v759, %v821
  %v838 = vmul.f32 %v761, %v822
  %v839 = vmul.f32 %v763, %v823
  %v840 = vmul.f32 %v765, %v824
  %v841 = vmul.f32 %v767, %v825
  %v842 = vmul.f32 %v769, %v826
  %v843 = vmul.f32 %v771, %v827
  %v844 = vmul.f32 %v773, %v828
  %v845 = vmul.f32 %v775, %v829
  %v846 = vmul.f32 %v777, %v830
  %v847 = vmul.f32 %v779, %v831
  %v848 = vmul.f32 %v781, %v832
  %v849 = vmul.f32 %v783, %v833
  %v850 = vmul.f32 %v785, %v834
  %v851 = vmul.f32 %v787, %v835
  %v852 = vpack.c.bf16 %v837, %v836
  %v853 = vpack.c.bf16 %v839, %v838
  %v854 = vpack.c.bf16 %v841, %v840
  %v855 = vpack.c.bf16 %v843, %v842
  %v856 = vpack.c.bf16 %v845, %v844
  %v857 = vpack.c.bf16 %v847, %v846
  %v858 = vpack.c.bf16 %v849, %v848
  %v859 = vpack.c.bf16 %v851, %v850
  %860 = vrot.lane.b32.xlu0 %v586, 120
  %v861 = vpop.permute.xlu0 %860
  %862 = vrot.lane.b32.xlu0 %v587, 120
  %v863 = vpop.permute.xlu0 %862
  %864 = vrot.lane.b32.xlu0 %v588, 120
  %v865 = vpop.permute.xlu0 %864
  %866 = vrot.lane.b32.xlu0 %v589, 120
  %v867 = vpop.permute.xlu0 %866
  %868 = vrot.lane.b32.xlu0 %v590, 120
  %v869 = vpop.permute.xlu0 %868
  %870 = vrot.lane.b32.xlu0 %v591, 120
  %v871 = vpop.permute.xlu0 %870
  %872 = vrot.lane.b32.xlu0 %v592, 120
  %v873 = vpop.permute.xlu0 %872
  %874 = vrot.lane.b32.xlu0 %v593, 120
  %v875 = vpop.permute.xlu0 %874
  %876 = vrot.lane.b32.xlu0 %v586, 88
  %v877 = vpop.permute.xlu0 %876
  %878 = vrot.lane.b32.xlu0 %v587, 88
  %v879 = vpop.permute.xlu0 %878
  %880 = vrot.lane.b32.xlu0 %v588, 88
  %v881 = vpop.permute.xlu0 %880
  %882 = vrot.lane.b32.xlu0 %v589, 88
  %v883 = vpop.permute.xlu0 %882
  %884 = vrot.lane.b32.xlu0 %v590, 88
  %v885 = vpop.permute.xlu0 %884
  %886 = vrot.lane.b32.xlu0 %v591, 88
  %v887 = vpop.permute.xlu0 %886
  %888 = vrot.lane.b32.xlu0 %v592, 88
  %v889 = vpop.permute.xlu0 %888
  %890 = vrot.lane.b32.xlu0 %v593, 88
  %v891 = vpop.permute.xlu0 %890
  %v893 = vsel %vm610, %v861, 0
  %v896 = vsel %vm610, %v863, 0
  %v899 = vsel %vm610, %v865, 0
  %v902 = vsel %vm610, %v867, 0
  %v905 = vsel %vm610, %v869, 0
  %v908 = vsel %vm610, %v871, 0
  %v911 = vsel %vm610, %v873, 0
  %v914 = vsel %vm610, %v875, 0
  %v917 = vsel %vm610, %v877, 0
  %v920 = vsel %vm610, %v879, 0
  %v923 = vsel %vm610, %v881, 0
  %v926 = vsel %vm610, %v883, 0
  %v929 = vsel %vm610, %v885, 0
  %v932 = vsel %vm610, %v887, 0
  %v935 = vsel %vm610, %v889, 0
  %v938 = vsel %vm610, %v891, 0
  %940 = vmatpush.bf16.xpose.msra.mxu0 %v938
  %941 = vmatpush.bf16.xpose.msra.mxu0 %v935
  %942 = vmatpush.bf16.xpose.msra.mxu0 %v932
  %943 = vmatpush.bf16.xpose.msra.mxu0 %v929
  %944 = vmatpush.bf16.xpose.msra.mxu0 %v926
  %945 = vmatpush.bf16.xpose.msra.mxu0 %v923
  %946 = vmatpush.bf16.xpose.msra.mxu0 %v920
  %947 = vmatpush.bf16.xpose.msra.mxu0 %v917
  %948 = vmatmul.bf16.gmra.mxu0 %v893
  %v949 = vpop.f32.mrf.mxu0
  %v950 = vadd.f32 %v99, %v949
  %v951 = vpop.f32.mrf.mxu0
  %v952 = vadd.f32 %v99, %v951
  %953 = vmatmul.bf16.gmra.mxu0 %v896
  %v954 = vpop.f32.mrf.mxu0
  %v955 = vadd.f32 %v99, %v954
  %v956 = vpop.f32.mrf.mxu0
  %v957 = vadd.f32 %v99, %v956
  %958 = vmatmul.bf16.gmra.mxu0 %v899
  %v959 = vpop.f32.mrf.mxu0
  %v960 = vadd.f32 %v99, %v959
  %v961 = vpop.f32.mrf.mxu0
  %v962 = vadd.f32 %v99, %v961
  %963 = vmatmul.bf16.gmra.mxu0 %v902
  %v964 = vpop.f32.mrf.mxu0
  %v965 = vadd.f32 %v99, %v964
  %v966 = vpop.f32.mrf.mxu0
  %v967 = vadd.f32 %v99, %v966
  %968 = vmatmul.bf16.gmra.mxu0 %v905
  %v969 = vpop.f32.mrf.mxu0
  %v970 = vadd.f32 %v99, %v969
  %v971 = vpop.f32.mrf.mxu0
  %v972 = vadd.f32 %v99, %v971
  %973 = vmatmul.bf16.gmra.mxu0 %v908
  %v974 = vpop.f32.mrf.mxu0
  %v975 = vadd.f32 %v99, %v974
  %v976 = vpop.f32.mrf.mxu0
  %v977 = vadd.f32 %v99, %v976
  %978 = vmatmul.bf16.gmra.mxu0 %v911
  %v979 = vpop.f32.mrf.mxu0
  %v980 = vadd.f32 %v99, %v979
  %v981 = vpop.f32.mrf.mxu0
  %v982 = vadd.f32 %v99, %v981
  %983 = vmatmul.bf16.gmra.mxu0 %v914
  %v984 = vpop.f32.mrf.mxu0
  %v985 = vadd.f32 %v99, %v984
  %v986 = vpop.f32.mrf.mxu0
  %v987 = vadd.f32 %v99, %v986
  %988 = vdwg.mxu0
  %989 = vmax.xlane.f32.xlu0 %v950
  %v990 = vpop.xlane.xlu0 %989
  %991 = vmax.xlane.f32.xlu0 %v952
  %v992 = vpop.xlane.xlu0 %991
  %993 = vmax.xlane.f32.xlu0 %v955
  %v994 = vpop.xlane.xlu0 %993
  %995 = vmax.xlane.f32.xlu0 %v957
  %v996 = vpop.xlane.xlu0 %995
  %997 = vmax.xlane.f32.xlu0 %v960
  %v998 = vpop.xlane.xlu0 %997
  %999 = vmax.xlane.f32.xlu0 %v962
  %v1000 = vpop.xlane.xlu0 %999
  %1001 = vmax.xlane.f32.xlu0 %v965
  %v1002 = vpop.xlane.xlu0 %1001
  %1003 = vmax.xlane.f32.xlu0 %v967
  %v1004 = vpop.xlane.xlu0 %1003
  %1005 = vmax.xlane.f32.xlu0 %v970
  %v1006 = vpop.xlane.xlu0 %1005
  %1007 = vmax.xlane.f32.xlu0 %v972
  %v1008 = vpop.xlane.xlu0 %1007
  %1009 = vmax.xlane.f32.xlu0 %v975
  %v1010 = vpop.xlane.xlu0 %1009
  %1011 = vmax.xlane.f32.xlu0 %v977
  %v1012 = vpop.xlane.xlu0 %1011
  %1013 = vmax.xlane.f32.xlu0 %v980
  %v1014 = vpop.xlane.xlu0 %1013
  %1015 = vmax.xlane.f32.xlu0 %v982
  %v1016 = vpop.xlane.xlu0 %1015
  %1017 = vmax.xlane.f32.xlu0 %v985
  %v1018 = vpop.xlane.xlu0 %1017
  %1019 = vmax.xlane.f32.xlu0 %v987
  %v1020 = vpop.xlane.xlu0 %1019
  %v1021 = vsub.f32 %v950, %v990
  %v1022 = vsub.f32 %v952, %v992
  %v1023 = vsub.f32 %v955, %v994
  %v1024 = vsub.f32 %v957, %v996
  %v1025 = vsub.f32 %v960, %v998
  %v1026 = vsub.f32 %v962, %v1000
  %v1027 = vsub.f32 %v965, %v1002
  %v1028 = vsub.f32 %v967, %v1004
  %v1029 = vsub.f32 %v970, %v1006
  %v1030 = vsub.f32 %v972, %v1008
  %v1031 = vsub.f32 %v975, %v1010
  %v1032 = vsub.f32 %v977, %v1012
  %v1033 = vsub.f32 %v980, %v1014
  %v1034 = vsub.f32 %v982, %v1016
  %v1035 = vsub.f32 %v985, %v1018
  %v1036 = vsub.f32 %v987, %v1020
  %v1037 = vmul.f32 %v1021, 1.442695
  %v1038 = vpow.pop %v1037
  %v1039 = vmul.f32 %v1022, 1.442695
  %v1040 = vpow.pop %v1039
  %v1041 = vmul.f32 %v1023, 1.442695
  %v1042 = vpow.pop %v1041
  %v1043 = vmul.f32 %v1024, 1.442695
  %v1044 = vpow.pop %v1043
  %v1045 = vmul.f32 %v1025, 1.442695
  %v1046 = vpow.pop %v1045
  %v1047 = vmul.f32 %v1026, 1.442695
  %v1048 = vpow.pop %v1047
  %v1049 = vmul.f32 %v1027, 1.442695
  %v1050 = vpow.pop %v1049
  %v1051 = vmul.f32 %v1028, 1.442695
  %v1052 = vpow.pop %v1051
  %v1053 = vmul.f32 %v1029, 1.442695
  %v1054 = vpow.pop %v1053
  %v1055 = vmul.f32 %v1030, 1.442695
  %v1056 = vpow.pop %v1055
  %v1057 = vmul.f32 %v1031, 1.442695
  %v1058 = vpow.pop %v1057
  %v1059 = vmul.f32 %v1032, 1.442695
  %v1060 = vpow.pop %v1059
  %v1061 = vmul.f32 %v1033, 1.442695
  %v1062 = vpow.pop %v1061
  %v1063 = vmul.f32 %v1034, 1.442695
  %v1064 = vpow.pop %v1063
  %v1065 = vmul.f32 %v1035, 1.442695
  %v1066 = vpow.pop %v1065
  %v1067 = vmul.f32 %v1036, 1.442695
  %v1068 = vpow.pop %v1067
  %1069 = vadd.xlane.f32.xlu0 %v1038
  %v1070 = vpop.xlane.xlu0 %1069
  %1071 = vadd.xlane.f32.xlu0 %v1040
  %v1072 = vpop.xlane.xlu0 %1071
  %1073 = vadd.xlane.f32.xlu0 %v1042
  %v1074 = vpop.xlane.xlu0 %1073
  %1075 = vadd.xlane.f32.xlu0 %v1044
  %v1076 = vpop.xlane.xlu0 %1075
  %1077 = vadd.xlane.f32.xlu0 %v1046
  %v1078 = vpop.xlane.xlu0 %1077
  %1079 = vadd.xlane.f32.xlu0 %v1048
  %v1080 = vpop.xlane.xlu0 %1079
  %1081 = vadd.xlane.f32.xlu0 %v1050
  %v1082 = vpop.xlane.xlu0 %1081
  %1083 = vadd.xlane.f32.xlu0 %v1052
  %v1084 = vpop.xlane.xlu0 %1083
  %1085 = vadd.xlane.f32.xlu0 %v1054
  %v1086 = vpop.xlane.xlu0 %1085
  %1087 = vadd.xlane.f32.xlu0 %v1056
  %v1088 = vpop.xlane.xlu0 %1087
  %1089 = vadd.xlane.f32.xlu0 %v1058
  %v1090 = vpop.xlane.xlu0 %1089
  %1091 = vadd.xlane.f32.xlu0 %v1060
  %v1092 = vpop.xlane.xlu0 %1091
  %1093 = vadd.xlane.f32.xlu0 %v1062
  %v1094 = vpop.xlane.xlu0 %1093
  %1095 = vadd.xlane.f32.xlu0 %v1064
  %v1096 = vpop.xlane.xlu0 %1095
  %1097 = vadd.xlane.f32.xlu0 %v1066
  %v1098 = vpop.xlane.xlu0 %1097
  %1099 = vadd.xlane.f32.xlu0 %v1068
  %v1100 = vpop.xlane.xlu0 %1099
  %v1101 = vrcp.pop %v1070
  %v1102 = vrcp.pop %v1072
  %v1103 = vrcp.pop %v1074
  %v1104 = vrcp.pop %v1076
  %v1105 = vrcp.pop %v1078
  %v1106 = vrcp.pop %v1080
  %v1107 = vrcp.pop %v1082
  %v1108 = vrcp.pop %v1084
  %v1109 = vrcp.pop %v1086
  %v1110 = vrcp.pop %v1088
  %v1111 = vrcp.pop %v1090
  %v1112 = vrcp.pop %v1092
  %v1113 = vrcp.pop %v1094
  %v1114 = vrcp.pop %v1096
  %v1115 = vrcp.pop %v1098
  %v1116 = vrcp.pop %v1100
  %v1117 = vmul.f32 %v1038, %v1101
  %v1118 = vmul.f32 %v1040, %v1102
  %v1119 = vmul.f32 %v1042, %v1103
  %v1120 = vmul.f32 %v1044, %v1104
  %v1121 = vmul.f32 %v1046, %v1105
  %v1122 = vmul.f32 %v1048, %v1106
  %v1123 = vmul.f32 %v1050, %v1107
  %v1124 = vmul.f32 %v1052, %v1108
  %v1125 = vmul.f32 %v1054, %v1109
  %v1126 = vmul.f32 %v1056, %v1110
  %v1127 = vmul.f32 %v1058, %v1111
  %v1128 = vmul.f32 %v1060, %v1112
  %v1129 = vmul.f32 %v1062, %v1113
  %v1130 = vmul.f32 %v1064, %v1114
  %v1131 = vmul.f32 %v1066, %v1115
  %v1132 = vmul.f32 %v1068, %v1116
  %v1133 = vpack.c.bf16 %v1118, %v1117
  %v1134 = vpack.c.bf16 %v1120, %v1119
  %v1135 = vpack.c.bf16 %v1122, %v1121
  %v1136 = vpack.c.bf16 %v1124, %v1123
  %v1137 = vpack.c.bf16 %v1126, %v1125
  %v1138 = vpack.c.bf16 %v1128, %v1127
  %v1139 = vpack.c.bf16 %v1130, %v1129
  %v1140 = vpack.c.bf16 %v1132, %v1131
  %v1157 = vunpack.c.l.b16 %v522
  %v1158 = vunpack.c.l.b16 %v523
  %v1159 = vunpack.c.l.b16 %v524
  %v1160 = vunpack.c.l.b16 %v525
  %v1161 = vunpack.c.l.b16 %v526
  %v1162 = vunpack.c.l.b16 %v527
  %v1163 = vunpack.c.l.b16 %v528
  %v1164 = vunpack.c.l.b16 %v529
  %v1165 = vunpack.c.l.b16 %v530
  %v1166 = vunpack.c.l.b16 %v531
  %v1167 = vunpack.c.l.b16 %v532
  %v1168 = vunpack.c.l.b16 %v533
  %v1169 = vunpack.c.l.b16 %v534
  %v1170 = vunpack.c.l.b16 %v535
  %v1171 = vunpack.c.l.b16 %v536
  %v1172 = vunpack.c.l.b16 %v537
  %v1173 = vpack.c.b16 %v1158, %v1157
  %v1174 = vpack.c.b16 %v1160, %v1159
  %v1175 = vpack.c.b16 %v1162, %v1161
  %v1176 = vpack.c.b16 %v1164, %v1163
  %v1177 = vpack.c.b16 %v1166, %v1165
  %v1178 = vpack.c.b16 %v1168, %v1167
  %v1179 = vpack.c.b16 %v1170, %v1169
  %v1180 = vpack.c.b16 %v1172, %v1171
  %1181 = vrot.lane.b32.xlu0 %v1173, 96
  %v1182 = vpop.permute.xlu0 %1181
  %1183 = vrot.lane.b32.xlu0 %v1174, 96
  %v1184 = vpop.permute.xlu0 %1183
  %1185 = vrot.lane.b32.xlu0 %v1175, 96
  %v1186 = vpop.permute.xlu0 %1185
  %1187 = vrot.lane.b32.xlu0 %v1176, 96
  %v1188 = vpop.permute.xlu0 %1187
  %1189 = vrot.lane.b32.xlu0 %v1177, 96
  %v1190 = vpop.permute.xlu0 %1189
  %1191 = vrot.lane.b32.xlu0 %v1178, 96
  %v1192 = vpop.permute.xlu0 %1191
  %1193 = vrot.lane.b32.xlu0 %v1179, 96
  %v1194 = vpop.permute.xlu0 %1193
  %1195 = vrot.lane.b32.xlu0 %v1180, 96
  %v1196 = vpop.permute.xlu0 %1195
  %1205 = vmatpush.bf16.msra.mxu0 %v1196
  %1206 = vmatpush.bf16.msra.mxu0 %v1194
  %1207 = vmatpush.bf16.msra.mxu0 %v1192
  %1208 = vmatpush.bf16.msra.mxu0 %v1190
  %1209 = vmatpush.bf16.msra.mxu0 %v1188
  %1210 = vmatpush.bf16.msra.mxu0 %v1186
  %1211 = vmatpush.bf16.msra.mxu0 %v1184
  %1212 = vmatpush.bf16.msra.mxu0 %v1182
  %1213 = vmatmul.bf16.gmra.mxu0 %v1133
  %v1214 = vpop.f32.mrf.mxu0
  %v1215 = vadd.f32 0.0, %v1214
  %v1216 = vpop.f32.mrf.mxu0
  %v1217 = vadd.f32 0.0, %v1216
  %1218 = vmatmul.bf16.gmra.mxu0 %v1134
  %v1219 = vpop.f32.mrf.mxu0
  %v1220 = vadd.f32 0.0, %v1219
  %v1221 = vpop.f32.mrf.mxu0
  %v1222 = vadd.f32 0.0, %v1221
  %1223 = vmatmul.bf16.gmra.mxu0 %v1135
  %v1224 = vpop.f32.mrf.mxu0
  %v1225 = vadd.f32 0.0, %v1224
  %v1226 = vpop.f32.mrf.mxu0
  %v1227 = vadd.f32 0.0, %v1226
  %1228 = vmatmul.bf16.gmra.mxu0 %v1136
  %v1229 = vpop.f32.mrf.mxu0
  %v1230 = vadd.f32 0.0, %v1229
  %v1231 = vpop.f32.mrf.mxu0
  %v1232 = vadd.f32 0.0, %v1231
  %1233 = vmatmul.bf16.gmra.mxu0 %v1137
  %v1234 = vpop.f32.mrf.mxu0
  %v1235 = vadd.f32 0.0, %v1234
  %v1236 = vpop.f32.mrf.mxu0
  %v1237 = vadd.f32 0.0, %v1236
  %1238 = vmatmul.bf16.gmra.mxu0 %v1138
  %v1239 = vpop.f32.mrf.mxu0
  %v1240 = vadd.f32 0.0, %v1239
  %v1241 = vpop.f32.mrf.mxu0
  %v1242 = vadd.f32 0.0, %v1241
  %1243 = vmatmul.bf16.gmra.mxu0 %v1139
  %v1244 = vpop.f32.mrf.mxu0
  %v1245 = vadd.f32 0.0, %v1244
  %v1246 = vpop.f32.mrf.mxu0
  %v1247 = vadd.f32 0.0, %v1246
  %1248 = vmatmul.bf16.gmra.mxu0 %v1140
  %v1249 = vpop.f32.mrf.mxu0
  %v1250 = vadd.f32 0.0, %v1249
  %v1251 = vpop.f32.mrf.mxu0
  %v1252 = vadd.f32 0.0, %v1251
  %1253 = vdwg.mxu0
  %1262 = vmatpush.bf16.msra.mxu0 %v1180
  %1263 = vmatpush.bf16.msra.mxu0 %v1179
  %1264 = vmatpush.bf16.msra.mxu0 %v1178
  %1265 = vmatpush.bf16.msra.mxu0 %v1177
  %1266 = vmatpush.bf16.msra.mxu0 %v1176
  %1267 = vmatpush.bf16.msra.mxu0 %v1175
  %1268 = vmatpush.bf16.msra.mxu0 %v1174
  %1269 = vmatpush.bf16.msra.mxu0 %v1173
  %1270 = vmatmul.bf16.gmra.mxu0 %v852
  %v1271 = vpop.f32.mrf.mxu0
  %v1272 = vadd.f32 %v1215, %v1271
  %v1273 = vpop.f32.mrf.mxu0
  %v1274 = vadd.f32 %v1217, %v1273
  %1275 = vmatmul.bf16.gmra.mxu0 %v853
  %v1276 = vpop.f32.mrf.mxu0
  %v1277 = vadd.f32 %v1220, %v1276
  %v1278 = vpop.f32.mrf.mxu0
  %v1279 = vadd.f32 %v1222, %v1278
  %1280 = vmatmul.bf16.gmra.mxu0 %v854
  %v1281 = vpop.f32.mrf.mxu0
  %v1282 = vadd.f32 %v1225, %v1281
  %v1283 = vpop.f32.mrf.mxu0
  %v1284 = vadd.f32 %v1227, %v1283
  %1285 = vmatmul.bf16.gmra.mxu0 %v855
  %v1286 = vpop.f32.mrf.mxu0
  %v1287 = vadd.f32 %v1230, %v1286
  %v1288 = vpop.f32.mrf.mxu0
  %v1289 = vadd.f32 %v1232, %v1288
  %1290 = vmatmul.bf16.gmra.mxu0 %v856
  %v1291 = vpop.f32.mrf.mxu0
  %v1292 = vadd.f32 %v1235, %v1291
  %v1293 = vpop.f32.mrf.mxu0
  %v1294 = vadd.f32 %v1237, %v1293
  %1295 = vmatmul.bf16.gmra.mxu0 %v857
  %v1296 = vpop.f32.mrf.mxu0
  %v1297 = vadd.f32 %v1240, %v1296
  %v1298 = vpop.f32.mrf.mxu0
  %v1299 = vadd.f32 %v1242, %v1298
  %1300 = vmatmul.bf16.gmra.mxu0 %v858
  %v1301 = vpop.f32.mrf.mxu0
  %v1302 = vadd.f32 %v1245, %v1301
  %v1303 = vpop.f32.mrf.mxu0
  %v1304 = vadd.f32 %v1247, %v1303
  %1305 = vmatmul.bf16.gmra.mxu0 %v859
  %v1306 = vpop.f32.mrf.mxu0
  %v1307 = vadd.f32 %v1250, %v1306
  %v1308 = vpop.f32.mrf.mxu0
  %v1309 = vadd.f32 %v1252, %v1308
  %1310 = vdwg.mxu0
  %1311 = vrot.lane.b32.xlu0 %v586, 112
  %v1312 = vpop.permute.xlu0 %1311
  %1313 = vrot.lane.b32.xlu0 %v587, 112
  %v1314 = vpop.permute.xlu0 %1313
  %1315 = vrot.lane.b32.xlu0 %v588, 112
  %v1316 = vpop.permute.xlu0 %1315
  %1317 = vrot.lane.b32.xlu0 %v589, 112
  %v1318 = vpop.permute.xlu0 %1317
  %1319 = vrot.lane.b32.xlu0 %v590, 112
  %v1320 = vpop.permute.xlu0 %1319
  %1321 = vrot.lane.b32.xlu0 %v591, 112
  %v1322 = vpop.permute.xlu0 %1321
  %1323 = vrot.lane.b32.xlu0 %v592, 112
  %v1324 = vpop.permute.xlu0 %1323
  %1325 = vrot.lane.b32.xlu0 %v593, 112
  %v1326 = vpop.permute.xlu0 %1325
  %1327 = vrot.lane.b32.xlu0 %v586, 80
  %v1328 = vpop.permute.xlu0 %1327
  %1329 = vrot.lane.b32.xlu0 %v587, 80
  %v1330 = vpop.permute.xlu0 %1329
  %1331 = vrot.lane.b32.xlu0 %v588, 80
  %v1332 = vpop.permute.xlu0 %1331
  %1333 = vrot.lane.b32.xlu0 %v589, 80
  %v1334 = vpop.permute.xlu0 %1333
  %1335 = vrot.lane.b32.xlu0 %v590, 80
  %v1336 = vpop.permute.xlu0 %1335
  %1337 = vrot.lane.b32.xlu0 %v591, 80
  %v1338 = vpop.permute.xlu0 %1337
  %1339 = vrot.lane.b32.xlu0 %v592, 80
  %v1340 = vpop.permute.xlu0 %1339
  %1341 = vrot.lane.b32.xlu0 %v593, 80
  %v1342 = vpop.permute.xlu0 %1341
  %v1344 = vsel %vm610, %v1312, 0
  %v1347 = vsel %vm610, %v1314, 0
  %v1350 = vsel %vm610, %v1316, 0
  %v1353 = vsel %vm610, %v1318, 0
  %v1356 = vsel %vm610, %v1320, 0
  %v1359 = vsel %vm610, %v1322, 0
  %v1362 = vsel %vm610, %v1324, 0
  %v1365 = vsel %vm610, %v1326, 0
  %v1368 = vsel %vm610, %v1328, 0
  %v1371 = vsel %vm610, %v1330, 0
  %v1374 = vsel %vm610, %v1332, 0
  %v1377 = vsel %vm610, %v1334, 0
  %v1380 = vsel %vm610, %v1336, 0
  %v1383 = vsel %vm610, %v1338, 0
  %v1386 = vsel %vm610, %v1340, 0
  %v1389 = vsel %vm610, %v1342, 0
  %1391 = vmatpush.bf16.xpose.msra.mxu0 %v1389
  %1392 = vmatpush.bf16.xpose.msra.mxu0 %v1386
  %1393 = vmatpush.bf16.xpose.msra.mxu0 %v1383
  %1394 = vmatpush.bf16.xpose.msra.mxu0 %v1380
  %1395 = vmatpush.bf16.xpose.msra.mxu0 %v1377
  %1396 = vmatpush.bf16.xpose.msra.mxu0 %v1374
  %1397 = vmatpush.bf16.xpose.msra.mxu0 %v1371
  %1398 = vmatpush.bf16.xpose.msra.mxu0 %v1368
  %1399 = vmatmul.bf16.gmra.mxu0 %v1344
  %v1400 = vpop.f32.mrf.mxu0
  %v1401 = vadd.f32 %v99, %v1400
  %v1402 = vpop.f32.mrf.mxu0
  %v1403 = vadd.f32 %v99, %v1402
  %1404 = vmatmul.bf16.gmra.mxu0 %v1347
  %v1405 = vpop.f32.mrf.mxu0
  %v1406 = vadd.f32 %v99, %v1405
  %v1407 = vpop.f32.mrf.mxu0
  %v1408 = vadd.f32 %v99, %v1407
  %1409 = vmatmul.bf16.gmra.mxu0 %v1350
  %v1410 = vpop.f32.mrf.mxu0
  %v1411 = vadd.f32 %v99, %v1410
  %v1412 = vpop.f32.mrf.mxu0
  %v1413 = vadd.f32 %v99, %v1412
  %1414 = vmatmul.bf16.gmra.mxu0 %v1353
  %v1415 = vpop.f32.mrf.mxu0
  %v1416 = vadd.f32 %v99, %v1415
  %v1417 = vpop.f32.mrf.mxu0
  %v1418 = vadd.f32 %v99, %v1417
  %1419 = vmatmul.bf16.gmra.mxu0 %v1356
  %v1420 = vpop.f32.mrf.mxu0
  %v1421 = vadd.f32 %v99, %v1420
  %v1422 = vpop.f32.mrf.mxu0
  %v1423 = vadd.f32 %v99, %v1422
  %1424 = vmatmul.bf16.gmra.mxu0 %v1359
  %v1425 = vpop.f32.mrf.mxu0
  %v1426 = vadd.f32 %v99, %v1425
  %v1427 = vpop.f32.mrf.mxu0
  %v1428 = vadd.f32 %v99, %v1427
  %1429 = vmatmul.bf16.gmra.mxu0 %v1362
  %v1430 = vpop.f32.mrf.mxu0
  %v1431 = vadd.f32 %v99, %v1430
  %v1432 = vpop.f32.mrf.mxu0
  %v1433 = vadd.f32 %v99, %v1432
  %1434 = vmatmul.bf16.gmra.mxu0 %v1365
  %v1435 = vpop.f32.mrf.mxu0
  %v1436 = vadd.f32 %v99, %v1435
  %v1437 = vpop.f32.mrf.mxu0
  %v1438 = vadd.f32 %v99, %v1437
  %1439 = vdwg.mxu0
  %1440 = vmax.xlane.f32.xlu0 %v1401
  %v1441 = vpop.xlane.xlu0 %1440
  %1442 = vmax.xlane.f32.xlu0 %v1403
  %v1443 = vpop.xlane.xlu0 %1442
  %1444 = vmax.xlane.f32.xlu0 %v1406
  %v1445 = vpop.xlane.xlu0 %1444
  %1446 = vmax.xlane.f32.xlu0 %v1408
  %v1447 = vpop.xlane.xlu0 %1446
  %1448 = vmax.xlane.f32.xlu0 %v1411
  %v1449 = vpop.xlane.xlu0 %1448
  %1450 = vmax.xlane.f32.xlu0 %v1413
  %v1451 = vpop.xlane.xlu0 %1450
  %1452 = vmax.xlane.f32.xlu0 %v1416
  %v1453 = vpop.xlane.xlu0 %1452
  %1454 = vmax.xlane.f32.xlu0 %v1418
  %v1455 = vpop.xlane.xlu0 %1454
  %1456 = vmax.xlane.f32.xlu0 %v1421
  %v1457 = vpop.xlane.xlu0 %1456
  %1458 = vmax.xlane.f32.xlu0 %v1423
  %v1459 = vpop.xlane.xlu0 %1458
  %1460 = vmax.xlane.f32.xlu0 %v1426
  %v1461 = vpop.xlane.xlu0 %1460
  %1462 = vmax.xlane.f32.xlu0 %v1428
  %v1463 = vpop.xlane.xlu0 %1462
  %1464 = vmax.xlane.f32.xlu0 %v1431
  %v1465 = vpop.xlane.xlu0 %1464
  %1466 = vmax.xlane.f32.xlu0 %v1433
  %v1467 = vpop.xlane.xlu0 %1466
  %1468 = vmax.xlane.f32.xlu0 %v1436
  %v1469 = vpop.xlane.xlu0 %1468
  %1470 = vmax.xlane.f32.xlu0 %v1438
  %v1471 = vpop.xlane.xlu0 %1470
  %v1472 = vsub.f32 %v1401, %v1441
  %v1473 = vsub.f32 %v1403, %v1443
  %v1474 = vsub.f32 %v1406, %v1445
  %v1475 = vsub.f32 %v1408, %v1447
  %v1476 = vsub.f32 %v1411, %v1449
  %v1477 = vsub.f32 %v1413, %v1451
  %v1478 = vsub.f32 %v1416, %v1453
  %v1479 = vsub.f32 %v1418, %v1455
  %v1480 = vsub.f32 %v1421, %v1457
  %v1481 = vsub.f32 %v1423, %v1459
  %v1482 = vsub.f32 %v1426, %v1461
  %v1483 = vsub.f32 %v1428, %v1463
  %v1484 = vsub.f32 %v1431, %v1465
  %v1485 = vsub.f32 %v1433, %v1467
  %v1486 = vsub.f32 %v1436, %v1469
  %v1487 = vsub.f32 %v1438, %v1471
  %v1488 = vmul.f32 %v1472, 1.442695
  %v1489 = vpow.pop %v1488
  %v1490 = vmul.f32 %v1473, 1.442695
  %v1491 = vpow.pop %v1490
  %v1492 = vmul.f32 %v1474, 1.442695
  %v1493 = vpow.pop %v1492
  %v1494 = vmul.f32 %v1475, 1.442695
  %v1495 = vpow.pop %v1494
  %v1496 = vmul.f32 %v1476, 1.442695
  %v1497 = vpow.pop %v1496
  %v1498 = vmul.f32 %v1477, 1.442695
  %v1499 = vpow.pop %v1498
  %v1500 = vmul.f32 %v1478, 1.442695
  %v1501 = vpow.pop %v1500
  %v1502 = vmul.f32 %v1479, 1.442695
  %v1503 = vpow.pop %v1502
  %v1504 = vmul.f32 %v1480, 1.442695
  %v1505 = vpow.pop %v1504
  %v1506 = vmul.f32 %v1481, 1.442695
  %v1507 = vpow.pop %v1506
  %v1508 = vmul.f32 %v1482, 1.442695
  %v1509 = vpow.pop %v1508
  %v1510 = vmul.f32 %v1483, 1.442695
  %v1511 = vpow.pop %v1510
  %v1512 = vmul.f32 %v1484, 1.442695
  %v1513 = vpow.pop %v1512
  %v1514 = vmul.f32 %v1485, 1.442695
  %v1515 = vpow.pop %v1514
  %v1516 = vmul.f32 %v1486, 1.442695
  %v1517 = vpow.pop %v1516
  %v1518 = vmul.f32 %v1487, 1.442695
  %v1519 = vpow.pop %v1518
  %1520 = vadd.xlane.f32.xlu0 %v1489
  %v1521 = vpop.xlane.xlu0 %1520
  %1522 = vadd.xlane.f32.xlu0 %v1491
  %v1523 = vpop.xlane.xlu0 %1522
  %1524 = vadd.xlane.f32.xlu0 %v1493
  %v1525 = vpop.xlane.xlu0 %1524
  %1526 = vadd.xlane.f32.xlu0 %v1495
  %v1527 = vpop.xlane.xlu0 %1526
  %1528 = vadd.xlane.f32.xlu0 %v1497
  %v1529 = vpop.xlane.xlu0 %1528
  %1530 = vadd.xlane.f32.xlu0 %v1499
  %v1531 = vpop.xlane.xlu0 %1530
  %1532 = vadd.xlane.f32.xlu0 %v1501
  %v1533 = vpop.xlane.xlu0 %1532
  %1534 = vadd.xlane.f32.xlu0 %v1503
  %v1535 = vpop.xlane.xlu0 %1534
  %1536 = vadd.xlane.f32.xlu0 %v1505
  %v1537 = vpop.xlane.xlu0 %1536
  %1538 = vadd.xlane.f32.xlu0 %v1507
  %v1539 = vpop.xlane.xlu0 %1538
  %1540 = vadd.xlane.f32.xlu0 %v1509
  %v1541 = vpop.xlane.xlu0 %1540
  %1542 = vadd.xlane.f32.xlu0 %v1511
  %v1543 = vpop.xlane.xlu0 %1542
  %1544 = vadd.xlane.f32.xlu0 %v1513
  %v1545 = vpop.xlane.xlu0 %1544
  %1546 = vadd.xlane.f32.xlu0 %v1515
  %v1547 = vpop.xlane.xlu0 %1546
  %1548 = vadd.xlane.f32.xlu0 %v1517
  %v1549 = vpop.xlane.xlu0 %1548
  %1550 = vadd.xlane.f32.xlu0 %v1519
  %v1551 = vpop.xlane.xlu0 %1550
  %v1552 = vrcp.pop %v1521
  %v1553 = vrcp.pop %v1523
  %v1554 = vrcp.pop %v1525
  %v1555 = vrcp.pop %v1527
  %v1556 = vrcp.pop %v1529
  %v1557 = vrcp.pop %v1531
  %v1558 = vrcp.pop %v1533
  %v1559 = vrcp.pop %v1535
  %v1560 = vrcp.pop %v1537
  %v1561 = vrcp.pop %v1539
  %v1562 = vrcp.pop %v1541
  %v1563 = vrcp.pop %v1543
  %v1564 = vrcp.pop %v1545
  %v1565 = vrcp.pop %v1547
  %v1566 = vrcp.pop %v1549
  %v1567 = vrcp.pop %v1551
  %v1568 = vmul.f32 %v1489, %v1552
  %v1569 = vmul.f32 %v1491, %v1553
  %v1570 = vmul.f32 %v1493, %v1554
  %v1571 = vmul.f32 %v1495, %v1555
  %v1572 = vmul.f32 %v1497, %v1556
  %v1573 = vmul.f32 %v1499, %v1557
  %v1574 = vmul.f32 %v1501, %v1558
  %v1575 = vmul.f32 %v1503, %v1559
  %v1576 = vmul.f32 %v1505, %v1560
  %v1577 = vmul.f32 %v1507, %v1561
  %v1578 = vmul.f32 %v1509, %v1562
  %v1579 = vmul.f32 %v1511, %v1563
  %v1580 = vmul.f32 %v1513, %v1564
  %v1581 = vmul.f32 %v1515, %v1565
  %v1582 = vmul.f32 %v1517, %v1566
  %v1583 = vmul.f32 %v1519, %v1567
  %v1584 = vpack.c.bf16 %v1569, %v1568
  %v1585 = vpack.c.bf16 %v1571, %v1570
  %v1586 = vpack.c.bf16 %v1573, %v1572
  %v1587 = vpack.c.bf16 %v1575, %v1574
  %v1588 = vpack.c.bf16 %v1577, %v1576
  %v1589 = vpack.c.bf16 %v1579, %v1578
  %v1590 = vpack.c.bf16 %v1581, %v1580
  %v1591 = vpack.c.bf16 %v1583, %v1582
  %1592 = vrot.lane.b32.xlu0 %v1173, 64
  %v1593 = vpop.permute.xlu0 %1592
  %1594 = vrot.lane.b32.xlu0 %v1174, 64
  %v1595 = vpop.permute.xlu0 %1594
  %1596 = vrot.lane.b32.xlu0 %v1175, 64
  %v1597 = vpop.permute.xlu0 %1596
  %1598 = vrot.lane.b32.xlu0 %v1176, 64
  %v1599 = vpop.permute.xlu0 %1598
  %1600 = vrot.lane.b32.xlu0 %v1177, 64
  %v1601 = vpop.permute.xlu0 %1600
  %1602 = vrot.lane.b32.xlu0 %v1178, 64
  %v1603 = vpop.permute.xlu0 %1602
  %1604 = vrot.lane.b32.xlu0 %v1179, 64
  %v1605 = vpop.permute.xlu0 %1604
  %1606 = vrot.lane.b32.xlu0 %v1180, 64
  %v1607 = vpop.permute.xlu0 %1606
  %1616 = vmatpush.bf16.msra.mxu0 %v1607
  %1617 = vmatpush.bf16.msra.mxu0 %v1605
  %1618 = vmatpush.bf16.msra.mxu0 %v1603
  %1619 = vmatpush.bf16.msra.mxu0 %v1601
  %1620 = vmatpush.bf16.msra.mxu0 %v1599
  %1621 = vmatpush.bf16.msra.mxu0 %v1597
  %1622 = vmatpush.bf16.msra.mxu0 %v1595
  %1623 = vmatpush.bf16.msra.mxu0 %v1593
  %1624 = vmatmul.bf16.gmra.mxu0 %v1584
  %v1625 = vpop.f32.mrf.mxu0
  %v1626 = vadd.f32 0.0, %v1625
  %v1627 = vpop.f32.mrf.mxu0
  %v1628 = vadd.f32 0.0, %v1627
  %1629 = vmatmul.bf16.gmra.mxu0 %v1585
  %v1630 = vpop.f32.mrf.mxu0
  %v1631 = vadd.f32 0.0, %v1630
  %v1632 = vpop.f32.mrf.mxu0
  %v1633 = vadd.f32 0.0, %v1632
  %1634 = vmatmul.bf16.gmra.mxu0 %v1586
  %v1635 = vpop.f32.mrf.mxu0
  %v1636 = vadd.f32 0.0, %v1635
  %v1637 = vpop.f32.mrf.mxu0
  %v1638 = vadd.f32 0.0, %v1637
  %1639 = vmatmul.bf16.gmra.mxu0 %v1587
  %v1640 = vpop.f32.mrf.mxu0
  %v1641 = vadd.f32 0.0, %v1640
  %v1642 = vpop.f32.mrf.mxu0
  %v1643 = vadd.f32 0.0, %v1642
  %1644 = vmatmul.bf16.gmra.mxu0 %v1588
  %v1645 = vpop.f32.mrf.mxu0
  %v1646 = vadd.f32 0.0, %v1645
  %v1647 = vpop.f32.mrf.mxu0
  %v1648 = vadd.f32 0.0, %v1647
  %1649 = vmatmul.bf16.gmra.mxu0 %v1589
  %v1650 = vpop.f32.mrf.mxu0
  %v1651 = vadd.f32 0.0, %v1650
  %v1652 = vpop.f32.mrf.mxu0
  %v1653 = vadd.f32 0.0, %v1652
  %1654 = vmatmul.bf16.gmra.mxu0 %v1590
  %v1655 = vpop.f32.mrf.mxu0
  %v1656 = vadd.f32 0.0, %v1655
  %v1657 = vpop.f32.mrf.mxu0
  %v1658 = vadd.f32 0.0, %v1657
  %1659 = vmatmul.bf16.gmra.mxu0 %v1591
  %v1660 = vpop.f32.mrf.mxu0
  %v1661 = vadd.f32 0.0, %v1660
  %v1662 = vpop.f32.mrf.mxu0
  %v1663 = vadd.f32 0.0, %v1662
  %1664 = vdwg.mxu0
  %v1665 = vadd.f32 %v1272, %v1626
  %v1666 = vadd.f32 %v1274, %v1628
  %v1667 = vadd.f32 %v1277, %v1631
  %v1668 = vadd.f32 %v1279, %v1633
  %v1669 = vadd.f32 %v1282, %v1636
  %v1670 = vadd.f32 %v1284, %v1638
  %v1671 = vadd.f32 %v1287, %v1641
  %v1672 = vadd.f32 %v1289, %v1643
  %v1673 = vadd.f32 %v1292, %v1646
  %v1674 = vadd.f32 %v1294, %v1648
  %v1675 = vadd.f32 %v1297, %v1651
  %v1676 = vadd.f32 %v1299, %v1653
  %v1677 = vadd.f32 %v1302, %v1656
  %v1678 = vadd.f32 %v1304, %v1658
  %v1679 = vadd.f32 %v1307, %v1661
  %v1680 = vadd.f32 %v1309, %v1663
  %1681 = vrot.lane.b32.xlu0 %v586, 104
  %v1682 = vpop.permute.xlu0 %1681
  %1683 = vrot.lane.b32.xlu0 %v587, 104
  %v1684 = vpop.permute.xlu0 %1683
  %1685 = vrot.lane.b32.xlu0 %v588, 104
  %v1686 = vpop.permute.xlu0 %1685
  %1687 = vrot.lane.b32.xlu0 %v589, 104
  %v1688 = vpop.permute.xlu0 %1687
  %1689 = vrot.lane.b32.xlu0 %v590, 104
  %v1690 = vpop.permute.xlu0 %1689
  %1691 = vrot.lane.b32.xlu0 %v591, 104
  %v1692 = vpop.permute.xlu0 %1691
  %1693 = vrot.lane.b32.xlu0 %v592, 104
  %v1694 = vpop.permute.xlu0 %1693
  %1695 = vrot.lane.b32.xlu0 %v593, 104
  %v1696 = vpop.permute.xlu0 %1695
  %1697 = vrot.lane.b32.xlu0 %v586, 72
  %v1698 = vpop.permute.xlu0 %1697
  %1699 = vrot.lane.b32.xlu0 %v587, 72
  %v1700 = vpop.permute.xlu0 %1699
  %1701 = vrot.lane.b32.xlu0 %v588, 72
  %v1702 = vpop.permute.xlu0 %1701
  %1703 = vrot.lane.b32.xlu0 %v589, 72
  %v1704 = vpop.permute.xlu0 %1703
  %1705 = vrot.lane.b32.xlu0 %v590, 72
  %v1706 = vpop.permute.xlu0 %1705
  %1707 = vrot.lane.b32.xlu0 %v591, 72
  %v1708 = vpop.permute.xlu0 %1707
  %1709 = vrot.lane.b32.xlu0 %v592, 72
  %v1710 = vpop.permute.xlu0 %1709
  %1711 = vrot.lane.b32.xlu0 %v593, 72
  %v1712 = vpop.permute.xlu0 %1711
  %v1714 = vsel %vm610, %v1682, 0
  %v1717 = vsel %vm610, %v1684, 0
  %v1720 = vsel %vm610, %v1686, 0
  %v1723 = vsel %vm610, %v1688, 0
  %v1726 = vsel %vm610, %v1690, 0
  %v1729 = vsel %vm610, %v1692, 0
  %v1732 = vsel %vm610, %v1694, 0
  %v1735 = vsel %vm610, %v1696, 0
  %v1738 = vsel %vm610, %v1698, 0
  %v1741 = vsel %vm610, %v1700, 0
  %v1744 = vsel %vm610, %v1702, 0
  %v1747 = vsel %vm610, %v1704, 0
  %v1750 = vsel %vm610, %v1706, 0
  %v1753 = vsel %vm610, %v1708, 0
  %v1756 = vsel %vm610, %v1710, 0
  %v1759 = vsel %vm610, %v1712, 0
  %1761 = vmatpush.bf16.xpose.msra.mxu0 %v1759
  %1762 = vmatpush.bf16.xpose.msra.mxu0 %v1756
  %1763 = vmatpush.bf16.xpose.msra.mxu0 %v1753
  %1764 = vmatpush.bf16.xpose.msra.mxu0 %v1750
  %1765 = vmatpush.bf16.xpose.msra.mxu0 %v1747
  %1766 = vmatpush.bf16.xpose.msra.mxu0 %v1744
  %1767 = vmatpush.bf16.xpose.msra.mxu0 %v1741
  %1768 = vmatpush.bf16.xpose.msra.mxu0 %v1738
  %1769 = vmatmul.bf16.gmra.mxu0 %v1714
  %v1770 = vpop.f32.mrf.mxu0
  %v1771 = vadd.f32 %v99, %v1770
  %v1772 = vpop.f32.mrf.mxu0
  %v1773 = vadd.f32 %v99, %v1772
  %1774 = vmatmul.bf16.gmra.mxu0 %v1717
  %v1775 = vpop.f32.mrf.mxu0
  %v1776 = vadd.f32 %v99, %v1775
  %v1777 = vpop.f32.mrf.mxu0
  %v1778 = vadd.f32 %v99, %v1777
  %1779 = vmatmul.bf16.gmra.mxu0 %v1720
  %v1780 = vpop.f32.mrf.mxu0
  %v1781 = vadd.f32 %v99, %v1780
  %v1782 = vpop.f32.mrf.mxu0
  %v1783 = vadd.f32 %v99, %v1782
  %1784 = vmatmul.bf16.gmra.mxu0 %v1723
  %v1785 = vpop.f32.mrf.mxu0
  %v1786 = vadd.f32 %v99, %v1785
  %v1787 = vpop.f32.mrf.mxu0
  %v1788 = vadd.f32 %v99, %v1787
  %1789 = vmatmul.bf16.gmra.mxu0 %v1726
  %v1790 = vpop.f32.mrf.mxu0
  %v1791 = vadd.f32 %v99, %v1790
  %v1792 = vpop.f32.mrf.mxu0
  %v1793 = vadd.f32 %v99, %v1792
  %1794 = vmatmul.bf16.gmra.mxu0 %v1729
  %v1795 = vpop.f32.mrf.mxu0
  %v1796 = vadd.f32 %v99, %v1795
  %v1797 = vpop.f32.mrf.mxu0
  %v1798 = vadd.f32 %v99, %v1797
  %1799 = vmatmul.bf16.gmra.mxu0 %v1732
  %v1800 = vpop.f32.mrf.mxu0
  %v1801 = vadd.f32 %v99, %v1800
  %v1802 = vpop.f32.mrf.mxu0
  %v1803 = vadd.f32 %v99, %v1802
  %1804 = vmatmul.bf16.gmra.mxu0 %v1735
  %v1805 = vpop.f32.mrf.mxu0
  %v1806 = vadd.f32 %v99, %v1805
  %v1807 = vpop.f32.mrf.mxu0
  %v1808 = vadd.f32 %v99, %v1807
  %1809 = vdwg.mxu0
  %1810 = vmax.xlane.f32.xlu0 %v1771
  %v1811 = vpop.xlane.xlu0 %1810
  %1812 = vmax.xlane.f32.xlu0 %v1773
  %v1813 = vpop.xlane.xlu0 %1812
  %1814 = vmax.xlane.f32.xlu0 %v1776
  %v1815 = vpop.xlane.xlu0 %1814
  %1816 = vmax.xlane.f32.xlu0 %v1778
  %v1817 = vpop.xlane.xlu0 %1816
  %1818 = vmax.xlane.f32.xlu0 %v1781
  %v1819 = vpop.xlane.xlu0 %1818
  %1820 = vmax.xlane.f32.xlu0 %v1783
  %v1821 = vpop.xlane.xlu0 %1820
  %1822 = vmax.xlane.f32.xlu0 %v1786
  %v1823 = vpop.xlane.xlu0 %1822
  %1824 = vmax.xlane.f32.xlu0 %v1788
  %v1825 = vpop.xlane.xlu0 %1824
  %1826 = vmax.xlane.f32.xlu0 %v1791
  %v1827 = vpop.xlane.xlu0 %1826
  %1828 = vmax.xlane.f32.xlu0 %v1793
  %v1829 = vpop.xlane.xlu0 %1828
  %1830 = vmax.xlane.f32.xlu0 %v1796
  %v1831 = vpop.xlane.xlu0 %1830
  %1832 = vmax.xlane.f32.xlu0 %v1798
  %v1833 = vpop.xlane.xlu0 %1832
  %1834 = vmax.xlane.f32.xlu0 %v1801
  %v1835 = vpop.xlane.xlu0 %1834
  %1836 = vmax.xlane.f32.xlu0 %v1803
  %v1837 = vpop.xlane.xlu0 %1836
  %1838 = vmax.xlane.f32.xlu0 %v1806
  %v1839 = vpop.xlane.xlu0 %1838
  %1840 = vmax.xlane.f32.xlu0 %v1808
  %v1841 = vpop.xlane.xlu0 %1840
  %v1842 = vsub.f32 %v1771, %v1811
  %v1843 = vsub.f32 %v1773, %v1813
  %v1844 = vsub.f32 %v1776, %v1815
  %v1845 = vsub.f32 %v1778, %v1817
  %v1846 = vsub.f32 %v1781, %v1819
  %v1847 = vsub.f32 %v1783, %v1821
  %v1848 = vsub.f32 %v1786, %v1823
  %v1849 = vsub.f32 %v1788, %v1825
  %v1850 = vsub.f32 %v1791, %v1827
  %v1851 = vsub.f32 %v1793, %v1829
  %v1852 = vsub.f32 %v1796, %v1831
  %v1853 = vsub.f32 %v1798, %v1833
  %v1854 = vsub.f32 %v1801, %v1835
  %v1855 = vsub.f32 %v1803, %v1837
  %v1856 = vsub.f32 %v1806, %v1839
  %v1857 = vsub.f32 %v1808, %v1841
  %v1858 = vmul.f32 %v1842, 1.442695
  %v1859 = vpow.pop %v1858
  %v1860 = vmul.f32 %v1843, 1.442695
  %v1861 = vpow.pop %v1860
  %v1862 = vmul.f32 %v1844, 1.442695
  %v1863 = vpow.pop %v1862
  %v1864 = vmul.f32 %v1845, 1.442695
  %v1865 = vpow.pop %v1864
  %v1866 = vmul.f32 %v1846, 1.442695
  %v1867 = vpow.pop %v1866
  %v1868 = vmul.f32 %v1847, 1.442695
  %v1869 = vpow.pop %v1868
  %v1870 = vmul.f32 %v1848, 1.442695
  %v1871 = vpow.pop %v1870
  %v1872 = vmul.f32 %v1849, 1.442695
  %v1873 = vpow.pop %v1872
  %v1874 = vmul.f32 %v1850, 1.442695
  %v1875 = vpow.pop %v1874
  %v1876 = vmul.f32 %v1851, 1.442695
  %v1877 = vpow.pop %v1876
  %v1878 = vmul.f32 %v1852, 1.442695
  %v1879 = vpow.pop %v1878
  %v1880 = vmul.f32 %v1853, 1.442695
  %v1881 = vpow.pop %v1880
  %v1882 = vmul.f32 %v1854, 1.442695
  %v1883 = vpow.pop %v1882
  %v1884 = vmul.f32 %v1855, 1.442695
  %v1885 = vpow.pop %v1884
  %v1886 = vmul.f32 %v1856, 1.442695
  %v1887 = vpow.pop %v1886
  %v1888 = vmul.f32 %v1857, 1.442695
  %v1889 = vpow.pop %v1888
  %1890 = vadd.xlane.f32.xlu0 %v1859
  %v1891 = vpop.xlane.xlu0 %1890
  %1892 = vadd.xlane.f32.xlu0 %v1861
  %v1893 = vpop.xlane.xlu0 %1892
  %1894 = vadd.xlane.f32.xlu0 %v1863
  %v1895 = vpop.xlane.xlu0 %1894
  %1896 = vadd.xlane.f32.xlu0 %v1865
  %v1897 = vpop.xlane.xlu0 %1896
  %1898 = vadd.xlane.f32.xlu0 %v1867
  %v1899 = vpop.xlane.xlu0 %1898
  %1900 = vadd.xlane.f32.xlu0 %v1869
  %v1901 = vpop.xlane.xlu0 %1900
  %1902 = vadd.xlane.f32.xlu0 %v1871
  %v1903 = vpop.xlane.xlu0 %1902
  %1904 = vadd.xlane.f32.xlu0 %v1873
  %v1905 = vpop.xlane.xlu0 %1904
  %1906 = vadd.xlane.f32.xlu0 %v1875
  %v1907 = vpop.xlane.xlu0 %1906
  %1908 = vadd.xlane.f32.xlu0 %v1877
  %v1909 = vpop.xlane.xlu0 %1908
  %1910 = vadd.xlane.f32.xlu0 %v1879
  %v1911 = vpop.xlane.xlu0 %1910
  %1912 = vadd.xlane.f32.xlu0 %v1881
  %v1913 = vpop.xlane.xlu0 %1912
  %1914 = vadd.xlane.f32.xlu0 %v1883
  %v1915 = vpop.xlane.xlu0 %1914
  %1916 = vadd.xlane.f32.xlu0 %v1885
  %v1917 = vpop.xlane.xlu0 %1916
  %1918 = vadd.xlane.f32.xlu0 %v1887
  %v1919 = vpop.xlane.xlu0 %1918
  %1920 = vadd.xlane.f32.xlu0 %v1889
  %v1921 = vpop.xlane.xlu0 %1920
  %v1922 = vrcp.pop %v1891
  %v1923 = vrcp.pop %v1893
  %v1924 = vrcp.pop %v1895
  %v1925 = vrcp.pop %v1897
  %v1926 = vrcp.pop %v1899
  %v1927 = vrcp.pop %v1901
  %v1928 = vrcp.pop %v1903
  %v1929 = vrcp.pop %v1905
  %v1930 = vrcp.pop %v1907
  %v1931 = vrcp.pop %v1909
  %v1932 = vrcp.pop %v1911
  %v1933 = vrcp.pop %v1913
  %v1934 = vrcp.pop %v1915
  %v1935 = vrcp.pop %v1917
  %v1936 = vrcp.pop %v1919
  %v1937 = vrcp.pop %v1921
  %v1938 = vmul.f32 %v1859, %v1922
  %v1939 = vmul.f32 %v1861, %v1923
  %v1940 = vmul.f32 %v1863, %v1924
  %v1941 = vmul.f32 %v1865, %v1925
  %v1942 = vmul.f32 %v1867, %v1926
  %v1943 = vmul.f32 %v1869, %v1927
  %v1944 = vmul.f32 %v1871, %v1928
  %v1945 = vmul.f32 %v1873, %v1929
  %v1946 = vmul.f32 %v1875, %v1930
  %v1947 = vmul.f32 %v1877, %v1931
  %v1948 = vmul.f32 %v1879, %v1932
  %v1949 = vmul.f32 %v1881, %v1933
  %v1950 = vmul.f32 %v1883, %v1934
  %v1951 = vmul.f32 %v1885, %v1935
  %v1952 = vmul.f32 %v1887, %v1936
  %v1953 = vmul.f32 %v1889, %v1937
  %v1954 = vpack.c.bf16 %v1939, %v1938
  %v1955 = vpack.c.bf16 %v1941, %v1940
  %v1956 = vpack.c.bf16 %v1943, %v1942
  %v1957 = vpack.c.bf16 %v1945, %v1944
  %v1958 = vpack.c.bf16 %v1947, %v1946
  %v1959 = vpack.c.bf16 %v1949, %v1948
  %v1960 = vpack.c.bf16 %v1951, %v1950
  %v1961 = vpack.c.bf16 %v1953, %v1952
  %1962 = vrot.lane.b32.xlu0 %v1173, 32
  %v1963 = vpop.permute.xlu0 %1962
  %1964 = vrot.lane.b32.xlu0 %v1174, 32
  %v1965 = vpop.permute.xlu0 %1964
  %1966 = vrot.lane.b32.xlu0 %v1175, 32
  %v1967 = vpop.permute.xlu0 %1966
  %1968 = vrot.lane.b32.xlu0 %v1176, 32
  %v1969 = vpop.permute.xlu0 %1968
  %1970 = vrot.lane.b32.xlu0 %v1177, 32
  %v1971 = vpop.permute.xlu0 %1970
  %1972 = vrot.lane.b32.xlu0 %v1178, 32
  %v1973 = vpop.permute.xlu0 %1972
  %1974 = vrot.lane.b32.xlu0 %v1179, 32
  %v1975 = vpop.permute.xlu0 %1974
  %1976 = vrot.lane.b32.xlu0 %v1180, 32
  %v1977 = vpop.permute.xlu0 %1976
  %1986 = vmatpush.bf16.msra.mxu0 %v1977
  %1987 = vmatpush.bf16.msra.mxu0 %v1975
  %1988 = vmatpush.bf16.msra.mxu0 %v1973
  %1989 = vmatpush.bf16.msra.mxu0 %v1971
  %1990 = vmatpush.bf16.msra.mxu0 %v1969
  %1991 = vmatpush.bf16.msra.mxu0 %v1967
  %1992 = vmatpush.bf16.msra.mxu0 %v1965
  %1993 = vmatpush.bf16.msra.mxu0 %v1963
  %1994 = vmatmul.bf16.gmra.mxu0 %v1954
  %v1995 = vpop.f32.mrf.mxu0
  %v1996 = vadd.f32 0.0, %v1995
  %v1997 = vpop.f32.mrf.mxu0
  %v1998 = vadd.f32 0.0, %v1997
  %1999 = vmatmul.bf16.gmra.mxu0 %v1955
  %v2000 = vpop.f32.mrf.mxu0
  %v2001 = vadd.f32 0.0, %v2000
  %v2002 = vpop.f32.mrf.mxu0
  %v2003 = vadd.f32 0.0, %v2002
  %2004 = vmatmul.bf16.gmra.mxu0 %v1956
  %v2005 = vpop.f32.mrf.mxu0
  %v2006 = vadd.f32 0.0, %v2005
  %v2007 = vpop.f32.mrf.mxu0
  %v2008 = vadd.f32 0.0, %v2007
  %2009 = vmatmul.bf16.gmra.mxu0 %v1957
  %v2010 = vpop.f32.mrf.mxu0
  %v2011 = vadd.f32 0.0, %v2010
  %v2012 = vpop.f32.mrf.mxu0
  %v2013 = vadd.f32 0.0, %v2012
  %2014 = vmatmul.bf16.gmra.mxu0 %v1958
  %v2015 = vpop.f32.mrf.mxu0
  %v2016 = vadd.f32 0.0, %v2015
  %v2017 = vpop.f32.mrf.mxu0
  %v2018 = vadd.f32 0.0, %v2017
  %2019 = vmatmul.bf16.gmra.mxu0 %v1959
  %v2020 = vpop.f32.mrf.mxu0
  %v2021 = vadd.f32 0.0, %v2020
  %v2022 = vpop.f32.mrf.mxu0
  %v2023 = vadd.f32 0.0, %v2022
  %2024 = vmatmul.bf16.gmra.mxu0 %v1960
  %v2025 = vpop.f32.mrf.mxu0
  %v2026 = vadd.f32 0.0, %v2025
  %v2027 = vpop.f32.mrf.mxu0
  %v2028 = vadd.f32 0.0, %v2027
  %2029 = vmatmul.bf16.gmra.mxu0 %v1961
  %v2030 = vpop.f32.mrf.mxu0
  %v2031 = vadd.f32 0.0, %v2030
  %v2032 = vpop.f32.mrf.mxu0
  %v2033 = vadd.f32 0.0, %v2032
  %2034 = vdwg.mxu0
  %v2035 = vadd.f32 %v1665, %v1996
  %v2036 = vadd.f32 %v1666, %v1998
  %v2037 = vadd.f32 %v1667, %v2001
  %v2038 = vadd.f32 %v1668, %v2003
  %v2039 = vadd.f32 %v1669, %v2006
  %v2040 = vadd.f32 %v1670, %v2008
  %v2041 = vadd.f32 %v1671, %v2011
  %v2042 = vadd.f32 %v1672, %v2013
  %v2043 = vadd.f32 %v1673, %v2016
  %v2044 = vadd.f32 %v1674, %v2018
  %v2045 = vadd.f32 %v1675, %v2021
  %v2046 = vadd.f32 %v1676, %v2023
  %v2047 = vadd.f32 %v1677, %v2026
  %v2048 = vadd.f32 %v1678, %v2028
  %v2049 = vadd.f32 %v1679, %v2031
  %v2050 = vadd.f32 %v1680, %v2033
  %v2067 = vunpack.c.l.b16 %v341
  %v2068 = vunpack.c.l.b16 %v342
  %v2069 = vunpack.c.l.b16 %v343
  %v2070 = vunpack.c.l.b16 %v344
  %v2071 = vunpack.c.l.b16 %v345
  %v2072 = vunpack.c.l.b16 %v346
  %v2073 = vunpack.c.l.b16 %v347
  %v2074 = vunpack.c.l.b16 %v348
  %v2075 = vunpack.c.l.b16 %v349
  %v2076 = vunpack.c.l.b16 %v350
  %v2077 = vunpack.c.l.b16 %v351
  %v2078 = vunpack.c.l.b16 %v352
  %v2079 = vunpack.c.l.b16 %v353
  %v2080 = vunpack.c.l.b16 %v354
  %v2081 = vunpack.c.l.b16 %v355
  %v2082 = vunpack.c.l.b16 %v356
  %v2083 = vpack.c.b16 %v2068, %v2067
  %v2084 = vpack.c.b16 %v2070, %v2069
  %v2085 = vpack.c.b16 %v2072, %v2071
  %v2086 = vpack.c.b16 %v2074, %v2073
  %v2087 = vpack.c.b16 %v2076, %v2075
  %v2088 = vpack.c.b16 %v2078, %v2077
  %v2089 = vpack.c.b16 %v2080, %v2079
  %v2090 = vpack.c.b16 %v2082, %v2081
  %2091 = vrot.lane.b32.xlu0 %v2083, 96
  %v2092 = vpop.permute.xlu0 %2091
  %2093 = vrot.lane.b32.xlu0 %v2084, 96
  %v2094 = vpop.permute.xlu0 %2093
  %2095 = vrot.lane.b32.xlu0 %v2085, 96
  %v2096 = vpop.permute.xlu0 %2095
  %2097 = vrot.lane.b32.xlu0 %v2086, 96
  %v2098 = vpop.permute.xlu0 %2097
  %2099 = vrot.lane.b32.xlu0 %v2087, 96
  %v2100 = vpop.permute.xlu0 %2099
  %2101 = vrot.lane.b32.xlu0 %v2088, 96
  %v2102 = vpop.permute.xlu0 %2101
  %2103 = vrot.lane.b32.xlu0 %v2089, 96
  %v2104 = vpop.permute.xlu0 %2103
  %2105 = vrot.lane.b32.xlu0 %v2090, 96
  %v2106 = vpop.permute.xlu0 %2105
  %v2108 = vsel %vm610, %v2083, 0
  %v2111 = vsel %vm610, %v2084, 0
  %v2114 = vsel %vm610, %v2085, 0
  %v2117 = vsel %vm610, %v2086, 0
  %v2120 = vsel %vm610, %v2087, 0
  %v2123 = vsel %vm610, %v2088, 0
  %v2126 = vsel %vm610, %v2089, 0
  %v2129 = vsel %vm610, %v2090, 0
  %v2132 = vsel %vm610, %v2092, 0
  %v2135 = vsel %vm610, %v2094, 0
  %v2138 = vsel %vm610, %v2096, 0
  %v2141 = vsel %vm610, %v2098, 0
  %v2144 = vsel %vm610, %v2100, 0
  %v2147 = vsel %vm610, %v2102, 0
  %v2150 = vsel %vm610, %v2104, 0
  %v2153 = vsel %vm610, %v2106, 0
  %2155 = vmatpush.bf16.xpose.msra.mxu0 %v2153
  %2156 = vmatpush.bf16.xpose.msra.mxu0 %v2150
  %2157 = vmatpush.bf16.xpose.msra.mxu0 %v2147
  %2158 = vmatpush.bf16.xpose.msra.mxu0 %v2144
  %2159 = vmatpush.bf16.xpose.msra.mxu0 %v2141
  %2160 = vmatpush.bf16.xpose.msra.mxu0 %v2138
  %2161 = vmatpush.bf16.xpose.msra.mxu0 %v2135
  %2162 = vmatpush.bf16.xpose.msra.mxu0 %v2132
  %2163 = vmatmul.bf16.gmra.mxu0 %v2108
  %v2164 = vpop.f32.mrf.mxu0
  %v2165 = vadd.f32 %v104, %v2164
  %v2166 = vpop.f32.mrf.mxu0
  %v2167 = vadd.f32 %v104, %v2166
  %2168 = vmatmul.bf16.gmra.mxu0 %v2111
  %v2169 = vpop.f32.mrf.mxu0
  %v2170 = vadd.f32 %v104, %v2169
  %v2171 = vpop.f32.mrf.mxu0
  %v2172 = vadd.f32 %v104, %v2171
  %2173 = vmatmul.bf16.gmra.mxu0 %v2114
  %v2174 = vpop.f32.mrf.mxu0
  %v2175 = vadd.f32 %v104, %v2174
  %v2176 = vpop.f32.mrf.mxu0
  %v2177 = vadd.f32 %v104, %v2176
  %2178 = vmatmul.bf16.gmra.mxu0 %v2117
  %v2179 = vpop.f32.mrf.mxu0
  %v2180 = vadd.f32 %v104, %v2179
  %v2181 = vpop.f32.mrf.mxu0
  %v2182 = vadd.f32 %v104, %v2181
  %2183 = vmatmul.bf16.gmra.mxu0 %v2120
  %v2184 = vpop.f32.mrf.mxu0
  %v2185 = vadd.f32 %v104, %v2184
  %v2186 = vpop.f32.mrf.mxu0
  %v2187 = vadd.f32 %v104, %v2186
  %2188 = vmatmul.bf16.gmra.mxu0 %v2123
  %v2189 = vpop.f32.mrf.mxu0
  %v2190 = vadd.f32 %v104, %v2189
  %v2191 = vpop.f32.mrf.mxu0
  %v2192 = vadd.f32 %v104, %v2191
  %2193 = vmatmul.bf16.gmra.mxu0 %v2126
  %v2194 = vpop.f32.mrf.mxu0
  %v2195 = vadd.f32 %v104, %v2194
  %v2196 = vpop.f32.mrf.mxu0
  %v2197 = vadd.f32 %v104, %v2196
  %2198 = vmatmul.bf16.gmra.mxu0 %v2129
  %v2199 = vpop.f32.mrf.mxu0
  %v2200 = vadd.f32 %v104, %v2199
  %v2201 = vpop.f32.mrf.mxu0
  %v2202 = vadd.f32 %v104, %v2201
  %2203 = vdwg.mxu0
  %2204 = vmax.xlane.f32.xlu0 %v2165
  %v2205 = vpop.xlane.xlu0 %2204
  %2206 = vmax.xlane.f32.xlu0 %v2167
  %v2207 = vpop.xlane.xlu0 %2206
  %2208 = vmax.xlane.f32.xlu0 %v2170
  %v2209 = vpop.xlane.xlu0 %2208
  %2210 = vmax.xlane.f32.xlu0 %v2172
  %v2211 = vpop.xlane.xlu0 %2210
  %2212 = vmax.xlane.f32.xlu0 %v2175
  %v2213 = vpop.xlane.xlu0 %2212
  %2214 = vmax.xlane.f32.xlu0 %v2177
  %v2215 = vpop.xlane.xlu0 %2214
  %2216 = vmax.xlane.f32.xlu0 %v2180
  %v2217 = vpop.xlane.xlu0 %2216
  %2218 = vmax.xlane.f32.xlu0 %v2182
  %v2219 = vpop.xlane.xlu0 %2218
  %2220 = vmax.xlane.f32.xlu0 %v2185
  %v2221 = vpop.xlane.xlu0 %2220
  %2222 = vmax.xlane.f32.xlu0 %v2187
  %v2223 = vpop.xlane.xlu0 %2222
  %2224 = vmax.xlane.f32.xlu0 %v2190
  %v2225 = vpop.xlane.xlu0 %2224
  %2226 = vmax.xlane.f32.xlu0 %v2192
  %v2227 = vpop.xlane.xlu0 %2226
  %2228 = vmax.xlane.f32.xlu0 %v2195
  %v2229 = vpop.xlane.xlu0 %2228
  %2230 = vmax.xlane.f32.xlu0 %v2197
  %v2231 = vpop.xlane.xlu0 %2230
  %2232 = vmax.xlane.f32.xlu0 %v2200
  %v2233 = vpop.xlane.xlu0 %2232
  %2234 = vmax.xlane.f32.xlu0 %v2202
  %v2235 = vpop.xlane.xlu0 %2234
  %v2236 = vsub.f32 %v2165, %v2205
  %v2237 = vsub.f32 %v2167, %v2207
  %v2238 = vsub.f32 %v2170, %v2209
  %v2239 = vsub.f32 %v2172, %v2211
  %v2240 = vsub.f32 %v2175, %v2213
  %v2241 = vsub.f32 %v2177, %v2215
  %v2242 = vsub.f32 %v2180, %v2217
  %v2243 = vsub.f32 %v2182, %v2219
  %v2244 = vsub.f32 %v2185, %v2221
  %v2245 = vsub.f32 %v2187, %v2223
  %v2246 = vsub.f32 %v2190, %v2225
  %v2247 = vsub.f32 %v2192, %v2227
  %v2248 = vsub.f32 %v2195, %v2229
  %v2249 = vsub.f32 %v2197, %v2231
  %v2250 = vsub.f32 %v2200, %v2233
  %v2251 = vsub.f32 %v2202, %v2235
  %v2252 = vmul.f32 %v2236, 1.442695
  %v2253 = vpow.pop %v2252
  %v2254 = vmul.f32 %v2237, 1.442695
  %v2255 = vpow.pop %v2254
  %v2256 = vmul.f32 %v2238, 1.442695
  %v2257 = vpow.pop %v2256
  %v2258 = vmul.f32 %v2239, 1.442695
  %v2259 = vpow.pop %v2258
  %v2260 = vmul.f32 %v2240, 1.442695
  %v2261 = vpow.pop %v2260
  %v2262 = vmul.f32 %v2241, 1.442695
  %v2263 = vpow.pop %v2262
  %v2264 = vmul.f32 %v2242, 1.442695
  %v2265 = vpow.pop %v2264
  %v2266 = vmul.f32 %v2243, 1.442695
  %v2267 = vpow.pop %v2266
  %v2268 = vmul.f32 %v2244, 1.442695
  %v2269 = vpow.pop %v2268
  %v2270 = vmul.f32 %v2245, 1.442695
  %v2271 = vpow.pop %v2270
  %v2272 = vmul.f32 %v2246, 1.442695
  %v2273 = vpow.pop %v2272
  %v2274 = vmul.f32 %v2247, 1.442695
  %v2275 = vpow.pop %v2274
  %v2276 = vmul.f32 %v2248, 1.442695
  %v2277 = vpow.pop %v2276
  %v2278 = vmul.f32 %v2249, 1.442695
  %v2279 = vpow.pop %v2278
  %v2280 = vmul.f32 %v2250, 1.442695
  %v2281 = vpow.pop %v2280
  %v2282 = vmul.f32 %v2251, 1.442695
  %v2283 = vpow.pop %v2282
  %2284 = vadd.xlane.f32.xlu0 %v2253
  %v2285 = vpop.xlane.xlu0 %2284
  %2286 = vadd.xlane.f32.xlu0 %v2255
  %v2287 = vpop.xlane.xlu0 %2286
  %2288 = vadd.xlane.f32.xlu0 %v2257
  %v2289 = vpop.xlane.xlu0 %2288
  %2290 = vadd.xlane.f32.xlu0 %v2259
  %v2291 = vpop.xlane.xlu0 %2290
  %2292 = vadd.xlane.f32.xlu0 %v2261
  %v2293 = vpop.xlane.xlu0 %2292
  %2294 = vadd.xlane.f32.xlu0 %v2263
  %v2295 = vpop.xlane.xlu0 %2294
  %2296 = vadd.xlane.f32.xlu0 %v2265
  %v2297 = vpop.xlane.xlu0 %2296
  %2298 = vadd.xlane.f32.xlu0 %v2267
  %v2299 = vpop.xlane.xlu0 %2298
  %2300 = vadd.xlane.f32.xlu0 %v2269
  %v2301 = vpop.xlane.xlu0 %2300
  %2302 = vadd.xlane.f32.xlu0 %v2271
  %v2303 = vpop.xlane.xlu0 %2302
  %2304 = vadd.xlane.f32.xlu0 %v2273
  %v2305 = vpop.xlane.xlu0 %2304
  %2306 = vadd.xlane.f32.xlu0 %v2275
  %v2307 = vpop.xlane.xlu0 %2306
  %2308 = vadd.xlane.f32.xlu0 %v2277
  %v2309 = vpop.xlane.xlu0 %2308
  %2310 = vadd.xlane.f32.xlu0 %v2279
  %v2311 = vpop.xlane.xlu0 %2310
  %2312 = vadd.xlane.f32.xlu0 %v2281
  %v2313 = vpop.xlane.xlu0 %2312
  %2314 = vadd.xlane.f32.xlu0 %v2283
  %v2315 = vpop.xlane.xlu0 %2314
  %v2316 = vrcp.pop %v2285
  %v2317 = vrcp.pop %v2287
  %v2318 = vrcp.pop %v2289
  %v2319 = vrcp.pop %v2291
  %v2320 = vrcp.pop %v2293
  %v2321 = vrcp.pop %v2295
  %v2322 = vrcp.pop %v2297
  %v2323 = vrcp.pop %v2299
  %v2324 = vrcp.pop %v2301
  %v2325 = vrcp.pop %v2303
  %v2326 = vrcp.pop %v2305
  %v2327 = vrcp.pop %v2307
  %v2328 = vrcp.pop %v2309
  %v2329 = vrcp.pop %v2311
  %v2330 = vrcp.pop %v2313
  %v2331 = vrcp.pop %v2315
  %v2332 = vmul.f32 %v2253, %v2316
  %v2333 = vmul.f32 %v2255, %v2317
  %v2334 = vmul.f32 %v2257, %v2318
  %v2335 = vmul.f32 %v2259, %v2319
  %v2336 = vmul.f32 %v2261, %v2320
  %v2337 = vmul.f32 %v2263, %v2321
  %v2338 = vmul.f32 %v2265, %v2322
  %v2339 = vmul.f32 %v2267, %v2323
  %v2340 = vmul.f32 %v2269, %v2324
  %v2341 = vmul.f32 %v2271, %v2325
  %v2342 = vmul.f32 %v2273, %v2326
  %v2343 = vmul.f32 %v2275, %v2327
  %v2344 = vmul.f32 %v2277, %v2328
  %v2345 = vmul.f32 %v2279, %v2329
  %v2346 = vmul.f32 %v2281, %v2330
  %v2347 = vmul.f32 %v2283, %v2331
  %v2348 = vpack.c.bf16 %v2333, %v2332
  %v2349 = vpack.c.bf16 %v2335, %v2334
  %v2350 = vpack.c.bf16 %v2337, %v2336
  %v2351 = vpack.c.bf16 %v2339, %v2338
  %v2352 = vpack.c.bf16 %v2341, %v2340
  %v2353 = vpack.c.bf16 %v2343, %v2342
  %v2354 = vpack.c.bf16 %v2345, %v2344
  %v2355 = vpack.c.bf16 %v2347, %v2346
  %2356 = vrot.lane.b32.xlu0 %v2083, 120
  %v2357 = vpop.permute.xlu0 %2356
  %2358 = vrot.lane.b32.xlu0 %v2084, 120
  %v2359 = vpop.permute.xlu0 %2358
  %2360 = vrot.lane.b32.xlu0 %v2085, 120
  %v2361 = vpop.permute.xlu0 %2360
  %2362 = vrot.lane.b32.xlu0 %v2086, 120
  %v2363 = vpop.permute.xlu0 %2362
  %2364 = vrot.lane.b32.xlu0 %v2087, 120
  %v2365 = vpop.permute.xlu0 %2364
  %2366 = vrot.lane.b32.xlu0 %v2088, 120
  %v2367 = vpop.permute.xlu0 %2366
  %2368 = vrot.lane.b32.xlu0 %v2089, 120
  %v2369 = vpop.permute.xlu0 %2368
  %2370 = vrot.lane.b32.xlu0 %v2090, 120
  %v2371 = vpop.permute.xlu0 %2370
  %2372 = vrot.lane.b32.xlu0 %v2083, 88
  %v2373 = vpop.permute.xlu0 %2372
  %2374 = vrot.lane.b32.xlu0 %v2084, 88
  %v2375 = vpop.permute.xlu0 %2374
  %2376 = vrot.lane.b32.xlu0 %v2085, 88
  %v2377 = vpop.permute.xlu0 %2376
  %2378 = vrot.lane.b32.xlu0 %v2086, 88
  %v2379 = vpop.permute.xlu0 %2378
  %2380 = vrot.lane.b32.xlu0 %v2087, 88
  %v2381 = vpop.permute.xlu0 %2380
  %2382 = vrot.lane.b32.xlu0 %v2088, 88
  %v2383 = vpop.permute.xlu0 %2382
  %2384 = vrot.lane.b32.xlu0 %v2089, 88
  %v2385 = vpop.permute.xlu0 %2384
  %2386 = vrot.lane.b32.xlu0 %v2090, 88
  %v2387 = vpop.permute.xlu0 %2386
  %v2389 = vsel %vm610, %v2357, 0
  %v2392 = vsel %vm610, %v2359, 0
  %v2395 = vsel %vm610, %v2361, 0
  %v2398 = vsel %vm610, %v2363, 0
  %v2401 = vsel %vm610, %v2365, 0
  %v2404 = vsel %vm610, %v2367, 0
  %v2407 = vsel %vm610, %v2369, 0
  %v2410 = vsel %vm610, %v2371, 0
  %v2413 = vsel %vm610, %v2373, 0
  %v2416 = vsel %vm610, %v2375, 0
  %v2419 = vsel %vm610, %v2377, 0
  %v2422 = vsel %vm610, %v2379, 0
  %v2425 = vsel %vm610, %v2381, 0
  %v2428 = vsel %vm610, %v2383, 0
  %v2431 = vsel %vm610, %v2385, 0
  %v2434 = vsel %vm610, %v2387, 0
  %2436 = vmatpush.bf16.xpose.msra.mxu0 %v2434
  %2437 = vmatpush.bf16.xpose.msra.mxu0 %v2431
  %2438 = vmatpush.bf16.xpose.msra.mxu0 %v2428
  %2439 = vmatpush.bf16.xpose.msra.mxu0 %v2425
  %2440 = vmatpush.bf16.xpose.msra.mxu0 %v2422
  %2441 = vmatpush.bf16.xpose.msra.mxu0 %v2419
  %2442 = vmatpush.bf16.xpose.msra.mxu0 %v2416
  %2443 = vmatpush.bf16.xpose.msra.mxu0 %v2413
  %2444 = vmatmul.bf16.gmra.mxu0 %v2389
  %v2445 = vpop.f32.mrf.mxu0
  %v2446 = vadd.f32 %v104, %v2445
  %v2447 = vpop.f32.mrf.mxu0
  %v2448 = vadd.f32 %v104, %v2447
  %2449 = vmatmul.bf16.gmra.mxu0 %v2392
  %v2450 = vpop.f32.mrf.mxu0
  %v2451 = vadd.f32 %v104, %v2450
  %v2452 = vpop.f32.mrf.mxu0
  %v2453 = vadd.f32 %v104, %v2452
  %2454 = vmatmul.bf16.gmra.mxu0 %v2395
  %v2455 = vpop.f32.mrf.mxu0
  %v2456 = vadd.f32 %v104, %v2455
  %v2457 = vpop.f32.mrf.mxu0
  %v2458 = vadd.f32 %v104, %v2457
  %2459 = vmatmul.bf16.gmra.mxu0 %v2398
  %v2460 = vpop.f32.mrf.mxu0
  %v2461 = vadd.f32 %v104, %v2460
  %v2462 = vpop.f32.mrf.mxu0
  %v2463 = vadd.f32 %v104, %v2462
  %2464 = vmatmul.bf16.gmra.mxu0 %v2401
  %v2465 = vpop.f32.mrf.mxu0
  %v2466 = vadd.f32 %v104, %v2465
  %v2467 = vpop.f32.mrf.mxu0
  %v2468 = vadd.f32 %v104, %v2467
  %2469 = vmatmul.bf16.gmra.mxu0 %v2404
  %v2470 = vpop.f32.mrf.mxu0
  %v2471 = vadd.f32 %v104, %v2470
  %v2472 = vpop.f32.mrf.mxu0
  %v2473 = vadd.f32 %v104, %v2472
  %2474 = vmatmul.bf16.gmra.mxu0 %v2407
  %v2475 = vpop.f32.mrf.mxu0
  %v2476 = vadd.f32 %v104, %v2475
  %v2477 = vpop.f32.mrf.mxu0
  %v2478 = vadd.f32 %v104, %v2477
  %2479 = vmatmul.bf16.gmra.mxu0 %v2410
  %v2480 = vpop.f32.mrf.mxu0
  %v2481 = vadd.f32 %v104, %v2480
  %v2482 = vpop.f32.mrf.mxu0
  %v2483 = vadd.f32 %v104, %v2482
  %2484 = vdwg.mxu0
  %2485 = vmax.xlane.f32.xlu0 %v2446
  %v2486 = vpop.xlane.xlu0 %2485
  %2487 = vmax.xlane.f32.xlu0 %v2448
  %v2488 = vpop.xlane.xlu0 %2487
  %2489 = vmax.xlane.f32.xlu0 %v2451
  %v2490 = vpop.xlane.xlu0 %2489
  %2491 = vmax.xlane.f32.xlu0 %v2453
  %v2492 = vpop.xlane.xlu0 %2491
  %2493 = vmax.xlane.f32.xlu0 %v2456
  %v2494 = vpop.xlane.xlu0 %2493
  %2495 = vmax.xlane.f32.xlu0 %v2458
  %v2496 = vpop.xlane.xlu0 %2495
  %2497 = vmax.xlane.f32.xlu0 %v2461
  %v2498 = vpop.xlane.xlu0 %2497
  %2499 = vmax.xlane.f32.xlu0 %v2463
  %v2500 = vpop.xlane.xlu0 %2499
  %2501 = vmax.xlane.f32.xlu0 %v2466
  %v2502 = vpop.xlane.xlu0 %2501
  %2503 = vmax.xlane.f32.xlu0 %v2468
  %v2504 = vpop.xlane.xlu0 %2503
  %2505 = vmax.xlane.f32.xlu0 %v2471
  %v2506 = vpop.xlane.xlu0 %2505
  %2507 = vmax.xlane.f32.xlu0 %v2473
  %v2508 = vpop.xlane.xlu0 %2507
  %2509 = vmax.xlane.f32.xlu0 %v2476
  %v2510 = vpop.xlane.xlu0 %2509
  %2511 = vmax.xlane.f32.xlu0 %v2478
  %v2512 = vpop.xlane.xlu0 %2511
  %2513 = vmax.xlane.f32.xlu0 %v2481
  %v2514 = vpop.xlane.xlu0 %2513
  %2515 = vmax.xlane.f32.xlu0 %v2483
  %v2516 = vpop.xlane.xlu0 %2515
  %v2517 = vsub.f32 %v2446, %v2486
  %v2518 = vsub.f32 %v2448, %v2488
  %v2519 = vsub.f32 %v2451, %v2490
  %v2520 = vsub.f32 %v2453, %v2492
  %v2521 = vsub.f32 %v2456, %v2494
  %v2522 = vsub.f32 %v2458, %v2496
  %v2523 = vsub.f32 %v2461, %v2498
  %v2524 = vsub.f32 %v2463, %v2500
  %v2525 = vsub.f32 %v2466, %v2502
  %v2526 = vsub.f32 %v2468, %v2504
  %v2527 = vsub.f32 %v2471, %v2506
  %v2528 = vsub.f32 %v2473, %v2508
  %v2529 = vsub.f32 %v2476, %v2510
  %v2530 = vsub.f32 %v2478, %v2512
  %v2531 = vsub.f32 %v2481, %v2514
  %v2532 = vsub.f32 %v2483, %v2516
  %v2533 = vmul.f32 %v2517, 1.442695
  %v2534 = vpow.pop %v2533
  %v2535 = vmul.f32 %v2518, 1.442695
  %v2536 = vpow.pop %v2535
  %v2537 = vmul.f32 %v2519, 1.442695
  %v2538 = vpow.pop %v2537
  %v2539 = vmul.f32 %v2520, 1.442695
  %v2540 = vpow.pop %v2539
  %v2541 = vmul.f32 %v2521, 1.442695
  %v2542 = vpow.pop %v2541
  %v2543 = vmul.f32 %v2522, 1.442695
  %v2544 = vpow.pop %v2543
  %v2545 = vmul.f32 %v2523, 1.442695
  %v2546 = vpow.pop %v2545
  %v2547 = vmul.f32 %v2524, 1.442695
  %v2548 = vpow.pop %v2547
  %v2549 = vmul.f32 %v2525, 1.442695
  %v2550 = vpow.pop %v2549
  %v2551 = vmul.f32 %v2526, 1.442695
  %v2552 = vpow.pop %v2551
  %v2553 = vmul.f32 %v2527, 1.442695
  %v2554 = vpow.pop %v2553
  %v2555 = vmul.f32 %v2528, 1.442695
  %v2556 = vpow.pop %v2555
  %v2557 = vmul.f32 %v2529, 1.442695
  %v2558 = vpow.pop %v2557
  %v2559 = vmul.f32 %v2530, 1.442695
  %v2560 = vpow.pop %v2559
  %v2561 = vmul.f32 %v2531, 1.442695
  %v2562 = vpow.pop %v2561
  %v2563 = vmul.f32 %v2532, 1.442695
  %v2564 = vpow.pop %v2563
  %2565 = vadd.xlane.f32.xlu0 %v2534
  %v2566 = vpop.xlane.xlu0 %2565
  %2567 = vadd.xlane.f32.xlu0 %v2536
  %v2568 = vpop.xlane.xlu0 %2567
  %2569 = vadd.xlane.f32.xlu0 %v2538
  %v2570 = vpop.xlane.xlu0 %2569
  %2571 = vadd.xlane.f32.xlu0 %v2540
  %v2572 = vpop.xlane.xlu0 %2571
  %2573 = vadd.xlane.f32.xlu0 %v2542
  %v2574 = vpop.xlane.xlu0 %2573
  %2575 = vadd.xlane.f32.xlu0 %v2544
  %v2576 = vpop.xlane.xlu0 %2575
  %2577 = vadd.xlane.f32.xlu0 %v2546
  %v2578 = vpop.xlane.xlu0 %2577
  %2579 = vadd.xlane.f32.xlu0 %v2548
  %v2580 = vpop.xlane.xlu0 %2579
  %2581 = vadd.xlane.f32.xlu0 %v2550
  %v2582 = vpop.xlane.xlu0 %2581
  %2583 = vadd.xlane.f32.xlu0 %v2552
  %v2584 = vpop.xlane.xlu0 %2583
  %2585 = vadd.xlane.f32.xlu0 %v2554
  %v2586 = vpop.xlane.xlu0 %2585
  %2587 = vadd.xlane.f32.xlu0 %v2556
  %v2588 = vpop.xlane.xlu0 %2587
  %2589 = vadd.xlane.f32.xlu0 %v2558
  %v2590 = vpop.xlane.xlu0 %2589
  %2591 = vadd.xlane.f32.xlu0 %v2560
  %v2592 = vpop.xlane.xlu0 %2591
  %2593 = vadd.xlane.f32.xlu0 %v2562
  %v2594 = vpop.xlane.xlu0 %2593
  %2595 = vadd.xlane.f32.xlu0 %v2564
  %v2596 = vpop.xlane.xlu0 %2595
  %v2597 = vrcp.pop %v2566
  %v2598 = vrcp.pop %v2568
  %v2599 = vrcp.pop %v2570
  %v2600 = vrcp.pop %v2572
  %v2601 = vrcp.pop %v2574
  %v2602 = vrcp.pop %v2576
  %v2603 = vrcp.pop %v2578
  %v2604 = vrcp.pop %v2580
  %v2605 = vrcp.pop %v2582
  %v2606 = vrcp.pop %v2584
  %v2607 = vrcp.pop %v2586
  %v2608 = vrcp.pop %v2588
  %v2609 = vrcp.pop %v2590
  %v2610 = vrcp.pop %v2592
  %v2611 = vrcp.pop %v2594
  %v2612 = vrcp.pop %v2596
  %v2613 = vmul.f32 %v2534, %v2597
  %v2614 = vmul.f32 %v2536, %v2598
  %v2615 = vmul.f32 %v2538, %v2599
  %v2616 = vmul.f32 %v2540, %v2600
  %v2617 = vmul.f32 %v2542, %v2601
  %v2618 = vmul.f32 %v2544, %v2602
  %v2619 = vmul.f32 %v2546, %v2603
  %v2620 = vmul.f32 %v2548, %v2604
  %v2621 = vmul.f32 %v2550, %v2605
  %v2622 = vmul.f32 %v2552, %v2606
  %v2623 = vmul.f32 %v2554, %v2607
  %v2624 = vmul.f32 %v2556, %v2608
  %v2625 = vmul.f32 %v2558, %v2609
  %v2626 = vmul.f32 %v2560, %v2610
  %v2627 = vmul.f32 %v2562, %v2611
  %v2628 = vmul.f32 %v2564, %v2612
  %v2629 = vpack.c.bf16 %v2614, %v2613
  %v2630 = vpack.c.bf16 %v2616, %v2615
  %v2631 = vpack.c.bf16 %v2618, %v2617
  %v2632 = vpack.c.bf16 %v2620, %v2619
  %v2633 = vpack.c.bf16 %v2622, %v2621
  %v2634 = vpack.c.bf16 %v2624, %v2623
  %v2635 = vpack.c.bf16 %v2626, %v2625
  %v2636 = vpack.c.bf16 %v2628, %v2627
  %v2653 = vunpack.c.l.b16 %v538
  %v2654 = vunpack.c.l.b16 %v539
  %v2655 = vunpack.c.l.b16 %v540
  %v2656 = vunpack.c.l.b16 %v541
  %v2657 = vunpack.c.l.b16 %v542
  %v2658 = vunpack.c.l.b16 %v543
  %v2659 = vunpack.c.l.b16 %v544
  %v2660 = vunpack.c.l.b16 %v545
  %v2661 = vunpack.c.l.b16 %v546
  %v2662 = vunpack.c.l.b16 %v547
  %v2663 = vunpack.c.l.b16 %v548
  %v2664 = vunpack.c.l.b16 %v549
  %v2665 = vunpack.c.l.b16 %v550
  %v2666 = vunpack.c.l.b16 %v551
  %v2667 = vunpack.c.l.b16 %v552
  %v2668 = vunpack.c.l.b16 %v553
  %v2669 = vpack.c.b16 %v2654, %v2653
  %v2670 = vpack.c.b16 %v2656, %v2655
  %v2671 = vpack.c.b16 %v2658, %v2657
  %v2672 = vpack.c.b16 %v2660, %v2659
  %v2673 = vpack.c.b16 %v2662, %v2661
  %v2674 = vpack.c.b16 %v2664, %v2663
  %v2675 = vpack.c.b16 %v2666, %v2665
  %v2676 = vpack.c.b16 %v2668, %v2667
  %2677 = vrot.lane.b32.xlu0 %v2669, 96
  %v2678 = vpop.permute.xlu0 %2677
  %2679 = vrot.lane.b32.xlu0 %v2670, 96
  %v2680 = vpop.permute.xlu0 %2679
  %2681 = vrot.lane.b32.xlu0 %v2671, 96
  %v2682 = vpop.permute.xlu0 %2681
  %2683 = vrot.lane.b32.xlu0 %v2672, 96
  %v2684 = vpop.permute.xlu0 %2683
  %2685 = vrot.lane.b32.xlu0 %v2673, 96
  %v2686 = vpop.permute.xlu0 %2685
  %2687 = vrot.lane.b32.xlu0 %v2674, 96
  %v2688 = vpop.permute.xlu0 %2687
  %2689 = vrot.lane.b32.xlu0 %v2675, 96
  %v2690 = vpop.permute.xlu0 %2689
  %2691 = vrot.lane.b32.xlu0 %v2676, 96
  %v2692 = vpop.permute.xlu0 %2691
  %2701 = vmatpush.bf16.msra.mxu0 %v2692
  %2702 = vmatpush.bf16.msra.mxu0 %v2690
  %2703 = vmatpush.bf16.msra.mxu0 %v2688
  %2704 = vmatpush.bf16.msra.mxu0 %v2686
  %2705 = vmatpush.bf16.msra.mxu0 %v2684
  %2706 = vmatpush.bf16.msra.mxu0 %v2682
  %2707 = vmatpush.bf16.msra.mxu0 %v2680
  %2708 = vmatpush.bf16.msra.mxu0 %v2678
  %2709 = vmatmul.bf16.gmra.mxu0 %v2629
  %v2710 = vpop.f32.mrf.mxu0
  %v2711 = vadd.f32 0.0, %v2710
  %v2712 = vpop.f32.mrf.mxu0
  %v2713 = vadd.f32 0.0, %v2712
  %2714 = vmatmul.bf16.gmra.mxu0 %v2630
  %v2715 = vpop.f32.mrf.mxu0
  %v2716 = vadd.f32 0.0, %v2715
  %v2717 = vpop.f32.mrf.mxu0
  %v2718 = vadd.f32 0.0, %v2717
  %2719 = vmatmul.bf16.gmra.mxu0 %v2631
  %v2720 = vpop.f32.mrf.mxu0
  %v2721 = vadd.f32 0.0, %v2720
  %v2722 = vpop.f32.mrf.mxu0
  %v2723 = vadd.f32 0.0, %v2722
  %2724 = vmatmul.bf16.gmra.mxu0 %v2632
  %v2725 = vpop.f32.mrf.mxu0
  %v2726 = vadd.f32 0.0, %v2725
  %v2727 = vpop.f32.mrf.mxu0
  %v2728 = vadd.f32 0.0, %v2727
  %2729 = vmatmul.bf16.gmra.mxu0 %v2633
  %v2730 = vpop.f32.mrf.mxu0
  %v2731 = vadd.f32 0.0, %v2730
  %v2732 = vpop.f32.mrf.mxu0
  %v2733 = vadd.f32 0.0, %v2732
  %2734 = vmatmul.bf16.gmra.mxu0 %v2634
  %v2735 = vpop.f32.mrf.mxu0
  %v2736 = vadd.f32 0.0, %v2735
  %v2737 = vpop.f32.mrf.mxu0
  %v2738 = vadd.f32 0.0, %v2737
  %2739 = vmatmul.bf16.gmra.mxu0 %v2635
  %v2740 = vpop.f32.mrf.mxu0
  %v2741 = vadd.f32 0.0, %v2740
  %v2742 = vpop.f32.mrf.mxu0
  %v2743 = vadd.f32 0.0, %v2742
  %2744 = vmatmul.bf16.gmra.mxu0 %v2636
  %v2745 = vpop.f32.mrf.mxu0
  %v2746 = vadd.f32 0.0, %v2745
  %v2747 = vpop.f32.mrf.mxu0
  %v2748 = vadd.f32 0.0, %v2747
  %2749 = vdwg.mxu0
  %2758 = vmatpush.bf16.msra.mxu0 %v2676
  %2759 = vmatpush.bf16.msra.mxu0 %v2675
  %2760 = vmatpush.bf16.msra.mxu0 %v2674
  %2761 = vmatpush.bf16.msra.mxu0 %v2673
  %2762 = vmatpush.bf16.msra.mxu0 %v2672
  %2763 = vmatpush.bf16.msra.mxu0 %v2671
  %2764 = vmatpush.bf16.msra.mxu0 %v2670
  %2765 = vmatpush.bf16.msra.mxu0 %v2669
  %2766 = vmatmul.bf16.gmra.mxu0 %v2348
  %v2767 = vpop.f32.mrf.mxu0
  %v2768 = vadd.f32 %v2711, %v2767
  %v2769 = vpop.f32.mrf.mxu0
  %v2770 = vadd.f32 %v2713, %v2769
  %2771 = vmatmul.bf16.gmra.mxu0 %v2349
  %v2772 = vpop.f32.mrf.mxu0
  %v2773 = vadd.f32 %v2716, %v2772
  %v2774 = vpop.f32.mrf.mxu0
  %v2775 = vadd.f32 %v2718, %v2774
  %2776 = vmatmul.bf16.gmra.mxu0 %v2350
  %v2777 = vpop.f32.mrf.mxu0
  %v2778 = vadd.f32 %v2721, %v2777
  %v2779 = vpop.f32.mrf.mxu0
  %v2780 = vadd.f32 %v2723, %v2779
  %2781 = vmatmul.bf16.gmra.mxu0 %v2351
  %v2782 = vpop.f32.mrf.mxu0
  %v2783 = vadd.f32 %v2726, %v2782
  %v2784 = vpop.f32.mrf.mxu0
  %v2785 = vadd.f32 %v2728, %v2784
  %2786 = vmatmul.bf16.gmra.mxu0 %v2352
  %v2787 = vpop.f32.mrf.mxu0
  %v2788 = vadd.f32 %v2731, %v2787
  %v2789 = vpop.f32.mrf.mxu0
  %v2790 = vadd.f32 %v2733, %v2789
  %2791 = vmatmul.bf16.gmra.mxu0 %v2353
  %v2792 = vpop.f32.mrf.mxu0
  %v2793 = vadd.f32 %v2736, %v2792
  %v2794 = vpop.f32.mrf.mxu0
  %v2795 = vadd.f32 %v2738, %v2794
  %2796 = vmatmul.bf16.gmra.mxu0 %v2354
  %v2797 = vpop.f32.mrf.mxu0
  %v2798 = vadd.f32 %v2741, %v2797
  %v2799 = vpop.f32.mrf.mxu0
  %v2800 = vadd.f32 %v2743, %v2799
  %2801 = vmatmul.bf16.gmra.mxu0 %v2355
  %v2802 = vpop.f32.mrf.mxu0
  %v2803 = vadd.f32 %v2746, %v2802
  %v2804 = vpop.f32.mrf.mxu0
  %v2805 = vadd.f32 %v2748, %v2804
  %2806 = vdwg.mxu0
  %2807 = vrot.lane.b32.xlu0 %v2083, 112
  %v2808 = vpop.permute.xlu0 %2807
  %2809 = vrot.lane.b32.xlu0 %v2084, 112
  %v2810 = vpop.permute.xlu0 %2809
  %2811 = vrot.lane.b32.xlu0 %v2085, 112
  %v2812 = vpop.permute.xlu0 %2811
  %2813 = vrot.lane.b32.xlu0 %v2086, 112
  %v2814 = vpop.permute.xlu0 %2813
  %2815 = vrot.lane.b32.xlu0 %v2087, 112
  %v2816 = vpop.permute.xlu0 %2815
  %2817 = vrot.lane.b32.xlu0 %v2088, 112
  %v2818 = vpop.permute.xlu0 %2817
  %2819 = vrot.lane.b32.xlu0 %v2089, 112
  %v2820 = vpop.permute.xlu0 %2819
  %2821 = vrot.lane.b32.xlu0 %v2090, 112
  %v2822 = vpop.permute.xlu0 %2821
  %2823 = vrot.lane.b32.xlu0 %v2083, 80
  %v2824 = vpop.permute.xlu0 %2823
  %2825 = vrot.lane.b32.xlu0 %v2084, 80
  %v2826 = vpop.permute.xlu0 %2825
  %2827 = vrot.lane.b32.xlu0 %v2085, 80
  %v2828 = vpop.permute.xlu0 %2827
  %2829 = vrot.lane.b32.xlu0 %v2086, 80
  %v2830 = vpop.permute.xlu0 %2829
  %2831 = vrot.lane.b32.xlu0 %v2087, 80
  %v2832 = vpop.permute.xlu0 %2831
  %2833 = vrot.lane.b32.xlu0 %v2088, 80
  %v2834 = vpop.permute.xlu0 %2833
  %2835 = vrot.lane.b32.xlu0 %v2089, 80
  %v2836 = vpop.permute.xlu0 %2835
  %2837 = vrot.lane.b32.xlu0 %v2090, 80
  %v2838 = vpop.permute.xlu0 %2837
  %v2840 = vsel %vm610, %v2808, 0
  %v2843 = vsel %vm610, %v2810, 0
  %v2846 = vsel %vm610, %v2812, 0
  %v2849 = vsel %vm610, %v2814, 0
  %v2852 = vsel %vm610, %v2816, 0
  %v2855 = vsel %vm610, %v2818, 0
  %v2858 = vsel %vm610, %v2820, 0
  %v2861 = vsel %vm610, %v2822, 0
  %v2864 = vsel %vm610, %v2824, 0
  %v2867 = vsel %vm610, %v2826, 0
  %v2870 = vsel %vm610, %v2828, 0
  %v2873 = vsel %vm610, %v2830, 0
  %v2876 = vsel %vm610, %v2832, 0
  %v2879 = vsel %vm610, %v2834, 0
  %v2882 = vsel %vm610, %v2836, 0
  %v2885 = vsel %vm610, %v2838, 0
  %2887 = vmatpush.bf16.xpose.msra.mxu0 %v2885
  %2888 = vmatpush.bf16.xpose.msra.mxu0 %v2882
  %2889 = vmatpush.bf16.xpose.msra.mxu0 %v2879
  %2890 = vmatpush.bf16.xpose.msra.mxu0 %v2876
  %2891 = vmatpush.bf16.xpose.msra.mxu0 %v2873
  %2892 = vmatpush.bf16.xpose.msra.mxu0 %v2870
  %2893 = vmatpush.bf16.xpose.msra.mxu0 %v2867
  %2894 = vmatpush.bf16.xpose.msra.mxu0 %v2864
  %2895 = vmatmul.bf16.gmra.mxu0 %v2840
  %v2896 = vpop.f32.mrf.mxu0
  %v2897 = vadd.f32 %v104, %v2896
  %v2898 = vpop.f32.mrf.mxu0
  %v2899 = vadd.f32 %v104, %v2898
  %2900 = vmatmul.bf16.gmra.mxu0 %v2843
  %v2901 = vpop.f32.mrf.mxu0
  %v2902 = vadd.f32 %v104, %v2901
  %v2903 = vpop.f32.mrf.mxu0
  %v2904 = vadd.f32 %v104, %v2903
  %2905 = vmatmul.bf16.gmra.mxu0 %v2846
  %v2906 = vpop.f32.mrf.mxu0
  %v2907 = vadd.f32 %v104, %v2906
  %v2908 = vpop.f32.mrf.mxu0
  %v2909 = vadd.f32 %v104, %v2908
  %2910 = vmatmul.bf16.gmra.mxu0 %v2849
  %v2911 = vpop.f32.mrf.mxu0
  %v2912 = vadd.f32 %v104, %v2911
  %v2913 = vpop.f32.mrf.mxu0
  %v2914 = vadd.f32 %v104, %v2913
  %2915 = vmatmul.bf16.gmra.mxu0 %v2852
  %v2916 = vpop.f32.mrf.mxu0
  %v2917 = vadd.f32 %v104, %v2916
  %v2918 = vpop.f32.mrf.mxu0
  %v2919 = vadd.f32 %v104, %v2918
  %2920 = vmatmul.bf16.gmra.mxu0 %v2855
  %v2921 = vpop.f32.mrf.mxu0
  %v2922 = vadd.f32 %v104, %v2921
  %v2923 = vpop.f32.mrf.mxu0
  %v2924 = vadd.f32 %v104, %v2923
  %2925 = vmatmul.bf16.gmra.mxu0 %v2858
  %v2926 = vpop.f32.mrf.mxu0
  %v2927 = vadd.f32 %v104, %v2926
  %v2928 = vpop.f32.mrf.mxu0
  %v2929 = vadd.f32 %v104, %v2928
  %2930 = vmatmul.bf16.gmra.mxu0 %v2861
  %v2931 = vpop.f32.mrf.mxu0
  %v2932 = vadd.f32 %v104, %v2931
  %v2933 = vpop.f32.mrf.mxu0
  %v2934 = vadd.f32 %v104, %v2933
  %2935 = vdwg.mxu0
  %2936 = vmax.xlane.f32.xlu0 %v2897
  %v2937 = vpop.xlane.xlu0 %2936
  %2938 = vmax.xlane.f32.xlu0 %v2899
  %v2939 = vpop.xlane.xlu0 %2938
  %2940 = vmax.xlane.f32.xlu0 %v2902
  %v2941 = vpop.xlane.xlu0 %2940
  %2942 = vmax.xlane.f32.xlu0 %v2904
  %v2943 = vpop.xlane.xlu0 %2942
  %2944 = vmax.xlane.f32.xlu0 %v2907
  %v2945 = vpop.xlane.xlu0 %2944
  %2946 = vmax.xlane.f32.xlu0 %v2909
  %v2947 = vpop.xlane.xlu0 %2946
  %2948 = vmax.xlane.f32.xlu0 %v2912
  %v2949 = vpop.xlane.xlu0 %2948
  %2950 = vmax.xlane.f32.xlu0 %v2914
  %v2951 = vpop.xlane.xlu0 %2950
  %2952 = vmax.xlane.f32.xlu0 %v2917
  %v2953 = vpop.xlane.xlu0 %2952
  %2954 = vmax.xlane.f32.xlu0 %v2919
  %v2955 = vpop.xlane.xlu0 %2954
  %2956 = vmax.xlane.f32.xlu0 %v2922
  %v2957 = vpop.xlane.xlu0 %2956
  %2958 = vmax.xlane.f32.xlu0 %v2924
  %v2959 = vpop.xlane.xlu0 %2958
  %2960 = vmax.xlane.f32.xlu0 %v2927
  %v2961 = vpop.xlane.xlu0 %2960
  %2962 = vmax.xlane.f32.xlu0 %v2929
  %v2963 = vpop.xlane.xlu0 %2962
  %2964 = vmax.xlane.f32.xlu0 %v2932
  %v2965 = vpop.xlane.xlu0 %2964
  %2966 = vmax.xlane.f32.xlu0 %v2934
  %v2967 = vpop.xlane.xlu0 %2966
  %v2968 = vsub.f32 %v2897, %v2937
  %v2969 = vsub.f32 %v2899, %v2939
  %v2970 = vsub.f32 %v2902, %v2941
  %v2971 = vsub.f32 %v2904, %v2943
  %v2972 = vsub.f32 %v2907, %v2945
  %v2973 = vsub.f32 %v2909, %v2947
  %v2974 = vsub.f32 %v2912, %v2949
  %v2975 = vsub.f32 %v2914, %v2951
  %v2976 = vsub.f32 %v2917, %v2953
  %v2977 = vsub.f32 %v2919, %v2955
  %v2978 = vsub.f32 %v2922, %v2957
  %v2979 = vsub.f32 %v2924, %v2959
  %v2980 = vsub.f32 %v2927, %v2961
  %v2981 = vsub.f32 %v2929, %v2963
  %v2982 = vsub.f32 %v2932, %v2965
  %v2983 = vsub.f32 %v2934, %v2967
  %v2984 = vmul.f32 %v2968, 1.442695
  %v2985 = vpow.pop %v2984
  %v2986 = vmul.f32 %v2969, 1.442695
  %v2987 = vpow.pop %v2986
  %v2988 = vmul.f32 %v2970, 1.442695
  %v2989 = vpow.pop %v2988
  %v2990 = vmul.f32 %v2971, 1.442695
  %v2991 = vpow.pop %v2990
  %v2992 = vmul.f32 %v2972, 1.442695
  %v2993 = vpow.pop %v2992
  %v2994 = vmul.f32 %v2973, 1.442695
  %v2995 = vpow.pop %v2994
  %v2996 = vmul.f32 %v2974, 1.442695
  %v2997 = vpow.pop %v2996
  %v2998 = vmul.f32 %v2975, 1.442695
  %v2999 = vpow.pop %v2998
  %v3000 = vmul.f32 %v2976, 1.442695
  %v3001 = vpow.pop %v3000
  %v3002 = vmul.f32 %v2977, 1.442695
  %v3003 = vpow.pop %v3002
  %v3004 = vmul.f32 %v2978, 1.442695
  %v3005 = vpow.pop %v3004
  %v3006 = vmul.f32 %v2979, 1.442695
  %v3007 = vpow.pop %v3006
  %v3008 = vmul.f32 %v2980, 1.442695
  %v3009 = vpow.pop %v3008
  %v3010 = vmul.f32 %v2981, 1.442695
  %v3011 = vpow.pop %v3010
  %v3012 = vmul.f32 %v2982, 1.442695
  %v3013 = vpow.pop %v3012
  %v3014 = vmul.f32 %v2983, 1.442695
  %v3015 = vpow.pop %v3014
  %3016 = vadd.xlane.f32.xlu0 %v2985
  %v3017 = vpop.xlane.xlu0 %3016
  %3018 = vadd.xlane.f32.xlu0 %v2987
  %v3019 = vpop.xlane.xlu0 %3018
  %3020 = vadd.xlane.f32.xlu0 %v2989
  %v3021 = vpop.xlane.xlu0 %3020
  %3022 = vadd.xlane.f32.xlu0 %v2991
  %v3023 = vpop.xlane.xlu0 %3022
  %3024 = vadd.xlane.f32.xlu0 %v2993
  %v3025 = vpop.xlane.xlu0 %3024
  %3026 = vadd.xlane.f32.xlu0 %v2995
  %v3027 = vpop.xlane.xlu0 %3026
  %3028 = vadd.xlane.f32.xlu0 %v2997
  %v3029 = vpop.xlane.xlu0 %3028
  %3030 = vadd.xlane.f32.xlu0 %v2999
  %v3031 = vpop.xlane.xlu0 %3030
  %3032 = vadd.xlane.f32.xlu0 %v3001
  %v3033 = vpop.xlane.xlu0 %3032
  %3034 = vadd.xlane.f32.xlu0 %v3003
  %v3035 = vpop.xlane.xlu0 %3034
  %3036 = vadd.xlane.f32.xlu0 %v3005
  %v3037 = vpop.xlane.xlu0 %3036
  %3038 = vadd.xlane.f32.xlu0 %v3007
  %v3039 = vpop.xlane.xlu0 %3038
  %3040 = vadd.xlane.f32.xlu0 %v3009
  %v3041 = vpop.xlane.xlu0 %3040
  %3042 = vadd.xlane.f32.xlu0 %v3011
  %v3043 = vpop.xlane.xlu0 %3042
  %3044 = vadd.xlane.f32.xlu0 %v3013
  %v3045 = vpop.xlane.xlu0 %3044
  %3046 = vadd.xlane.f32.xlu0 %v3015
  %v3047 = vpop.xlane.xlu0 %3046
  %v3048 = vrcp.pop %v3017
  %v3049 = vrcp.pop %v3019
  %v3050 = vrcp.pop %v3021
  %v3051 = vrcp.pop %v3023
  %v3052 = vrcp.pop %v3025
  %v3053 = vrcp.pop %v3027
  %v3054 = vrcp.pop %v3029
  %v3055 = vrcp.pop %v3031
  %v3056 = vrcp.pop %v3033
  %v3057 = vrcp.pop %v3035
  %v3058 = vrcp.pop %v3037
  %v3059 = vrcp.pop %v3039
  %v3060 = vrcp.pop %v3041
  %v3061 = vrcp.pop %v3043
  %v3062 = vrcp.pop %v3045
  %v3063 = vrcp.pop %v3047
  %v3064 = vmul.f32 %v2985, %v3048
  %v3065 = vmul.f32 %v2987, %v3049
  %v3066 = vmul.f32 %v2989, %v3050
  %v3067 = vmul.f32 %v2991, %v3051
  %v3068 = vmul.f32 %v2993, %v3052
  %v3069 = vmul.f32 %v2995, %v3053
  %v3070 = vmul.f32 %v2997, %v3054
  %v3071 = vmul.f32 %v2999, %v3055
  %v3072 = vmul.f32 %v3001, %v3056
  %v3073 = vmul.f32 %v3003, %v3057
  %v3074 = vmul.f32 %v3005, %v3058
  %v3075 = vmul.f32 %v3007, %v3059
  %v3076 = vmul.f32 %v3009, %v3060
  %v3077 = vmul.f32 %v3011, %v3061
  %v3078 = vmul.f32 %v3013, %v3062
  %v3079 = vmul.f32 %v3015, %v3063
  %v3080 = vpack.c.bf16 %v3065, %v3064
  %v3081 = vpack.c.bf16 %v3067, %v3066
  %v3082 = vpack.c.bf16 %v3069, %v3068
  %v3083 = vpack.c.bf16 %v3071, %v3070
  %v3084 = vpack.c.bf16 %v3073, %v3072
  %v3085 = vpack.c.bf16 %v3075, %v3074
  %v3086 = vpack.c.bf16 %v3077, %v3076
  %v3087 = vpack.c.bf16 %v3079, %v3078
  %3088 = vrot.lane.b32.xlu0 %v2669, 64
  %v3089 = vpop.permute.xlu0 %3088
  %3090 = vrot.lane.b32.xlu0 %v2670, 64
  %v3091 = vpop.permute.xlu0 %3090
  %3092 = vrot.lane.b32.xlu0 %v2671, 64
  %v3093 = vpop.permute.xlu0 %3092
  %3094 = vrot.lane.b32.xlu0 %v2672, 64
  %v3095 = vpop.permute.xlu0 %3094
  %3096 = vrot.lane.b32.xlu0 %v2673, 64
  %v3097 = vpop.permute.xlu0 %3096
  %3098 = vrot.lane.b32.xlu0 %v2674, 64
  %v3099 = vpop.permute.xlu0 %3098
  %3100 = vrot.lane.b32.xlu0 %v2675, 64
  %v3101 = vpop.permute.xlu0 %3100
  %3102 = vrot.lane.b32.xlu0 %v2676, 64
  %v3103 = vpop.permute.xlu0 %3102
  %3112 = vmatpush.bf16.msra.mxu0 %v3103
  %3113 = vmatpush.bf16.msra.mxu0 %v3101
  %3114 = vmatpush.bf16.msra.mxu0 %v3099
  %3115 = vmatpush.bf16.msra.mxu0 %v3097
  %3116 = vmatpush.bf16.msra.mxu0 %v3095
  %3117 = vmatpush.bf16.msra.mxu0 %v3093
  %3118 = vmatpush.bf16.msra.mxu0 %v3091
  %3119 = vmatpush.bf16.msra.mxu0 %v3089
  %3120 = vmatmul.bf16.gmra.mxu0 %v3080
  %v3121 = vpop.f32.mrf.mxu0
  %v3122 = vadd.f32 0.0, %v3121
  %v3123 = vpop.f32.mrf.mxu0
  %v3124 = vadd.f32 0.0, %v3123
  %3125 = vmatmul.bf16.gmra.mxu0 %v3081
  %v3126 = vpop.f32.mrf.mxu0
  %v3127 = vadd.f32 0.0, %v3126
  %v3128 = vpop.f32.mrf.mxu0
  %v3129 = vadd.f32 0.0, %v3128
  %3130 = vmatmul.bf16.gmra.mxu0 %v3082
  %v3131 = vpop.f32.mrf.mxu0
  %v3132 = vadd.f32 0.0, %v3131
  %v3133 = vpop.f32.mrf.mxu0
  %v3134 = vadd.f32 0.0, %v3133
  %3135 = vmatmul.bf16.gmra.mxu0 %v3083
  %v3136 = vpop.f32.mrf.mxu0
  %v3137 = vadd.f32 0.0, %v3136
  %v3138 = vpop.f32.mrf.mxu0
  %v3139 = vadd.f32 0.0, %v3138
  %3140 = vmatmul.bf16.gmra.mxu0 %v3084
  %v3141 = vpop.f32.mrf.mxu0
  %v3142 = vadd.f32 0.0, %v3141
  %v3143 = vpop.f32.mrf.mxu0
  %v3144 = vadd.f32 0.0, %v3143
  %3145 = vmatmul.bf16.gmra.mxu0 %v3085
  %v3146 = vpop.f32.mrf.mxu0
  %v3147 = vadd.f32 0.0, %v3146
  %v3148 = vpop.f32.mrf.mxu0
  %v3149 = vadd.f32 0.0, %v3148
  %3150 = vmatmul.bf16.gmra.mxu0 %v3086
  %v3151 = vpop.f32.mrf.mxu0
  %v3152 = vadd.f32 0.0, %v3151
  %v3153 = vpop.f32.mrf.mxu0
  %v3154 = vadd.f32 0.0, %v3153
  %3155 = vmatmul.bf16.gmra.mxu0 %v3087
  %v3156 = vpop.f32.mrf.mxu0
  %v3157 = vadd.f32 0.0, %v3156
  %v3158 = vpop.f32.mrf.mxu0
  %v3159 = vadd.f32 0.0, %v3158
  %3160 = vdwg.mxu0
  %v3161 = vadd.f32 %v2768, %v3122
  %v3162 = vadd.f32 %v2770, %v3124
  %v3163 = vadd.f32 %v2773, %v3127
  %v3164 = vadd.f32 %v2775, %v3129
  %v3165 = vadd.f32 %v2778, %v3132
  %v3166 = vadd.f32 %v2780, %v3134
  %v3167 = vadd.f32 %v2783, %v3137
  %v3168 = vadd.f32 %v2785, %v3139
  %v3169 = vadd.f32 %v2788, %v3142
  %v3170 = vadd.f32 %v2790, %v3144
  %v3171 = vadd.f32 %v2793, %v3147
  %v3172 = vadd.f32 %v2795, %v3149
  %v3173 = vadd.f32 %v2798, %v3152
  %v3174 = vadd.f32 %v2800, %v3154
  %v3175 = vadd.f32 %v2803, %v3157
  %v3176 = vadd.f32 %v2805, %v3159
  %3177 = vrot.lane.b32.xlu0 %v2083, 104
  %v3178 = vpop.permute.xlu0 %3177
  %3179 = vrot.lane.b32.xlu0 %v2084, 104
  %v3180 = vpop.permute.xlu0 %3179
  %3181 = vrot.lane.b32.xlu0 %v2085, 104
  %v3182 = vpop.permute.xlu0 %3181
  %3183 = vrot.lane.b32.xlu0 %v2086, 104
  %v3184 = vpop.permute.xlu0 %3183
  %3185 = vrot.lane.b32.xlu0 %v2087, 104
  %v3186 = vpop.permute.xlu0 %3185
  %3187 = vrot.lane.b32.xlu0 %v2088, 104
  %v3188 = vpop.permute.xlu0 %3187
  %3189 = vrot.lane.b32.xlu0 %v2089, 104
  %v3190 = vpop.permute.xlu0 %3189
  %3191 = vrot.lane.b32.xlu0 %v2090, 104
  %v3192 = vpop.permute.xlu0 %3191
  %3193 = vrot.lane.b32.xlu0 %v2083, 72
  %v3194 = vpop.permute.xlu0 %3193
  %3195 = vrot.lane.b32.xlu0 %v2084, 72
  %v3196 = vpop.permute.xlu0 %3195
  %3197 = vrot.lane.b32.xlu0 %v2085, 72
  %v3198 = vpop.permute.xlu0 %3197
  %3199 = vrot.lane.b32.xlu0 %v2086, 72
  %v3200 = vpop.permute.xlu0 %3199
  %3201 = vrot.lane.b32.xlu0 %v2087, 72
  %v3202 = vpop.permute.xlu0 %3201
  %3203 = vrot.lane.b32.xlu0 %v2088, 72
  %v3204 = vpop.permute.xlu0 %3203
  %3205 = vrot.lane.b32.xlu0 %v2089, 72
  %v3206 = vpop.permute.xlu0 %3205
  %3207 = vrot.lane.b32.xlu0 %v2090, 72
  %v3208 = vpop.permute.xlu0 %3207
  %v3210 = vsel %vm610, %v3178, 0
  %v3213 = vsel %vm610, %v3180, 0
  %v3216 = vsel %vm610, %v3182, 0
  %v3219 = vsel %vm610, %v3184, 0
  %v3222 = vsel %vm610, %v3186, 0
  %v3225 = vsel %vm610, %v3188, 0
  %v3228 = vsel %vm610, %v3190, 0
  %v3231 = vsel %vm610, %v3192, 0
  %v3234 = vsel %vm610, %v3194, 0
  %v3237 = vsel %vm610, %v3196, 0
  %v3240 = vsel %vm610, %v3198, 0
  %v3243 = vsel %vm610, %v3200, 0
  %v3246 = vsel %vm610, %v3202, 0
  %v3249 = vsel %vm610, %v3204, 0
  %v3252 = vsel %vm610, %v3206, 0
  %v3255 = vsel %vm610, %v3208, 0
  %3257 = vmatpush.bf16.xpose.msra.mxu0 %v3255
  %3258 = vmatpush.bf16.xpose.msra.mxu0 %v3252
  %3259 = vmatpush.bf16.xpose.msra.mxu0 %v3249
  %3260 = vmatpush.bf16.xpose.msra.mxu0 %v3246
  %3261 = vmatpush.bf16.xpose.msra.mxu0 %v3243
  %3262 = vmatpush.bf16.xpose.msra.mxu0 %v3240
  %3263 = vmatpush.bf16.xpose.msra.mxu0 %v3237
  %3264 = vmatpush.bf16.xpose.msra.mxu0 %v3234
  %3265 = vmatmul.bf16.gmra.mxu0 %v3210
  %v3266 = vpop.f32.mrf.mxu0
  %v3267 = vadd.f32 %v104, %v3266
  %v3268 = vpop.f32.mrf.mxu0
  %v3269 = vadd.f32 %v104, %v3268
  %3270 = vmatmul.bf16.gmra.mxu0 %v3213
  %v3271 = vpop.f32.mrf.mxu0
  %v3272 = vadd.f32 %v104, %v3271
  %v3273 = vpop.f32.mrf.mxu0
  %v3274 = vadd.f32 %v104, %v3273
  %3275 = vmatmul.bf16.gmra.mxu0 %v3216
  %v3276 = vpop.f32.mrf.mxu0
  %v3277 = vadd.f32 %v104, %v3276
  %v3278 = vpop.f32.mrf.mxu0
  %v3279 = vadd.f32 %v104, %v3278
  %3280 = vmatmul.bf16.gmra.mxu0 %v3219
  %v3281 = vpop.f32.mrf.mxu0
  %v3282 = vadd.f32 %v104, %v3281
  %v3283 = vpop.f32.mrf.mxu0
  %v3284 = vadd.f32 %v104, %v3283
  %3285 = vmatmul.bf16.gmra.mxu0 %v3222
  %v3286 = vpop.f32.mrf.mxu0
  %v3287 = vadd.f32 %v104, %v3286
  %v3288 = vpop.f32.mrf.mxu0
  %v3289 = vadd.f32 %v104, %v3288
  %3290 = vmatmul.bf16.gmra.mxu0 %v3225
  %v3291 = vpop.f32.mrf.mxu0
  %v3292 = vadd.f32 %v104, %v3291
  %v3293 = vpop.f32.mrf.mxu0
  %v3294 = vadd.f32 %v104, %v3293
  %3295 = vmatmul.bf16.gmra.mxu0 %v3228
  %v3296 = vpop.f32.mrf.mxu0
  %v3297 = vadd.f32 %v104, %v3296
  %v3298 = vpop.f32.mrf.mxu0
  %v3299 = vadd.f32 %v104, %v3298
  %3300 = vmatmul.bf16.gmra.mxu0 %v3231
  %v3301 = vpop.f32.mrf.mxu0
  %v3302 = vadd.f32 %v104, %v3301
  %v3303 = vpop.f32.mrf.mxu0
  %v3304 = vadd.f32 %v104, %v3303
  %3305 = vdwg.mxu0
  %3306 = vmax.xlane.f32.xlu0 %v3267
  %v3307 = vpop.xlane.xlu0 %3306
  %3308 = vmax.xlane.f32.xlu0 %v3269
  %v3309 = vpop.xlane.xlu0 %3308
  %3310 = vmax.xlane.f32.xlu0 %v3272
  %v3311 = vpop.xlane.xlu0 %3310
  %3312 = vmax.xlane.f32.xlu0 %v3274
  %v3313 = vpop.xlane.xlu0 %3312
  %3314 = vmax.xlane.f32.xlu0 %v3277
  %v3315 = vpop.xlane.xlu0 %3314
  %3316 = vmax.xlane.f32.xlu0 %v3279
  %v3317 = vpop.xlane.xlu0 %3316
  %3318 = vmax.xlane.f32.xlu0 %v3282
  %v3319 = vpop.xlane.xlu0 %3318
  %3320 = vmax.xlane.f32.xlu0 %v3284
  %v3321 = vpop.xlane.xlu0 %3320
  %3322 = vmax.xlane.f32.xlu0 %v3287
  %v3323 = vpop.xlane.xlu0 %3322
  %3324 = vmax.xlane.f32.xlu0 %v3289
  %v3325 = vpop.xlane.xlu0 %3324
  %3326 = vmax.xlane.f32.xlu0 %v3292
  %v3327 = vpop.xlane.xlu0 %3326
  %3328 = vmax.xlane.f32.xlu0 %v3294
  %v3329 = vpop.xlane.xlu0 %3328
  %3330 = vmax.xlane.f32.xlu0 %v3297
  %v3331 = vpop.xlane.xlu0 %3330
  %3332 = vmax.xlane.f32.xlu0 %v3299
  %v3333 = vpop.xlane.xlu0 %3332
  %3334 = vmax.xlane.f32.xlu0 %v3302
  %v3335 = vpop.xlane.xlu0 %3334
  %3336 = vmax.xlane.f32.xlu0 %v3304
  %v3337 = vpop.xlane.xlu0 %3336
  %v3338 = vsub.f32 %v3267, %v3307
  %v3339 = vsub.f32 %v3269, %v3309
  %v3340 = vsub.f32 %v3272, %v3311
  %v3341 = vsub.f32 %v3274, %v3313
  %v3342 = vsub.f32 %v3277, %v3315
  %v3343 = vsub.f32 %v3279, %v3317
  %v3344 = vsub.f32 %v3282, %v3319
  %v3345 = vsub.f32 %v3284, %v3321
  %v3346 = vsub.f32 %v3287, %v3323
  %v3347 = vsub.f32 %v3289, %v3325
  %v3348 = vsub.f32 %v3292, %v3327
  %v3349 = vsub.f32 %v3294, %v3329
  %v3350 = vsub.f32 %v3297, %v3331
  %v3351 = vsub.f32 %v3299, %v3333
  %v3352 = vsub.f32 %v3302, %v3335
  %v3353 = vsub.f32 %v3304, %v3337
  %v3354 = vmul.f32 %v3338, 1.442695
  %v3355 = vpow.pop %v3354
  %v3356 = vmul.f32 %v3339, 1.442695
  %v3357 = vpow.pop %v3356
  %v3358 = vmul.f32 %v3340, 1.442695
  %v3359 = vpow.pop %v3358
  %v3360 = vmul.f32 %v3341, 1.442695
  %v3361 = vpow.pop %v3360
  %v3362 = vmul.f32 %v3342, 1.442695
  %v3363 = vpow.pop %v3362
  %v3364 = vmul.f32 %v3343, 1.442695
  %v3365 = vpow.pop %v3364
  %v3366 = vmul.f32 %v3344, 1.442695
  %v3367 = vpow.pop %v3366
  %v3368 = vmul.f32 %v3345, 1.442695
  %v3369 = vpow.pop %v3368
  %v3370 = vmul.f32 %v3346, 1.442695
  %v3371 = vpow.pop %v3370
  %v3372 = vmul.f32 %v3347, 1.442695
  %v3373 = vpow.pop %v3372
  %v3374 = vmul.f32 %v3348, 1.442695
  %v3375 = vpow.pop %v3374
  %v3376 = vmul.f32 %v3349, 1.442695
  %v3377 = vpow.pop %v3376
  %v3378 = vmul.f32 %v3350, 1.442695
  %v3379 = vpow.pop %v3378
  %v3380 = vmul.f32 %v3351, 1.442695
  %v3381 = vpow.pop %v3380
  %v3382 = vmul.f32 %v3352, 1.442695
  %v3383 = vpow.pop %v3382
  %v3384 = vmul.f32 %v3353, 1.442695
  %v3385 = vpow.pop %v3384
  %3386 = vadd.xlane.f32.xlu0 %v3355
  %v3387 = vpop.xlane.xlu0 %3386
  %3388 = vadd.xlane.f32.xlu0 %v3357
  %v3389 = vpop.xlane.xlu0 %3388
  %3390 = vadd.xlane.f32.xlu0 %v3359
  %v3391 = vpop.xlane.xlu0 %3390
  %3392 = vadd.xlane.f32.xlu0 %v3361
  %v3393 = vpop.xlane.xlu0 %3392
  %3394 = vadd.xlane.f32.xlu0 %v3363
  %v3395 = vpop.xlane.xlu0 %3394
  %3396 = vadd.xlane.f32.xlu0 %v3365
  %v3397 = vpop.xlane.xlu0 %3396
  %3398 = vadd.xlane.f32.xlu0 %v3367
  %v3399 = vpop.xlane.xlu0 %3398
  %3400 = vadd.xlane.f32.xlu0 %v3369
  %v3401 = vpop.xlane.xlu0 %3400
  %3402 = vadd.xlane.f32.xlu0 %v3371
  %v3403 = vpop.xlane.xlu0 %3402
  %3404 = vadd.xlane.f32.xlu0 %v3373
  %v3405 = vpop.xlane.xlu0 %3404
  %3406 = vadd.xlane.f32.xlu0 %v3375
  %v3407 = vpop.xlane.xlu0 %3406
  %3408 = vadd.xlane.f32.xlu0 %v3377
  %v3409 = vpop.xlane.xlu0 %3408
  %3410 = vadd.xlane.f32.xlu0 %v3379
  %v3411 = vpop.xlane.xlu0 %3410
  %3412 = vadd.xlane.f32.xlu0 %v3381
  %v3413 = vpop.xlane.xlu0 %3412
  %3414 = vadd.xlane.f32.xlu0 %v3383
  %v3415 = vpop.xlane.xlu0 %3414
  %3416 = vadd.xlane.f32.xlu0 %v3385
  %v3417 = vpop.xlane.xlu0 %3416
  %v3418 = vrcp.pop %v3387
  %v3419 = vrcp.pop %v3389
  %v3420 = vrcp.pop %v3391
  %v3421 = vrcp.pop %v3393
  %v3422 = vrcp.pop %v3395
  %v3423 = vrcp.pop %v3397
  %v3424 = vrcp.pop %v3399
  %v3425 = vrcp.pop %v3401
  %v3426 = vrcp.pop %v3403
  %v3427 = vrcp.pop %v3405
  %v3428 = vrcp.pop %v3407
  %v3429 = vrcp.pop %v3409
  %v3430 = vrcp.pop %v3411
  %v3431 = vrcp.pop %v3413
  %v3432 = vrcp.pop %v3415
  %v3433 = vrcp.pop %v3417
  %v3434 = vmul.f32 %v3355, %v3418
  %v3435 = vmul.f32 %v3357, %v3419
  %v3436 = vmul.f32 %v3359, %v3420
  %v3437 = vmul.f32 %v3361, %v3421
  %v3438 = vmul.f32 %v3363, %v3422
  %v3439 = vmul.f32 %v3365, %v3423
  %v3440 = vmul.f32 %v3367, %v3424
  %v3441 = vmul.f32 %v3369, %v3425
  %v3442 = vmul.f32 %v3371, %v3426
  %v3443 = vmul.f32 %v3373, %v3427
  %v3444 = vmul.f32 %v3375, %v3428
  %v3445 = vmul.f32 %v3377, %v3429
  %v3446 = vmul.f32 %v3379, %v3430
  %v3447 = vmul.f32 %v3381, %v3431
  %v3448 = vmul.f32 %v3383, %v3432
  %v3449 = vmul.f32 %v3385, %v3433
  %v3450 = vpack.c.bf16 %v3435, %v3434
  %v3451 = vpack.c.bf16 %v3437, %v3436
  %v3452 = vpack.c.bf16 %v3439, %v3438
  %v3453 = vpack.c.bf16 %v3441, %v3440
  %v3454 = vpack.c.bf16 %v3443, %v3442
  %v3455 = vpack.c.bf16 %v3445, %v3444
  %v3456 = vpack.c.bf16 %v3447, %v3446
  %v3457 = vpack.c.bf16 %v3449, %v3448
  %3458 = vrot.lane.b32.xlu0 %v2669, 32
  %v3459 = vpop.permute.xlu0 %3458
  %3460 = vrot.lane.b32.xlu0 %v2670, 32
  %v3461 = vpop.permute.xlu0 %3460
  %3462 = vrot.lane.b32.xlu0 %v2671, 32
  %v3463 = vpop.permute.xlu0 %3462
  %3464 = vrot.lane.b32.xlu0 %v2672, 32
  %v3465 = vpop.permute.xlu0 %3464
  %3466 = vrot.lane.b32.xlu0 %v2673, 32
  %v3467 = vpop.permute.xlu0 %3466
  %3468 = vrot.lane.b32.xlu0 %v2674, 32
  %v3469 = vpop.permute.xlu0 %3468
  %3470 = vrot.lane.b32.xlu0 %v2675, 32
  %v3471 = vpop.permute.xlu0 %3470
  %3472 = vrot.lane.b32.xlu0 %v2676, 32
  %v3473 = vpop.permute.xlu0 %3472
  %3482 = vmatpush.bf16.msra.mxu0 %v3473
  %3483 = vmatpush.bf16.msra.mxu0 %v3471
  %3484 = vmatpush.bf16.msra.mxu0 %v3469
  %3485 = vmatpush.bf16.msra.mxu0 %v3467
  %3486 = vmatpush.bf16.msra.mxu0 %v3465
  %3487 = vmatpush.bf16.msra.mxu0 %v3463
  %3488 = vmatpush.bf16.msra.mxu0 %v3461
  %3489 = vmatpush.bf16.msra.mxu0 %v3459
  %3490 = vmatmul.bf16.gmra.mxu0 %v3450
  %v3491 = vpop.f32.mrf.mxu0
  %v3492 = vadd.f32 0.0, %v3491
  %v3493 = vpop.f32.mrf.mxu0
  %v3494 = vadd.f32 0.0, %v3493
  %3495 = vmatmul.bf16.gmra.mxu0 %v3451
  %v3496 = vpop.f32.mrf.mxu0
  %v3497 = vadd.f32 0.0, %v3496
  %v3498 = vpop.f32.mrf.mxu0
  %v3499 = vadd.f32 0.0, %v3498
  %3500 = vmatmul.bf16.gmra.mxu0 %v3452
  %v3501 = vpop.f32.mrf.mxu0
  %v3502 = vadd.f32 0.0, %v3501
  %v3503 = vpop.f32.mrf.mxu0
  %v3504 = vadd.f32 0.0, %v3503
  %3505 = vmatmul.bf16.gmra.mxu0 %v3453
  %v3506 = vpop.f32.mrf.mxu0
  %v3507 = vadd.f32 0.0, %v3506
  %v3508 = vpop.f32.mrf.mxu0
  %v3509 = vadd.f32 0.0, %v3508
  %3510 = vmatmul.bf16.gmra.mxu0 %v3454
  %v3511 = vpop.f32.mrf.mxu0
  %v3512 = vadd.f32 0.0, %v3511
  %v3513 = vpop.f32.mrf.mxu0
  %v3514 = vadd.f32 0.0, %v3513
  %3515 = vmatmul.bf16.gmra.mxu0 %v3455
  %v3516 = vpop.f32.mrf.mxu0
  %v3517 = vadd.f32 0.0, %v3516
  %v3518 = vpop.f32.mrf.mxu0
  %v3519 = vadd.f32 0.0, %v3518
  %3520 = vmatmul.bf16.gmra.mxu0 %v3456
  %v3521 = vpop.f32.mrf.mxu0
  %v3522 = vadd.f32 0.0, %v3521
  %v3523 = vpop.f32.mrf.mxu0
  %v3524 = vadd.f32 0.0, %v3523
  %3525 = vmatmul.bf16.gmra.mxu0 %v3457
  %v3526 = vpop.f32.mrf.mxu0
  %v3527 = vadd.f32 0.0, %v3526
  %v3528 = vpop.f32.mrf.mxu0
  %v3529 = vadd.f32 0.0, %v3528
  %3530 = vdwg.mxu0
  %v3531 = vadd.f32 %v3161, %v3492
  %v3532 = vadd.f32 %v3162, %v3494
  %v3533 = vadd.f32 %v3163, %v3497
  %v3534 = vadd.f32 %v3164, %v3499
  %v3535 = vadd.f32 %v3165, %v3502
  %v3536 = vadd.f32 %v3166, %v3504
  %v3537 = vadd.f32 %v3167, %v3507
  %v3538 = vadd.f32 %v3168, %v3509
  %v3539 = vadd.f32 %v3169, %v3512
  %v3540 = vadd.f32 %v3170, %v3514
  %v3541 = vadd.f32 %v3171, %v3517
  %v3542 = vadd.f32 %v3172, %v3519
  %v3543 = vadd.f32 %v3173, %v3522
  %v3544 = vadd.f32 %v3174, %v3524
  %v3545 = vadd.f32 %v3175, %v3527
  %v3546 = vadd.f32 %v3176, %v3529
  %v3547 = vperm.slane %v94, 1
  %v3548 = vadd.f32 %v2035, %v3547
  %v3549 = vadd.f32 %v2036, %v3547
  %v3550 = vadd.f32 %v2037, %v3547
  %v3551 = vadd.f32 %v2038, %v3547
  %v3552 = vadd.f32 %v2039, %v3547
  %v3553 = vadd.f32 %v2040, %v3547
  %v3554 = vadd.f32 %v2041, %v3547
  %v3555 = vadd.f32 %v2042, %v3547
  %v3556 = vadd.f32 %v2043, %v3547
  %v3557 = vadd.f32 %v2044, %v3547
  %v3558 = vadd.f32 %v2045, %v3547
  %v3559 = vadd.f32 %v2046, %v3547
  %v3560 = vadd.f32 %v2047, %v3547
  %v3561 = vadd.f32 %v2048, %v3547
  %v3562 = vadd.f32 %v2049, %v3547
  %v3563 = vadd.f32 %v2050, %v3547
  %v3564 = vadd.f32 %v3531, %v3547
  %v3565 = vadd.f32 %v3532, %v3547
  %v3566 = vadd.f32 %v3533, %v3547
  %v3567 = vadd.f32 %v3534, %v3547
  %v3568 = vadd.f32 %v3535, %v3547
  %v3569 = vadd.f32 %v3536, %v3547
  %v3570 = vadd.f32 %v3537, %v3547
  %v3571 = vadd.f32 %v3538, %v3547
  %v3572 = vadd.f32 %v3539, %v3547
  %v3573 = vadd.f32 %v3540, %v3547
  %v3574 = vadd.f32 %v3541, %v3547
  %v3575 = vadd.f32 %v3542, %v3547
  %v3576 = vadd.f32 %v3543, %v3547
  %v3577 = vadd.f32 %v3544, %v3547
  %v3578 = vadd.f32 %v3545, %v3547
  %v3579 = vadd.f32 %v3546, %v3547
  %v3580 = vadd.f32 %v30, %v3548
  %v3581 = vadd.f32 %v31, %v3549
  %v3582 = vadd.f32 %v32, %v3550
  %v3583 = vadd.f32 %v33, %v3551
  %v3584 = vadd.f32 %v34, %v3552
  %v3585 = vadd.f32 %v35, %v3553
  %v3586 = vadd.f32 %v36, %v3554
  %v3587 = vadd.f32 %v37, %v3555
  %v3588 = vadd.f32 %v38, %v3556
  %v3589 = vadd.f32 %v39, %v3557
  %v3590 = vadd.f32 %v40, %v3558
  %v3591 = vadd.f32 %v41, %v3559
  %v3592 = vadd.f32 %v42, %v3560
  %v3593 = vadd.f32 %v43, %v3561
  %v3594 = vadd.f32 %v44, %v3562
  %v3595 = vadd.f32 %v45, %v3563
  %v3596 = vadd.f32 %v46, %v3564
  %v3597 = vadd.f32 %v47, %v3565
  %v3598 = vadd.f32 %v48, %v3566
  %v3599 = vadd.f32 %v49, %v3567
  %v3600 = vadd.f32 %v50, %v3568
  %v3601 = vadd.f32 %v51, %v3569
  %v3602 = vadd.f32 %v52, %v3570
  %v3603 = vadd.f32 %v53, %v3571
  %v3604 = vadd.f32 %v54, %v3572
  %v3605 = vadd.f32 %v55, %v3573
  %v3606 = vadd.f32 %v56, %v3574
  %v3607 = vadd.f32 %v57, %v3575
  %v3608 = vadd.f32 %v58, %v3576
  %v3609 = vadd.f32 %v59, %v3577
  %v3610 = vadd.f32 %v60, %v3578
  %v3611 = vadd.f32 %v61, %v3579
  %v3612 = vsel %vm187, %v3580, 0.0
  %3613 = vadd.xlane.f32.xlu0 %v3612
  %v3614 = vpop.xlane.xlu0 %3613
  %v3615 = vsel %vm187, %v3581, 0.0
  %3616 = vadd.xlane.f32.xlu0 %v3615
  %v3617 = vpop.xlane.xlu0 %3616
  %v3618 = vsel %vm187, %v3582, 0.0
  %3619 = vadd.xlane.f32.xlu0 %v3618
  %v3620 = vpop.xlane.xlu0 %3619
  %v3621 = vsel %vm187, %v3583, 0.0
  %3622 = vadd.xlane.f32.xlu0 %v3621
  %v3623 = vpop.xlane.xlu0 %3622
  %v3624 = vsel %vm187, %v3584, 0.0
  %3625 = vadd.xlane.f32.xlu0 %v3624
  %v3626 = vpop.xlane.xlu0 %3625
  %v3627 = vsel %vm187, %v3585, 0.0
  %3628 = vadd.xlane.f32.xlu0 %v3627
  %v3629 = vpop.xlane.xlu0 %3628
  %v3630 = vsel %vm187, %v3586, 0.0
  %3631 = vadd.xlane.f32.xlu0 %v3630
  %v3632 = vpop.xlane.xlu0 %3631
  %v3633 = vsel %vm187, %v3587, 0.0
  %3634 = vadd.xlane.f32.xlu0 %v3633
  %v3635 = vpop.xlane.xlu0 %3634
  %v3636 = vsel %vm187, %v3588, 0.0
  %3637 = vadd.xlane.f32.xlu0 %v3636
  %v3638 = vpop.xlane.xlu0 %3637
  %v3639 = vsel %vm187, %v3589, 0.0
  %3640 = vadd.xlane.f32.xlu0 %v3639
  %v3641 = vpop.xlane.xlu0 %3640
  %v3642 = vsel %vm187, %v3590, 0.0
  %3643 = vadd.xlane.f32.xlu0 %v3642
  %v3644 = vpop.xlane.xlu0 %3643
  %v3645 = vsel %vm187, %v3591, 0.0
  %3646 = vadd.xlane.f32.xlu0 %v3645
  %v3647 = vpop.xlane.xlu0 %3646
  %v3648 = vsel %vm187, %v3592, 0.0
  %3649 = vadd.xlane.f32.xlu0 %v3648
  %v3650 = vpop.xlane.xlu0 %3649
  %v3651 = vsel %vm187, %v3593, 0.0
  %3652 = vadd.xlane.f32.xlu0 %v3651
  %v3653 = vpop.xlane.xlu0 %3652
  %v3654 = vsel %vm187, %v3594, 0.0
  %3655 = vadd.xlane.f32.xlu0 %v3654
  %v3656 = vpop.xlane.xlu0 %3655
  %v3657 = vsel %vm187, %v3595, 0.0
  %3658 = vadd.xlane.f32.xlu0 %v3657
  %v3659 = vpop.xlane.xlu0 %3658
  %v3660 = vsel %vm187, %v3596, 0.0
  %3661 = vadd.xlane.f32.xlu0 %v3660
  %v3662 = vpop.xlane.xlu0 %3661
  %v3663 = vsel %vm187, %v3597, 0.0
  %3664 = vadd.xlane.f32.xlu0 %v3663
  %v3665 = vpop.xlane.xlu0 %3664
  %v3666 = vsel %vm187, %v3598, 0.0
  %3667 = vadd.xlane.f32.xlu0 %v3666
  %v3668 = vpop.xlane.xlu0 %3667
  %v3669 = vsel %vm187, %v3599, 0.0
  %3670 = vadd.xlane.f32.xlu0 %v3669
  %v3671 = vpop.xlane.xlu0 %3670
  %v3672 = vsel %vm187, %v3600, 0.0
  %3673 = vadd.xlane.f32.xlu0 %v3672
  %v3674 = vpop.xlane.xlu0 %3673
  %v3675 = vsel %vm187, %v3601, 0.0
  %3676 = vadd.xlane.f32.xlu0 %v3675
  %v3677 = vpop.xlane.xlu0 %3676
  %v3678 = vsel %vm187, %v3602, 0.0
  %3679 = vadd.xlane.f32.xlu0 %v3678
  %v3680 = vpop.xlane.xlu0 %3679
  %v3681 = vsel %vm187, %v3603, 0.0
  %3682 = vadd.xlane.f32.xlu0 %v3681
  %v3683 = vpop.xlane.xlu0 %3682
  %v3684 = vsel %vm187, %v3604, 0.0
  %3685 = vadd.xlane.f32.xlu0 %v3684
  %v3686 = vpop.xlane.xlu0 %3685
  %v3687 = vsel %vm187, %v3605, 0.0
  %3688 = vadd.xlane.f32.xlu0 %v3687
  %v3689 = vpop.xlane.xlu0 %3688
  %v3690 = vsel %vm187, %v3606, 0.0
  %3691 = vadd.xlane.f32.xlu0 %v3690
  %v3692 = vpop.xlane.xlu0 %3691
  %v3693 = vsel %vm187, %v3607, 0.0
  %3694 = vadd.xlane.f32.xlu0 %v3693
  %v3695 = vpop.xlane.xlu0 %3694
  %v3696 = vsel %vm187, %v3608, 0.0
  %3697 = vadd.xlane.f32.xlu0 %v3696
  %v3698 = vpop.xlane.xlu0 %3697
  %v3699 = vsel %vm187, %v3609, 0.0
  %3700 = vadd.xlane.f32.xlu0 %v3699
  %v3701 = vpop.xlane.xlu0 %3700
  %v3702 = vsel %vm187, %v3610, 0.0
  %3703 = vadd.xlane.f32.xlu0 %v3702
  %v3704 = vpop.xlane.xlu0 %3703
  %v3705 = vsel %vm187, %v3611, 0.0
  %3706 = vadd.xlane.f32.xlu0 %v3705
  %v3707 = vpop.xlane.xlu0 %3706
  %v3708 = vrcp.pop 32.0
  %v3709 = vmul.f32 32.0, %v3708
  %v3710 = vsub.f32 1.0, %v3709
  %v3711 = vmul.f32 %v3708, %v3710
  %v3712 = vadd.f32 %v3708, %v3711
  %vm3713 = vweird.f32 %v3708
  %v3714 = vsel %vm3713, %v3708, %v3712
  %v3715 = vmul.f32 %v3614, %v3714
  %v3716 = vmul.f32 %v3617, %v3714
  %v3717 = vmul.f32 %v3620, %v3714
  %v3718 = vmul.f32 %v3623, %v3714
  %v3719 = vmul.f32 %v3626, %v3714
  %v3720 = vmul.f32 %v3629, %v3714
  %v3721 = vmul.f32 %v3632, %v3714
  %v3722 = vmul.f32 %v3635, %v3714
  %v3723 = vmul.f32 %v3638, %v3714
  %v3724 = vmul.f32 %v3641, %v3714
  %v3725 = vmul.f32 %v3644, %v3714
  %v3726 = vmul.f32 %v3647, %v3714
  %v3727 = vmul.f32 %v3650, %v3714
  %v3728 = vmul.f32 %v3653, %v3714
  %v3729 = vmul.f32 %v3656, %v3714
  %v3730 = vmul.f32 %v3659, %v3714
  %v3731 = vmul.f32 %v3662, %v3714
  %v3732 = vmul.f32 %v3665, %v3714
  %v3733 = vmul.f32 %v3668, %v3714
  %v3734 = vmul.f32 %v3671, %v3714
  %v3735 = vmul.f32 %v3674, %v3714
  %v3736 = vmul.f32 %v3677, %v3714
  %v3737 = vmul.f32 %v3680, %v3714
  %v3738 = vmul.f32 %v3683, %v3714
  %v3739 = vmul.f32 %v3686, %v3714
  %v3740 = vmul.f32 %v3689, %v3714
  %v3741 = vmul.f32 %v3692, %v3714
  %v3742 = vmul.f32 %v3695, %v3714
  %v3743 = vmul.f32 %v3698, %v3714
  %v3744 = vmul.f32 %v3701, %v3714
  %v3745 = vmul.f32 %v3704, %v3714
  %v3746 = vmul.f32 %v3707, %v3714
  %v3747 = vsub.f32 %v3580, %v3715
  %v3748 = vsub.f32 %v3581, %v3716
  %v3749 = vsub.f32 %v3582, %v3717
  %v3750 = vsub.f32 %v3583, %v3718
  %v3751 = vsub.f32 %v3584, %v3719
  %v3752 = vsub.f32 %v3585, %v3720
  %v3753 = vsub.f32 %v3586, %v3721
  %v3754 = vsub.f32 %v3587, %v3722
  %v3755 = vsub.f32 %v3588, %v3723
  %v3756 = vsub.f32 %v3589, %v3724
  %v3757 = vsub.f32 %v3590, %v3725
  %v3758 = vsub.f32 %v3591, %v3726
  %v3759 = vsub.f32 %v3592, %v3727
  %v3760 = vsub.f32 %v3593, %v3728
  %v3761 = vsub.f32 %v3594, %v3729
  %v3762 = vsub.f32 %v3595, %v3730
  %v3763 = vsub.f32 %v3596, %v3731
  %v3764 = vsub.f32 %v3597, %v3732
  %v3765 = vsub.f32 %v3598, %v3733
  %v3766 = vsub.f32 %v3599, %v3734
  %v3767 = vsub.f32 %v3600, %v3735
  %v3768 = vsub.f32 %v3601, %v3736
  %v3769 = vsub.f32 %v3602, %v3737
  %v3770 = vsub.f32 %v3603, %v3738
  %v3771 = vsub.f32 %v3604, %v3739
  %v3772 = vsub.f32 %v3605, %v3740
  %v3773 = vsub.f32 %v3606, %v3741
  %v3774 = vsub.f32 %v3607, %v3742
  %v3775 = vsub.f32 %v3608, %v3743
  %v3776 = vsub.f32 %v3609, %v3744
  %v3777 = vsub.f32 %v3610, %v3745
  %v3778 = vsub.f32 %v3611, %v3746
  %v3779 = vmul.f32 %v3747, %v3747
  %v3780 = vmul.f32 %v3748, %v3748
  %v3781 = vmul.f32 %v3749, %v3749
  %v3782 = vmul.f32 %v3750, %v3750
  %v3783 = vmul.f32 %v3751, %v3751
  %v3784 = vmul.f32 %v3752, %v3752
  %v3785 = vmul.f32 %v3753, %v3753
  %v3786 = vmul.f32 %v3754, %v3754
  %v3787 = vmul.f32 %v3755, %v3755
  %v3788 = vmul.f32 %v3756, %v3756
  %v3789 = vmul.f32 %v3757, %v3757
  %v3790 = vmul.f32 %v3758, %v3758
  %v3791 = vmul.f32 %v3759, %v3759
  %v3792 = vmul.f32 %v3760, %v3760
  %v3793 = vmul.f32 %v3761, %v3761
  %v3794 = vmul.f32 %v3762, %v3762
  %v3795 = vmul.f32 %v3763, %v3763
  %v3796 = vmul.f32 %v3764, %v3764
  %v3797 = vmul.f32 %v3765, %v3765
  %v3798 = vmul.f32 %v3766, %v3766
  %v3799 = vmul.f32 %v3767, %v3767
  %v3800 = vmul.f32 %v3768, %v3768
  %v3801 = vmul.f32 %v3769, %v3769
  %v3802 = vmul.f32 %v3770, %v3770
  %v3803 = vmul.f32 %v3771, %v3771
  %v3804 = vmul.f32 %v3772, %v3772
  %v3805 = vmul.f32 %v3773, %v3773
  %v3806 = vmul.f32 %v3774, %v3774
  %v3807 = vmul.f32 %v3775, %v3775
  %v3808 = vmul.f32 %v3776, %v3776
  %v3809 = vmul.f32 %v3777, %v3777
  %v3810 = vmul.f32 %v3778, %v3778
  %v3811 = vsel %vm187, %v3779, 0.0
  %3812 = vadd.xlane.f32.xlu0 %v3811
  %v3813 = vpop.xlane.xlu0 %3812
  %v3814 = vsel %vm187, %v3780, 0.0
  %3815 = vadd.xlane.f32.xlu0 %v3814
  %v3816 = vpop.xlane.xlu0 %3815
  %v3817 = vsel %vm187, %v3781, 0.0
  %3818 = vadd.xlane.f32.xlu0 %v3817
  %v3819 = vpop.xlane.xlu0 %3818
  %v3820 = vsel %vm187, %v3782, 0.0
  %3821 = vadd.xlane.f32.xlu0 %v3820
  %v3822 = vpop.xlane.xlu0 %3821
  %v3823 = vsel %vm187, %v3783, 0.0
  %3824 = vadd.xlane.f32.xlu0 %v3823
  %v3825 = vpop.xlane.xlu0 %3824
  %v3826 = vsel %vm187, %v3784, 0.0
  %3827 = vadd.xlane.f32.xlu0 %v3826
  %v3828 = vpop.xlane.xlu0 %3827
  %v3829 = vsel %vm187, %v3785, 0.0
  %3830 = vadd.xlane.f32.xlu0 %v3829
  %v3831 = vpop.xlane.xlu0 %3830
  %v3832 = vsel %vm187, %v3786, 0.0
  %3833 = vadd.xlane.f32.xlu0 %v3832
  %v3834 = vpop.xlane.xlu0 %3833
  %v3835 = vsel %vm187, %v3787, 0.0
  %3836 = vadd.xlane.f32.xlu0 %v3835
  %v3837 = vpop.xlane.xlu0 %3836
  %v3838 = vsel %vm187, %v3788, 0.0
  %3839 = vadd.xlane.f32.xlu0 %v3838
  %v3840 = vpop.xlane.xlu0 %3839
  %v3841 = vsel %vm187, %v3789, 0.0
  %3842 = vadd.xlane.f32.xlu0 %v3841
  %v3843 = vpop.xlane.xlu0 %3842
  %v3844 = vsel %vm187, %v3790, 0.0
  %3845 = vadd.xlane.f32.xlu0 %v3844
  %v3846 = vpop.xlane.xlu0 %3845
  %v3847 = vsel %vm187, %v3791, 0.0
  %3848 = vadd.xlane.f32.xlu0 %v3847
  %v3849 = vpop.xlane.xlu0 %3848
  %v3850 = vsel %vm187, %v3792, 0.0
  %3851 = vadd.xlane.f32.xlu0 %v3850
  %v3852 = vpop.xlane.xlu0 %3851
  %v3853 = vsel %vm187, %v3793, 0.0
  %3854 = vadd.xlane.f32.xlu0 %v3853
  %v3855 = vpop.xlane.xlu0 %3854
  %v3856 = vsel %vm187, %v3794, 0.0
  %3857 = vadd.xlane.f32.xlu0 %v3856
  %v3858 = vpop.xlane.xlu0 %3857
  %v3859 = vsel %vm187, %v3795, 0.0
  %3860 = vadd.xlane.f32.xlu0 %v3859
  %v3861 = vpop.xlane.xlu0 %3860
  %v3862 = vsel %vm187, %v3796, 0.0
  %3863 = vadd.xlane.f32.xlu0 %v3862
  %v3864 = vpop.xlane.xlu0 %3863
  %v3865 = vsel %vm187, %v3797, 0.0
  %3866 = vadd.xlane.f32.xlu0 %v3865
  %v3867 = vpop.xlane.xlu0 %3866
  %v3868 = vsel %vm187, %v3798, 0.0
  %3869 = vadd.xlane.f32.xlu0 %v3868
  %v3870 = vpop.xlane.xlu0 %3869
  %v3871 = vsel %vm187, %v3799, 0.0
  %3872 = vadd.xlane.f32.xlu0 %v3871
  %v3873 = vpop.xlane.xlu0 %3872
  %v3874 = vsel %vm187, %v3800, 0.0
  %3875 = vadd.xlane.f32.xlu0 %v3874
  %v3876 = vpop.xlane.xlu0 %3875
  %v3877 = vsel %vm187, %v3801, 0.0
  %3878 = vadd.xlane.f32.xlu0 %v3877
  %v3879 = vpop.xlane.xlu0 %3878
  %v3880 = vsel %vm187, %v3802, 0.0
  %3881 = vadd.xlane.f32.xlu0 %v3880
  %v3882 = vpop.xlane.xlu0 %3881
  %v3883 = vsel %vm187, %v3803, 0.0
  %3884 = vadd.xlane.f32.xlu0 %v3883
  %v3885 = vpop.xlane.xlu0 %3884
  %v3886 = vsel %vm187, %v3804, 0.0
  %3887 = vadd.xlane.f32.xlu0 %v3886
  %v3888 = vpop.xlane.xlu0 %3887
  %v3889 = vsel %vm187, %v3805, 0.0
  %3890 = vadd.xlane.f32.xlu0 %v3889
  %v3891 = vpop.xlane.xlu0 %3890
  %v3892 = vsel %vm187, %v3806, 0.0
  %3893 = vadd.xlane.f32.xlu0 %v3892
  %v3894 = vpop.xlane.xlu0 %3893
  %v3895 = vsel %vm187, %v3807, 0.0
  %3896 = vadd.xlane.f32.xlu0 %v3895
  %v3897 = vpop.xlane.xlu0 %3896
  %v3898 = vsel %vm187, %v3808, 0.0
  %3899 = vadd.xlane.f32.xlu0 %v3898
  %v3900 = vpop.xlane.xlu0 %3899
  %v3901 = vsel %vm187, %v3809, 0.0
  %3902 = vadd.xlane.f32.xlu0 %v3901
  %v3903 = vpop.xlane.xlu0 %3902
  %v3904 = vsel %vm187, %v3810, 0.0
  %3905 = vadd.xlane.f32.xlu0 %v3904
  %v3906 = vpop.xlane.xlu0 %3905
  %v3907 = vmul.f32 %v3813, %v3714
  %v3908 = vmul.f32 %v3816, %v3714
  %v3909 = vmul.f32 %v3819, %v3714
  %v3910 = vmul.f32 %v3822, %v3714
  %v3911 = vmul.f32 %v3825, %v3714
  %v3912 = vmul.f32 %v3828, %v3714
  %v3913 = vmul.f32 %v3831, %v3714
  %v3914 = vmul.f32 %v3834, %v3714
  %v3915 = vmul.f32 %v3837, %v3714
  %v3916 = vmul.f32 %v3840, %v3714
  %v3917 = vmul.f32 %v3843, %v3714
  %v3918 = vmul.f32 %v3846, %v3714
  %v3919 = vmul.f32 %v3849, %v3714
  %v3920 = vmul.f32 %v3852, %v3714
  %v3921 = vmul.f32 %v3855, %v3714
  %v3922 = vmul.f32 %v3858, %v3714
  %v3923 = vmul.f32 %v3861, %v3714
  %v3924 = vmul.f32 %v3864, %v3714
  %v3925 = vmul.f32 %v3867, %v3714
  %v3926 = vmul.f32 %v3870, %v3714
  %v3927 = vmul.f32 %v3873, %v3714
  %v3928 = vmul.f32 %v3876, %v3714
  %v3929 = vmul.f32 %v3879, %v3714
  %v3930 = vmul.f32 %v3882, %v3714
  %v3931 = vmul.f32 %v3885, %v3714
  %v3932 = vmul.f32 %v3888, %v3714
  %v3933 = vmul.f32 %v3891, %v3714
  %v3934 = vmul.f32 %v3894, %v3714
  %v3935 = vmul.f32 %v3897, %v3714
  %v3936 = vmul.f32 %v3900, %v3714
  %v3937 = vmul.f32 %v3903, %v3714
  %v3938 = vmul.f32 %v3906, %v3714
  %v3939 = vadd.f32 %v3907, 1e-05
  %v3940 = vadd.f32 %v3908, 1e-05
  %v3941 = vadd.f32 %v3909, 1e-05
  %v3942 = vadd.f32 %v3910, 1e-05
  %v3943 = vadd.f32 %v3911, 1e-05
  %v3944 = vadd.f32 %v3912, 1e-05
  %v3945 = vadd.f32 %v3913, 1e-05
  %v3946 = vadd.f32 %v3914, 1e-05
  %v3947 = vadd.f32 %v3915, 1e-05
  %v3948 = vadd.f32 %v3916, 1e-05
  %v3949 = vadd.f32 %v3917, 1e-05
  %v3950 = vadd.f32 %v3918, 1e-05
  %v3951 = vadd.f32 %v3919, 1e-05
  %v3952 = vadd.f32 %v3920, 1e-05
  %v3953 = vadd.f32 %v3921, 1e-05
  %v3954 = vadd.f32 %v3922, 1e-05
  %v3955 = vadd.f32 %v3923, 1e-05
  %v3956 = vadd.f32 %v3924, 1e-05
  %v3957 = vadd.f32 %v3925, 1e-05
  %v3958 = vadd.f32 %v3926, 1e-05
  %v3959 = vadd.f32 %v3927, 1e-05
  %v3960 = vadd.f32 %v3928, 1e-05
  %v3961 = vadd.f32 %v3929, 1e-05
  %v3962 = vadd.f32 %v3930, 1e-05
  %v3963 = vadd.f32 %v3931, 1e-05
  %v3964 = vadd.f32 %v3932, 1e-05
  %v3965 = vadd.f32 %v3933, 1e-05
  %v3966 = vadd.f32 %v3934, 1e-05
  %v3967 = vadd.f32 %v3935, 1e-05
  %v3968 = vadd.f32 %v3936, 1e-05
  %v3969 = vadd.f32 %v3937, 1e-05
  %v3970 = vadd.f32 %v3938, 1e-05
  %v3971 = vrsqrt.pop %v3939
  %v3972 = vmul.f32 %v3971, %v3939
  %v3973 = vmul.f32 %v3972, %v3971
  %v3974 = vmul.f32 0.5, %v3973
  %v3975 = vsub.f32 1.5, %v3974
  %v3976 = vmul.f32 %v3971, %v3975
  %vm3977 = vweird.f32 %v3939
  %vm3978 = vweird.f32 %v3971
  %vm3979 = vmor %vm3977, %vm3978
  %v3980 = vsel %vm3979, %v3971, %v3976
  %v3981 = vrsqrt.pop %v3940
  %v3982 = vmul.f32 %v3981, %v3940
  %v3983 = vmul.f32 %v3982, %v3981
  %v3984 = vmul.f32 0.5, %v3983
  %v3985 = vsub.f32 1.5, %v3984
  %v3986 = vmul.f32 %v3981, %v3985
  %vm3987 = vweird.f32 %v3940
  %vm3988 = vweird.f32 %v3981
  %vm3989 = vmor %vm3987, %vm3988
  %v3990 = vsel %vm3989, %v3981, %v3986
  %v3991 = vrsqrt.pop %v3941
  %v3992 = vmul.f32 %v3991, %v3941
  %v3993 = vmul.f32 %v3992, %v3991
  %v3994 = vmul.f32 0.5, %v3993
  %v3995 = vsub.f32 1.5, %v3994
  %v3996 = vmul.f32 %v3991, %v3995
  %vm3997 = vweird.f32 %v3941
  %vm3998 = vweird.f32 %v3991
  %vm3999 = vmor %vm3997, %vm3998
  %v4000 = vsel %vm3999, %v3991, %v3996
  %v4001 = vrsqrt.pop %v3942
  %v4002 = vmul.f32 %v4001, %v3942
  %v4003 = vmul.f32 %v4002, %v4001
  %v4004 = vmul.f32 0.5, %v4003
  %v4005 = vsub.f32 1.5, %v4004
  %v4006 = vmul.f32 %v4001, %v4005
  %vm4007 = vweird.f32 %v3942
  %vm4008 = vweird.f32 %v4001
  %vm4009 = vmor %vm4007, %vm4008
  %v4010 = vsel %vm4009, %v4001, %v4006
  %v4011 = vrsqrt.pop %v3943
  %v4012 = vmul.f32 %v4011, %v3943
  %v4013 = vmul.f32 %v4012, %v4011
  %v4014 = vmul.f32 0.5, %v4013
  %v4015 = vsub.f32 1.5, %v4014
  %v4016 = vmul.f32 %v4011, %v4015
  %vm4017 = vweird.f32 %v3943
  %vm4018 = vweird.f32 %v4011
  %vm4019 = vmor %vm4017, %vm4018
  %v4020 = vsel %vm4019, %v4011, %v4016
  %v4021 = vrsqrt.pop %v3944
  %v4022 = vmul.f32 %v4021, %v3944
  %v4023 = vmul.f32 %v4022, %v4021
  %v4024 = vmul.f32 0.5, %v4023
  %v4025 = vsub.f32 1.5, %v4024
  %v4026 = vmul.f32 %v4021, %v4025
  %vm4027 = vweird.f32 %v3944
  %vm4028 = vweird.f32 %v4021
  %vm4029 = vmor %vm4027, %vm4028
  %v4030 = vsel %vm4029, %v4021, %v4026
  %v4031 = vrsqrt.pop %v3945
  %v4032 = vmul.f32 %v4031, %v3945
  %v4033 = vmul.f32 %v4032, %v4031
  %v4034 = vmul.f32 0.5, %v4033
  %v4035 = vsub.f32 1.5, %v4034
  %v4036 = vmul.f32 %v4031, %v4035
  %vm4037 = vweird.f32 %v3945
  %vm4038 = vweird.f32 %v4031
  %vm4039 = vmor %vm4037, %vm4038
  %v4040 = vsel %vm4039, %v4031, %v4036
  %v4041 = vrsqrt.pop %v3946
  %v4042 = vmul.f32 %v4041, %v3946
  %v4043 = vmul.f32 %v4042, %v4041
  %v4044 = vmul.f32 0.5, %v4043
  %v4045 = vsub.f32 1.5, %v4044
  %v4046 = vmul.f32 %v4041, %v4045
  %vm4047 = vweird.f32 %v3946
  %vm4048 = vweird.f32 %v4041
  %vm4049 = vmor %vm4047, %vm4048
  %v4050 = vsel %vm4049, %v4041, %v4046
  %v4051 = vrsqrt.pop %v3947
  %v4052 = vmul.f32 %v4051, %v3947
  %v4053 = vmul.f32 %v4052, %v4051
  %v4054 = vmul.f32 0.5, %v4053
  %v4055 = vsub.f32 1.5, %v4054
  %v4056 = vmul.f32 %v4051, %v4055
  %vm4057 = vweird.f32 %v3947
  %vm4058 = vweird.f32 %v4051
  %vm4059 = vmor %vm4057, %vm4058
  %v4060 = vsel %vm4059, %v4051, %v4056
  %v4061 = vrsqrt.pop %v3948
  %v4062 = vmul.f32 %v4061, %v3948
  %v4063 = vmul.f32 %v4062, %v4061
  %v4064 = vmul.f32 0.5, %v4063
  %v4065 = vsub.f32 1.5, %v4064
  %v4066 = vmul.f32 %v4061, %v4065
  %vm4067 = vweird.f32 %v3948
  %vm4068 = vweird.f32 %v4061
  %vm4069 = vmor %vm4067, %vm4068
  %v4070 = vsel %vm4069, %v4061, %v4066
  %v4071 = vrsqrt.pop %v3949
  %v4072 = vmul.f32 %v4071, %v3949
  %v4073 = vmul.f32 %v4072, %v4071
  %v4074 = vmul.f32 0.5, %v4073
  %v4075 = vsub.f32 1.5, %v4074
  %v4076 = vmul.f32 %v4071, %v4075
  %vm4077 = vweird.f32 %v3949
  %vm4078 = vweird.f32 %v4071
  %vm4079 = vmor %vm4077, %vm4078
  %v4080 = vsel %vm4079, %v4071, %v4076
  %v4081 = vrsqrt.pop %v3950
  %v4082 = vmul.f32 %v4081, %v3950
  %v4083 = vmul.f32 %v4082, %v4081
  %v4084 = vmul.f32 0.5, %v4083
  %v4085 = vsub.f32 1.5, %v4084
  %v4086 = vmul.f32 %v4081, %v4085
  %vm4087 = vweird.f32 %v3950
  %vm4088 = vweird.f32 %v4081
  %vm4089 = vmor %vm4087, %vm4088
  %v4090 = vsel %vm4089, %v4081, %v4086
  %v4091 = vrsqrt.pop %v3951
  %v4092 = vmul.f32 %v4091, %v3951
  %v4093 = vmul.f32 %v4092, %v4091
  %v4094 = vmul.f32 0.5, %v4093
  %v4095 = vsub.f32 1.5, %v4094
  %v4096 = vmul.f32 %v4091, %v4095
  %vm4097 = vweird.f32 %v3951
  %vm4098 = vweird.f32 %v4091
  %vm4099 = vmor %vm4097, %vm4098
  %v4100 = vsel %vm4099, %v4091, %v4096
  %v4101 = vrsqrt.pop %v3952
  %v4102 = vmul.f32 %v4101, %v3952
  %v4103 = vmul.f32 %v4102, %v4101
  %v4104 = vmul.f32 0.5, %v4103
  %v4105 = vsub.f32 1.5, %v4104
  %v4106 = vmul.f32 %v4101, %v4105
  %vm4107 = vweird.f32 %v3952
  %vm4108 = vweird.f32 %v4101
  %vm4109 = vmor %vm4107, %vm4108
  %v4110 = vsel %vm4109, %v4101, %v4106
  %v4111 = vrsqrt.pop %v3953
  %v4112 = vmul.f32 %v4111, %v3953
  %v4113 = vmul.f32 %v4112, %v4111
  %v4114 = vmul.f32 0.5, %v4113
  %v4115 = vsub.f32 1.5, %v4114
  %v4116 = vmul.f32 %v4111, %v4115
  %vm4117 = vweird.f32 %v3953
  %vm4118 = vweird.f32 %v4111
  %vm4119 = vmor %vm4117, %vm4118
  %v4120 = vsel %vm4119, %v4111, %v4116
  %v4121 = vrsqrt.pop %v3954
  %v4122 = vmul.f32 %v4121, %v3954
  %v4123 = vmul.f32 %v4122, %v4121
  %v4124 = vmul.f32 0.5, %v4123
  %v4125 = vsub.f32 1.5, %v4124
  %v4126 = vmul.f32 %v4121, %v4125
  %vm4127 = vweird.f32 %v3954
  %vm4128 = vweird.f32 %v4121
  %vm4129 = vmor %vm4127, %vm4128
  %v4130 = vsel %vm4129, %v4121, %v4126
  %v4131 = vrsqrt.pop %v3955
  %v4132 = vmul.f32 %v4131, %v3955
  %v4133 = vmul.f32 %v4132, %v4131
  %v4134 = vmul.f32 0.5, %v4133
  %v4135 = vsub.f32 1.5, %v4134
  %v4136 = vmul.f32 %v4131, %v4135
  %vm4137 = vweird.f32 %v3955
  %vm4138 = vweird.f32 %v4131
  %vm4139 = vmor %vm4137, %vm4138
  %v4140 = vsel %vm4139, %v4131, %v4136
  %v4141 = vrsqrt.pop %v3956
  %v4142 = vmul.f32 %v4141, %v3956
  %v4143 = vmul.f32 %v4142, %v4141
  %v4144 = vmul.f32 0.5, %v4143
  %v4145 = vsub.f32 1.5, %v4144
  %v4146 = vmul.f32 %v4141, %v4145
  %vm4147 = vweird.f32 %v3956
  %vm4148 = vweird.f32 %v4141
  %vm4149 = vmor %vm4147, %vm4148
  %v4150 = vsel %vm4149, %v4141, %v4146
  %v4151 = vrsqrt.pop %v3957
  %v4152 = vmul.f32 %v4151, %v3957
  %v4153 = vmul.f32 %v4152, %v4151
  %v4154 = vmul.f32 0.5, %v4153
  %v4155 = vsub.f32 1.5, %v4154
  %v4156 = vmul.f32 %v4151, %v4155
  %vm4157 = vweird.f32 %v3957
  %vm4158 = vweird.f32 %v4151
  %vm4159 = vmor %vm4157, %vm4158
  %v4160 = vsel %vm4159, %v4151, %v4156
  %v4161 = vrsqrt.pop %v3958
  %v4162 = vmul.f32 %v4161, %v3958
  %v4163 = vmul.f32 %v4162, %v4161
  %v4164 = vmul.f32 0.5, %v4163
  %v4165 = vsub.f32 1.5, %v4164
  %v4166 = vmul.f32 %v4161, %v4165
  %vm4167 = vweird.f32 %v3958
  %vm4168 = vweird.f32 %v4161
  %vm4169 = vmor %vm4167, %vm4168
  %v4170 = vsel %vm4169, %v4161, %v4166
  %v4171 = vrsqrt.pop %v3959
  %v4172 = vmul.f32 %v4171, %v3959
  %v4173 = vmul.f32 %v4172, %v4171
  %v4174 = vmul.f32 0.5, %v4173
  %v4175 = vsub.f32 1.5, %v4174
  %v4176 = vmul.f32 %v4171, %v4175
  %vm4177 = vweird.f32 %v3959
  %vm4178 = vweird.f32 %v4171
  %vm4179 = vmor %vm4177, %vm4178
  %v4180 = vsel %vm4179, %v4171, %v4176
  %v4181 = vrsqrt.pop %v3960
  %v4182 = vmul.f32 %v4181, %v3960
  %v4183 = vmul.f32 %v4182, %v4181
  %v4184 = vmul.f32 0.5, %v4183
  %v4185 = vsub.f32 1.5, %v4184
  %v4186 = vmul.f32 %v4181, %v4185
  %vm4187 = vweird.f32 %v3960
  %vm4188 = vweird.f32 %v4181
  %vm4189 = vmor %vm4187, %vm4188
  %v4190 = vsel %vm4189, %v4181, %v4186
  %v4191 = vrsqrt.pop %v3961
  %v4192 = vmul.f32 %v4191, %v3961
  %v4193 = vmul.f32 %v4192, %v4191
  %v4194 = vmul.f32 0.5, %v4193
  %v4195 = vsub.f32 1.5, %v4194
  %v4196 = vmul.f32 %v4191, %v4195
  %vm4197 = vweird.f32 %v3961
  %vm4198 = vweird.f32 %v4191
  %vm4199 = vmor %vm4197, %vm4198
  %v4200 = vsel %vm4199, %v4191, %v4196
  %v4201 = vrsqrt.pop %v3962
  %v4202 = vmul.f32 %v4201, %v3962
  %v4203 = vmul.f32 %v4202, %v4201
  %v4204 = vmul.f32 0.5, %v4203
  %v4205 = vsub.f32 1.5, %v4204
  %v4206 = vmul.f32 %v4201, %v4205
  %vm4207 = vweird.f32 %v3962
  %vm4208 = vweird.f32 %v4201
  %vm4209 = vmor %vm4207, %vm4208
  %v4210 = vsel %vm4209, %v4201, %v4206
  %v4211 = vrsqrt.pop %v3963
  %v4212 = vmul.f32 %v4211, %v3963
  %v4213 = vmul.f32 %v4212, %v4211
  %v4214 = vmul.f32 0.5, %v4213
  %v4215 = vsub.f32 1.5, %v4214
  %v4216 = vmul.f32 %v4211, %v4215
  %vm4217 = vweird.f32 %v3963
  %vm4218 = vweird.f32 %v4211
  %vm4219 = vmor %vm4217, %vm4218
  %v4220 = vsel %vm4219, %v4211, %v4216
  %v4221 = vrsqrt.pop %v3964
  %v4222 = vmul.f32 %v4221, %v3964
  %v4223 = vmul.f32 %v4222, %v4221
  %v4224 = vmul.f32 0.5, %v4223
  %v4225 = vsub.f32 1.5, %v4224
  %v4226 = vmul.f32 %v4221, %v4225
  %vm4227 = vweird.f32 %v3964
  %vm4228 = vweird.f32 %v4221
  %vm4229 = vmor %vm4227, %vm4228
  %v4230 = vsel %vm4229, %v4221, %v4226
  %v4231 = vrsqrt.pop %v3965
  %v4232 = vmul.f32 %v4231, %v3965
  %v4233 = vmul.f32 %v4232, %v4231
  %v4234 = vmul.f32 0.5, %v4233
  %v4235 = vsub.f32 1.5, %v4234
  %v4236 = vmul.f32 %v4231, %v4235
  %vm4237 = vweird.f32 %v3965
  %vm4238 = vweird.f32 %v4231
  %vm4239 = vmor %vm4237, %vm4238
  %v4240 = vsel %vm4239, %v4231, %v4236
  %v4241 = vrsqrt.pop %v3966
  %v4242 = vmul.f32 %v4241, %v3966
  %v4243 = vmul.f32 %v4242, %v4241
  %v4244 = vmul.f32 0.5, %v4243
  %v4245 = vsub.f32 1.5, %v4244
  %v4246 = vmul.f32 %v4241, %v4245
  %vm4247 = vweird.f32 %v3966
  %vm4248 = vweird.f32 %v4241
  %vm4249 = vmor %vm4247, %vm4248
  %v4250 = vsel %vm4249, %v4241, %v4246
  %v4251 = vrsqrt.pop %v3967
  %v4252 = vmul.f32 %v4251, %v3967
  %v4253 = vmul.f32 %v4252, %v4251
  %v4254 = vmul.f32 0.5, %v4253
  %v4255 = vsub.f32 1.5, %v4254
  %v4256 = vmul.f32 %v4251, %v4255
  %vm4257 = vweird.f32 %v3967
  %vm4258 = vweird.f32 %v4251
  %vm4259 = vmor %vm4257, %vm4258
  %v4260 = vsel %vm4259, %v4251, %v4256
  %v4261 = vrsqrt.pop %v3968
  %v4262 = vmul.f32 %v4261, %v3968
  %v4263 = vmul.f32 %v4262, %v4261
  %v4264 = vmul.f32 0.5, %v4263
  %v4265 = vsub.f32 1.5, %v4264
  %v4266 = vmul.f32 %v4261, %v4265
  %vm4267 = vweird.f32 %v3968
  %vm4268 = vweird.f32 %v4261
  %vm4269 = vmor %vm4267, %vm4268
  %v4270 = vsel %vm4269, %v4261, %v4266
  %v4271 = vrsqrt.pop %v3969
  %v4272 = vmul.f32 %v4271, %v3969
  %v4273 = vmul.f32 %v4272, %v4271
  %v4274 = vmul.f32 0.5, %v4273
  %v4275 = vsub.f32 1.5, %v4274
  %v4276 = vmul.f32 %v4271, %v4275
  %vm4277 = vweird.f32 %v3969
  %vm4278 = vweird.f32 %v4271
  %vm4279 = vmor %vm4277, %vm4278
  %v4280 = vsel %vm4279, %v4271, %v4276
  %v4281 = vrsqrt.pop %v3970
  %v4282 = vmul.f32 %v4281, %v3970
  %v4283 = vmul.f32 %v4282, %v4281
  %v4284 = vmul.f32 0.5, %v4283
  %v4285 = vsub.f32 1.5, %v4284
  %v4286 = vmul.f32 %v4281, %v4285
  %vm4287 = vweird.f32 %v3970
  %vm4288 = vweird.f32 %v4281
  %vm4289 = vmor %vm4287, %vm4288
  %v4290 = vsel %vm4289, %v4281, %v4286
  %v4291 = vmul.f32 %v3747, %v3980
  %v4292 = vmul.f32 %v3748, %v3990
  %v4293 = vmul.f32 %v3749, %v4000
  %v4294 = vmul.f32 %v3750, %v4010
  %v4295 = vmul.f32 %v3751, %v4020
  %v4296 = vmul.f32 %v3752, %v4030
  %v4297 = vmul.f32 %v3753, %v4040
  %v4298 = vmul.f32 %v3754, %v4050
  %v4299 = vmul.f32 %v3755, %v4060
  %v4300 = vmul.f32 %v3756, %v4070
  %v4301 = vmul.f32 %v3757, %v4080
  %v4302 = vmul.f32 %v3758, %v4090
  %v4303 = vmul.f32 %v3759, %v4100
  %v4304 = vmul.f32 %v3760, %v4110
  %v4305 = vmul.f32 %v3761, %v4120
  %v4306 = vmul.f32 %v3762, %v4130
  %v4307 = vmul.f32 %v3763, %v4140
  %v4308 = vmul.f32 %v3764, %v4150
  %v4309 = vmul.f32 %v3765, %v4160
  %v4310 = vmul.f32 %v3766, %v4170
  %v4311 = vmul.f32 %v3767, %v4180
  %v4312 = vmul.f32 %v3768, %v4190
  %v4313 = vmul.f32 %v3769, %v4200
  %v4314 = vmul.f32 %v3770, %v4210
  %v4315 = vmul.f32 %v3771, %v4220
  %v4316 = vmul.f32 %v3772, %v4230
  %v4317 = vmul.f32 %v3773, %v4240
  %v4318 = vmul.f32 %v3774, %v4250
  %v4319 = vmul.f32 %v3775, %v4260
  %v4320 = vmul.f32 %v3776, %v4270
  %v4321 = vmul.f32 %v3777, %v4280
  %v4322 = vmul.f32 %v3778, %v4290
  %v4323 = vperm.slane %v94, 2
  %v4324 = vmul.f32 %v4291, %v4323
  %v4325 = vmul.f32 %v4292, %v4323
  %v4326 = vmul.f32 %v4293, %v4323
  %v4327 = vmul.f32 %v4294, %v4323
  %v4328 = vmul.f32 %v4295, %v4323
  %v4329 = vmul.f32 %v4296, %v4323
  %v4330 = vmul.f32 %v4297, %v4323
  %v4331 = vmul.f32 %v4298, %v4323
  %v4332 = vmul.f32 %v4299, %v4323
  %v4333 = vmul.f32 %v4300, %v4323
  %v4334 = vmul.f32 %v4301, %v4323
  %v4335 = vmul.f32 %v4302, %v4323
  %v4336 = vmul.f32 %v4303, %v4323
  %v4337 = vmul.f32 %v4304, %v4323
  %v4338 = vmul.f32 %v4305, %v4323
  %v4339 = vmul.f32 %v4306, %v4323
  %v4340 = vmul.f32 %v4307, %v4323
  %v4341 = vmul.f32 %v4308, %v4323
  %v4342 = vmul.f32 %v4309, %v4323
  %v4343 = vmul.f32 %v4310, %v4323
  %v4344 = vmul.f32 %v4311, %v4323
  %v4345 = vmul.f32 %v4312, %v4323
  %v4346 = vmul.f32 %v4313, %v4323
  %v4347 = vmul.f32 %v4314, %v4323
  %v4348 = vmul.f32 %v4315, %v4323
  %v4349 = vmul.f32 %v4316, %v4323
  %v4350 = vmul.f32 %v4317, %v4323
  %v4351 = vmul.f32 %v4318, %v4323
  %v4352 = vmul.f32 %v4319, %v4323
  %v4353 = vmul.f32 %v4320, %v4323
  %v4354 = vmul.f32 %v4321, %v4323
  %v4355 = vmul.f32 %v4322, %v4323
  %v4356 = vperm.slane %v94, 3
  %v4357 = vadd.f32 %v4324, %v4356
  %v4358 = vadd.f32 %v4325, %v4356
  %v4359 = vadd.f32 %v4326, %v4356
  %v4360 = vadd.f32 %v4327, %v4356
  %v4361 = vadd.f32 %v4328, %v4356
  %v4362 = vadd.f32 %v4329, %v4356
  %v4363 = vadd.f32 %v4330, %v4356
  %v4364 = vadd.f32 %v4331, %v4356
  %v4365 = vadd.f32 %v4332, %v4356
  %v4366 = vadd.f32 %v4333, %v4356
  %v4367 = vadd.f32 %v4334, %v4356
  %v4368 = vadd.f32 %v4335, %v4356
  %v4369 = vadd.f32 %v4336, %v4356
  %v4370 = vadd.f32 %v4337, %v4356
  %v4371 = vadd.f32 %v4338, %v4356
  %v4372 = vadd.f32 %v4339, %v4356
  %v4373 = vadd.f32 %v4340, %v4356
  %v4374 = vadd.f32 %v4341, %v4356
  %v4375 = vadd.f32 %v4342, %v4356
  %v4376 = vadd.f32 %v4343, %v4356
  %v4377 = vadd.f32 %v4344, %v4356
  %v4378 = vadd.f32 %v4345, %v4356
  %v4379 = vadd.f32 %v4346, %v4356
  %v4380 = vadd.f32 %v4347, %v4356
  %v4381 = vadd.f32 %v4348, %v4356
  %v4382 = vadd.f32 %v4349, %v4356
  %v4383 = vadd.f32 %v4350, %v4356
  %v4384 = vadd.f32 %v4351, %v4356
  %v4385 = vadd.f32 %v4352, %v4356
  %v4386 = vadd.f32 %v4353, %v4356
  %v4387 = vadd.f32 %v4354, %v4356
  %v4388 = vadd.f32 %v4355, %v4356
  %v4389 = vpack.c.bf16 %v4358, %v4357
  %v4390 = vpack.c.bf16 %v4360, %v4359
  %v4391 = vpack.c.bf16 %v4362, %v4361
  %v4392 = vpack.c.bf16 %v4364, %v4363
  %v4393 = vpack.c.bf16 %v4366, %v4365
  %v4394 = vpack.c.bf16 %v4368, %v4367
  %v4395 = vpack.c.bf16 %v4370, %v4369
  %v4396 = vpack.c.bf16 %v4372, %v4371
  %v4397 = vpack.c.bf16 %v4374, %v4373
  %v4398 = vpack.c.bf16 %v4376, %v4375
  %v4399 = vpack.c.bf16 %v4378, %v4377
  %v4400 = vpack.c.bf16 %v4380, %v4379
  %v4401 = vpack.c.bf16 %v4382, %v4381
  %v4402 = vpack.c.bf16 %v4384, %v4383
  %v4403 = vpack.c.bf16 %v4386, %v4385
  %v4404 = vpack.c.bf16 %v4388, %v4387
  %v4405 = vperm.slane %v94, 4
  %v4410 = vunpack.c.l.b16 %v114
  %v4411 = vunpack.c.l.b16 %v115
  %v4412 = vunpack.c.l.b16 %v116
  %v4413 = vunpack.c.l.b16 %v117
  %v4414 = vpack.c.b16 %v4411, %v4410
  %v4415 = vpack.c.b16 %v4413, %v4412
  %v4419 = vsel %vm187, %v4389, 0
  %v4422 = vsel %vm187, %v4390, 0
  %v4425 = vsel %vm187, %v4391, 0
  %v4428 = vsel %vm187, %v4392, 0
  %v4431 = vsel %vm187, %v4393, 0
  %v4434 = vsel %vm187, %v4394, 0
  %v4437 = vsel %vm187, %v4395, 0
  %v4440 = vsel %vm187, %v4396, 0
  %v4443 = vsel %vm187, %v4397, 0
  %v4446 = vsel %vm187, %v4398, 0
  %v4449 = vsel %vm187, %v4399, 0
  %v4452 = vsel %vm187, %v4400, 0
  %v4455 = vsel %vm187, %v4401, 0
  %v4458 = vsel %vm187, %v4402, 0
  %v4461 = vsel %vm187, %v4403, 0
  %v4464 = vsel %vm187, %v4404, 0
  %4466 = vmatpush.bf16.msra.mxu0 0
  %4467 = vmatpush.bf16.msra.mxu0 0
  %4468 = vmatpush.bf16.msra.mxu0 0
  %4469 = vmatpush.bf16.msra.mxu0 0
  %4470 = vmatpush.bf16.msra.mxu0 0
  %4471 = vmatpush.bf16.msra.mxu0 0
  %4472 = vmatpush.bf16.msra.mxu0 %v4415
  %4473 = vmatpush.bf16.msra.mxu0 %v4414
  %4474 = vmatmul.bf16.gmra.mxu0 %v4419
  %v4475 = vpop.f32.mrf.mxu0
  %v4476 = vadd.f32 %v4405, %v4475
  %v4477 = vpop.f32.mrf.mxu0
  %v4478 = vadd.f32 %v4405, %v4477
  %4479 = vmatmul.bf16.gmra.mxu0 %v4422
  %v4480 = vpop.f32.mrf.mxu0
  %v4481 = vadd.f32 %v4405, %v4480
  %v4482 = vpop.f32.mrf.mxu0
  %v4483 = vadd.f32 %v4405, %v4482
  %4484 = vmatmul.bf16.gmra.mxu0 %v4425
  %v4485 = vpop.f32.mrf.mxu0
  %v4486 = vadd.f32 %v4405, %v4485
  %v4487 = vpop.f32.mrf.mxu0
  %v4488 = vadd.f32 %v4405, %v4487
  %4489 = vmatmul.bf16.gmra.mxu0 %v4428
  %v4490 = vpop.f32.mrf.mxu0
  %v4491 = vadd.f32 %v4405, %v4490
  %v4492 = vpop.f32.mrf.mxu0
  %v4493 = vadd.f32 %v4405, %v4492
  %4494 = vmatmul.bf16.gmra.mxu0 %v4431
  %v4495 = vpop.f32.mrf.mxu0
  %v4496 = vadd.f32 %v4405, %v4495
  %v4497 = vpop.f32.mrf.mxu0
  %v4498 = vadd.f32 %v4405, %v4497
  %4499 = vmatmul.bf16.gmra.mxu0 %v4434
  %v4500 = vpop.f32.mrf.mxu0
  %v4501 = vadd.f32 %v4405, %v4500
  %v4502 = vpop.f32.mrf.mxu0
  %v4503 = vadd.f32 %v4405, %v4502
  %4504 = vmatmul.bf16.gmra.mxu0 %v4437
  %v4505 = vpop.f32.mrf.mxu0
  %v4506 = vadd.f32 %v4405, %v4505
  %v4507 = vpop.f32.mrf.mxu0
  %v4508 = vadd.f32 %v4405, %v4507
  %4509 = vmatmul.bf16.gmra.mxu0 %v4440
  %v4510 = vpop.f32.mrf.mxu0
  %v4511 = vadd.f32 %v4405, %v4510
  %v4512 = vpop.f32.mrf.mxu0
  %v4513 = vadd.f32 %v4405, %v4512
  %4514 = vmatmul.bf16.gmra.mxu0 %v4443
  %v4515 = vpop.f32.mrf.mxu0
  %v4516 = vadd.f32 %v4405, %v4515
  %v4517 = vpop.f32.mrf.mxu0
  %v4518 = vadd.f32 %v4405, %v4517
  %4519 = vmatmul.bf16.gmra.mxu0 %v4446
  %v4520 = vpop.f32.mrf.mxu0
  %v4521 = vadd.f32 %v4405, %v4520
  %v4522 = vpop.f32.mrf.mxu0
  %v4523 = vadd.f32 %v4405, %v4522
  %4524 = vmatmul.bf16.gmra.mxu0 %v4449
  %v4525 = vpop.f32.mrf.mxu0
  %v4526 = vadd.f32 %v4405, %v4525
  %v4527 = vpop.f32.mrf.mxu0
  %v4528 = vadd.f32 %v4405, %v4527
  %4529 = vmatmul.bf16.gmra.mxu0 %v4452
  %v4530 = vpop.f32.mrf.mxu0
  %v4531 = vadd.f32 %v4405, %v4530
  %v4532 = vpop.f32.mrf.mxu0
  %v4533 = vadd.f32 %v4405, %v4532
  %4534 = vmatmul.bf16.gmra.mxu0 %v4455
  %v4535 = vpop.f32.mrf.mxu0
  %v4536 = vadd.f32 %v4405, %v4535
  %v4537 = vpop.f32.mrf.mxu0
  %v4538 = vadd.f32 %v4405, %v4537
  %4539 = vmatmul.bf16.gmra.mxu0 %v4458
  %v4540 = vpop.f32.mrf.mxu0
  %v4541 = vadd.f32 %v4405, %v4540
  %v4542 = vpop.f32.mrf.mxu0
  %v4543 = vadd.f32 %v4405, %v4542
  %4544 = vmatmul.bf16.gmra.mxu0 %v4461
  %v4545 = vpop.f32.mrf.mxu0
  %v4546 = vadd.f32 %v4405, %v4545
  %v4547 = vpop.f32.mrf.mxu0
  %v4548 = vadd.f32 %v4405, %v4547
  %4549 = vmatmul.bf16.gmra.mxu0 %v4464
  %v4550 = vpop.f32.mrf.mxu0
  %v4551 = vadd.f32 %v4405, %v4550
  %v4552 = vpop.f32.mrf.mxu0
  %v4553 = vadd.f32 %v4405, %v4552
  %4554 = vdwg.mxu0
  %v4555 = vmax.f32 %v4476, 0.0
  %v4556 = vmax.f32 %v4478, 0.0
  %v4557 = vmax.f32 %v4481, 0.0
  %v4558 = vmax.f32 %v4483, 0.0
  %v4559 = vmax.f32 %v4486, 0.0
  %v4560 = vmax.f32 %v4488, 0.0
  %v4561 = vmax.f32 %v4491, 0.0
  %v4562 = vmax.f32 %v4493, 0.0
  %v4563 = vmax.f32 %v4496, 0.0
  %v4564 = vmax.f32 %v4498, 0.0
  %v4565 = vmax.f32 %v4501, 0.0
  %v4566 = vmax.f32 %v4503, 0.0
  %v4567 = vmax.f32 %v4506, 0.0
  %v4568 = vmax.f32 %v4508, 0.0
  %v4569 = vmax.f32 %v4511, 0.0
  %v4570 = vmax.f32 %v4513, 0.0
  %v4571 = vmax.f32 %v4516, 0.0
  %v4572 = vmax.f32 %v4518, 0.0
  %v4573 = vmax.f32 %v4521, 0.0
  %v4574 = vmax.f32 %v4523, 0.0
  %v4575 = vmax.f32 %v4526, 0.0
  %v4576 = vmax.f32 %v4528, 0.0
  %v4577 = vmax.f32 %v4531, 0.0
  %v4578 = vmax.f32 %v4533, 0.0
  %v4579 = vmax.f32 %v4536, 0.0
  %v4580 = vmax.f32 %v4538, 0.0
  %v4581 = vmax.f32 %v4541, 0.0
  %v4582 = vmax.f32 %v4543, 0.0
  %v4583 = vmax.f32 %v4546, 0.0
  %v4584 = vmax.f32 %v4548, 0.0
  %v4585 = vmax.f32 %v4551, 0.0
  %v4586 = vmax.f32 %v4553, 0.0
  %v4587 = vpack.c.bf16 %v4556, %v4555
  %v4588 = vpack.c.bf16 %v4558, %v4557
  %v4589 = vpack.c.bf16 %v4560, %v4559
  %v4590 = vpack.c.bf16 %v4562, %v4561
  %v4591 = vpack.c.bf16 %v4564, %v4563
  %v4592 = vpack.c.bf16 %v4566, %v4565
  %v4593 = vpack.c.bf16 %v4568, %v4567
  %v4594 = vpack.c.bf16 %v4570, %v4569
  %v4595 = vpack.c.bf16 %v4572, %v4571
  %v4596 = vpack.c.bf16 %v4574, %v4573
  %v4597 = vpack.c.bf16 %v4576, %v4575
  %v4598 = vpack.c.bf16 %v4578, %v4577
  %v4599 = vpack.c.bf16 %v4580, %v4579
  %v4600 = vpack.c.bf16 %v4582, %v4581
  %v4601 = vpack.c.bf16 %v4584, %v4583
  %v4602 = vpack.c.bf16 %v4586, %v4585
  %v4603 = vperm.slane %v94, 5
  %v4612 = vunpack.c.l.b16 %v118
  %v4613 = vunpack.c.l.b16 %v119
  %v4614 = vunpack.c.l.b16 %v120
  %v4615 = vunpack.c.l.b16 %v121
  %v4616 = vunpack.c.l.b16 %v122
  %v4617 = vunpack.c.l.b16 %v123
  %v4618 = vunpack.c.l.b16 %v124
  %v4619 = vunpack.c.l.b16 %v125
  %v4620 = vpack.c.b16 %v4613, %v4612
  %v4621 = vpack.c.b16 %v4615, %v4614
  %v4622 = vpack.c.b16 %v4617, %v4616
  %v4623 = vpack.c.b16 %v4619, %v4618
  %vm4628 = vcmask 523264
  %v4630 = vsel %vm4628, %v4587, 0
  %v4633 = vsel %vm4628, %v4588, 0
  %v4636 = vsel %vm4628, %v4589, 0
  %v4639 = vsel %vm4628, %v4590, 0
  %v4642 = vsel %vm4628, %v4591, 0
  %v4645 = vsel %vm4628, %v4592, 0
  %v4648 = vsel %vm4628, %v4593, 0
  %v4651 = vsel %vm4628, %v4594, 0
  %v4654 = vsel %vm4628, %v4595, 0
  %v4657 = vsel %vm4628, %v4596, 0
  %v4660 = vsel %vm4628, %v4597, 0
  %v4663 = vsel %vm4628, %v4598, 0
  %v4666 = vsel %vm4628, %v4599, 0
  %v4669 = vsel %vm4628, %v4600, 0
  %v4672 = vsel %vm4628, %v4601, 0
  %v4675 = vsel %vm4628, %v4602, 0
  %4677 = vmatpush.bf16.msra.mxu0 0
  %4678 = vmatpush.bf16.msra.mxu0 0
  %4679 = vmatpush.bf16.msra.mxu0 0
  %4680 = vmatpush.bf16.msra.mxu0 0
  %4681 = vmatpush.bf16.msra.mxu0 %v4623
  %4682 = vmatpush.bf16.msra.mxu0 %v4622
  %4683 = vmatpush.bf16.msra.mxu0 %v4621
  %4684 = vmatpush.bf16.msra.mxu0 %v4620
  %4685 = vmatmul.bf16.gmra.mxu0 %v4630
  %v4686 = vpop.f32.mrf.mxu0
  %v4687 = vadd.f32 %v4603, %v4686
  %v4688 = vpop.f32.mrf.mxu0
  %v4689 = vadd.f32 %v4603, %v4688
  %4690 = vmatmul.bf16.gmra.mxu0 %v4633
  %v4691 = vpop.f32.mrf.mxu0
  %v4692 = vadd.f32 %v4603, %v4691
  %v4693 = vpop.f32.mrf.mxu0
  %v4694 = vadd.f32 %v4603, %v4693
  %4695 = vmatmul.bf16.gmra.mxu0 %v4636
  %v4696 = vpop.f32.mrf.mxu0
  %v4697 = vadd.f32 %v4603, %v4696
  %v4698 = vpop.f32.mrf.mxu0
  %v4699 = vadd.f32 %v4603, %v4698
  %4700 = vmatmul.bf16.gmra.mxu0 %v4639
  %v4701 = vpop.f32.mrf.mxu0
  %v4702 = vadd.f32 %v4603, %v4701
  %v4703 = vpop.f32.mrf.mxu0
  %v4704 = vadd.f32 %v4603, %v4703
  %4705 = vmatmul.bf16.gmra.mxu0 %v4642
  %v4706 = vpop.f32.mrf.mxu0
  %v4707 = vadd.f32 %v4603, %v4706
  %v4708 = vpop.f32.mrf.mxu0
  %v4709 = vadd.f32 %v4603, %v4708
  %4710 = vmatmul.bf16.gmra.mxu0 %v4645
  %v4711 = vpop.f32.mrf.mxu0
  %v4712 = vadd.f32 %v4603, %v4711
  %v4713 = vpop.f32.mrf.mxu0
  %v4714 = vadd.f32 %v4603, %v4713
  %4715 = vmatmul.bf16.gmra.mxu0 %v4648
  %v4716 = vpop.f32.mrf.mxu0
  %v4717 = vadd.f32 %v4603, %v4716
  %v4718 = vpop.f32.mrf.mxu0
  %v4719 = vadd.f32 %v4603, %v4718
  %4720 = vmatmul.bf16.gmra.mxu0 %v4651
  %v4721 = vpop.f32.mrf.mxu0
  %v4722 = vadd.f32 %v4603, %v4721
  %v4723 = vpop.f32.mrf.mxu0
  %v4724 = vadd.f32 %v4603, %v4723
  %4725 = vmatmul.bf16.gmra.mxu0 %v4654
  %v4726 = vpop.f32.mrf.mxu0
  %v4727 = vadd.f32 %v4603, %v4726
  %v4728 = vpop.f32.mrf.mxu0
  %v4729 = vadd.f32 %v4603, %v4728
  %4730 = vmatmul.bf16.gmra.mxu0 %v4657
  %v4731 = vpop.f32.mrf.mxu0
  %v4732 = vadd.f32 %v4603, %v4731
  %v4733 = vpop.f32.mrf.mxu0
  %v4734 = vadd.f32 %v4603, %v4733
  %4735 = vmatmul.bf16.gmra.mxu0 %v4660
  %v4736 = vpop.f32.mrf.mxu0
  %v4737 = vadd.f32 %v4603, %v4736
  %v4738 = vpop.f32.mrf.mxu0
  %v4739 = vadd.f32 %v4603, %v4738
  %4740 = vmatmul.bf16.gmra.mxu0 %v4663
  %v4741 = vpop.f32.mrf.mxu0
  %v4742 = vadd.f32 %v4603, %v4741
  %v4743 = vpop.f32.mrf.mxu0
  %v4744 = vadd.f32 %v4603, %v4743
  %4745 = vmatmul.bf16.gmra.mxu0 %v4666
  %v4746 = vpop.f32.mrf.mxu0
  %v4747 = vadd.f32 %v4603, %v4746
  %v4748 = vpop.f32.mrf.mxu0
  %v4749 = vadd.f32 %v4603, %v4748
  %4750 = vmatmul.bf16.gmra.mxu0 %v4669
  %v4751 = vpop.f32.mrf.mxu0
  %v4752 = vadd.f32 %v4603, %v4751
  %v4753 = vpop.f32.mrf.mxu0
  %v4754 = vadd.f32 %v4603, %v4753
  %4755 = vmatmul.bf16.gmra.mxu0 %v4672
  %v4756 = vpop.f32.mrf.mxu0
  %v4757 = vadd.f32 %v4603, %v4756
  %v4758 = vpop.f32.mrf.mxu0
  %v4759 = vadd.f32 %v4603, %v4758
  %4760 = vmatmul.bf16.gmra.mxu0 %v4675
  %v4761 = vpop.f32.mrf.mxu0
  %v4762 = vadd.f32 %v4603, %v4761
  %v4763 = vpop.f32.mrf.mxu0
  %v4764 = vadd.f32 %v4603, %v4763
  %4765 = vdwg.mxu0
  %v4766 = vadd.f32 %v4357, %v4687
  %v4767 = vadd.f32 %v4358, %v4689
  %v4768 = vadd.f32 %v4359, %v4692
  %v4769 = vadd.f32 %v4360, %v4694
  %v4770 = vadd.f32 %v4361, %v4697
  %v4771 = vadd.f32 %v4362, %v4699
  %v4772 = vadd.f32 %v4363, %v4702
  %v4773 = vadd.f32 %v4364, %v4704
  %v4774 = vadd.f32 %v4365, %v4707
  %v4775 = vadd.f32 %v4366, %v4709
  %v4776 = vadd.f32 %v4367, %v4712
  %v4777 = vadd.f32 %v4368, %v4714
  %v4778 = vadd.f32 %v4369, %v4717
  %v4779 = vadd.f32 %v4370, %v4719
  %v4780 = vadd.f32 %v4371, %v4722
  %v4781 = vadd.f32 %v4372, %v4724
  %v4782 = vadd.f32 %v4373, %v4727
  %v4783 = vadd.f32 %v4374, %v4729
  %v4784 = vadd.f32 %v4375, %v4732
  %v4785 = vadd.f32 %v4376, %v4734
  %v4786 = vadd.f32 %v4377, %v4737
  %v4787 = vadd.f32 %v4378, %v4739
  %v4788 = vadd.f32 %v4379, %v4742
  %v4789 = vadd.f32 %v4380, %v4744
  %v4790 = vadd.f32 %v4381, %v4747
  %v4791 = vadd.f32 %v4382, %v4749
  %v4792 = vadd.f32 %v4383, %v4752
  %v4793 = vadd.f32 %v4384, %v4754
  %v4794 = vadd.f32 %v4385, %v4757
  %v4795 = vadd.f32 %v4386, %v4759
  %v4796 = vadd.f32 %v4387, %v4762
  %v4797 = vadd.f32 %v4388, %v4764
  %v4798 = vsel %vm187, %v4766, 0.0
  %4799 = vadd.xlane.f32.xlu0 %v4798
  %v4800 = vpop.xlane.xlu0 %4799
  %v4801 = vsel %vm187, %v4767, 0.0
  %4802 = vadd.xlane.f32.xlu0 %v4801
  %v4803 = vpop.xlane.xlu0 %4802
  %v4804 = vsel %vm187, %v4768, 0.0
  %4805 = vadd.xlane.f32.xlu0 %v4804
  %v4806 = vpop.xlane.xlu0 %4805
  %v4807 = vsel %vm187, %v4769, 0.0
  %4808 = vadd.xlane.f32.xlu0 %v4807
  %v4809 = vpop.xlane.xlu0 %4808
  %v4810 = vsel %vm187, %v4770, 0.0
  %4811 = vadd.xlane.f32.xlu0 %v4810
  %v4812 = vpop.xlane.xlu0 %4811
  %v4813 = vsel %vm187, %v4771, 0.0
  %4814 = vadd.xlane.f32.xlu0 %v4813
  %v4815 = vpop.xlane.xlu0 %4814
  %v4816 = vsel %vm187, %v4772, 0.0
  %4817 = vadd.xlane.f32.xlu0 %v4816
  %v4818 = vpop.xlane.xlu0 %4817
  %v4819 = vsel %vm187, %v4773, 0.0
  %4820 = vadd.xlane.f32.xlu0 %v4819
  %v4821 = vpop.xlane.xlu0 %4820
  %v4822 = vsel %vm187, %v4774, 0.0
  %4823 = vadd.xlane.f32.xlu0 %v4822
  %v4824 = vpop.xlane.xlu0 %4823
  %v4825 = vsel %vm187, %v4775, 0.0
  %4826 = vadd.xlane.f32.xlu0 %v4825
  %v4827 = vpop.xlane.xlu0 %4826
  %v4828 = vsel %vm187, %v4776, 0.0
  %4829 = vadd.xlane.f32.xlu0 %v4828
  %v4830 = vpop.xlane.xlu0 %4829
  %v4831 = vsel %vm187, %v4777, 0.0
  %4832 = vadd.xlane.f32.xlu0 %v4831
  %v4833 = vpop.xlane.xlu0 %4832
  %v4834 = vsel %vm187, %v4778, 0.0
  %4835 = vadd.xlane.f32.xlu0 %v4834
  %v4836 = vpop.xlane.xlu0 %4835
  %v4837 = vsel %vm187, %v4779, 0.0
  %4838 = vadd.xlane.f32.xlu0 %v4837
  %v4839 = vpop.xlane.xlu0 %4838
  %v4840 = vsel %vm187, %v4780, 0.0
  %4841 = vadd.xlane.f32.xlu0 %v4840
  %v4842 = vpop.xlane.xlu0 %4841
  %v4843 = vsel %vm187, %v4781, 0.0
  %4844 = vadd.xlane.f32.xlu0 %v4843
  %v4845 = vpop.xlane.xlu0 %4844
  %v4846 = vsel %vm187, %v4782, 0.0
  %4847 = vadd.xlane.f32.xlu0 %v4846
  %v4848 = vpop.xlane.xlu0 %4847
  %v4849 = vsel %vm187, %v4783, 0.0
  %4850 = vadd.xlane.f32.xlu0 %v4849
  %v4851 = vpop.xlane.xlu0 %4850
  %v4852 = vsel %vm187, %v4784, 0.0
  %4853 = vadd.xlane.f32.xlu0 %v4852
  %v4854 = vpop.xlane.xlu0 %4853
  %v4855 = vsel %vm187, %v4785, 0.0
  %4856 = vadd.xlane.f32.xlu0 %v4855
  %v4857 = vpop.xlane.xlu0 %4856
  %v4858 = vsel %vm187, %v4786, 0.0
  %4859 = vadd.xlane.f32.xlu0 %v4858
  %v4860 = vpop.xlane.xlu0 %4859
  %v4861 = vsel %vm187, %v4787, 0.0
  %4862 = vadd.xlane.f32.xlu0 %v4861
  %v4863 = vpop.xlane.xlu0 %4862
  %v4864 = vsel %vm187, %v4788, 0.0
  %4865 = vadd.xlane.f32.xlu0 %v4864
  %v4866 = vpop.xlane.xlu0 %4865
  %v4867 = vsel %vm187, %v4789, 0.0
  %4868 = vadd.xlane.f32.xlu0 %v4867
  %v4869 = vpop.xlane.xlu0 %4868
  %v4870 = vsel %vm187, %v4790, 0.0
  %4871 = vadd.xlane.f32.xlu0 %v4870
  %v4872 = vpop.xlane.xlu0 %4871
  %v4873 = vsel %vm187, %v4791, 0.0
  %4874 = vadd.xlane.f32.xlu0 %v4873
  %v4875 = vpop.xlane.xlu0 %4874
  %v4876 = vsel %vm187, %v4792, 0.0
  %4877 = vadd.xlane.f32.xlu0 %v4876
  %v4878 = vpop.xlane.xlu0 %4877
  %v4879 = vsel %vm187, %v4793, 0.0
  %4880 = vadd.xlane.f32.xlu0 %v4879
  %v4881 = vpop.xlane.xlu0 %4880
  %v4882 = vsel %vm187, %v4794, 0.0
  %4883 = vadd.xlane.f32.xlu0 %v4882
  %v4884 = vpop.xlane.xlu0 %4883
  %v4885 = vsel %vm187, %v4795, 0.0
  %4886 = vadd.xlane.f32.xlu0 %v4885
  %v4887 = vpop.xlane.xlu0 %4886
  %v4888 = vsel %vm187, %v4796, 0.0
  %4889 = vadd.xlane.f32.xlu0 %v4888
  %v4890 = vpop.xlane.xlu0 %4889
  %v4891 = vsel %vm187, %v4797, 0.0
  %4892 = vadd.xlane.f32.xlu0 %v4891
  %v4893 = vpop.xlane.xlu0 %4892
  %v4894 = vmul.f32 %v4800, %v3714
  %v4895 = vmul.f32 %v4803, %v3714
  %v4896 = vmul.f32 %v4806, %v3714
  %v4897 = vmul.f32 %v4809, %v3714
  %v4898 = vmul.f32 %v4812, %v3714
  %v4899 = vmul.f32 %v4815, %v3714
  %v4900 = vmul.f32 %v4818, %v3714
  %v4901 = vmul.f32 %v4821, %v3714
  %v4902 = vmul.f32 %v4824, %v3714
  %v4903 = vmul.f32 %v4827, %v3714
  %v4904 = vmul.f32 %v4830, %v3714
  %v4905 = vmul.f32 %v4833, %v3714
  %v4906 = vmul.f32 %v4836, %v3714
  %v4907 = vmul.f32 %v4839, %v3714
  %v4908 = vmul.f32 %v4842, %v3714
  %v4909 = vmul.f32 %v4845, %v3714
  %v4910 = vmul.f32 %v4848, %v3714
  %v4911 = vmul.f32 %v4851, %v3714
  %v4912 = vmul.f32 %v4854, %v3714
  %v4913 = vmul.f32 %v4857, %v3714
  %v4914 = vmul.f32 %v4860, %v3714
  %v4915 = vmul.f32 %v4863, %v3714
  %v4916 = vmul.f32 %v4866, %v3714
  %v4917 = vmul.f32 %v4869, %v3714
  %v4918 = vmul.f32 %v4872, %v3714
  %v4919 = vmul.f32 %v4875, %v3714
  %v4920 = vmul.f32 %v4878, %v3714
  %v4921 = vmul.f32 %v4881, %v3714
  %v4922 = vmul.f32 %v4884, %v3714
  %v4923 = vmul.f32 %v4887, %v3714
  %v4924 = vmul.f32 %v4890, %v3714
  %v4925 = vmul.f32 %v4893, %v3714
  %v4926 = vsub.f32 %v4766, %v4894
  %v4927 = vsub.f32 %v4767, %v4895
  %v4928 = vsub.f32 %v4768, %v4896
  %v4929 = vsub.f32 %v4769, %v4897
  %v4930 = vsub.f32 %v4770, %v4898
  %v4931 = vsub.f32 %v4771, %v4899
  %v4932 = vsub.f32 %v4772, %v4900
  %v4933 = vsub.f32 %v4773, %v4901
  %v4934 = vsub.f32 %v4774, %v4902
  %v4935 = vsub.f32 %v4775, %v4903
  %v4936 = vsub.f32 %v4776, %v4904
  %v4937 = vsub.f32 %v4777, %v4905
  %v4938 = vsub.f32 %v4778, %v4906
  %v4939 = vsub.f32 %v4779, %v4907
  %v4940 = vsub.f32 %v4780, %v4908
  %v4941 = vsub.f32 %v4781, %v4909
  %v4942 = vsub.f32 %v4782, %v4910
  %v4943 = vsub.f32 %v4783, %v4911
  %v4944 = vsub.f32 %v4784, %v4912
  %v4945 = vsub.f32 %v4785, %v4913
  %v4946 = vsub.f32 %v4786, %v4914
  %v4947 = vsub.f32 %v4787, %v4915
  %v4948 = vsub.f32 %v4788, %v4916
  %v4949 = vsub.f32 %v4789, %v4917
  %v4950 = vsub.f32 %v4790, %v4918
  %v4951 = vsub.f32 %v4791, %v4919
  %v4952 = vsub.f32 %v4792, %v4920
  %v4953 = vsub.f32 %v4793, %v4921
  %v4954 = vsub.f32 %v4794, %v4922
  %v4955 = vsub.f32 %v4795, %v4923
  %v4956 = vsub.f32 %v4796, %v4924
  %v4957 = vsub.f32 %v4797, %v4925
  %v4958 = vmul.f32 %v4926, %v4926
  %v4959 = vmul.f32 %v4927, %v4927
  %v4960 = vmul.f32 %v4928, %v4928
  %v4961 = vmul.f32 %v4929, %v4929
  %v4962 = vmul.f32 %v4930, %v4930
  %v4963 = vmul.f32 %v4931, %v4931
  %v4964 = vmul.f32 %v4932, %v4932
  %v4965 = vmul.f32 %v4933, %v4933
  %v4966 = vmul.f32 %v4934, %v4934
  %v4967 = vmul.f32 %v4935, %v4935
  %v4968 = vmul.f32 %v4936, %v4936
  %v4969 = vmul.f32 %v4937, %v4937
  %v4970 = vmul.f32 %v4938, %v4938
  %v4971 = vmul.f32 %v4939, %v4939
  %v4972 = vmul.f32 %v4940, %v4940
  %v4973 = vmul.f32 %v4941, %v4941
  %v4974 = vmul.f32 %v4942, %v4942
  %v4975 = vmul.f32 %v4943, %v4943
  %v4976 = vmul.f32 %v4944, %v4944
  %v4977 = vmul.f32 %v4945, %v4945
  %v4978 = vmul.f32 %v4946, %v4946
  %v4979 = vmul.f32 %v4947, %v4947
  %v4980 = vmul.f32 %v4948, %v4948
  %v4981 = vmul.f32 %v4949, %v4949
  %v4982 = vmul.f32 %v4950, %v4950
  %v4983 = vmul.f32 %v4951, %v4951
  %v4984 = vmul.f32 %v4952, %v4952
  %v4985 = vmul.f32 %v4953, %v4953
  %v4986 = vmul.f32 %v4954, %v4954
  %v4987 = vmul.f32 %v4955, %v4955
  %v4988 = vmul.f32 %v4956, %v4956
  %v4989 = vmul.f32 %v4957, %v4957
  %v4990 = vsel %vm187, %v4958, 0.0
  %4991 = vadd.xlane.f32.xlu0 %v4990
  %v4992 = vpop.xlane.xlu0 %4991
  %v4993 = vsel %vm187, %v4959, 0.0
  %4994 = vadd.xlane.f32.xlu0 %v4993
  %v4995 = vpop.xlane.xlu0 %4994
  %v4996 = vsel %vm187, %v4960, 0.0
  %4997 = vadd.xlane.f32.xlu0 %v4996
  %v4998 = vpop.xlane.xlu0 %4997
  %v4999 = vsel %vm187, %v4961, 0.0
  %5000 = vadd.xlane.f32.xlu0 %v4999
  %v5001 = vpop.xlane.xlu0 %5000
  %v5002 = vsel %vm187, %v4962, 0.0
  %5003 = vadd.xlane.f32.xlu0 %v5002
  %v5004 = vpop.xlane.xlu0 %5003
  %v5005 = vsel %vm187, %v4963, 0.0
  %5006 = vadd.xlane.f32.xlu0 %v5005
  %v5007 = vpop.xlane.xlu0 %5006
  %v5008 = vsel %vm187, %v4964, 0.0
  %5009 = vadd.xlane.f32.xlu0 %v5008
  %v5010 = vpop.xlane.xlu0 %5009
  %v5011 = vsel %vm187, %v4965, 0.0
  %5012 = vadd.xlane.f32.xlu0 %v5011
  %v5013 = vpop.xlane.xlu0 %5012
  %v5014 = vsel %vm187, %v4966, 0.0
  %5015 = vadd.xlane.f32.xlu0 %v5014
  %v5016 = vpop.xlane.xlu0 %5015
  %v5017 = vsel %vm187, %v4967, 0.0
  %5018 = vadd.xlane.f32.xlu0 %v5017
  %v5019 = vpop.xlane.xlu0 %5018
  %v5020 = vsel %vm187, %v4968, 0.0
  %5021 = vadd.xlane.f32.xlu0 %v5020
  %v5022 = vpop.xlane.xlu0 %5021
  %v5023 = vsel %vm187, %v4969, 0.0
  %5024 = vadd.xlane.f32.xlu0 %v5023
  %v5025 = vpop.xlane.xlu0 %5024
  %v5026 = vsel %vm187, %v4970, 0.0
  %5027 = vadd.xlane.f32.xlu0 %v5026
  %v5028 = vpop.xlane.xlu0 %5027
  %v5029 = vsel %vm187, %v4971, 0.0
  %5030 = vadd.xlane.f32.xlu0 %v5029
  %v5031 = vpop.xlane.xlu0 %5030
  %v5032 = vsel %vm187, %v4972, 0.0
  %5033 = vadd.xlane.f32.xlu0 %v5032
  %v5034 = vpop.xlane.xlu0 %5033
  %v5035 = vsel %vm187, %v4973, 0.0
  %5036 = vadd.xlane.f32.xlu0 %v5035
  %v5037 = vpop.xlane.xlu0 %5036
  %v5038 = vsel %vm187, %v4974, 0.0
  %5039 = vadd.xlane.f32.xlu0 %v5038
  %v5040 = vpop.xlane.xlu0 %5039
  %v5041 = vsel %vm187, %v4975, 0.0
  %5042 = vadd.xlane.f32.xlu0 %v5041
  %v5043 = vpop.xlane.xlu0 %5042
  %v5044 = vsel %vm187, %v4976, 0.0
  %5045 = vadd.xlane.f32.xlu0 %v5044
  %v5046 = vpop.xlane.xlu0 %5045
  %v5047 = vsel %vm187, %v4977, 0.0
  %5048 = vadd.xlane.f32.xlu0 %v5047
  %v5049 = vpop.xlane.xlu0 %5048
  %v5050 = vsel %vm187, %v4978, 0.0
  %5051 = vadd.xlane.f32.xlu0 %v5050
  %v5052 = vpop.xlane.xlu0 %5051
  %v5053 = vsel %vm187, %v4979, 0.0
  %5054 = vadd.xlane.f32.xlu0 %v5053
  %v5055 = vpop.xlane.xlu0 %5054
  %v5056 = vsel %vm187, %v4980, 0.0
  %5057 = vadd.xlane.f32.xlu0 %v5056
  %v5058 = vpop.xlane.xlu0 %5057
  %v5059 = vsel %vm187, %v4981, 0.0
  %5060 = vadd.xlane.f32.xlu0 %v5059
  %v5061 = vpop.xlane.xlu0 %5060
  %v5062 = vsel %vm187, %v4982, 0.0
  %5063 = vadd.xlane.f32.xlu0 %v5062
  %v5064 = vpop.xlane.xlu0 %5063
  %v5065 = vsel %vm187, %v4983, 0.0
  %5066 = vadd.xlane.f32.xlu0 %v5065
  %v5067 = vpop.xlane.xlu0 %5066
  %v5068 = vsel %vm187, %v4984, 0.0
  %5069 = vadd.xlane.f32.xlu0 %v5068
  %v5070 = vpop.xlane.xlu0 %5069
  %v5071 = vsel %vm187, %v4985, 0.0
  %5072 = vadd.xlane.f32.xlu0 %v5071
  %v5073 = vpop.xlane.xlu0 %5072
  %v5074 = vsel %vm187, %v4986, 0.0
  %5075 = vadd.xlane.f32.xlu0 %v5074
  %v5076 = vpop.xlane.xlu0 %5075
  %v5077 = vsel %vm187, %v4987, 0.0
  %5078 = vadd.xlane.f32.xlu0 %v5077
  %v5079 = vpop.xlane.xlu0 %5078
  %v5080 = vsel %vm187, %v4988, 0.0
  %5081 = vadd.xlane.f32.xlu0 %v5080
  %v5082 = vpop.xlane.xlu0 %5081
  %v5083 = vsel %vm187, %v4989, 0.0
  %5084 = vadd.xlane.f32.xlu0 %v5083
  %v5085 = vpop.xlane.xlu0 %5084
  %v5086 = vmul.f32 %v4992, %v3714
  %v5087 = vmul.f32 %v4995, %v3714
  %v5088 = vmul.f32 %v4998, %v3714
  %v5089 = vmul.f32 %v5001, %v3714
  %v5090 = vmul.f32 %v5004, %v3714
  %v5091 = vmul.f32 %v5007, %v3714
  %v5092 = vmul.f32 %v5010, %v3714
  %v5093 = vmul.f32 %v5013, %v3714
  %v5094 = vmul.f32 %v5016, %v3714
  %v5095 = vmul.f32 %v5019, %v3714
  %v5096 = vmul.f32 %v5022, %v3714
  %v5097 = vmul.f32 %v5025, %v3714
  %v5098 = vmul.f32 %v5028, %v3714
  %v5099 = vmul.f32 %v5031, %v3714
  %v5100 = vmul.f32 %v5034, %v3714
  %v5101 = vmul.f32 %v5037, %v3714
  %v5102 = vmul.f32 %v5040, %v3714
  %v5103 = vmul.f32 %v5043, %v3714
  %v5104 = vmul.f32 %v5046, %v3714
  %v5105 = vmul.f32 %v5049, %v3714
  %v5106 = vmul.f32 %v5052, %v3714
  %v5107 = vmul.f32 %v5055, %v3714
  %v5108 = vmul.f32 %v5058, %v3714
  %v5109 = vmul.f32 %v5061, %v3714
  %v5110 = vmul.f32 %v5064, %v3714
  %v5111 = vmul.f32 %v5067, %v3714
  %v5112 = vmul.f32 %v5070, %v3714
  %v5113 = vmul.f32 %v5073, %v3714
  %v5114 = vmul.f32 %v5076, %v3714
  %v5115 = vmul.f32 %v5079, %v3714
  %v5116 = vmul.f32 %v5082, %v3714
  %v5117 = vmul.f32 %v5085, %v3714
  %v5118 = vadd.f32 %v5086, 1e-05
  %v5119 = vadd.f32 %v5087, 1e-05
  %v5120 = vadd.f32 %v5088, 1e-05
  %v5121 = vadd.f32 %v5089, 1e-05
  %v5122 = vadd.f32 %v5090, 1e-05
  %v5123 = vadd.f32 %v5091, 1e-05
  %v5124 = vadd.f32 %v5092, 1e-05
  %v5125 = vadd.f32 %v5093, 1e-05
  %v5126 = vadd.f32 %v5094, 1e-05
  %v5127 = vadd.f32 %v5095, 1e-05
  %v5128 = vadd.f32 %v5096, 1e-05
  %v5129 = vadd.f32 %v5097, 1e-05
  %v5130 = vadd.f32 %v5098, 1e-05
  %v5131 = vadd.f32 %v5099, 1e-05
  %v5132 = vadd.f32 %v5100, 1e-05
  %v5133 = vadd.f32 %v5101, 1e-05
  %v5134 = vadd.f32 %v5102, 1e-05
  %v5135 = vadd.f32 %v5103, 1e-05
  %v5136 = vadd.f32 %v5104, 1e-05
  %v5137 = vadd.f32 %v5105, 1e-05
  %v5138 = vadd.f32 %v5106, 1e-05
  %v5139 = vadd.f32 %v5107, 1e-05
  %v5140 = vadd.f32 %v5108, 1e-05
  %v5141 = vadd.f32 %v5109, 1e-05
  %v5142 = vadd.f32 %v5110, 1e-05
  %v5143 = vadd.f32 %v5111, 1e-05
  %v5144 = vadd.f32 %v5112, 1e-05
  %v5145 = vadd.f32 %v5113, 1e-05
  %v5146 = vadd.f32 %v5114, 1e-05
  %v5147 = vadd.f32 %v5115, 1e-05
  %v5148 = vadd.f32 %v5116, 1e-05
  %v5149 = vadd.f32 %v5117, 1e-05
  %v5150 = vrsqrt.pop %v5118
  %v5151 = vmul.f32 %v5150, %v5118
  %v5152 = vmul.f32 %v5151, %v5150
  %v5153 = vmul.f32 0.5, %v5152
  %v5154 = vsub.f32 1.5, %v5153
  %v5155 = vmul.f32 %v5150, %v5154
  %vm5156 = vweird.f32 %v5118
  %vm5157 = vweird.f32 %v5150
  %vm5158 = vmor %vm5156, %vm5157
  %v5159 = vsel %vm5158, %v5150, %v5155
  %v5160 = vrsqrt.pop %v5119
  %v5161 = vmul.f32 %v5160, %v5119
  %v5162 = vmul.f32 %v5161, %v5160
  %v5163 = vmul.f32 0.5, %v5162
  %v5164 = vsub.f32 1.5, %v5163
  %v5165 = vmul.f32 %v5160, %v5164
  %vm5166 = vweird.f32 %v5119
  %vm5167 = vweird.f32 %v5160
  %vm5168 = vmor %vm5166, %vm5167
  %v5169 = vsel %vm5168, %v5160, %v5165
  %v5170 = vrsqrt.pop %v5120
  %v5171 = vmul.f32 %v5170, %v5120
  %v5172 = vmul.f32 %v5171, %v5170
  %v5173 = vmul.f32 0.5, %v5172
  %v5174 = vsub.f32 1.5, %v5173
  %v5175 = vmul.f32 %v5170, %v5174
  %vm5176 = vweird.f32 %v5120
  %vm5177 = vweird.f32 %v5170
  %vm5178 = vmor %vm5176, %vm5177
  %v5179 = vsel %vm5178, %v5170, %v5175
  %v5180 = vrsqrt.pop %v5121
  %v5181 = vmul.f32 %v5180, %v5121
  %v5182 = vmul.f32 %v5181, %v5180
  %v5183 = vmul.f32 0.5, %v5182
  %v5184 = vsub.f32 1.5, %v5183
  %v5185 = vmul.f32 %v5180, %v5184
  %vm5186 = vweird.f32 %v5121
  %vm5187 = vweird.f32 %v5180
  %vm5188 = vmor %vm5186, %vm5187
  %v5189 = vsel %vm5188, %v5180, %v5185
  %v5190 = vrsqrt.pop %v5122
  %v5191 = vmul.f32 %v5190, %v5122
  %v5192 = vmul.f32 %v5191, %v5190
  %v5193 = vmul.f32 0.5, %v5192
  %v5194 = vsub.f32 1.5, %v5193
  %v5195 = vmul.f32 %v5190, %v5194
  %vm5196 = vweird.f32 %v5122
  %vm5197 = vweird.f32 %v5190
  %vm5198 = vmor %vm5196, %vm5197
  %v5199 = vsel %vm5198, %v5190, %v5195
  %v5200 = vrsqrt.pop %v5123
  %v5201 = vmul.f32 %v5200, %v5123
  %v5202 = vmul.f32 %v5201, %v5200
  %v5203 = vmul.f32 0.5, %v5202
  %v5204 = vsub.f32 1.5, %v5203
  %v5205 = vmul.f32 %v5200, %v5204
  %vm5206 = vweird.f32 %v5123
  %vm5207 = vweird.f32 %v5200
  %vm5208 = vmor %vm5206, %vm5207
  %v5209 = vsel %vm5208, %v5200, %v5205
  %v5210 = vrsqrt.pop %v5124
  %v5211 = vmul.f32 %v5210, %v5124
  %v5212 = vmul.f32 %v5211, %v5210
  %v5213 = vmul.f32 0.5, %v5212
  %v5214 = vsub.f32 1.5, %v5213
  %v5215 = vmul.f32 %v5210, %v5214
  %vm5216 = vweird.f32 %v5124
  %vm5217 = vweird.f32 %v5210
  %vm5218 = vmor %vm5216, %vm5217
  %v5219 = vsel %vm5218, %v5210, %v5215
  %v5220 = vrsqrt.pop %v5125
  %v5221 = vmul.f32 %v5220, %v5125
  %v5222 = vmul.f32 %v5221, %v5220
  %v5223 = vmul.f32 0.5, %v5222
  %v5224 = vsub.f32 1.5, %v5223
  %v5225 = vmul.f32 %v5220, %v5224
  %vm5226 = vweird.f32 %v5125
  %vm5227 = vweird.f32 %v5220
  %vm5228 = vmor %vm5226, %vm5227
  %v5229 = vsel %vm5228, %v5220, %v5225
  %v5230 = vrsqrt.pop %v5126
  %v5231 = vmul.f32 %v5230, %v5126
  %v5232 = vmul.f32 %v5231, %v5230
  %v5233 = vmul.f32 0.5, %v5232
  %v5234 = vsub.f32 1.5, %v5233
  %v5235 = vmul.f32 %v5230, %v5234
  %vm5236 = vweird.f32 %v5126
  %vm5237 = vweird.f32 %v5230
  %vm5238 = vmor %vm5236, %vm5237
  %v5239 = vsel %vm5238, %v5230, %v5235
  %v5240 = vrsqrt.pop %v5127
  %v5241 = vmul.f32 %v5240, %v5127
  %v5242 = vmul.f32 %v5241, %v5240
  %v5243 = vmul.f32 0.5, %v5242
  %v5244 = vsub.f32 1.5, %v5243
  %v5245 = vmul.f32 %v5240, %v5244
  %vm5246 = vweird.f32 %v5127
  %vm5247 = vweird.f32 %v5240
  %vm5248 = vmor %vm5246, %vm5247
  %v5249 = vsel %vm5248, %v5240, %v5245
  %v5250 = vrsqrt.pop %v5128
  %v5251 = vmul.f32 %v5250, %v5128
  %v5252 = vmul.f32 %v5251, %v5250
  %v5253 = vmul.f32 0.5, %v5252
  %v5254 = vsub.f32 1.5, %v5253
  %v5255 = vmul.f32 %v5250, %v5254
  %vm5256 = vweird.f32 %v5128
  %vm5257 = vweird.f32 %v5250
  %vm5258 = vmor %vm5256, %vm5257
  %v5259 = vsel %vm5258, %v5250, %v5255
  %v5260 = vrsqrt.pop %v5129
  %v5261 = vmul.f32 %v5260, %v5129
  %v5262 = vmul.f32 %v5261, %v5260
  %v5263 = vmul.f32 0.5, %v5262
  %v5264 = vsub.f32 1.5, %v5263
  %v5265 = vmul.f32 %v5260, %v5264
  %vm5266 = vweird.f32 %v5129
  %vm5267 = vweird.f32 %v5260
  %vm5268 = vmor %vm5266, %vm5267
  %v5269 = vsel %vm5268, %v5260, %v5265
  %v5270 = vrsqrt.pop %v5130
  %v5271 = vmul.f32 %v5270, %v5130
  %v5272 = vmul.f32 %v5271, %v5270
  %v5273 = vmul.f32 0.5, %v5272
  %v5274 = vsub.f32 1.5, %v5273
  %v5275 = vmul.f32 %v5270, %v5274
  %vm5276 = vweird.f32 %v5130
  %vm5277 = vweird.f32 %v5270
  %vm5278 = vmor %vm5276, %vm5277
  %v5279 = vsel %vm5278, %v5270, %v5275
  %v5280 = vrsqrt.pop %v5131
  %v5281 = vmul.f32 %v5280, %v5131
  %v5282 = vmul.f32 %v5281, %v5280
  %v5283 = vmul.f32 0.5, %v5282
  %v5284 = vsub.f32 1.5, %v5283
  %v5285 = vmul.f32 %v5280, %v5284
  %vm5286 = vweird.f32 %v5131
  %vm5287 = vweird.f32 %v5280
  %vm5288 = vmor %vm5286, %vm5287
  %v5289 = vsel %vm5288, %v5280, %v5285
  %v5290 = vrsqrt.pop %v5132
  %v5291 = vmul.f32 %v5290, %v5132
  %v5292 = vmul.f32 %v5291, %v5290
  %v5293 = vmul.f32 0.5, %v5292
  %v5294 = vsub.f32 1.5, %v5293
  %v5295 = vmul.f32 %v5290, %v5294
  %vm5296 = vweird.f32 %v5132
  %vm5297 = vweird.f32 %v5290
  %vm5298 = vmor %vm5296, %vm5297
  %v5299 = vsel %vm5298, %v5290, %v5295
  %v5300 = vrsqrt.pop %v5133
  %v5301 = vmul.f32 %v5300, %v5133
  %v5302 = vmul.f32 %v5301, %v5300
  %v5303 = vmul.f32 0.5, %v5302
  %v5304 = vsub.f32 1.5, %v5303
  %v5305 = vmul.f32 %v5300, %v5304
  %vm5306 = vweird.f32 %v5133
  %vm5307 = vweird.f32 %v5300
  %vm5308 = vmor %vm5306, %vm5307
  %v5309 = vsel %vm5308, %v5300, %v5305
  %v5310 = vrsqrt.pop %v5134
  %v5311 = vmul.f32 %v5310, %v5134
  %v5312 = vmul.f32 %v5311, %v5310
  %v5313 = vmul.f32 0.5, %v5312
  %v5314 = vsub.f32 1.5, %v5313
  %v5315 = vmul.f32 %v5310, %v5314
  %vm5316 = vweird.f32 %v5134
  %vm5317 = vweird.f32 %v5310
  %vm5318 = vmor %vm5316, %vm5317
  %v5319 = vsel %vm5318, %v5310, %v5315
  %v5320 = vrsqrt.pop %v5135
  %v5321 = vmul.f32 %v5320, %v5135
  %v5322 = vmul.f32 %v5321, %v5320
  %v5323 = vmul.f32 0.5, %v5322
  %v5324 = vsub.f32 1.5, %v5323
  %v5325 = vmul.f32 %v5320, %v5324
  %vm5326 = vweird.f32 %v5135
  %vm5327 = vweird.f32 %v5320
  %vm5328 = vmor %vm5326, %vm5327
  %v5329 = vsel %vm5328, %v5320, %v5325
  %v5330 = vrsqrt.pop %v5136
  %v5331 = vmul.f32 %v5330, %v5136
  %v5332 = vmul.f32 %v5331, %v5330
  %v5333 = vmul.f32 0.5, %v5332
  %v5334 = vsub.f32 1.5, %v5333
  %v5335 = vmul.f32 %v5330, %v5334
  %vm5336 = vweird.f32 %v5136
  %vm5337 = vweird.f32 %v5330
  %vm5338 = vmor %vm5336, %vm5337
  %v5339 = vsel %vm5338, %v5330, %v5335
  %v5340 = vrsqrt.pop %v5137
  %v5341 = vmul.f32 %v5340, %v5137
  %v5342 = vmul.f32 %v5341, %v5340
  %v5343 = vmul.f32 0.5, %v5342
  %v5344 = vsub.f32 1.5, %v5343
  %v5345 = vmul.f32 %v5340, %v5344
  %vm5346 = vweird.f32 %v5137
  %vm5347 = vweird.f32 %v5340
  %vm5348 = vmor %vm5346, %vm5347
  %v5349 = vsel %vm5348, %v5340, %v5345
  %v5350 = vrsqrt.pop %v5138
  %v5351 = vmul.f32 %v5350, %v5138
  %v5352 = vmul.f32 %v5351, %v5350
  %v5353 = vmul.f32 0.5, %v5352
  %v5354 = vsub.f32 1.5, %v5353
  %v5355 = vmul.f32 %v5350, %v5354
  %vm5356 = vweird.f32 %v5138
  %vm5357 = vweird.f32 %v5350
  %vm5358 = vmor %vm5356, %vm5357
  %v5359 = vsel %vm5358, %v5350, %v5355
  %v5360 = vrsqrt.pop %v5139
  %v5361 = vmul.f32 %v5360, %v5139
  %v5362 = vmul.f32 %v5361, %v5360
  %v5363 = vmul.f32 0.5, %v5362
  %v5364 = vsub.f32 1.5, %v5363
  %v5365 = vmul.f32 %v5360, %v5364
  %vm5366 = vweird.f32 %v5139
  %vm5367 = vweird.f32 %v5360
  %vm5368 = vmor %vm5366, %vm5367
  %v5369 = vsel %vm5368, %v5360, %v5365
  %v5370 = vrsqrt.pop %v5140
  %v5371 = vmul.f32 %v5370, %v5140
  %v5372 = vmul.f32 %v5371, %v5370
  %v5373 = vmul.f32 0.5, %v5372
  %v5374 = vsub.f32 1.5, %v5373
  %v5375 = vmul.f32 %v5370, %v5374
  %vm5376 = vweird.f32 %v5140
  %vm5377 = vweird.f32 %v5370
  %vm5378 = vmor %vm5376, %vm5377
  %v5379 = vsel %vm5378, %v5370, %v5375
  %v5380 = vrsqrt.pop %v5141
  %v5381 = vmul.f32 %v5380, %v5141
  %v5382 = vmul.f32 %v5381, %v5380
  %v5383 = vmul.f32 0.5, %v5382
  %v5384 = vsub.f32 1.5, %v5383
  %v5385 = vmul.f32 %v5380, %v5384
  %vm5386 = vweird.f32 %v5141
  %vm5387 = vweird.f32 %v5380
  %vm5388 = vmor %vm5386, %vm5387
  %v5389 = vsel %vm5388, %v5380, %v5385
  %v5390 = vrsqrt.pop %v5142
  %v5391 = vmul.f32 %v5390, %v5142
  %v5392 = vmul.f32 %v5391, %v5390
  %v5393 = vmul.f32 0.5, %v5392
  %v5394 = vsub.f32 1.5, %v5393
  %v5395 = vmul.f32 %v5390, %v5394
  %vm5396 = vweird.f32 %v5142
  %vm5397 = vweird.f32 %v5390
  %vm5398 = vmor %vm5396, %vm5397
  %v5399 = vsel %vm5398, %v5390, %v5395
  %v5400 = vrsqrt.pop %v5143
  %v5401 = vmul.f32 %v5400, %v5143
  %v5402 = vmul.f32 %v5401, %v5400
  %v5403 = vmul.f32 0.5, %v5402
  %v5404 = vsub.f32 1.5, %v5403
  %v5405 = vmul.f32 %v5400, %v5404
  %vm5406 = vweird.f32 %v5143
  %vm5407 = vweird.f32 %v5400
  %vm5408 = vmor %vm5406, %vm5407
  %v5409 = vsel %vm5408, %v5400, %v5405
  %v5410 = vrsqrt.pop %v5144
  %v5411 = vmul.f32 %v5410, %v5144
  %v5412 = vmul.f32 %v5411, %v5410
  %v5413 = vmul.f32 0.5, %v5412
  %v5414 = vsub.f32 1.5, %v5413
  %v5415 = vmul.f32 %v5410, %v5414
  %vm5416 = vweird.f32 %v5144
  %vm5417 = vweird.f32 %v5410
  %vm5418 = vmor %vm5416, %vm5417
  %v5419 = vsel %vm5418, %v5410, %v5415
  %v5420 = vrsqrt.pop %v5145
  %v5421 = vmul.f32 %v5420, %v5145
  %v5422 = vmul.f32 %v5421, %v5420
  %v5423 = vmul.f32 0.5, %v5422
  %v5424 = vsub.f32 1.5, %v5423
  %v5425 = vmul.f32 %v5420, %v5424
  %vm5426 = vweird.f32 %v5145
  %vm5427 = vweird.f32 %v5420
  %vm5428 = vmor %vm5426, %vm5427
  %v5429 = vsel %vm5428, %v5420, %v5425
  %v5430 = vrsqrt.pop %v5146
  %v5431 = vmul.f32 %v5430, %v5146
  %v5432 = vmul.f32 %v5431, %v5430
  %v5433 = vmul.f32 0.5, %v5432
  %v5434 = vsub.f32 1.5, %v5433
  %v5435 = vmul.f32 %v5430, %v5434
  %vm5436 = vweird.f32 %v5146
  %vm5437 = vweird.f32 %v5430
  %vm5438 = vmor %vm5436, %vm5437
  %v5439 = vsel %vm5438, %v5430, %v5435
  %v5440 = vrsqrt.pop %v5147
  %v5441 = vmul.f32 %v5440, %v5147
  %v5442 = vmul.f32 %v5441, %v5440
  %v5443 = vmul.f32 0.5, %v5442
  %v5444 = vsub.f32 1.5, %v5443
  %v5445 = vmul.f32 %v5440, %v5444
  %vm5446 = vweird.f32 %v5147
  %vm5447 = vweird.f32 %v5440
  %vm5448 = vmor %vm5446, %vm5447
  %v5449 = vsel %vm5448, %v5440, %v5445
  %v5450 = vrsqrt.pop %v5148
  %v5451 = vmul.f32 %v5450, %v5148
  %v5452 = vmul.f32 %v5451, %v5450
  %v5453 = vmul.f32 0.5, %v5452
  %v5454 = vsub.f32 1.5, %v5453
  %v5455 = vmul.f32 %v5450, %v5454
  %vm5456 = vweird.f32 %v5148
  %vm5457 = vweird.f32 %v5450
  %vm5458 = vmor %vm5456, %vm5457
  %v5459 = vsel %vm5458, %v5450, %v5455
  %v5460 = vrsqrt.pop %v5149
  %v5461 = vmul.f32 %v5460, %v5149
  %v5462 = vmul.f32 %v5461, %v5460
  %v5463 = vmul.f32 0.5, %v5462
  %v5464 = vsub.f32 1.5, %v5463
  %v5465 = vmul.f32 %v5460, %v5464
  %vm5466 = vweird.f32 %v5149
  %vm5467 = vweird.f32 %v5460
  %vm5468 = vmor %vm5466, %vm5467
  %v5469 = vsel %vm5468, %v5460, %v5465
  %v5470 = vmul.f32 %v4926, %v5159
  %v5471 = vmul.f32 %v4927, %v5169
  %v5472 = vmul.f32 %v4928, %v5179
  %v5473 = vmul.f32 %v4929, %v5189
  %v5474 = vmul.f32 %v4930, %v5199
  %v5475 = vmul.f32 %v4931, %v5209
  %v5476 = vmul.f32 %v4932, %v5219
  %v5477 = vmul.f32 %v4933, %v5229
  %v5478 = vmul.f32 %v4934, %v5239
  %v5479 = vmul.f32 %v4935, %v5249
  %v5480 = vmul.f32 %v4936, %v5259
  %v5481 = vmul.f32 %v4937, %v5269
  %v5482 = vmul.f32 %v4938, %v5279
  %v5483 = vmul.f32 %v4939, %v5289
  %v5484 = vmul.f32 %v4940, %v5299
  %v5485 = vmul.f32 %v4941, %v5309
  %v5486 = vmul.f32 %v4942, %v5319
  %v5487 = vmul.f32 %v4943, %v5329
  %v5488 = vmul.f32 %v4944, %v5339
  %v5489 = vmul.f32 %v4945, %v5349
  %v5490 = vmul.f32 %v4946, %v5359
  %v5491 = vmul.f32 %v4947, %v5369
  %v5492 = vmul.f32 %v4948, %v5379
  %v5493 = vmul.f32 %v4949, %v5389
  %v5494 = vmul.f32 %v4950, %v5399
  %v5495 = vmul.f32 %v4951, %v5409
  %v5496 = vmul.f32 %v4952, %v5419
  %v5497 = vmul.f32 %v4953, %v5429
  %v5498 = vmul.f32 %v4954, %v5439
  %v5499 = vmul.f32 %v4955, %v5449
  %v5500 = vmul.f32 %v4956, %v5459
  %v5501 = vmul.f32 %v4957, %v5469
  %v5502 = vperm.slane %v94, 6
  %v5503 = vmul.f32 %v5470, %v5502
  %v5504 = vmul.f32 %v5471, %v5502
  %v5505 = vmul.f32 %v5472, %v5502
  %v5506 = vmul.f32 %v5473, %v5502
  %v5507 = vmul.f32 %v5474, %v5502
  %v5508 = vmul.f32 %v5475, %v5502
  %v5509 = vmul.f32 %v5476, %v5502
  %v5510 = vmul.f32 %v5477, %v5502
  %v5511 = vmul.f32 %v5478, %v5502
  %v5512 = vmul.f32 %v5479, %v5502
  %v5513 = vmul.f32 %v5480, %v5502
  %v5514 = vmul.f32 %v5481, %v5502
  %v5515 = vmul.f32 %v5482, %v5502
  %v5516 = vmul.f32 %v5483, %v5502
  %v5517 = vmul.f32 %v5484, %v5502
  %v5518 = vmul.f32 %v5485, %v5502
  %v5519 = vmul.f32 %v5486, %v5502
  %v5520 = vmul.f32 %v5487, %v5502
  %v5521 = vmul.f32 %v5488, %v5502
  %v5522 = vmul.f32 %v5489, %v5502
  %v5523 = vmul.f32 %v5490, %v5502
  %v5524 = vmul.f32 %v5491, %v5502
  %v5525 = vmul.f32 %v5492, %v5502
  %v5526 = vmul.f32 %v5493, %v5502
  %v5527 = vmul.f32 %v5494, %v5502
  %v5528 = vmul.f32 %v5495, %v5502
  %v5529 = vmul.f32 %v5496, %v5502
  %v5530 = vmul.f32 %v5497, %v5502
  %v5531 = vmul.f32 %v5498, %v5502
  %v5532 = vmul.f32 %v5499, %v5502
  %v5533 = vmul.f32 %v5500, %v5502
  %v5534 = vmul.f32 %v5501, %v5502
  %v5535 = vperm.slane %v94, 7
  %v5536 = vadd.f32 %v5503, %v5535
  %v5537 = vadd.f32 %v5504, %v5535
  %v5538 = vadd.f32 %v5505, %v5535
  %v5539 = vadd.f32 %v5506, %v5535
  %v5540 = vadd.f32 %v5507, %v5535
  %v5541 = vadd.f32 %v5508, %v5535
  %v5542 = vadd.f32 %v5509, %v5535
  %v5543 = vadd.f32 %v5510, %v5535
  %v5544 = vadd.f32 %v5511, %v5535
  %v5545 = vadd.f32 %v5512, %v5535
  %v5546 = vadd.f32 %v5513, %v5535
  %v5547 = vadd.f32 %v5514, %v5535
  %v5548 = vadd.f32 %v5515, %v5535
  %v5549 = vadd.f32 %v5516, %v5535
  %v5550 = vadd.f32 %v5517, %v5535
  %v5551 = vadd.f32 %v5518, %v5535
  %v5552 = vadd.f32 %v5519, %v5535
  %v5553 = vadd.f32 %v5520, %v5535
  %v5554 = vadd.f32 %v5521, %v5535
  %v5555 = vadd.f32 %v5522, %v5535
  %v5556 = vadd.f32 %v5523, %v5535
  %v5557 = vadd.f32 %v5524, %v5535
  %v5558 = vadd.f32 %v5525, %v5535
  %v5559 = vadd.f32 %v5526, %v5535
  %v5560 = vadd.f32 %v5527, %v5535
  %v5561 = vadd.f32 %v5528, %v5535
  %v5562 = vadd.f32 %v5529, %v5535
  %v5563 = vadd.f32 %v5530, %v5535
  %v5564 = vadd.f32 %v5531, %v5535
  %v5565 = vadd.f32 %v5532, %v5535
  %v5566 = vadd.f32 %v5533, %v5535
  %v5567 = vadd.f32 %v5534, %v5535
  %s5568 = scalar_lea.vmem %s3, 16
  %v5569 = vld [vmem:[%s5568] sm:$0xf]
  %v5570 = vld [vmem:[%s5568 + $0x4] sm:$0xf]
  %v5571 = vld [vmem:[%s5568 + $0x8] sm:$0xf]
  %v5572 = vld [vmem:[%s5568 + $0xc] sm:$0xf]
  %s5573 = scalar_lea.vmem %s4, 16
  %v5574 = vld [vmem:[%s5573] sm:$0xf]
  %v5575 = vld [vmem:[%s5573 + $0x4] sm:$0xf]
  %v5576 = vld [vmem:[%s5573 + $0x8] sm:$0xf]
  %v5577 = vld [vmem:[%s5573 + $0xc] sm:$0xf]
  %s5578 = scalar_lea.vmem %s5, 16
  %v5579 = vld [vmem:[%s5578] sm:$0xf]
  %v5580 = vld [vmem:[%s5578 + $0x4] sm:$0xf]
  %v5581 = vld [vmem:[%s5578 + $0x8] sm:$0xf]
  %v5582 = vld [vmem:[%s5578 + $0xc] sm:$0xf]
  %s5583 = scalar_lea.vmem %s6, 32
  %v5584 = vld [vmem:[%s5583] sm:$0xf]
  %v5585 = vld [vmem:[%s5583 + $0x4] sm:$0xf]
  %v5586 = vld [vmem:[%s5583 + $0x8] sm:$0xf]
  %v5587 = vld [vmem:[%s5583 + $0xc] sm:$0xf]
  %v5588 = vld [vmem:[%s5583 + $0x10] sm:$0xf]
  %v5589 = vld [vmem:[%s5583 + $0x14] sm:$0xf]
  %v5590 = vld [vmem:[%s5583 + $0x18] sm:$0xf]
  %v5591 = vld [vmem:[%s5583 + $0x1c] sm:$0xf]
  %v5592 = vadd.f32 %v5536, %v62
  %v5593 = vadd.f32 %v5537, %v63
  %v5594 = vadd.f32 %v5538, %v64
  %v5595 = vadd.f32 %v5539, %v65
  %v5596 = vadd.f32 %v5540, %v66
  %v5597 = vadd.f32 %v5541, %v67
  %v5598 = vadd.f32 %v5542, %v68
  %v5599 = vadd.f32 %v5543, %v69
  %v5600 = vadd.f32 %v5544, %v70
  %v5601 = vadd.f32 %v5545, %v71
  %v5602 = vadd.f32 %v5546, %v72
  %v5603 = vadd.f32 %v5547, %v73
  %v5604 = vadd.f32 %v5548, %v74
  %v5605 = vadd.f32 %v5549, %v75
  %v5606 = vadd.f32 %v5550, %v76
  %v5607 = vadd.f32 %v5551, %v77
  %v5608 = vadd.f32 %v5552, %v78
  %v5609 = vadd.f32 %v5553, %v79
  %v5610 = vadd.f32 %v5554, %v80
  %v5611 = vadd.f32 %v5555, %v81
  %v5612 = vadd.f32 %v5556, %v82
  %v5613 = vadd.f32 %v5557, %v83
  %v5614 = vadd.f32 %v5558, %v84
  %v5615 = vadd.f32 %v5559, %v85
  %v5616 = vadd.f32 %v5560, %v86
  %v5617 = vadd.f32 %v5561, %v87
  %v5618 = vadd.f32 %v5562, %v88
  %v5619 = vadd.f32 %v5563, %v89
  %v5620 = vadd.f32 %v5564, %v90
  %v5621 = vadd.f32 %v5565, %v91
  %v5622 = vadd.f32 %v5566, %v92
  %v5623 = vadd.f32 %v5567, %v93
  %v5624 = vpack.c.bf16 %v5593, %v5592
  %v5625 = vpack.c.bf16 %v5595, %v5594
  %v5626 = vpack.c.bf16 %v5597, %v5596
  %v5627 = vpack.c.bf16 %v5599, %v5598
  %v5628 = vpack.c.bf16 %v5601, %v5600
  %v5629 = vpack.c.bf16 %v5603, %v5602
  %v5630 = vpack.c.bf16 %v5605, %v5604
  %v5631 = vpack.c.bf16 %v5607, %v5606
  %v5632 = vpack.c.bf16 %v5609, %v5608
  %v5633 = vpack.c.bf16 %v5611, %v5610
  %v5634 = vpack.c.bf16 %v5613, %v5612
  %v5635 = vpack.c.bf16 %v5615, %v5614
  %v5636 = vpack.c.bf16 %v5617, %v5616
  %v5637 = vpack.c.bf16 %v5619, %v5618
  %v5638 = vpack.c.bf16 %v5621, %v5620
  %v5639 = vpack.c.bf16 %v5623, %v5622
  %v5640 = vperm.slane %v95, 0
  %v5645 = vunpack.c.l.b16 %v5569
  %v5646 = vunpack.c.l.b16 %v5570
  %v5647 = vunpack.c.l.b16 %v5571
  %v5648 = vunpack.c.l.b16 %v5572
  %v5649 = vpack.c.b16 %v5646, %v5645
  %v5650 = vpack.c.b16 %v5648, %v5647
  %v5654 = vsel %vm187, %v5624, 0
  %v5657 = vsel %vm187, %v5625, 0
  %v5660 = vsel %vm187, %v5626, 0
  %v5663 = vsel %vm187, %v5627, 0
  %v5666 = vsel %vm187, %v5628, 0
  %v5669 = vsel %vm187, %v5629, 0
  %v5672 = vsel %vm187, %v5630, 0
  %v5675 = vsel %vm187, %v5631, 0
  %v5678 = vsel %vm187, %v5632, 0
  %v5681 = vsel %vm187, %v5633, 0
  %v5684 = vsel %vm187, %v5634, 0
  %v5687 = vsel %vm187, %v5635, 0
  %v5690 = vsel %vm187, %v5636, 0
  %v5693 = vsel %vm187, %v5637, 0
  %v5696 = vsel %vm187, %v5638, 0
  %v5699 = vsel %vm187, %v5639, 0
  %5701 = vmatpush.bf16.msra.mxu0 0
  %5702 = vmatpush.bf16.msra.mxu0 0
  %5703 = vmatpush.bf16.msra.mxu0 0
  %5704 = vmatpush.bf16.msra.mxu0 0
  %5705 = vmatpush.bf16.msra.mxu0 0
  %5706 = vmatpush.bf16.msra.mxu0 0
  %5707 = vmatpush.bf16.msra.mxu0 %v5650
  %5708 = vmatpush.bf16.msra.mxu0 %v5649
  %5709 = vmatmul.bf16.gmra.mxu0 %v5654
  %v5710 = vpop.f32.mrf.mxu0
  %v5711 = vadd.f32 %v5640, %v5710
  %v5712 = vpop.f32.mrf.mxu0
  %v5713 = vadd.f32 %v5640, %v5712
  %5714 = vmatmul.bf16.gmra.mxu0 %v5657
  %v5715 = vpop.f32.mrf.mxu0
  %v5716 = vadd.f32 %v5640, %v5715
  %v5717 = vpop.f32.mrf.mxu0
  %v5718 = vadd.f32 %v5640, %v5717
  %5719 = vmatmul.bf16.gmra.mxu0 %v5660
  %v5720 = vpop.f32.mrf.mxu0
  %v5721 = vadd.f32 %v5640, %v5720
  %v5722 = vpop.f32.mrf.mxu0
  %v5723 = vadd.f32 %v5640, %v5722
  %5724 = vmatmul.bf16.gmra.mxu0 %v5663
  %v5725 = vpop.f32.mrf.mxu0
  %v5726 = vadd.f32 %v5640, %v5725
  %v5727 = vpop.f32.mrf.mxu0
  %v5728 = vadd.f32 %v5640, %v5727
  %5729 = vmatmul.bf16.gmra.mxu0 %v5666
  %v5730 = vpop.f32.mrf.mxu0
  %v5731 = vadd.f32 %v5640, %v5730
  %v5732 = vpop.f32.mrf.mxu0
  %v5733 = vadd.f32 %v5640, %v5732
  %5734 = vmatmul.bf16.gmra.mxu0 %v5669
  %v5735 = vpop.f32.mrf.mxu0
  %v5736 = vadd.f32 %v5640, %v5735
  %v5737 = vpop.f32.mrf.mxu0
  %v5738 = vadd.f32 %v5640, %v5737
  %5739 = vmatmul.bf16.gmra.mxu0 %v5672
  %v5740 = vpop.f32.mrf.mxu0
  %v5741 = vadd.f32 %v5640, %v5740
  %v5742 = vpop.f32.mrf.mxu0
  %v5743 = vadd.f32 %v5640, %v5742
  %5744 = vmatmul.bf16.gmra.mxu0 %v5675
  %v5745 = vpop.f32.mrf.mxu0
  %v5746 = vadd.f32 %v5640, %v5745
  %v5747 = vpop.f32.mrf.mxu0
  %v5748 = vadd.f32 %v5640, %v5747
  %5749 = vmatmul.bf16.gmra.mxu0 %v5678
  %v5750 = vpop.f32.mrf.mxu0
  %v5751 = vadd.f32 %v5640, %v5750
  %v5752 = vpop.f32.mrf.mxu0
  %v5753 = vadd.f32 %v5640, %v5752
  %5754 = vmatmul.bf16.gmra.mxu0 %v5681
  %v5755 = vpop.f32.mrf.mxu0
  %v5756 = vadd.f32 %v5640, %v5755
  %v5757 = vpop.f32.mrf.mxu0
  %v5758 = vadd.f32 %v5640, %v5757
  %5759 = vmatmul.bf16.gmra.mxu0 %v5684
  %v5760 = vpop.f32.mrf.mxu0
  %v5761 = vadd.f32 %v5640, %v5760
  %v5762 = vpop.f32.mrf.mxu0
  %v5763 = vadd.f32 %v5640, %v5762
  %5764 = vmatmul.bf16.gmra.mxu0 %v5687
  %v5765 = vpop.f32.mrf.mxu0
  %v5766 = vadd.f32 %v5640, %v5765
  %v5767 = vpop.f32.mrf.mxu0
  %v5768 = vadd.f32 %v5640, %v5767
  %5769 = vmatmul.bf16.gmra.mxu0 %v5690
  %v5770 = vpop.f32.mrf.mxu0
  %v5771 = vadd.f32 %v5640, %v5770
  %v5772 = vpop.f32.mrf.mxu0
  %v5773 = vadd.f32 %v5640, %v5772
  %5774 = vmatmul.bf16.gmra.mxu0 %v5693
  %v5775 = vpop.f32.mrf.mxu0
  %v5776 = vadd.f32 %v5640, %v5775
  %v5777 = vpop.f32.mrf.mxu0
  %v5778 = vadd.f32 %v5640, %v5777
  %5779 = vmatmul.bf16.gmra.mxu0 %v5696
  %v5780 = vpop.f32.mrf.mxu0
  %v5781 = vadd.f32 %v5640, %v5780
  %v5782 = vpop.f32.mrf.mxu0
  %v5783 = vadd.f32 %v5640, %v5782
  %5784 = vmatmul.bf16.gmra.mxu0 %v5699
  %v5785 = vpop.f32.mrf.mxu0
  %v5786 = vadd.f32 %v5640, %v5785
  %v5787 = vpop.f32.mrf.mxu0
  %v5788 = vadd.f32 %v5640, %v5787
  %5789 = vdwg.mxu0
  %v5790 = vpack.c.bf16 %v5711, %v5711
  %v5791 = vpack.c.bf16 %v5713, %v5713
  %v5792 = vpack.c.bf16 %v5716, %v5716
  %v5793 = vpack.c.bf16 %v5718, %v5718
  %v5794 = vpack.c.bf16 %v5721, %v5721
  %v5795 = vpack.c.bf16 %v5723, %v5723
  %v5796 = vpack.c.bf16 %v5726, %v5726
  %v5797 = vpack.c.bf16 %v5728, %v5728
  %v5798 = vpack.c.bf16 %v5731, %v5731
  %v5799 = vpack.c.bf16 %v5733, %v5733
  %v5800 = vpack.c.bf16 %v5736, %v5736
  %v5801 = vpack.c.bf16 %v5738, %v5738
  %v5802 = vpack.c.bf16 %v5741, %v5741
  %v5803 = vpack.c.bf16 %v5743, %v5743
  %v5804 = vpack.c.bf16 %v5746, %v5746
  %v5805 = vpack.c.bf16 %v5748, %v5748
  %v5806 = vpack.c.bf16 %v5751, %v5751
  %v5807 = vpack.c.bf16 %v5753, %v5753
  %v5808 = vpack.c.bf16 %v5756, %v5756
  %v5809 = vpack.c.bf16 %v5758, %v5758
  %v5810 = vpack.c.bf16 %v5761, %v5761
  %v5811 = vpack.c.bf16 %v5763, %v5763
  %v5812 = vpack.c.bf16 %v5766, %v5766
  %v5813 = vpack.c.bf16 %v5768, %v5768
  %v5814 = vpack.c.bf16 %v5771, %v5771
  %v5815 = vpack.c.bf16 %v5773, %v5773
  %v5816 = vpack.c.bf16 %v5776, %v5776
  %v5817 = vpack.c.bf16 %v5778, %v5778
  %v5818 = vpack.c.bf16 %v5781, %v5781
  %v5819 = vpack.c.bf16 %v5783, %v5783
  %v5820 = vpack.c.bf16 %v5786, %v5786
  %v5821 = vpack.c.bf16 %v5788, %v5788
  %v5822 = vpack.c.bf16 %v5537, %v5536
  %v5823 = vpack.c.bf16 %v5539, %v5538
  %v5824 = vpack.c.bf16 %v5541, %v5540
  %v5825 = vpack.c.bf16 %v5543, %v5542
  %v5826 = vpack.c.bf16 %v5545, %v5544
  %v5827 = vpack.c.bf16 %v5547, %v5546
  %v5828 = vpack.c.bf16 %v5549, %v5548
  %v5829 = vpack.c.bf16 %v5551, %v5550
  %v5830 = vpack.c.bf16 %v5553, %v5552
  %v5831 = vpack.c.bf16 %v5555, %v5554
  %v5832 = vpack.c.bf16 %v5557, %v5556
  %v5833 = vpack.c.bf16 %v5559, %v5558
  %v5834 = vpack.c.bf16 %v5561, %v5560
  %v5835 = vpack.c.bf16 %v5563, %v5562
  %v5836 = vpack.c.bf16 %v5565, %v5564
  %v5837 = vpack.c.bf16 %v5567, %v5566
  %v5842 = vunpack.c.l.b16 %v5574
  %v5843 = vunpack.c.l.b16 %v5575
  %v5844 = vunpack.c.l.b16 %v5576
  %v5845 = vunpack.c.l.b16 %v5577
  %v5846 = vpack.c.b16 %v5843, %v5842
  %v5847 = vpack.c.b16 %v5845, %v5844
  %v5851 = vsel %vm187, %v5822, 0
  %v5854 = vsel %vm187, %v5823, 0
  %v5857 = vsel %vm187, %v5824, 0
  %v5860 = vsel %vm187, %v5825, 0
  %v5863 = vsel %vm187, %v5826, 0
  %v5866 = vsel %vm187, %v5827, 0
  %v5869 = vsel %vm187, %v5828, 0
  %v5872 = vsel %vm187, %v5829, 0
  %v5875 = vsel %vm187, %v5830, 0
  %v5878 = vsel %vm187, %v5831, 0
  %v5881 = vsel %vm187, %v5832, 0
  %v5884 = vsel %vm187, %v5833, 0
  %v5887 = vsel %vm187, %v5834, 0
  %v5890 = vsel %vm187, %v5835, 0
  %v5893 = vsel %vm187, %v5836, 0
  %v5896 = vsel %vm187, %v5837, 0
  %5898 = vmatpush.bf16.msra.mxu0 0
  %5899 = vmatpush.bf16.msra.mxu0 0
  %5900 = vmatpush.bf16.msra.mxu0 0
  %5901 = vmatpush.bf16.msra.mxu0 0
  %5902 = vmatpush.bf16.msra.mxu0 0
  %5903 = vmatpush.bf16.msra.mxu0 0
  %5904 = vmatpush.bf16.msra.mxu0 %v5847
  %5905 = vmatpush.bf16.msra.mxu0 %v5846
  %5906 = vmatmul.bf16.gmra.mxu0 %v5851
  %v5907 = vpop.f32.mrf.mxu0
  %v5908 = vadd.f32 0.0, %v5907
  %v5909 = vpop.f32.mrf.mxu0
  %v5910 = vadd.f32 0.0, %v5909
  %5911 = vmatmul.bf16.gmra.mxu0 %v5854
  %v5912 = vpop.f32.mrf.mxu0
  %v5913 = vadd.f32 0.0, %v5912
  %v5914 = vpop.f32.mrf.mxu0
  %v5915 = vadd.f32 0.0, %v5914
  %5916 = vmatmul.bf16.gmra.mxu0 %v5857
  %v5917 = vpop.f32.mrf.mxu0
  %v5918 = vadd.f32 0.0, %v5917
  %v5919 = vpop.f32.mrf.mxu0
  %v5920 = vadd.f32 0.0, %v5919
  %5921 = vmatmul.bf16.gmra.mxu0 %v5860
  %v5922 = vpop.f32.mrf.mxu0
  %v5923 = vadd.f32 0.0, %v5922
  %v5924 = vpop.f32.mrf.mxu0
  %v5925 = vadd.f32 0.0, %v5924
  %5926 = vmatmul.bf16.gmra.mxu0 %v5863
  %v5927 = vpop.f32.mrf.mxu0
  %v5928 = vadd.f32 0.0, %v5927
  %v5929 = vpop.f32.mrf.mxu0
  %v5930 = vadd.f32 0.0, %v5929
  %5931 = vmatmul.bf16.gmra.mxu0 %v5866
  %v5932 = vpop.f32.mrf.mxu0
  %v5933 = vadd.f32 0.0, %v5932
  %v5934 = vpop.f32.mrf.mxu0
  %v5935 = vadd.f32 0.0, %v5934
  %5936 = vmatmul.bf16.gmra.mxu0 %v5869
  %v5937 = vpop.f32.mrf.mxu0
  %v5938 = vadd.f32 0.0, %v5937
  %v5939 = vpop.f32.mrf.mxu0
  %v5940 = vadd.f32 0.0, %v5939
  %5941 = vmatmul.bf16.gmra.mxu0 %v5872
  %v5942 = vpop.f32.mrf.mxu0
  %v5943 = vadd.f32 0.0, %v5942
  %v5944 = vpop.f32.mrf.mxu0
  %v5945 = vadd.f32 0.0, %v5944
  %5946 = vmatmul.bf16.gmra.mxu0 %v5875
  %v5947 = vpop.f32.mrf.mxu0
  %v5948 = vadd.f32 0.0, %v5947
  %v5949 = vpop.f32.mrf.mxu0
  %v5950 = vadd.f32 0.0, %v5949
  %5951 = vmatmul.bf16.gmra.mxu0 %v5878
  %v5952 = vpop.f32.mrf.mxu0
  %v5953 = vadd.f32 0.0, %v5952
  %v5954 = vpop.f32.mrf.mxu0
  %v5955 = vadd.f32 0.0, %v5954
  %5956 = vmatmul.bf16.gmra.mxu0 %v5881
  %v5957 = vpop.f32.mrf.mxu0
  %v5958 = vadd.f32 0.0, %v5957
  %v5959 = vpop.f32.mrf.mxu0
  %v5960 = vadd.f32 0.0, %v5959
  %5961 = vmatmul.bf16.gmra.mxu0 %v5884
  %v5962 = vpop.f32.mrf.mxu0
  %v5963 = vadd.f32 0.0, %v5962
  %v5964 = vpop.f32.mrf.mxu0
  %v5965 = vadd.f32 0.0, %v5964
  %5966 = vmatmul.bf16.gmra.mxu0 %v5887
  %v5967 = vpop.f32.mrf.mxu0
  %v5968 = vadd.f32 0.0, %v5967
  %v5969 = vpop.f32.mrf.mxu0
  %v5970 = vadd.f32 0.0, %v5969
  %5971 = vmatmul.bf16.gmra.mxu0 %v5890
  %v5972 = vpop.f32.mrf.mxu0
  %v5973 = vadd.f32 0.0, %v5972
  %v5974 = vpop.f32.mrf.mxu0
  %v5975 = vadd.f32 0.0, %v5974
  %5976 = vmatmul.bf16.gmra.mxu0 %v5893
  %v5977 = vpop.f32.mrf.mxu0
  %v5978 = vadd.f32 0.0, %v5977
  %v5979 = vpop.f32.mrf.mxu0
  %v5980 = vadd.f32 0.0, %v5979
  %5981 = vmatmul.bf16.gmra.mxu0 %v5896
  %v5982 = vpop.f32.mrf.mxu0
  %v5983 = vadd.f32 0.0, %v5982
  %v5984 = vpop.f32.mrf.mxu0
  %v5985 = vadd.f32 0.0, %v5984
  %5986 = vdwg.mxu0
  %v5987 = vpack.c.bf16 %v5908, %v5908
  %v5988 = vpack.c.bf16 %v5910, %v5910
  %v5989 = vpack.c.bf16 %v5913, %v5913
  %v5990 = vpack.c.bf16 %v5915, %v5915
  %v5991 = vpack.c.bf16 %v5918, %v5918
  %v5992 = vpack.c.bf16 %v5920, %v5920
  %v5993 = vpack.c.bf16 %v5923, %v5923
  %v5994 = vpack.c.bf16 %v5925, %v5925
  %v5995 = vpack.c.bf16 %v5928, %v5928
  %v5996 = vpack.c.bf16 %v5930, %v5930
  %v5997 = vpack.c.bf16 %v5933, %v5933
  %v5998 = vpack.c.bf16 %v5935, %v5935
  %v5999 = vpack.c.bf16 %v5938, %v5938
  %v6000 = vpack.c.bf16 %v5940, %v5940
  %v6001 = vpack.c.bf16 %v5943, %v5943
  %v6002 = vpack.c.bf16 %v5945, %v5945
  %v6003 = vpack.c.bf16 %v5948, %v5948
  %v6004 = vpack.c.bf16 %v5950, %v5950
  %v6005 = vpack.c.bf16 %v5953, %v5953
  %v6006 = vpack.c.bf16 %v5955, %v5955
  %v6007 = vpack.c.bf16 %v5958, %v5958
  %v6008 = vpack.c.bf16 %v5960, %v5960
  %v6009 = vpack.c.bf16 %v5963, %v5963
  %v6010 = vpack.c.bf16 %v5965, %v5965
  %v6011 = vpack.c.bf16 %v5968, %v5968
  %v6012 = vpack.c.bf16 %v5970, %v5970
  %v6013 = vpack.c.bf16 %v5973, %v5973
  %v6014 = vpack.c.bf16 %v5975, %v5975
  %v6015 = vpack.c.bf16 %v5978, %v5978
  %v6016 = vpack.c.bf16 %v5980, %v5980
  %v6017 = vpack.c.bf16 %v5983, %v5983
  %v6018 = vpack.c.bf16 %v5985, %v5985
  %v6035 = vunpack.c.l.b16 %v5790
  %v6036 = vunpack.c.l.b16 %v5791
  %v6037 = vunpack.c.l.b16 %v5792
  %v6038 = vunpack.c.l.b16 %v5793
  %v6039 = vunpack.c.l.b16 %v5794
  %v6040 = vunpack.c.l.b16 %v5795
  %v6041 = vunpack.c.l.b16 %v5796
  %v6042 = vunpack.c.l.b16 %v5797
  %v6043 = vunpack.c.l.b16 %v5798
  %v6044 = vunpack.c.l.b16 %v5799
  %v6045 = vunpack.c.l.b16 %v5800
  %v6046 = vunpack.c.l.b16 %v5801
  %v6047 = vunpack.c.l.b16 %v5802
  %v6048 = vunpack.c.l.b16 %v5803
  %v6049 = vunpack.c.l.b16 %v5804
  %v6050 = vunpack.c.l.b16 %v5805
  %v6051 = vpack.c.b16 %v6036, %v6035
  %v6052 = vpack.c.b16 %v6038, %v6037
  %v6053 = vpack.c.b16 %v6040, %v6039
  %v6054 = vpack.c.b16 %v6042, %v6041
  %v6055 = vpack.c.b16 %v6044, %v6043
  %v6056 = vpack.c.b16 %v6046, %v6045
  %v6057 = vpack.c.b16 %v6048, %v6047
  %v6058 = vpack.c.b16 %v6050, %v6049
  %6059 = vrot.lane.b32.xlu0 %v6051, 96
  %v6060 = vpop.permute.xlu0 %6059
  %6061 = vrot.lane.b32.xlu0 %v6052, 96
  %v6062 = vpop.permute.xlu0 %6061
  %6063 = vrot.lane.b32.xlu0 %v6053, 96
  %v6064 = vpop.permute.xlu0 %6063
  %6065 = vrot.lane.b32.xlu0 %v6054, 96
  %v6066 = vpop.permute.xlu0 %6065
  %6067 = vrot.lane.b32.xlu0 %v6055, 96
  %v6068 = vpop.permute.xlu0 %6067
  %6069 = vrot.lane.b32.xlu0 %v6056, 96
  %v6070 = vpop.permute.xlu0 %6069
  %6071 = vrot.lane.b32.xlu0 %v6057, 96
  %v6072 = vpop.permute.xlu0 %6071
  %6073 = vrot.lane.b32.xlu0 %v6058, 96
  %v6074 = vpop.permute.xlu0 %6073
  %v6076 = vsel %vm610, %v6051, 0
  %v6079 = vsel %vm610, %v6052, 0
  %v6082 = vsel %vm610, %v6053, 0
  %v6085 = vsel %vm610, %v6054, 0
  %v6088 = vsel %vm610, %v6055, 0
  %v6091 = vsel %vm610, %v6056, 0
  %v6094 = vsel %vm610, %v6057, 0
  %v6097 = vsel %vm610, %v6058, 0
  %v6100 = vsel %vm610, %v6060, 0
  %v6103 = vsel %vm610, %v6062, 0
  %v6106 = vsel %vm610, %v6064, 0
  %v6109 = vsel %vm610, %v6066, 0
  %v6112 = vsel %vm610, %v6068, 0
  %v6115 = vsel %vm610, %v6070, 0
  %v6118 = vsel %vm610, %v6072, 0
  %v6121 = vsel %vm610, %v6074, 0
  %6123 = vmatpush.bf16.xpose.msra.mxu0 %v6121
  %6124 = vmatpush.bf16.xpose.msra.mxu0 %v6118
  %6125 = vmatpush.bf16.xpose.msra.mxu0 %v6115
  %6126 = vmatpush.bf16.xpose.msra.mxu0 %v6112
  %6127 = vmatpush.bf16.xpose.msra.mxu0 %v6109
  %6128 = vmatpush.bf16.xpose.msra.mxu0 %v6106
  %6129 = vmatpush.bf16.xpose.msra.mxu0 %v6103
  %6130 = vmatpush.bf16.xpose.msra.mxu0 %v6100
  %6131 = vmatmul.bf16.gmra.mxu0 %v6076
  %v6132 = vpop.f32.mrf.mxu0
  %v6133 = vadd.f32 %v99, %v6132
  %v6134 = vpop.f32.mrf.mxu0
  %v6135 = vadd.f32 %v99, %v6134
  %6136 = vmatmul.bf16.gmra.mxu0 %v6079
  %v6137 = vpop.f32.mrf.mxu0
  %v6138 = vadd.f32 %v99, %v6137
  %v6139 = vpop.f32.mrf.mxu0
  %v6140 = vadd.f32 %v99, %v6139
  %6141 = vmatmul.bf16.gmra.mxu0 %v6082
  %v6142 = vpop.f32.mrf.mxu0
  %v6143 = vadd.f32 %v99, %v6142
  %v6144 = vpop.f32.mrf.mxu0
  %v6145 = vadd.f32 %v99, %v6144
  %6146 = vmatmul.bf16.gmra.mxu0 %v6085
  %v6147 = vpop.f32.mrf.mxu0
  %v6148 = vadd.f32 %v99, %v6147
  %v6149 = vpop.f32.mrf.mxu0
  %v6150 = vadd.f32 %v99, %v6149
  %6151 = vmatmul.bf16.gmra.mxu0 %v6088
  %v6152 = vpop.f32.mrf.mxu0
  %v6153 = vadd.f32 %v99, %v6152
  %v6154 = vpop.f32.mrf.mxu0
  %v6155 = vadd.f32 %v99, %v6154
  %6156 = vmatmul.bf16.gmra.mxu0 %v6091
  %v6157 = vpop.f32.mrf.mxu0
  %v6158 = vadd.f32 %v99, %v6157
  %v6159 = vpop.f32.mrf.mxu0
  %v6160 = vadd.f32 %v99, %v6159
  %6161 = vmatmul.bf16.gmra.mxu0 %v6094
  %v6162 = vpop.f32.mrf.mxu0
  %v6163 = vadd.f32 %v99, %v6162
  %v6164 = vpop.f32.mrf.mxu0
  %v6165 = vadd.f32 %v99, %v6164
  %6166 = vmatmul.bf16.gmra.mxu0 %v6097
  %v6167 = vpop.f32.mrf.mxu0
  %v6168 = vadd.f32 %v99, %v6167
  %v6169 = vpop.f32.mrf.mxu0
  %v6170 = vadd.f32 %v99, %v6169
  %6171 = vdwg.mxu0
  %6172 = vmax.xlane.f32.xlu0 %v6133
  %v6173 = vpop.xlane.xlu0 %6172
  %6174 = vmax.xlane.f32.xlu0 %v6135
  %v6175 = vpop.xlane.xlu0 %6174
  %6176 = vmax.xlane.f32.xlu0 %v6138
  %v6177 = vpop.xlane.xlu0 %6176
  %6178 = vmax.xlane.f32.xlu0 %v6140
  %v6179 = vpop.xlane.xlu0 %6178
  %6180 = vmax.xlane.f32.xlu0 %v6143
  %v6181 = vpop.xlane.xlu0 %6180
  %6182 = vmax.xlane.f32.xlu0 %v6145
  %v6183 = vpop.xlane.xlu0 %6182
  %6184 = vmax.xlane.f32.xlu0 %v6148
  %v6185 = vpop.xlane.xlu0 %6184
  %6186 = vmax.xlane.f32.xlu0 %v6150
  %v6187 = vpop.xlane.xlu0 %6186
  %6188 = vmax.xlane.f32.xlu0 %v6153
  %v6189 = vpop.xlane.xlu0 %6188
  %6190 = vmax.xlane.f32.xlu0 %v6155
  %v6191 = vpop.xlane.xlu0 %6190
  %6192 = vmax.xlane.f32.xlu0 %v6158
  %v6193 = vpop.xlane.xlu0 %6192
  %6194 = vmax.xlane.f32.xlu0 %v6160
  %v6195 = vpop.xlane.xlu0 %6194
  %6196 = vmax.xlane.f32.xlu0 %v6163
  %v6197 = vpop.xlane.xlu0 %6196
  %6198 = vmax.xlane.f32.xlu0 %v6165
  %v6199 = vpop.xlane.xlu0 %6198
  %6200 = vmax.xlane.f32.xlu0 %v6168
  %v6201 = vpop.xlane.xlu0 %6200
  %6202 = vmax.xlane.f32.xlu0 %v6170
  %v6203 = vpop.xlane.xlu0 %6202
  %v6204 = vsub.f32 %v6133, %v6173
  %v6205 = vsub.f32 %v6135, %v6175
  %v6206 = vsub.f32 %v6138, %v6177
  %v6207 = vsub.f32 %v6140, %v6179
  %v6208 = vsub.f32 %v6143, %v6181
  %v6209 = vsub.f32 %v6145, %v6183
  %v6210 = vsub.f32 %v6148, %v6185
  %v6211 = vsub.f32 %v6150, %v6187
  %v6212 = vsub.f32 %v6153, %v6189
  %v6213 = vsub.f32 %v6155, %v6191
  %v6214 = vsub.f32 %v6158, %v6193
  %v6215 = vsub.f32 %v6160, %v6195
  %v6216 = vsub.f32 %v6163, %v6197
  %v6217 = vsub.f32 %v6165, %v6199
  %v6218 = vsub.f32 %v6168, %v6201
  %v6219 = vsub.f32 %v6170, %v6203
  %v6220 = vmul.f32 %v6204, 1.442695
  %v6221 = vpow.pop %v6220
  %v6222 = vmul.f32 %v6205, 1.442695
  %v6223 = vpow.pop %v6222
  %v6224 = vmul.f32 %v6206, 1.442695
  %v6225 = vpow.pop %v6224
  %v6226 = vmul.f32 %v6207, 1.442695
  %v6227 = vpow.pop %v6226
  %v6228 = vmul.f32 %v6208, 1.442695
  %v6229 = vpow.pop %v6228
  %v6230 = vmul.f32 %v6209, 1.442695
  %v6231 = vpow.pop %v6230
  %v6232 = vmul.f32 %v6210, 1.442695
  %v6233 = vpow.pop %v6232
  %v6234 = vmul.f32 %v6211, 1.442695
  %v6235 = vpow.pop %v6234
  %v6236 = vmul.f32 %v6212, 1.442695
  %v6237 = vpow.pop %v6236
  %v6238 = vmul.f32 %v6213, 1.442695
  %v6239 = vpow.pop %v6238
  %v6240 = vmul.f32 %v6214, 1.442695
  %v6241 = vpow.pop %v6240
  %v6242 = vmul.f32 %v6215, 1.442695
  %v6243 = vpow.pop %v6242
  %v6244 = vmul.f32 %v6216, 1.442695
  %v6245 = vpow.pop %v6244
  %v6246 = vmul.f32 %v6217, 1.442695
  %v6247 = vpow.pop %v6246
  %v6248 = vmul.f32 %v6218, 1.442695
  %v6249 = vpow.pop %v6248
  %v6250 = vmul.f32 %v6219, 1.442695
  %v6251 = vpow.pop %v6250
  %6252 = vadd.xlane.f32.xlu0 %v6221
  %v6253 = vpop.xlane.xlu0 %6252
  %6254 = vadd.xlane.f32.xlu0 %v6223
  %v6255 = vpop.xlane.xlu0 %6254
  %6256 = vadd.xlane.f32.xlu0 %v6225
  %v6257 = vpop.xlane.xlu0 %6256
  %6258 = vadd.xlane.f32.xlu0 %v6227
  %v6259 = vpop.xlane.xlu0 %6258
  %6260 = vadd.xlane.f32.xlu0 %v6229
  %v6261 = vpop.xlane.xlu0 %6260
  %6262 = vadd.xlane.f32.xlu0 %v6231
  %v6263 = vpop.xlane.xlu0 %6262
  %6264 = vadd.xlane.f32.xlu0 %v6233
  %v6265 = vpop.xlane.xlu0 %6264
  %6266 = vadd.xlane.f32.xlu0 %v6235
  %v6267 = vpop.xlane.xlu0 %6266
  %6268 = vadd.xlane.f32.xlu0 %v6237
  %v6269 = vpop.xlane.xlu0 %6268
  %6270 = vadd.xlane.f32.xlu0 %v6239
  %v6271 = vpop.xlane.xlu0 %6270
  %6272 = vadd.xlane.f32.xlu0 %v6241
  %v6273 = vpop.xlane.xlu0 %6272
  %6274 = vadd.xlane.f32.xlu0 %v6243
  %v6275 = vpop.xlane.xlu0 %6274
  %6276 = vadd.xlane.f32.xlu0 %v6245
  %v6277 = vpop.xlane.xlu0 %6276
  %6278 = vadd.xlane.f32.xlu0 %v6247
  %v6279 = vpop.xlane.xlu0 %6278
  %6280 = vadd.xlane.f32.xlu0 %v6249
  %v6281 = vpop.xlane.xlu0 %6280
  %6282 = vadd.xlane.f32.xlu0 %v6251
  %v6283 = vpop.xlane.xlu0 %6282
  %v6284 = vrcp.pop %v6253
  %v6285 = vrcp.pop %v6255
  %v6286 = vrcp.pop %v6257
  %v6287 = vrcp.pop %v6259
  %v6288 = vrcp.pop %v6261
  %v6289 = vrcp.pop %v6263
  %v6290 = vrcp.pop %v6265
  %v6291 = vrcp.pop %v6267
  %v6292 = vrcp.pop %v6269
  %v6293 = vrcp.pop %v6271
  %v6294 = vrcp.pop %v6273
  %v6295 = vrcp.pop %v6275
  %v6296 = vrcp.pop %v6277
  %v6297 = vrcp.pop %v6279
  %v6298 = vrcp.pop %v6281
  %v6299 = vrcp.pop %v6283
  %v6300 = vmul.f32 %v6221, %v6284
  %v6301 = vmul.f32 %v6223, %v6285
  %v6302 = vmul.f32 %v6225, %v6286
  %v6303 = vmul.f32 %v6227, %v6287
  %v6304 = vmul.f32 %v6229, %v6288
  %v6305 = vmul.f32 %v6231, %v6289
  %v6306 = vmul.f32 %v6233, %v6290
  %v6307 = vmul.f32 %v6235, %v6291
  %v6308 = vmul.f32 %v6237, %v6292
  %v6309 = vmul.f32 %v6239, %v6293
  %v6310 = vmul.f32 %v6241, %v6294
  %v6311 = vmul.f32 %v6243, %v6295
  %v6312 = vmul.f32 %v6245, %v6296
  %v6313 = vmul.f32 %v6247, %v6297
  %v6314 = vmul.f32 %v6249, %v6298
  %v6315 = vmul.f32 %v6251, %v6299
  %v6316 = vpack.c.bf16 %v6301, %v6300
  %v6317 = vpack.c.bf16 %v6303, %v6302
  %v6318 = vpack.c.bf16 %v6305, %v6304
  %v6319 = vpack.c.bf16 %v6307, %v6306
  %v6320 = vpack.c.bf16 %v6309, %v6308
  %v6321 = vpack.c.bf16 %v6311, %v6310
  %v6322 = vpack.c.bf16 %v6313, %v6312
  %v6323 = vpack.c.bf16 %v6315, %v6314
  %6324 = vrot.lane.b32.xlu0 %v6051, 120
  %v6325 = vpop.permute.xlu0 %6324
  %6326 = vrot.lane.b32.xlu0 %v6052, 120
  %v6327 = vpop.permute.xlu0 %6326
  %6328 = vrot.lane.b32.xlu0 %v6053, 120
  %v6329 = vpop.permute.xlu0 %6328
  %6330 = vrot.lane.b32.xlu0 %v6054, 120
  %v6331 = vpop.permute.xlu0 %6330
  %6332 = vrot.lane.b32.xlu0 %v6055, 120
  %v6333 = vpop.permute.xlu0 %6332
  %6334 = vrot.lane.b32.xlu0 %v6056, 120
  %v6335 = vpop.permute.xlu0 %6334
  %6336 = vrot.lane.b32.xlu0 %v6057, 120
  %v6337 = vpop.permute.xlu0 %6336
  %6338 = vrot.lane.b32.xlu0 %v6058, 120
  %v6339 = vpop.permute.xlu0 %6338
  %6340 = vrot.lane.b32.xlu0 %v6051, 88
  %v6341 = vpop.permute.xlu0 %6340
  %6342 = vrot.lane.b32.xlu0 %v6052, 88
  %v6343 = vpop.permute.xlu0 %6342
  %6344 = vrot.lane.b32.xlu0 %v6053, 88
  %v6345 = vpop.permute.xlu0 %6344
  %6346 = vrot.lane.b32.xlu0 %v6054, 88
  %v6347 = vpop.permute.xlu0 %6346
  %6348 = vrot.lane.b32.xlu0 %v6055, 88
  %v6349 = vpop.permute.xlu0 %6348
  %6350 = vrot.lane.b32.xlu0 %v6056, 88
  %v6351 = vpop.permute.xlu0 %6350
  %6352 = vrot.lane.b32.xlu0 %v6057, 88
  %v6353 = vpop.permute.xlu0 %6352
  %6354 = vrot.lane.b32.xlu0 %v6058, 88
  %v6355 = vpop.permute.xlu0 %6354
  %v6357 = vsel %vm610, %v6325, 0
  %v6360 = vsel %vm610, %v6327, 0
  %v6363 = vsel %vm610, %v6329, 0
  %v6366 = vsel %vm610, %v6331, 0
  %v6369 = vsel %vm610, %v6333, 0
  %v6372 = vsel %vm610, %v6335, 0
  %v6375 = vsel %vm610, %v6337, 0
  %v6378 = vsel %vm610, %v6339, 0
  %v6381 = vsel %vm610, %v6341, 0
  %v6384 = vsel %vm610, %v6343, 0
  %v6387 = vsel %vm610, %v6345, 0
  %v6390 = vsel %vm610, %v6347, 0
  %v6393 = vsel %vm610, %v6349, 0
  %v6396 = vsel %vm610, %v6351, 0
  %v6399 = vsel %vm610, %v6353, 0
  %v6402 = vsel %vm610, %v6355, 0
  %6404 = vmatpush.bf16.xpose.msra.mxu0 %v6402
  %6405 = vmatpush.bf16.xpose.msra.mxu0 %v6399
  %6406 = vmatpush.bf16.xpose.msra.mxu0 %v6396
  %6407 = vmatpush.bf16.xpose.msra.mxu0 %v6393
  %6408 = vmatpush.bf16.xpose.msra.mxu0 %v6390
  %6409 = vmatpush.bf16.xpose.msra.mxu0 %v6387
  %6410 = vmatpush.bf16.xpose.msra.mxu0 %v6384
  %6411 = vmatpush.bf16.xpose.msra.mxu0 %v6381
  %6412 = vmatmul.bf16.gmra.mxu0 %v6357
  %v6413 = vpop.f32.mrf.mxu0
  %v6414 = vadd.f32 %v99, %v6413
  %v6415 = vpop.f32.mrf.mxu0
  %v6416 = vadd.f32 %v99, %v6415
  %6417 = vmatmul.bf16.gmra.mxu0 %v6360
  %v6418 = vpop.f32.mrf.mxu0
  %v6419 = vadd.f32 %v99, %v6418
  %v6420 = vpop.f32.mrf.mxu0
  %v6421 = vadd.f32 %v99, %v6420
  %6422 = vmatmul.bf16.gmra.mxu0 %v6363
  %v6423 = vpop.f32.mrf.mxu0
  %v6424 = vadd.f32 %v99, %v6423
  %v6425 = vpop.f32.mrf.mxu0
  %v6426 = vadd.f32 %v99, %v6425
  %6427 = vmatmul.bf16.gmra.mxu0 %v6366
  %v6428 = vpop.f32.mrf.mxu0
  %v6429 = vadd.f32 %v99, %v6428
  %v6430 = vpop.f32.mrf.mxu0
  %v6431 = vadd.f32 %v99, %v6430
  %6432 = vmatmul.bf16.gmra.mxu0 %v6369
  %v6433 = vpop.f32.mrf.mxu0
  %v6434 = vadd.f32 %v99, %v6433
  %v6435 = vpop.f32.mrf.mxu0
  %v6436 = vadd.f32 %v99, %v6435
  %6437 = vmatmul.bf16.gmra.mxu0 %v6372
  %v6438 = vpop.f32.mrf.mxu0
  %v6439 = vadd.f32 %v99, %v6438
  %v6440 = vpop.f32.mrf.mxu0
  %v6441 = vadd.f32 %v99, %v6440
  %6442 = vmatmul.bf16.gmra.mxu0 %v6375
  %v6443 = vpop.f32.mrf.mxu0
  %v6444 = vadd.f32 %v99, %v6443
  %v6445 = vpop.f32.mrf.mxu0
  %v6446 = vadd.f32 %v99, %v6445
  %6447 = vmatmul.bf16.gmra.mxu0 %v6378
  %v6448 = vpop.f32.mrf.mxu0
  %v6449 = vadd.f32 %v99, %v6448
  %v6450 = vpop.f32.mrf.mxu0
  %v6451 = vadd.f32 %v99, %v6450
  %6452 = vdwg.mxu0
  %6453 = vmax.xlane.f32.xlu0 %v6414
  %v6454 = vpop.xlane.xlu0 %6453
  %6455 = vmax.xlane.f32.xlu0 %v6416
  %v6456 = vpop.xlane.xlu0 %6455
  %6457 = vmax.xlane.f32.xlu0 %v6419
  %v6458 = vpop.xlane.xlu0 %6457
  %6459 = vmax.xlane.f32.xlu0 %v6421
  %v6460 = vpop.xlane.xlu0 %6459
  %6461 = vmax.xlane.f32.xlu0 %v6424
  %v6462 = vpop.xlane.xlu0 %6461
  %6463 = vmax.xlane.f32.xlu0 %v6426
  %v6464 = vpop.xlane.xlu0 %6463
  %6465 = vmax.xlane.f32.xlu0 %v6429
  %v6466 = vpop.xlane.xlu0 %6465
  %6467 = vmax.xlane.f32.xlu0 %v6431
  %v6468 = vpop.xlane.xlu0 %6467
  %6469 = vmax.xlane.f32.xlu0 %v6434
  %v6470 = vpop.xlane.xlu0 %6469
  %6471 = vmax.xlane.f32.xlu0 %v6436
  %v6472 = vpop.xlane.xlu0 %6471
  %6473 = vmax.xlane.f32.xlu0 %v6439
  %v6474 = vpop.xlane.xlu0 %6473
  %6475 = vmax.xlane.f32.xlu0 %v6441
  %v6476 = vpop.xlane.xlu0 %6475
  %6477 = vmax.xlane.f32.xlu0 %v6444
  %v6478 = vpop.xlane.xlu0 %6477
  %6479 = vmax.xlane.f32.xlu0 %v6446
  %v6480 = vpop.xlane.xlu0 %6479
  %6481 = vmax.xlane.f32.xlu0 %v6449
  %v6482 = vpop.xlane.xlu0 %6481
  %6483 = vmax.xlane.f32.xlu0 %v6451
  %v6484 = vpop.xlane.xlu0 %6483
  %v6485 = vsub.f32 %v6414, %v6454
  %v6486 = vsub.f32 %v6416, %v6456
  %v6487 = vsub.f32 %v6419, %v6458
  %v6488 = vsub.f32 %v6421, %v6460
  %v6489 = vsub.f32 %v6424, %v6462
  %v6490 = vsub.f32 %v6426, %v6464
  %v6491 = vsub.f32 %v6429, %v6466
  %v6492 = vsub.f32 %v6431, %v6468
  %v6493 = vsub.f32 %v6434, %v6470
  %v6494 = vsub.f32 %v6436, %v6472
  %v6495 = vsub.f32 %v6439, %v6474
  %v6496 = vsub.f32 %v6441, %v6476
  %v6497 = vsub.f32 %v6444, %v6478
  %v6498 = vsub.f32 %v6446, %v6480
  %v6499 = vsub.f32 %v6449, %v6482
  %v6500 = vsub.f32 %v6451, %v6484
  %v6501 = vmul.f32 %v6485, 1.442695
  %v6502 = vpow.pop %v6501
  %v6503 = vmul.f32 %v6486, 1.442695
  %v6504 = vpow.pop %v6503
  %v6505 = vmul.f32 %v6487, 1.442695
  %v6506 = vpow.pop %v6505
  %v6507 = vmul.f32 %v6488, 1.442695
  %v6508 = vpow.pop %v6507
  %v6509 = vmul.f32 %v6489, 1.442695
  %v6510 = vpow.pop %v6509
  %v6511 = vmul.f32 %v6490, 1.442695
  %v6512 = vpow.pop %v6511
  %v6513 = vmul.f32 %v6491, 1.442695
  %v6514 = vpow.pop %v6513
  %v6515 = vmul.f32 %v6492, 1.442695
  %v6516 = vpow.pop %v6515
  %v6517 = vmul.f32 %v6493, 1.442695
  %v6518 = vpow.pop %v6517
  %v6519 = vmul.f32 %v6494, 1.442695
  %v6520 = vpow.pop %v6519
  %v6521 = vmul.f32 %v6495, 1.442695
  %v6522 = vpow.pop %v6521
  %v6523 = vmul.f32 %v6496, 1.442695
  %v6524 = vpow.pop %v6523
  %v6525 = vmul.f32 %v6497, 1.442695
  %v6526 = vpow.pop %v6525
  %v6527 = vmul.f32 %v6498, 1.442695
  %v6528 = vpow.pop %v6527
  %v6529 = vmul.f32 %v6499, 1.442695
  %v6530 = vpow.pop %v6529
  %v6531 = vmul.f32 %v6500, 1.442695
  %v6532 = vpow.pop %v6531
  %6533 = vadd.xlane.f32.xlu0 %v6502
  %v6534 = vpop.xlane.xlu0 %6533
  %6535 = vadd.xlane.f32.xlu0 %v6504
  %v6536 = vpop.xlane.xlu0 %6535
  %6537 = vadd.xlane.f32.xlu0 %v6506
  %v6538 = vpop.xlane.xlu0 %6537
  %6539 = vadd.xlane.f32.xlu0 %v6508
  %v6540 = vpop.xlane.xlu0 %6539
  %6541 = vadd.xlane.f32.xlu0 %v6510
  %v6542 = vpop.xlane.xlu0 %6541
  %6543 = vadd.xlane.f32.xlu0 %v6512
  %v6544 = vpop.xlane.xlu0 %6543
  %6545 = vadd.xlane.f32.xlu0 %v6514
  %v6546 = vpop.xlane.xlu0 %6545
  %6547 = vadd.xlane.f32.xlu0 %v6516
  %v6548 = vpop.xlane.xlu0 %6547
  %6549 = vadd.xlane.f32.xlu0 %v6518
  %v6550 = vpop.xlane.xlu0 %6549
  %6551 = vadd.xlane.f32.xlu0 %v6520
  %v6552 = vpop.xlane.xlu0 %6551
  %6553 = vadd.xlane.f32.xlu0 %v6522
  %v6554 = vpop.xlane.xlu0 %6553
  %6555 = vadd.xlane.f32.xlu0 %v6524
  %v6556 = vpop.xlane.xlu0 %6555
  %6557 = vadd.xlane.f32.xlu0 %v6526
  %v6558 = vpop.xlane.xlu0 %6557
  %6559 = vadd.xlane.f32.xlu0 %v6528
  %v6560 = vpop.xlane.xlu0 %6559
  %6561 = vadd.xlane.f32.xlu0 %v6530
  %v6562 = vpop.xlane.xlu0 %6561
  %6563 = vadd.xlane.f32.xlu0 %v6532
  %v6564 = vpop.xlane.xlu0 %6563
  %v6565 = vrcp.pop %v6534
  %v6566 = vrcp.pop %v6536
  %v6567 = vrcp.pop %v6538
  %v6568 = vrcp.pop %v6540
  %v6569 = vrcp.pop %v6542
  %v6570 = vrcp.pop %v6544
  %v6571 = vrcp.pop %v6546
  %v6572 = vrcp.pop %v6548
  %v6573 = vrcp.pop %v6550
  %v6574 = vrcp.pop %v6552
  %v6575 = vrcp.pop %v6554
  %v6576 = vrcp.pop %v6556
  %v6577 = vrcp.pop %v6558
  %v6578 = vrcp.pop %v6560
  %v6579 = vrcp.pop %v6562
  %v6580 = vrcp.pop %v6564
  %v6581 = vmul.f32 %v6502, %v6565
  %v6582 = vmul.f32 %v6504, %v6566
  %v6583 = vmul.f32 %v6506, %v6567
  %v6584 = vmul.f32 %v6508, %v6568
  %v6585 = vmul.f32 %v6510, %v6569
  %v6586 = vmul.f32 %v6512, %v6570
  %v6587 = vmul.f32 %v6514, %v6571
  %v6588 = vmul.f32 %v6516, %v6572
  %v6589 = vmul.f32 %v6518, %v6573
  %v6590 = vmul.f32 %v6520, %v6574
  %v6591 = vmul.f32 %v6522, %v6575
  %v6592 = vmul.f32 %v6524, %v6576
  %v6593 = vmul.f32 %v6526, %v6577
  %v6594 = vmul.f32 %v6528, %v6578
  %v6595 = vmul.f32 %v6530, %v6579
  %v6596 = vmul.f32 %v6532, %v6580
  %v6597 = vpack.c.bf16 %v6582, %v6581
  %v6598 = vpack.c.bf16 %v6584, %v6583
  %v6599 = vpack.c.bf16 %v6586, %v6585
  %v6600 = vpack.c.bf16 %v6588, %v6587
  %v6601 = vpack.c.bf16 %v6590, %v6589
  %v6602 = vpack.c.bf16 %v6592, %v6591
  %v6603 = vpack.c.bf16 %v6594, %v6593
  %v6604 = vpack.c.bf16 %v6596, %v6595
  %v6621 = vunpack.c.l.b16 %v5987
  %v6622 = vunpack.c.l.b16 %v5988
  %v6623 = vunpack.c.l.b16 %v5989
  %v6624 = vunpack.c.l.b16 %v5990
  %v6625 = vunpack.c.l.b16 %v5991
  %v6626 = vunpack.c.l.b16 %v5992
  %v6627 = vunpack.c.l.b16 %v5993
  %v6628 = vunpack.c.l.b16 %v5994
  %v6629 = vunpack.c.l.b16 %v5995
  %v6630 = vunpack.c.l.b16 %v5996
  %v6631 = vunpack.c.l.b16 %v5997
  %v6632 = vunpack.c.l.b16 %v5998
  %v6633 = vunpack.c.l.b16 %v5999
  %v6634 = vunpack.c.l.b16 %v6000
  %v6635 = vunpack.c.l.b16 %v6001
  %v6636 = vunpack.c.l.b16 %v6002
  %v6637 = vpack.c.b16 %v6622, %v6621
  %v6638 = vpack.c.b16 %v6624, %v6623
  %v6639 = vpack.c.b16 %v6626, %v6625
  %v6640 = vpack.c.b16 %v6628, %v6627
  %v6641 = vpack.c.b16 %v6630, %v6629
  %v6642 = vpack.c.b16 %v6632, %v6631
  %v6643 = vpack.c.b16 %v6634, %v6633
  %v6644 = vpack.c.b16 %v6636, %v6635
  %6645 = vrot.lane.b32.xlu0 %v6637, 96
  %v6646 = vpop.permute.xlu0 %6645
  %6647 = vrot.lane.b32.xlu0 %v6638, 96
  %v6648 = vpop.permute.xlu0 %6647
  %6649 = vrot.lane.b32.xlu0 %v6639, 96
  %v6650 = vpop.permute.xlu0 %6649
  %6651 = vrot.lane.b32.xlu0 %v6640, 96
  %v6652 = vpop.permute.xlu0 %6651
  %6653 = vrot.lane.b32.xlu0 %v6641, 96
  %v6654 = vpop.permute.xlu0 %6653
  %6655 = vrot.lane.b32.xlu0 %v6642, 96
  %v6656 = vpop.permute.xlu0 %6655
  %6657 = vrot.lane.b32.xlu0 %v6643, 96
  %v6658 = vpop.permute.xlu0 %6657
  %6659 = vrot.lane.b32.xlu0 %v6644, 96
  %v6660 = vpop.permute.xlu0 %6659
  %6669 = vmatpush.bf16.msra.mxu0 %v6660
  %6670 = vmatpush.bf16.msra.mxu0 %v6658
  %6671 = vmatpush.bf16.msra.mxu0 %v6656
  %6672 = vmatpush.bf16.msra.mxu0 %v6654
  %6673 = vmatpush.bf16.msra.mxu0 %v6652
  %6674 = vmatpush.bf16.msra.mxu0 %v6650
  %6675 = vmatpush.bf16.msra.mxu0 %v6648
  %6676 = vmatpush.bf16.msra.mxu0 %v6646
  %6677 = vmatmul.bf16.gmra.mxu0 %v6597
  %v6678 = vpop.f32.mrf.mxu0
  %v6679 = vadd.f32 0.0, %v6678
  %v6680 = vpop.f32.mrf.mxu0
  %v6681 = vadd.f32 0.0, %v6680
  %6682 = vmatmul.bf16.gmra.mxu0 %v6598
  %v6683 = vpop.f32.mrf.mxu0
  %v6684 = vadd.f32 0.0, %v6683
  %v6685 = vpop.f32.mrf.mxu0
  %v6686 = vadd.f32 0.0, %v6685
  %6687 = vmatmul.bf16.gmra.mxu0 %v6599
  %v6688 = vpop.f32.mrf.mxu0
  %v6689 = vadd.f32 0.0, %v6688
  %v6690 = vpop.f32.mrf.mxu0
  %v6691 = vadd.f32 0.0, %v6690
  %6692 = vmatmul.bf16.gmra.mxu0 %v6600
  %v6693 = vpop.f32.mrf.mxu0
  %v6694 = vadd.f32 0.0, %v6693
  %v6695 = vpop.f32.mrf.mxu0
  %v6696 = vadd.f32 0.0, %v6695
  %6697 = vmatmul.bf16.gmra.mxu0 %v6601
  %v6698 = vpop.f32.mrf.mxu0
  %v6699 = vadd.f32 0.0, %v6698
  %v6700 = vpop.f32.mrf.mxu0
  %v6701 = vadd.f32 0.0, %v6700
  %6702 = vmatmul.bf16.gmra.mxu0 %v6602
  %v6703 = vpop.f32.mrf.mxu0
  %v6704 = vadd.f32 0.0, %v6703
  %v6705 = vpop.f32.mrf.mxu0
  %v6706 = vadd.f32 0.0, %v6705
  %6707 = vmatmul.bf16.gmra.mxu0 %v6603
  %v6708 = vpop.f32.mrf.mxu0
  %v6709 = vadd.f32 0.0, %v6708
  %v6710 = vpop.f32.mrf.mxu0
  %v6711 = vadd.f32 0.0, %v6710
  %6712 = vmatmul.bf16.gmra.mxu0 %v6604
  %v6713 = vpop.f32.mrf.mxu0
  %v6714 = vadd.f32 0.0, %v6713
  %v6715 = vpop.f32.mrf.mxu0
  %v6716 = vadd.f32 0.0, %v6715
  %6717 = vdwg.mxu0
  %6726 = vmatpush.bf16.msra.mxu0 %v6644
  %6727 = vmatpush.bf16.msra.mxu0 %v6643
  %6728 = vmatpush.bf16.msra.mxu0 %v6642
  %6729 = vmatpush.bf16.msra.mxu0 %v6641
  %6730 = vmatpush.bf16.msra.mxu0 %v6640
  %6731 = vmatpush.bf16.msra.mxu0 %v6639
  %6732 = vmatpush.bf16.msra.mxu0 %v6638
  %6733 = vmatpush.bf16.msra.mxu0 %v6637
  %6734 = vmatmul.bf16.gmra.mxu0 %v6316
  %v6735 = vpop.f32.mrf.mxu0
  %v6736 = vadd.f32 %v6679, %v6735
  %v6737 = vpop.f32.mrf.mxu0
  %v6738 = vadd.f32 %v6681, %v6737
  %6739 = vmatmul.bf16.gmra.mxu0 %v6317
  %v6740 = vpop.f32.mrf.mxu0
  %v6741 = vadd.f32 %v6684, %v6740
  %v6742 = vpop.f32.mrf.mxu0
  %v6743 = vadd.f32 %v6686, %v6742
  %6744 = vmatmul.bf16.gmra.mxu0 %v6318
  %v6745 = vpop.f32.mrf.mxu0
  %v6746 = vadd.f32 %v6689, %v6745
  %v6747 = vpop.f32.mrf.mxu0
  %v6748 = vadd.f32 %v6691, %v6747
  %6749 = vmatmul.bf16.gmra.mxu0 %v6319
  %v6750 = vpop.f32.mrf.mxu0
  %v6751 = vadd.f32 %v6694, %v6750
  %v6752 = vpop.f32.mrf.mxu0
  %v6753 = vadd.f32 %v6696, %v6752
  %6754 = vmatmul.bf16.gmra.mxu0 %v6320
  %v6755 = vpop.f32.mrf.mxu0
  %v6756 = vadd.f32 %v6699, %v6755
  %v6757 = vpop.f32.mrf.mxu0
  %v6758 = vadd.f32 %v6701, %v6757
  %6759 = vmatmul.bf16.gmra.mxu0 %v6321
  %v6760 = vpop.f32.mrf.mxu0
  %v6761 = vadd.f32 %v6704, %v6760
  %v6762 = vpop.f32.mrf.mxu0
  %v6763 = vadd.f32 %v6706, %v6762
  %6764 = vmatmul.bf16.gmra.mxu0 %v6322
  %v6765 = vpop.f32.mrf.mxu0
  %v6766 = vadd.f32 %v6709, %v6765
  %v6767 = vpop.f32.mrf.mxu0
  %v6768 = vadd.f32 %v6711, %v6767
  %6769 = vmatmul.bf16.gmra.mxu0 %v6323
  %v6770 = vpop.f32.mrf.mxu0
  %v6771 = vadd.f32 %v6714, %v6770
  %v6772 = vpop.f32.mrf.mxu0
  %v6773 = vadd.f32 %v6716, %v6772
  %6774 = vdwg.mxu0
  %6775 = vrot.lane.b32.xlu0 %v6051, 112
  %v6776 = vpop.permute.xlu0 %6775
  %6777 = vrot.lane.b32.xlu0 %v6052, 112
  %v6778 = vpop.permute.xlu0 %6777
  %6779 = vrot.lane.b32.xlu0 %v6053, 112
  %v6780 = vpop.permute.xlu0 %6779
  %6781 = vrot.lane.b32.xlu0 %v6054, 112
  %v6782 = vpop.permute.xlu0 %6781
  %6783 = vrot.lane.b32.xlu0 %v6055, 112
  %v6784 = vpop.permute.xlu0 %6783
  %6785 = vrot.lane.b32.xlu0 %v6056, 112
  %v6786 = vpop.permute.xlu0 %6785
  %6787 = vrot.lane.b32.xlu0 %v6057, 112
  %v6788 = vpop.permute.xlu0 %6787
  %6789 = vrot.lane.b32.xlu0 %v6058, 112
  %v6790 = vpop.permute.xlu0 %6789
  %6791 = vrot.lane.b32.xlu0 %v6051, 80
  %v6792 = vpop.permute.xlu0 %6791
  %6793 = vrot.lane.b32.xlu0 %v6052, 80
  %v6794 = vpop.permute.xlu0 %6793
  %6795 = vrot.lane.b32.xlu0 %v6053, 80
  %v6796 = vpop.permute.xlu0 %6795
  %6797 = vrot.lane.b32.xlu0 %v6054, 80
  %v6798 = vpop.permute.xlu0 %6797
  %6799 = vrot.lane.b32.xlu0 %v6055, 80
  %v6800 = vpop.permute.xlu0 %6799
  %6801 = vrot.lane.b32.xlu0 %v6056, 80
  %v6802 = vpop.permute.xlu0 %6801
  %6803 = vrot.lane.b32.xlu0 %v6057, 80
  %v6804 = vpop.permute.xlu0 %6803
  %6805 = vrot.lane.b32.xlu0 %v6058, 80
  %v6806 = vpop.permute.xlu0 %6805
  %v6808 = vsel %vm610, %v6776, 0
  %v6811 = vsel %vm610, %v6778, 0
  %v6814 = vsel %vm610, %v6780, 0
  %v6817 = vsel %vm610, %v6782, 0
  %v6820 = vsel %vm610, %v6784, 0
  %v6823 = vsel %vm610, %v6786, 0
  %v6826 = vsel %vm610, %v6788, 0
  %v6829 = vsel %vm610, %v6790, 0
  %v6832 = vsel %vm610, %v6792, 0
  %v6835 = vsel %vm610, %v6794, 0
  %v6838 = vsel %vm610, %v6796, 0
  %v6841 = vsel %vm610, %v6798, 0
  %v6844 = vsel %vm610, %v6800, 0
  %v6847 = vsel %vm610, %v6802, 0
  %v6850 = vsel %vm610, %v6804, 0
  %v6853 = vsel %vm610, %v6806, 0
  %6855 = vmatpush.bf16.xpose.msra.mxu0 %v6853
  %6856 = vmatpush.bf16.xpose.msra.mxu0 %v6850
  %6857 = vmatpush.bf16.xpose.msra.mxu0 %v6847
  %6858 = vmatpush.bf16.xpose.msra.mxu0 %v6844
  %6859 = vmatpush.bf16.xpose.msra.mxu0 %v6841
  %6860 = vmatpush.bf16.xpose.msra.mxu0 %v6838
  %6861 = vmatpush.bf16.xpose.msra.mxu0 %v6835
  %6862 = vmatpush.bf16.xpose.msra.mxu0 %v6832
  %6863 = vmatmul.bf16.gmra.mxu0 %v6808
  %v6864 = vpop.f32.mrf.mxu0
  %v6865 = vadd.f32 %v99, %v6864
  %v6866 = vpop.f32.mrf.mxu0
  %v6867 = vadd.f32 %v99, %v6866
  %6868 = vmatmul.bf16.gmra.mxu0 %v6811
  %v6869 = vpop.f32.mrf.mxu0
  %v6870 = vadd.f32 %v99, %v6869
  %v6871 = vpop.f32.mrf.mxu0
  %v6872 = vadd.f32 %v99, %v6871
  %6873 = vmatmul.bf16.gmra.mxu0 %v6814
  %v6874 = vpop.f32.mrf.mxu0
  %v6875 = vadd.f32 %v99, %v6874
  %v6876 = vpop.f32.mrf.mxu0
  %v6877 = vadd.f32 %v99, %v6876
  %6878 = vmatmul.bf16.gmra.mxu0 %v6817
  %v6879 = vpop.f32.mrf.mxu0
  %v6880 = vadd.f32 %v99, %v6879
  %v6881 = vpop.f32.mrf.mxu0
  %v6882 = vadd.f32 %v99, %v6881
  %6883 = vmatmul.bf16.gmra.mxu0 %v6820
  %v6884 = vpop.f32.mrf.mxu0
  %v6885 = vadd.f32 %v99, %v6884
  %v6886 = vpop.f32.mrf.mxu0
  %v6887 = vadd.f32 %v99, %v6886
  %6888 = vmatmul.bf16.gmra.mxu0 %v6823
  %v6889 = vpop.f32.mrf.mxu0
  %v6890 = vadd.f32 %v99, %v6889
  %v6891 = vpop.f32.mrf.mxu0
  %v6892 = vadd.f32 %v99, %v6891
  %6893 = vmatmul.bf16.gmra.mxu0 %v6826
  %v6894 = vpop.f32.mrf.mxu0
  %v6895 = vadd.f32 %v99, %v6894
  %v6896 = vpop.f32.mrf.mxu0
  %v6897 = vadd.f32 %v99, %v6896
  %6898 = vmatmul.bf16.gmra.mxu0 %v6829
  %v6899 = vpop.f32.mrf.mxu0
  %v6900 = vadd.f32 %v99, %v6899
  %v6901 = vpop.f32.mrf.mxu0
  %v6902 = vadd.f32 %v99, %v6901
  %6903 = vdwg.mxu0
  %6904 = vmax.xlane.f32.xlu0 %v6865
  %v6905 = vpop.xlane.xlu0 %6904
  %6906 = vmax.xlane.f32.xlu0 %v6867
  %v6907 = vpop.xlane.xlu0 %6906
  %6908 = vmax.xlane.f32.xlu0 %v6870
  %v6909 = vpop.xlane.xlu0 %6908
  %6910 = vmax.xlane.f32.xlu0 %v6872
  %v6911 = vpop.xlane.xlu0 %6910
  %6912 = vmax.xlane.f32.xlu0 %v6875
  %v6913 = vpop.xlane.xlu0 %6912
  %6914 = vmax.xlane.f32.xlu0 %v6877
  %v6915 = vpop.xlane.xlu0 %6914
  %6916 = vmax.xlane.f32.xlu0 %v6880
  %v6917 = vpop.xlane.xlu0 %6916
  %6918 = vmax.xlane.f32.xlu0 %v6882
  %v6919 = vpop.xlane.xlu0 %6918
  %6920 = vmax.xlane.f32.xlu0 %v6885
  %v6921 = vpop.xlane.xlu0 %6920
  %6922 = vmax.xlane.f32.xlu0 %v6887
  %v6923 = vpop.xlane.xlu0 %6922
  %6924 = vmax.xlane.f32.xlu0 %v6890
  %v6925 = vpop.xlane.xlu0 %6924
  %6926 = vmax.xlane.f32.xlu0 %v6892
  %v6927 = vpop.xlane.xlu0 %6926
  %6928 = vmax.xlane.f32.xlu0 %v6895
  %v6929 = vpop.xlane.xlu0 %6928
  %6930 = vmax.xlane.f32.xlu0 %v6897
  %v6931 = vpop.xlane.xlu0 %6930
  %6932 = vmax.xlane.f32.xlu0 %v6900
  %v6933 = vpop.xlane.xlu0 %6932
  %6934 = vmax.xlane.f32.xlu0 %v6902
  %v6935 = vpop.xlane.xlu0 %6934
  %v6936 = vsub.f32 %v6865, %v6905
  %v6937 = vsub.f32 %v6867, %v6907
  %v6938 = vsub.f32 %v6870, %v6909
  %v6939 = vsub.f32 %v6872, %v6911
  %v6940 = vsub.f32 %v6875, %v6913
  %v6941 = vsub.f32 %v6877, %v6915
  %v6942 = vsub.f32 %v6880, %v6917
  %v6943 = vsub.f32 %v6882, %v6919
  %v6944 = vsub.f32 %v6885, %v6921
  %v6945 = vsub.f32 %v6887, %v6923
  %v6946 = vsub.f32 %v6890, %v6925
  %v6947 = vsub.f32 %v6892, %v6927
  %v6948 = vsub.f32 %v6895, %v6929
  %v6949 = vsub.f32 %v6897, %v6931
  %v6950 = vsub.f32 %v6900, %v6933
  %v6951 = vsub.f32 %v6902, %v6935
  %v6952 = vmul.f32 %v6936, 1.442695
  %v6953 = vpow.pop %v6952
  %v6954 = vmul.f32 %v6937, 1.442695
  %v6955 = vpow.pop %v6954
  %v6956 = vmul.f32 %v6938, 1.442695
  %v6957 = vpow.pop %v6956
  %v6958 = vmul.f32 %v6939, 1.442695
  %v6959 = vpow.pop %v6958
  %v6960 = vmul.f32 %v6940, 1.442695
  %v6961 = vpow.pop %v6960
  %v6962 = vmul.f32 %v6941, 1.442695
  %v6963 = vpow.pop %v6962
  %v6964 = vmul.f32 %v6942, 1.442695
  %v6965 = vpow.pop %v6964
  %v6966 = vmul.f32 %v6943, 1.442695
  %v6967 = vpow.pop %v6966
  %v6968 = vmul.f32 %v6944, 1.442695
  %v6969 = vpow.pop %v6968
  %v6970 = vmul.f32 %v6945, 1.442695
  %v6971 = vpow.pop %v6970
  %v6972 = vmul.f32 %v6946, 1.442695
  %v6973 = vpow.pop %v6972
  %v6974 = vmul.f32 %v6947, 1.442695
  %v6975 = vpow.pop %v6974
  %v6976 = vmul.f32 %v6948, 1.442695
  %v6977 = vpow.pop %v6976
  %v6978 = vmul.f32 %v6949, 1.442695
  %v6979 = vpow.pop %v6978
  %v6980 = vmul.f32 %v6950, 1.442695
  %v6981 = vpow.pop %v6980
  %v6982 = vmul.f32 %v6951, 1.442695
  %v6983 = vpow.pop %v6982
  %6984 = vadd.xlane.f32.xlu0 %v6953
  %v6985 = vpop.xlane.xlu0 %6984
  %6986 = vadd.xlane.f32.xlu0 %v6955
  %v6987 = vpop.xlane.xlu0 %6986
  %6988 = vadd.xlane.f32.xlu0 %v6957
  %v6989 = vpop.xlane.xlu0 %6988
  %6990 = vadd.xlane.f32.xlu0 %v6959
  %v6991 = vpop.xlane.xlu0 %6990
  %6992 = vadd.xlane.f32.xlu0 %v6961
  %v6993 = vpop.xlane.xlu0 %6992
  %6994 = vadd.xlane.f32.xlu0 %v6963
  %v6995 = vpop.xlane.xlu0 %6994
  %6996 = vadd.xlane.f32.xlu0 %v6965
  %v6997 = vpop.xlane.xlu0 %6996
  %6998 = vadd.xlane.f32.xlu0 %v6967
  %v6999 = vpop.xlane.xlu0 %6998
  %7000 = vadd.xlane.f32.xlu0 %v6969
  %v7001 = vpop.xlane.xlu0 %7000
  %7002 = vadd.xlane.f32.xlu0 %v6971
  %v7003 = vpop.xlane.xlu0 %7002
  %7004 = vadd.xlane.f32.xlu0 %v6973
  %v7005 = vpop.xlane.xlu0 %7004
  %7006 = vadd.xlane.f32.xlu0 %v6975
  %v7007 = vpop.xlane.xlu0 %7006
  %7008 = vadd.xlane.f32.xlu0 %v6977
  %v7009 = vpop.xlane.xlu0 %7008
  %7010 = vadd.xlane.f32.xlu0 %v6979
  %v7011 = vpop.xlane.xlu0 %7010
  %7012 = vadd.xlane.f32.xlu0 %v6981
  %v7013 = vpop.xlane.xlu0 %7012
  %7014 = vadd.xlane.f32.xlu0 %v6983
  %v7015 = vpop.xlane.xlu0 %7014
  %v7016 = vrcp.pop %v6985
  %v7017 = vrcp.pop %v6987
  %v7018 = vrcp.pop %v6989
  %v7019 = vrcp.pop %v6991
  %v7020 = vrcp.pop %v6993
  %v7021 = vrcp.pop %v6995
  %v7022 = vrcp.pop %v6997
  %v7023 = vrcp.pop %v6999
  %v7024 = vrcp.pop %v7001
  %v7025 = vrcp.pop %v7003
  %v7026 = vrcp.pop %v7005
  %v7027 = vrcp.pop %v7007
  %v7028 = vrcp.pop %v7009
  %v7029 = vrcp.pop %v7011
  %v7030 = vrcp.pop %v7013
  %v7031 = vrcp.pop %v7015
  %v7032 = vmul.f32 %v6953, %v7016
  %v7033 = vmul.f32 %v6955, %v7017
  %v7034 = vmul.f32 %v6957, %v7018
  %v7035 = vmul.f32 %v6959, %v7019
  %v7036 = vmul.f32 %v6961, %v7020
  %v7037 = vmul.f32 %v6963, %v7021
  %v7038 = vmul.f32 %v6965, %v7022
  %v7039 = vmul.f32 %v6967, %v7023
  %v7040 = vmul.f32 %v6969, %v7024
  %v7041 = vmul.f32 %v6971, %v7025
  %v7042 = vmul.f32 %v6973, %v7026
  %v7043 = vmul.f32 %v6975, %v7027
  %v7044 = vmul.f32 %v6977, %v7028
  %v7045 = vmul.f32 %v6979, %v7029
  %v7046 = vmul.f32 %v6981, %v7030
  %v7047 = vmul.f32 %v6983, %v7031
  %v7048 = vpack.c.bf16 %v7033, %v7032
  %v7049 = vpack.c.bf16 %v7035, %v7034
  %v7050 = vpack.c.bf16 %v7037, %v7036
  %v7051 = vpack.c.bf16 %v7039, %v7038
  %v7052 = vpack.c.bf16 %v7041, %v7040
  %v7053 = vpack.c.bf16 %v7043, %v7042
  %v7054 = vpack.c.bf16 %v7045, %v7044
  %v7055 = vpack.c.bf16 %v7047, %v7046
  %7056 = vrot.lane.b32.xlu0 %v6637, 64
  %v7057 = vpop.permute.xlu0 %7056
  %7058 = vrot.lane.b32.xlu0 %v6638, 64
  %v7059 = vpop.permute.xlu0 %7058
  %7060 = vrot.lane.b32.xlu0 %v6639, 64
  %v7061 = vpop.permute.xlu0 %7060
  %7062 = vrot.lane.b32.xlu0 %v6640, 64
  %v7063 = vpop.permute.xlu0 %7062
  %7064 = vrot.lane.b32.xlu0 %v6641, 64
  %v7065 = vpop.permute.xlu0 %7064
  %7066 = vrot.lane.b32.xlu0 %v6642, 64
  %v7067 = vpop.permute.xlu0 %7066
  %7068 = vrot.lane.b32.xlu0 %v6643, 64
  %v7069 = vpop.permute.xlu0 %7068
  %7070 = vrot.lane.b32.xlu0 %v6644, 64
  %v7071 = vpop.permute.xlu0 %7070
  %7080 = vmatpush.bf16.msra.mxu0 %v7071
  %7081 = vmatpush.bf16.msra.mxu0 %v7069
  %7082 = vmatpush.bf16.msra.mxu0 %v7067
  %7083 = vmatpush.bf16.msra.mxu0 %v7065
  %7084 = vmatpush.bf16.msra.mxu0 %v7063
  %7085 = vmatpush.bf16.msra.mxu0 %v7061
  %7086 = vmatpush.bf16.msra.mxu0 %v7059
  %7087 = vmatpush.bf16.msra.mxu0 %v7057
  %7088 = vmatmul.bf16.gmra.mxu0 %v7048
  %v7089 = vpop.f32.mrf.mxu0
  %v7090 = vadd.f32 0.0, %v7089
  %v7091 = vpop.f32.mrf.mxu0
  %v7092 = vadd.f32 0.0, %v7091
  %7093 = vmatmul.bf16.gmra.mxu0 %v7049
  %v7094 = vpop.f32.mrf.mxu0
  %v7095 = vadd.f32 0.0, %v7094
  %v7096 = vpop.f32.mrf.mxu0
  %v7097 = vadd.f32 0.0, %v7096
  %7098 = vmatmul.bf16.gmra.mxu0 %v7050
  %v7099 = vpop.f32.mrf.mxu0
  %v7100 = vadd.f32 0.0, %v7099
  %v7101 = vpop.f32.mrf.mxu0
  %v7102 = vadd.f32 0.0, %v7101
  %7103 = vmatmul.bf16.gmra.mxu0 %v7051
  %v7104 = vpop.f32.mrf.mxu0
  %v7105 = vadd.f32 0.0, %v7104
  %v7106 = vpop.f32.mrf.mxu0
  %v7107 = vadd.f32 0.0, %v7106
  %7108 = vmatmul.bf16.gmra.mxu0 %v7052
  %v7109 = vpop.f32.mrf.mxu0
  %v7110 = vadd.f32 0.0, %v7109
  %v7111 = vpop.f32.mrf.mxu0
  %v7112 = vadd.f32 0.0, %v7111
  %7113 = vmatmul.bf16.gmra.mxu0 %v7053
  %v7114 = vpop.f32.mrf.mxu0
  %v7115 = vadd.f32 0.0, %v7114
  %v7116 = vpop.f32.mrf.mxu0
  %v7117 = vadd.f32 0.0, %v7116
  %7118 = vmatmul.bf16.gmra.mxu0 %v7054
  %v7119 = vpop.f32.mrf.mxu0
  %v7120 = vadd.f32 0.0, %v7119
  %v7121 = vpop.f32.mrf.mxu0
  %v7122 = vadd.f32 0.0, %v7121
  %7123 = vmatmul.bf16.gmra.mxu0 %v7055
  %v7124 = vpop.f32.mrf.mxu0
  %v7125 = vadd.f32 0.0, %v7124
  %v7126 = vpop.f32.mrf.mxu0
  %v7127 = vadd.f32 0.0, %v7126
  %7128 = vdwg.mxu0
  %v7129 = vadd.f32 %v6736, %v7090
  %v7130 = vadd.f32 %v6738, %v7092
  %v7131 = vadd.f32 %v6741, %v7095
  %v7132 = vadd.f32 %v6743, %v7097
  %v7133 = vadd.f32 %v6746, %v7100
  %v7134 = vadd.f32 %v6748, %v7102
  %v7135 = vadd.f32 %v6751, %v7105
  %v7136 = vadd.f32 %v6753, %v7107
  %v7137 = vadd.f32 %v6756, %v7110
  %v7138 = vadd.f32 %v6758, %v7112
  %v7139 = vadd.f32 %v6761, %v7115
  %v7140 = vadd.f32 %v6763, %v7117
  %v7141 = vadd.f32 %v6766, %v7120
  %v7142 = vadd.f32 %v6768, %v7122
  %v7143 = vadd.f32 %v6771, %v7125
  %v7144 = vadd.f32 %v6773, %v7127
  %7145 = vrot.lane.b32.xlu0 %v6051, 104
  %v7146 = vpop.permute.xlu0 %7145
  %7147 = vrot.lane.b32.xlu0 %v6052, 104
  %v7148 = vpop.permute.xlu0 %7147
  %7149 = vrot.lane.b32.xlu0 %v6053, 104
  %v7150 = vpop.permute.xlu0 %7149
  %7151 = vrot.lane.b32.xlu0 %v6054, 104
  %v7152 = vpop.permute.xlu0 %7151
  %7153 = vrot.lane.b32.xlu0 %v6055, 104
  %v7154 = vpop.permute.xlu0 %7153
  %7155 = vrot.lane.b32.xlu0 %v6056, 104
  %v7156 = vpop.permute.xlu0 %7155
  %7157 = vrot.lane.b32.xlu0 %v6057, 104
  %v7158 = vpop.permute.xlu0 %7157
  %7159 = vrot.lane.b32.xlu0 %v6058, 104
  %v7160 = vpop.permute.xlu0 %7159
  %7161 = vrot.lane.b32.xlu0 %v6051, 72
  %v7162 = vpop.permute.xlu0 %7161
  %7163 = vrot.lane.b32.xlu0 %v6052, 72
  %v7164 = vpop.permute.xlu0 %7163
  %7165 = vrot.lane.b32.xlu0 %v6053, 72
  %v7166 = vpop.permute.xlu0 %7165
  %7167 = vrot.lane.b32.xlu0 %v6054, 72
  %v7168 = vpop.permute.xlu0 %7167
  %7169 = vrot.lane.b32.xlu0 %v6055, 72
  %v7170 = vpop.permute.xlu0 %7169
  %7171 = vrot.lane.b32.xlu0 %v6056, 72
  %v7172 = vpop.permute.xlu0 %7171
  %7173 = vrot.lane.b32.xlu0 %v6057, 72
  %v7174 = vpop.permute.xlu0 %7173
  %7175 = vrot.lane.b32.xlu0 %v6058, 72
  %v7176 = vpop.permute.xlu0 %7175
  %v7178 = vsel %vm610, %v7146, 0
  %v7181 = vsel %vm610, %v7148, 0
  %v7184 = vsel %vm610, %v7150, 0
  %v7187 = vsel %vm610, %v7152, 0
  %v7190 = vsel %vm610, %v7154, 0
  %v7193 = vsel %vm610, %v7156, 0
  %v7196 = vsel %vm610, %v7158, 0
  %v7199 = vsel %vm610, %v7160, 0
  %v7202 = vsel %vm610, %v7162, 0
  %v7205 = vsel %vm610, %v7164, 0
  %v7208 = vsel %vm610, %v7166, 0
  %v7211 = vsel %vm610, %v7168, 0
  %v7214 = vsel %vm610, %v7170, 0
  %v7217 = vsel %vm610, %v7172, 0
  %v7220 = vsel %vm610, %v7174, 0
  %v7223 = vsel %vm610, %v7176, 0
  %7225 = vmatpush.bf16.xpose.msra.mxu0 %v7223
  %7226 = vmatpush.bf16.xpose.msra.mxu0 %v7220
  %7227 = vmatpush.bf16.xpose.msra.mxu0 %v7217
  %7228 = vmatpush.bf16.xpose.msra.mxu0 %v7214
  %7229 = vmatpush.bf16.xpose.msra.mxu0 %v7211
  %7230 = vmatpush.bf16.xpose.msra.mxu0 %v7208
  %7231 = vmatpush.bf16.xpose.msra.mxu0 %v7205
  %7232 = vmatpush.bf16.xpose.msra.mxu0 %v7202
  %7233 = vmatmul.bf16.gmra.mxu0 %v7178
  %v7234 = vpop.f32.mrf.mxu0
  %v7235 = vadd.f32 %v99, %v7234
  %v7236 = vpop.f32.mrf.mxu0
  %v7237 = vadd.f32 %v99, %v7236
  %7238 = vmatmul.bf16.gmra.mxu0 %v7181
  %v7239 = vpop.f32.mrf.mxu0
  %v7240 = vadd.f32 %v99, %v7239
  %v7241 = vpop.f32.mrf.mxu0
  %v7242 = vadd.f32 %v99, %v7241
  %7243 = vmatmul.bf16.gmra.mxu0 %v7184
  %v7244 = vpop.f32.mrf.mxu0
  %v7245 = vadd.f32 %v99, %v7244
  %v7246 = vpop.f32.mrf.mxu0
  %v7247 = vadd.f32 %v99, %v7246
  %7248 = vmatmul.bf16.gmra.mxu0 %v7187
  %v7249 = vpop.f32.mrf.mxu0
  %v7250 = vadd.f32 %v99, %v7249
  %v7251 = vpop.f32.mrf.mxu0
  %v7252 = vadd.f32 %v99, %v7251
  %7253 = vmatmul.bf16.gmra.mxu0 %v7190
  %v7254 = vpop.f32.mrf.mxu0
  %v7255 = vadd.f32 %v99, %v7254
  %v7256 = vpop.f32.mrf.mxu0
  %v7257 = vadd.f32 %v99, %v7256
  %7258 = vmatmul.bf16.gmra.mxu0 %v7193
  %v7259 = vpop.f32.mrf.mxu0
  %v7260 = vadd.f32 %v99, %v7259
  %v7261 = vpop.f32.mrf.mxu0
  %v7262 = vadd.f32 %v99, %v7261
  %7263 = vmatmul.bf16.gmra.mxu0 %v7196
  %v7264 = vpop.f32.mrf.mxu0
  %v7265 = vadd.f32 %v99, %v7264
  %v7266 = vpop.f32.mrf.mxu0
  %v7267 = vadd.f32 %v99, %v7266
  %7268 = vmatmul.bf16.gmra.mxu0 %v7199
  %v7269 = vpop.f32.mrf.mxu0
  %v7270 = vadd.f32 %v99, %v7269
  %v7271 = vpop.f32.mrf.mxu0
  %v7272 = vadd.f32 %v99, %v7271
  %7273 = vdwg.mxu0
  %7274 = vmax.xlane.f32.xlu0 %v7235
  %v7275 = vpop.xlane.xlu0 %7274
  %7276 = vmax.xlane.f32.xlu0 %v7237
  %v7277 = vpop.xlane.xlu0 %7276
  %7278 = vmax.xlane.f32.xlu0 %v7240
  %v7279 = vpop.xlane.xlu0 %7278
  %7280 = vmax.xlane.f32.xlu0 %v7242
  %v7281 = vpop.xlane.xlu0 %7280
  %7282 = vmax.xlane.f32.xlu0 %v7245
  %v7283 = vpop.xlane.xlu0 %7282
  %7284 = vmax.xlane.f32.xlu0 %v7247
  %v7285 = vpop.xlane.xlu0 %7284
  %7286 = vmax.xlane.f32.xlu0 %v7250
  %v7287 = vpop.xlane.xlu0 %7286
  %7288 = vmax.xlane.f32.xlu0 %v7252
  %v7289 = vpop.xlane.xlu0 %7288
  %7290 = vmax.xlane.f32.xlu0 %v7255
  %v7291 = vpop.xlane.xlu0 %7290
  %7292 = vmax.xlane.f32.xlu0 %v7257
  %v7293 = vpop.xlane.xlu0 %7292
  %7294 = vmax.xlane.f32.xlu0 %v7260
  %v7295 = vpop.xlane.xlu0 %7294
  %7296 = vmax.xlane.f32.xlu0 %v7262
  %v7297 = vpop.xlane.xlu0 %7296
  %7298 = vmax.xlane.f32.xlu0 %v7265
  %v7299 = vpop.xlane.xlu0 %7298
  %7300 = vmax.xlane.f32.xlu0 %v7267
  %v7301 = vpop.xlane.xlu0 %7300
  %7302 = vmax.xlane.f32.xlu0 %v7270
  %v7303 = vpop.xlane.xlu0 %7302
  %7304 = vmax.xlane.f32.xlu0 %v7272
  %v7305 = vpop.xlane.xlu0 %7304
  %v7306 = vsub.f32 %v7235, %v7275
  %v7307 = vsub.f32 %v7237, %v7277
  %v7308 = vsub.f32 %v7240, %v7279
  %v7309 = vsub.f32 %v7242, %v7281
  %v7310 = vsub.f32 %v7245, %v7283
  %v7311 = vsub.f32 %v7247, %v7285
  %v7312 = vsub.f32 %v7250, %v7287
  %v7313 = vsub.f32 %v7252, %v7289
  %v7314 = vsub.f32 %v7255, %v7291
  %v7315 = vsub.f32 %v7257, %v7293
  %v7316 = vsub.f32 %v7260, %v7295
  %v7317 = vsub.f32 %v7262, %v7297
  %v7318 = vsub.f32 %v7265, %v7299
  %v7319 = vsub.f32 %v7267, %v7301
  %v7320 = vsub.f32 %v7270, %v7303
  %v7321 = vsub.f32 %v7272, %v7305
  %v7322 = vmul.f32 %v7306, 1.442695
  %v7323 = vpow.pop %v7322
  %v7324 = vmul.f32 %v7307, 1.442695
  %v7325 = vpow.pop %v7324
  %v7326 = vmul.f32 %v7308, 1.442695
  %v7327 = vpow.pop %v7326
  %v7328 = vmul.f32 %v7309, 1.442695
  %v7329 = vpow.pop %v7328
  %v7330 = vmul.f32 %v7310, 1.442695
  %v7331 = vpow.pop %v7330
  %v7332 = vmul.f32 %v7311, 1.442695
  %v7333 = vpow.pop %v7332
  %v7334 = vmul.f32 %v7312, 1.442695
  %v7335 = vpow.pop %v7334
  %v7336 = vmul.f32 %v7313, 1.442695
  %v7337 = vpow.pop %v7336
  %v7338 = vmul.f32 %v7314, 1.442695
  %v7339 = vpow.pop %v7338
  %v7340 = vmul.f32 %v7315, 1.442695
  %v7341 = vpow.pop %v7340
  %v7342 = vmul.f32 %v7316, 1.442695
  %v7343 = vpow.pop %v7342
  %v7344 = vmul.f32 %v7317, 1.442695
  %v7345 = vpow.pop %v7344
  %v7346 = vmul.f32 %v7318, 1.442695
  %v7347 = vpow.pop %v7346
  %v7348 = vmul.f32 %v7319, 1.442695
  %v7349 = vpow.pop %v7348
  %v7350 = vmul.f32 %v7320, 1.442695
  %v7351 = vpow.pop %v7350
  %v7352 = vmul.f32 %v7321, 1.442695
  %v7353 = vpow.pop %v7352
  %7354 = vadd.xlane.f32.xlu0 %v7323
  %v7355 = vpop.xlane.xlu0 %7354
  %7356 = vadd.xlane.f32.xlu0 %v7325
  %v7357 = vpop.xlane.xlu0 %7356
  %7358 = vadd.xlane.f32.xlu0 %v7327
  %v7359 = vpop.xlane.xlu0 %7358
  %7360 = vadd.xlane.f32.xlu0 %v7329
  %v7361 = vpop.xlane.xlu0 %7360
  %7362 = vadd.xlane.f32.xlu0 %v7331
  %v7363 = vpop.xlane.xlu0 %7362
  %7364 = vadd.xlane.f32.xlu0 %v7333
  %v7365 = vpop.xlane.xlu0 %7364
  %7366 = vadd.xlane.f32.xlu0 %v7335
  %v7367 = vpop.xlane.xlu0 %7366
  %7368 = vadd.xlane.f32.xlu0 %v7337
  %v7369 = vpop.xlane.xlu0 %7368
  %7370 = vadd.xlane.f32.xlu0 %v7339
  %v7371 = vpop.xlane.xlu0 %7370
  %7372 = vadd.xlane.f32.xlu0 %v7341
  %v7373 = vpop.xlane.xlu0 %7372
  %7374 = vadd.xlane.f32.xlu0 %v7343
  %v7375 = vpop.xlane.xlu0 %7374
  %7376 = vadd.xlane.f32.xlu0 %v7345
  %v7377 = vpop.xlane.xlu0 %7376
  %7378 = vadd.xlane.f32.xlu0 %v7347
  %v7379 = vpop.xlane.xlu0 %7378
  %7380 = vadd.xlane.f32.xlu0 %v7349
  %v7381 = vpop.xlane.xlu0 %7380
  %7382 = vadd.xlane.f32.xlu0 %v7351
  %v7383 = vpop.xlane.xlu0 %7382
  %7384 = vadd.xlane.f32.xlu0 %v7353
  %v7385 = vpop.xlane.xlu0 %7384
  %v7386 = vrcp.pop %v7355
  %v7387 = vrcp.pop %v7357
  %v7388 = vrcp.pop %v7359
  %v7389 = vrcp.pop %v7361
  %v7390 = vrcp.pop %v7363
  %v7391 = vrcp.pop %v7365
  %v7392 = vrcp.pop %v7367
  %v7393 = vrcp.pop %v7369
  %v7394 = vrcp.pop %v7371
  %v7395 = vrcp.pop %v7373
  %v7396 = vrcp.pop %v7375
  %v7397 = vrcp.pop %v7377
  %v7398 = vrcp.pop %v7379
  %v7399 = vrcp.pop %v7381
  %v7400 = vrcp.pop %v7383
  %v7401 = vrcp.pop %v7385
  %v7402 = vmul.f32 %v7323, %v7386
  %v7403 = vmul.f32 %v7325, %v7387
  %v7404 = vmul.f32 %v7327, %v7388
  %v7405 = vmul.f32 %v7329, %v7389
  %v7406 = vmul.f32 %v7331, %v7390
  %v7407 = vmul.f32 %v7333, %v7391
  %v7408 = vmul.f32 %v7335, %v7392
  %v7409 = vmul.f32 %v7337, %v7393
  %v7410 = vmul.f32 %v7339, %v7394
  %v7411 = vmul.f32 %v7341, %v7395
  %v7412 = vmul.f32 %v7343, %v7396
  %v7413 = vmul.f32 %v7345, %v7397
  %v7414 = vmul.f32 %v7347, %v7398
  %v7415 = vmul.f32 %v7349, %v7399
  %v7416 = vmul.f32 %v7351, %v7400
  %v7417 = vmul.f32 %v7353, %v7401
  %v7418 = vpack.c.bf16 %v7403, %v7402
  %v7419 = vpack.c.bf16 %v7405, %v7404
  %v7420 = vpack.c.bf16 %v7407, %v7406
  %v7421 = vpack.c.bf16 %v7409, %v7408
  %v7422 = vpack.c.bf16 %v7411, %v7410
  %v7423 = vpack.c.bf16 %v7413, %v7412
  %v7424 = vpack.c.bf16 %v7415, %v7414
  %v7425 = vpack.c.bf16 %v7417, %v7416
  %7426 = vrot.lane.b32.xlu0 %v6637, 32
  %v7427 = vpop.permute.xlu0 %7426
  %7428 = vrot.lane.b32.xlu0 %v6638, 32
  %v7429 = vpop.permute.xlu0 %7428
  %7430 = vrot.lane.b32.xlu0 %v6639, 32
  %v7431 = vpop.permute.xlu0 %7430
  %7432 = vrot.lane.b32.xlu0 %v6640, 32
  %v7433 = vpop.permute.xlu0 %7432
  %7434 = vrot.lane.b32.xlu0 %v6641, 32
  %v7435 = vpop.permute.xlu0 %7434
  %7436 = vrot.lane.b32.xlu0 %v6642, 32
  %v7437 = vpop.permute.xlu0 %7436
  %7438 = vrot.lane.b32.xlu0 %v6643, 32
  %v7439 = vpop.permute.xlu0 %7438
  %7440 = vrot.lane.b32.xlu0 %v6644, 32
  %v7441 = vpop.permute.xlu0 %7440
  %7450 = vmatpush.bf16.msra.mxu0 %v7441
  %7451 = vmatpush.bf16.msra.mxu0 %v7439
  %7452 = vmatpush.bf16.msra.mxu0 %v7437
  %7453 = vmatpush.bf16.msra.mxu0 %v7435
  %7454 = vmatpush.bf16.msra.mxu0 %v7433
  %7455 = vmatpush.bf16.msra.mxu0 %v7431
  %7456 = vmatpush.bf16.msra.mxu0 %v7429
  %7457 = vmatpush.bf16.msra.mxu0 %v7427
  %7458 = vmatmul.bf16.gmra.mxu0 %v7418
  %v7459 = vpop.f32.mrf.mxu0
  %v7460 = vadd.f32 0.0, %v7459
  %v7461 = vpop.f32.mrf.mxu0
  %v7462 = vadd.f32 0.0, %v7461
  %7463 = vmatmul.bf16.gmra.mxu0 %v7419
  %v7464 = vpop.f32.mrf.mxu0
  %v7465 = vadd.f32 0.0, %v7464
  %v7466 = vpop.f32.mrf.mxu0
  %v7467 = vadd.f32 0.0, %v7466
  %7468 = vmatmul.bf16.gmra.mxu0 %v7420
  %v7469 = vpop.f32.mrf.mxu0
  %v7470 = vadd.f32 0.0, %v7469
  %v7471 = vpop.f32.mrf.mxu0
  %v7472 = vadd.f32 0.0, %v7471
  %7473 = vmatmul.bf16.gmra.mxu0 %v7421
  %v7474 = vpop.f32.mrf.mxu0
  %v7475 = vadd.f32 0.0, %v7474
  %v7476 = vpop.f32.mrf.mxu0
  %v7477 = vadd.f32 0.0, %v7476
  %7478 = vmatmul.bf16.gmra.mxu0 %v7422
  %v7479 = vpop.f32.mrf.mxu0
  %v7480 = vadd.f32 0.0, %v7479
  %v7481 = vpop.f32.mrf.mxu0
  %v7482 = vadd.f32 0.0, %v7481
  %7483 = vmatmul.bf16.gmra.mxu0 %v7423
  %v7484 = vpop.f32.mrf.mxu0
  %v7485 = vadd.f32 0.0, %v7484
  %v7486 = vpop.f32.mrf.mxu0
  %v7487 = vadd.f32 0.0, %v7486
  %7488 = vmatmul.bf16.gmra.mxu0 %v7424
  %v7489 = vpop.f32.mrf.mxu0
  %v7490 = vadd.f32 0.0, %v7489
  %v7491 = vpop.f32.mrf.mxu0
  %v7492 = vadd.f32 0.0, %v7491
  %7493 = vmatmul.bf16.gmra.mxu0 %v7425
  %v7494 = vpop.f32.mrf.mxu0
  %v7495 = vadd.f32 0.0, %v7494
  %v7496 = vpop.f32.mrf.mxu0
  %v7497 = vadd.f32 0.0, %v7496
  %7498 = vdwg.mxu0
  %v7499 = vadd.f32 %v7129, %v7460
  %v7500 = vadd.f32 %v7130, %v7462
  %v7501 = vadd.f32 %v7131, %v7465
  %v7502 = vadd.f32 %v7132, %v7467
  %v7503 = vadd.f32 %v7133, %v7470
  %v7504 = vadd.f32 %v7134, %v7472
  %v7505 = vadd.f32 %v7135, %v7475
  %v7506 = vadd.f32 %v7136, %v7477
  %v7507 = vadd.f32 %v7137, %v7480
  %v7508 = vadd.f32 %v7138, %v7482
  %v7509 = vadd.f32 %v7139, %v7485
  %v7510 = vadd.f32 %v7140, %v7487
  %v7511 = vadd.f32 %v7141, %v7490
  %v7512 = vadd.f32 %v7142, %v7492
  %v7513 = vadd.f32 %v7143, %v7495
  %v7514 = vadd.f32 %v7144, %v7497
  %v7531 = vunpack.c.l.b16 %v5806
  %v7532 = vunpack.c.l.b16 %v5807
  %v7533 = vunpack.c.l.b16 %v5808
  %v7534 = vunpack.c.l.b16 %v5809
  %v7535 = vunpack.c.l.b16 %v5810
  %v7536 = vunpack.c.l.b16 %v5811
  %v7537 = vunpack.c.l.b16 %v5812
  %v7538 = vunpack.c.l.b16 %v5813
  %v7539 = vunpack.c.l.b16 %v5814
  %v7540 = vunpack.c.l.b16 %v5815
  %v7541 = vunpack.c.l.b16 %v5816
  %v7542 = vunpack.c.l.b16 %v5817
  %v7543 = vunpack.c.l.b16 %v5818
  %v7544 = vunpack.c.l.b16 %v5819
  %v7545 = vunpack.c.l.b16 %v5820
  %v7546 = vunpack.c.l.b16 %v5821
  %v7547 = vpack.c.b16 %v7532, %v7531
  %v7548 = vpack.c.b16 %v7534, %v7533
  %v7549 = vpack.c.b16 %v7536, %v7535
  %v7550 = vpack.c.b16 %v7538, %v7537
  %v7551 = vpack.c.b16 %v7540, %v7539
  %v7552 = vpack.c.b16 %v7542, %v7541
  %v7553 = vpack.c.b16 %v7544, %v7543
  %v7554 = vpack.c.b16 %v7546, %v7545
  %7555 = vrot.lane.b32.xlu0 %v7547, 96
  %v7556 = vpop.permute.xlu0 %7555
  %7557 = vrot.lane.b32.xlu0 %v7548, 96
  %v7558 = vpop.permute.xlu0 %7557
  %7559 = vrot.lane.b32.xlu0 %v7549, 96
  %v7560 = vpop.permute.xlu0 %7559
  %7561 = vrot.lane.b32.xlu0 %v7550, 96
  %v7562 = vpop.permute.xlu0 %7561
  %7563 = vrot.lane.b32.xlu0 %v7551, 96
  %v7564 = vpop.permute.xlu0 %7563
  %7565 = vrot.lane.b32.xlu0 %v7552, 96
  %v7566 = vpop.permute.xlu0 %7565
  %7567 = vrot.lane.b32.xlu0 %v7553, 96
  %v7568 = vpop.permute.xlu0 %7567
  %7569 = vrot.lane.b32.xlu0 %v7554, 96
  %v7570 = vpop.permute.xlu0 %7569
  %v7572 = vsel %vm610, %v7547, 0
  %v7575 = vsel %vm610, %v7548, 0
  %v7578 = vsel %vm610, %v7549, 0
  %v7581 = vsel %vm610, %v7550, 0
  %v7584 = vsel %vm610, %v7551, 0
  %v7587 = vsel %vm610, %v7552, 0
  %v7590 = vsel %vm610, %v7553, 0
  %v7593 = vsel %vm610, %v7554, 0
  %v7596 = vsel %vm610, %v7556, 0
  %v7599 = vsel %vm610, %v7558, 0
  %v7602 = vsel %vm610, %v7560, 0
  %v7605 = vsel %vm610, %v7562, 0
  %v7608 = vsel %vm610, %v7564, 0
  %v7611 = vsel %vm610, %v7566, 0
  %v7614 = vsel %vm610, %v7568, 0
  %v7617 = vsel %vm610, %v7570, 0
  %7619 = vmatpush.bf16.xpose.msra.mxu0 %v7617
  %7620 = vmatpush.bf16.xpose.msra.mxu0 %v7614
  %7621 = vmatpush.bf16.xpose.msra.mxu0 %v7611
  %7622 = vmatpush.bf16.xpose.msra.mxu0 %v7608
  %7623 = vmatpush.bf16.xpose.msra.mxu0 %v7605
  %7624 = vmatpush.bf16.xpose.msra.mxu0 %v7602
  %7625 = vmatpush.bf16.xpose.msra.mxu0 %v7599
  %7626 = vmatpush.bf16.xpose.msra.mxu0 %v7596
  %7627 = vmatmul.bf16.gmra.mxu0 %v7572
  %v7628 = vpop.f32.mrf.mxu0
  %v7629 = vadd.f32 %v104, %v7628
  %v7630 = vpop.f32.mrf.mxu0
  %v7631 = vadd.f32 %v104, %v7630
  %7632 = vmatmul.bf16.gmra.mxu0 %v7575
  %v7633 = vpop.f32.mrf.mxu0
  %v7634 = vadd.f32 %v104, %v7633
  %v7635 = vpop.f32.mrf.mxu0
  %v7636 = vadd.f32 %v104, %v7635
  %7637 = vmatmul.bf16.gmra.mxu0 %v7578
  %v7638 = vpop.f32.mrf.mxu0
  %v7639 = vadd.f32 %v104, %v7638
  %v7640 = vpop.f32.mrf.mxu0
  %v7641 = vadd.f32 %v104, %v7640
  %7642 = vmatmul.bf16.gmra.mxu0 %v7581
  %v7643 = vpop.f32.mrf.mxu0
  %v7644 = vadd.f32 %v104, %v7643
  %v7645 = vpop.f32.mrf.mxu0
  %v7646 = vadd.f32 %v104, %v7645
  %7647 = vmatmul.bf16.gmra.mxu0 %v7584
  %v7648 = vpop.f32.mrf.mxu0
  %v7649 = vadd.f32 %v104, %v7648
  %v7650 = vpop.f32.mrf.mxu0
  %v7651 = vadd.f32 %v104, %v7650
  %7652 = vmatmul.bf16.gmra.mxu0 %v7587
  %v7653 = vpop.f32.mrf.mxu0
  %v7654 = vadd.f32 %v104, %v7653
  %v7655 = vpop.f32.mrf.mxu0
  %v7656 = vadd.f32 %v104, %v7655
  %7657 = vmatmul.bf16.gmra.mxu0 %v7590
  %v7658 = vpop.f32.mrf.mxu0
  %v7659 = vadd.f32 %v104, %v7658
  %v7660 = vpop.f32.mrf.mxu0
  %v7661 = vadd.f32 %v104, %v7660
  %7662 = vmatmul.bf16.gmra.mxu0 %v7593
  %v7663 = vpop.f32.mrf.mxu0
  %v7664 = vadd.f32 %v104, %v7663
  %v7665 = vpop.f32.mrf.mxu0
  %v7666 = vadd.f32 %v104, %v7665
  %7667 = vdwg.mxu0
  %7668 = vmax.xlane.f32.xlu0 %v7629
  %v7669 = vpop.xlane.xlu0 %7668
  %7670 = vmax.xlane.f32.xlu0 %v7631
  %v7671 = vpop.xlane.xlu0 %7670
  %7672 = vmax.xlane.f32.xlu0 %v7634
  %v7673 = vpop.xlane.xlu0 %7672
  %7674 = vmax.xlane.f32.xlu0 %v7636
  %v7675 = vpop.xlane.xlu0 %7674
  %7676 = vmax.xlane.f32.xlu0 %v7639
  %v7677 = vpop.xlane.xlu0 %7676
  %7678 = vmax.xlane.f32.xlu0 %v7641
  %v7679 = vpop.xlane.xlu0 %7678
  %7680 = vmax.xlane.f32.xlu0 %v7644
  %v7681 = vpop.xlane.xlu0 %7680
  %7682 = vmax.xlane.f32.xlu0 %v7646
  %v7683 = vpop.xlane.xlu0 %7682
  %7684 = vmax.xlane.f32.xlu0 %v7649
  %v7685 = vpop.xlane.xlu0 %7684
  %7686 = vmax.xlane.f32.xlu0 %v7651
  %v7687 = vpop.xlane.xlu0 %7686
  %7688 = vmax.xlane.f32.xlu0 %v7654
  %v7689 = vpop.xlane.xlu0 %7688
  %7690 = vmax.xlane.f32.xlu0 %v7656
  %v7691 = vpop.xlane.xlu0 %7690
  %7692 = vmax.xlane.f32.xlu0 %v7659
  %v7693 = vpop.xlane.xlu0 %7692
  %7694 = vmax.xlane.f32.xlu0 %v7661
  %v7695 = vpop.xlane.xlu0 %7694
  %7696 = vmax.xlane.f32.xlu0 %v7664
  %v7697 = vpop.xlane.xlu0 %7696
  %7698 = vmax.xlane.f32.xlu0 %v7666
  %v7699 = vpop.xlane.xlu0 %7698
  %v7700 = vsub.f32 %v7629, %v7669
  %v7701 = vsub.f32 %v7631, %v7671
  %v7702 = vsub.f32 %v7634, %v7673
  %v7703 = vsub.f32 %v7636, %v7675
  %v7704 = vsub.f32 %v7639, %v7677
  %v7705 = vsub.f32 %v7641, %v7679
  %v7706 = vsub.f32 %v7644, %v7681
  %v7707 = vsub.f32 %v7646, %v7683
  %v7708 = vsub.f32 %v7649, %v7685
  %v7709 = vsub.f32 %v7651, %v7687
  %v7710 = vsub.f32 %v7654, %v7689
  %v7711 = vsub.f32 %v7656, %v7691
  %v7712 = vsub.f32 %v7659, %v7693
  %v7713 = vsub.f32 %v7661, %v7695
  %v7714 = vsub.f32 %v7664, %v7697
  %v7715 = vsub.f32 %v7666, %v7699
  %v7716 = vmul.f32 %v7700, 1.442695
  %v7717 = vpow.pop %v7716
  %v7718 = vmul.f32 %v7701, 1.442695
  %v7719 = vpow.pop %v7718
  %v7720 = vmul.f32 %v7702, 1.442695
  %v7721 = vpow.pop %v7720
  %v7722 = vmul.f32 %v7703, 1.442695
  %v7723 = vpow.pop %v7722
  %v7724 = vmul.f32 %v7704, 1.442695
  %v7725 = vpow.pop %v7724
  %v7726 = vmul.f32 %v7705, 1.442695
  %v7727 = vpow.pop %v7726
  %v7728 = vmul.f32 %v7706, 1.442695
  %v7729 = vpow.pop %v7728
  %v7730 = vmul.f32 %v7707, 1.442695
  %v7731 = vpow.pop %v7730
  %v7732 = vmul.f32 %v7708, 1.442695
  %v7733 = vpow.pop %v7732
  %v7734 = vmul.f32 %v7709, 1.442695
  %v7735 = vpow.pop %v7734
  %v7736 = vmul.f32 %v7710, 1.442695
  %v7737 = vpow.pop %v7736
  %v7738 = vmul.f32 %v7711, 1.442695
  %v7739 = vpow.pop %v7738
  %v7740 = vmul.f32 %v7712, 1.442695
  %v7741 = vpow.pop %v7740
  %v7742 = vmul.f32 %v7713, 1.442695
  %v7743 = vpow.pop %v7742
  %v7744 = vmul.f32 %v7714, 1.442695
  %v7745 = vpow.pop %v7744
  %v7746 = vmul.f32 %v7715, 1.442695
  %v7747 = vpow.pop %v7746
  %7748 = vadd.xlane.f32.xlu0 %v7717
  %v7749 = vpop.xlane.xlu0 %7748
  %7750 = vadd.xlane.f32.xlu0 %v7719
  %v7751 = vpop.xlane.xlu0 %7750
  %7752 = vadd.xlane.f32.xlu0 %v7721
  %v7753 = vpop.xlane.xlu0 %7752
  %7754 = vadd.xlane.f32.xlu0 %v7723
  %v7755 = vpop.xlane.xlu0 %7754
  %7756 = vadd.xlane.f32.xlu0 %v7725
  %v7757 = vpop.xlane.xlu0 %7756
  %7758 = vadd.xlane.f32.xlu0 %v7727
  %v7759 = vpop.xlane.xlu0 %7758
  %7760 = vadd.xlane.f32.xlu0 %v7729
  %v7761 = vpop.xlane.xlu0 %7760
  %7762 = vadd.xlane.f32.xlu0 %v7731
  %v7763 = vpop.xlane.xlu0 %7762
  %7764 = vadd.xlane.f32.xlu0 %v7733
  %v7765 = vpop.xlane.xlu0 %7764
  %7766 = vadd.xlane.f32.xlu0 %v7735
  %v7767 = vpop.xlane.xlu0 %7766
  %7768 = vadd.xlane.f32.xlu0 %v7737
  %v7769 = vpop.xlane.xlu0 %7768
  %7770 = vadd.xlane.f32.xlu0 %v7739
  %v7771 = vpop.xlane.xlu0 %7770
  %7772 = vadd.xlane.f32.xlu0 %v7741
  %v7773 = vpop.xlane.xlu0 %7772
  %7774 = vadd.xlane.f32.xlu0 %v7743
  %v7775 = vpop.xlane.xlu0 %7774
  %7776 = vadd.xlane.f32.xlu0 %v7745
  %v7777 = vpop.xlane.xlu0 %7776
  %7778 = vadd.xlane.f32.xlu0 %v7747
  %v7779 = vpop.xlane.xlu0 %7778
  %v7780 = vrcp.pop %v7749
  %v7781 = vrcp.pop %v7751
  %v7782 = vrcp.pop %v7753
  %v7783 = vrcp.pop %v7755
  %v7784 = vrcp.pop %v7757
  %v7785 = vrcp.pop %v7759
  %v7786 = vrcp.pop %v7761
  %v7787 = vrcp.pop %v7763
  %v7788 = vrcp.pop %v7765
  %v7789 = vrcp.pop %v7767
  %v7790 = vrcp.pop %v7769
  %v7791 = vrcp.pop %v7771
  %v7792 = vrcp.pop %v7773
  %v7793 = vrcp.pop %v7775
  %v7794 = vrcp.pop %v7777
  %v7795 = vrcp.pop %v7779
  %v7796 = vmul.f32 %v7717, %v7780
  %v7797 = vmul.f32 %v7719, %v7781
  %v7798 = vmul.f32 %v7721, %v7782
  %v7799 = vmul.f32 %v7723, %v7783
  %v7800 = vmul.f32 %v7725, %v7784
  %v7801 = vmul.f32 %v7727, %v7785
  %v7802 = vmul.f32 %v7729, %v7786
  %v7803 = vmul.f32 %v7731, %v7787
  %v7804 = vmul.f32 %v7733, %v7788
  %v7805 = vmul.f32 %v7735, %v7789
  %v7806 = vmul.f32 %v7737, %v7790
  %v7807 = vmul.f32 %v7739, %v7791
  %v7808 = vmul.f32 %v7741, %v7792
  %v7809 = vmul.f32 %v7743, %v7793
  %v7810 = vmul.f32 %v7745, %v7794
  %v7811 = vmul.f32 %v7747, %v7795
  %v7812 = vpack.c.bf16 %v7797, %v7796
  %v7813 = vpack.c.bf16 %v7799, %v7798
  %v7814 = vpack.c.bf16 %v7801, %v7800
  %v7815 = vpack.c.bf16 %v7803, %v7802
  %v7816 = vpack.c.bf16 %v7805, %v7804
  %v7817 = vpack.c.bf16 %v7807, %v7806
  %v7818 = vpack.c.bf16 %v7809, %v7808
  %v7819 = vpack.c.bf16 %v7811, %v7810
  %7820 = vrot.lane.b32.xlu0 %v7547, 120
  %v7821 = vpop.permute.xlu0 %7820
  %7822 = vrot.lane.b32.xlu0 %v7548, 120
  %v7823 = vpop.permute.xlu0 %7822
  %7824 = vrot.lane.b32.xlu0 %v7549, 120
  %v7825 = vpop.permute.xlu0 %7824
  %7826 = vrot.lane.b32.xlu0 %v7550, 120
  %v7827 = vpop.permute.xlu0 %7826
  %7828 = vrot.lane.b32.xlu0 %v7551, 120
  %v7829 = vpop.permute.xlu0 %7828
  %7830 = vrot.lane.b32.xlu0 %v7552, 120
  %v7831 = vpop.permute.xlu0 %7830
  %7832 = vrot.lane.b32.xlu0 %v7553, 120
  %v7833 = vpop.permute.xlu0 %7832
  %7834 = vrot.lane.b32.xlu0 %v7554, 120
  %v7835 = vpop.permute.xlu0 %7834
  %7836 = vrot.lane.b32.xlu0 %v7547, 88
  %v7837 = vpop.permute.xlu0 %7836
  %7838 = vrot.lane.b32.xlu0 %v7548, 88
  %v7839 = vpop.permute.xlu0 %7838
  %7840 = vrot.lane.b32.xlu0 %v7549, 88
  %v7841 = vpop.permute.xlu0 %7840
  %7842 = vrot.lane.b32.xlu0 %v7550, 88
  %v7843 = vpop.permute.xlu0 %7842
  %7844 = vrot.lane.b32.xlu0 %v7551, 88
  %v7845 = vpop.permute.xlu0 %7844
  %7846 = vrot.lane.b32.xlu0 %v7552, 88
  %v7847 = vpop.permute.xlu0 %7846
  %7848 = vrot.lane.b32.xlu0 %v7553, 88
  %v7849 = vpop.permute.xlu0 %7848
  %7850 = vrot.lane.b32.xlu0 %v7554, 88
  %v7851 = vpop.permute.xlu0 %7850
  %v7853 = vsel %vm610, %v7821, 0
  %v7856 = vsel %vm610, %v7823, 0
  %v7859 = vsel %vm610, %v7825, 0
  %v7862 = vsel %vm610, %v7827, 0
  %v7865 = vsel %vm610, %v7829, 0
  %v7868 = vsel %vm610, %v7831, 0
  %v7871 = vsel %vm610, %v7833, 0
  %v7874 = vsel %vm610, %v7835, 0
  %v7877 = vsel %vm610, %v7837, 0
  %v7880 = vsel %vm610, %v7839, 0
  %v7883 = vsel %vm610, %v7841, 0
  %v7886 = vsel %vm610, %v7843, 0
  %v7889 = vsel %vm610, %v7845, 0
  %v7892 = vsel %vm610, %v7847, 0
  %v7895 = vsel %vm610, %v7849, 0
  %v7898 = vsel %vm610, %v7851, 0
  %7900 = vmatpush.bf16.xpose.msra.mxu0 %v7898
  %7901 = vmatpush.bf16.xpose.msra.mxu0 %v7895
  %7902 = vmatpush.bf16.xpose.msra.mxu0 %v7892
  %7903 = vmatpush.bf16.xpose.msra.mxu0 %v7889
  %7904 = vmatpush.bf16.xpose.msra.mxu0 %v7886
  %7905 = vmatpush.bf16.xpose.msra.mxu0 %v7883
  %7906 = vmatpush.bf16.xpose.msra.mxu0 %v7880
  %7907 = vmatpush.bf16.xpose.msra.mxu0 %v7877
  %7908 = vmatmul.bf16.gmra.mxu0 %v7853
  %v7909 = vpop.f32.mrf.mxu0
  %v7910 = vadd.f32 %v104, %v7909
  %v7911 = vpop.f32.mrf.mxu0
  %v7912 = vadd.f32 %v104, %v7911
  %7913 = vmatmul.bf16.gmra.mxu0 %v7856
  %v7914 = vpop.f32.mrf.mxu0
  %v7915 = vadd.f32 %v104, %v7914
  %v7916 = vpop.f32.mrf.mxu0
  %v7917 = vadd.f32 %v104, %v7916
  %7918 = vmatmul.bf16.gmra.mxu0 %v7859
  %v7919 = vpop.f32.mrf.mxu0
  %v7920 = vadd.f32 %v104, %v7919
  %v7921 = vpop.f32.mrf.mxu0
  %v7922 = vadd.f32 %v104, %v7921
  %7923 = vmatmul.bf16.gmra.mxu0 %v7862
  %v7924 = vpop.f32.mrf.mxu0
  %v7925 = vadd.f32 %v104, %v7924
  %v7926 = vpop.f32.mrf.mxu0
  %v7927 = vadd.f32 %v104, %v7926
  %7928 = vmatmul.bf16.gmra.mxu0 %v7865
  %v7929 = vpop.f32.mrf.mxu0
  %v7930 = vadd.f32 %v104, %v7929
  %v7931 = vpop.f32.mrf.mxu0
  %v7932 = vadd.f32 %v104, %v7931
  %7933 = vmatmul.bf16.gmra.mxu0 %v7868
  %v7934 = vpop.f32.mrf.mxu0
  %v7935 = vadd.f32 %v104, %v7934
  %v7936 = vpop.f32.mrf.mxu0
  %v7937 = vadd.f32 %v104, %v7936
  %7938 = vmatmul.bf16.gmra.mxu0 %v7871
  %v7939 = vpop.f32.mrf.mxu0
  %v7940 = vadd.f32 %v104, %v7939
  %v7941 = vpop.f32.mrf.mxu0
  %v7942 = vadd.f32 %v104, %v7941
  %7943 = vmatmul.bf16.gmra.mxu0 %v7874
  %v7944 = vpop.f32.mrf.mxu0
  %v7945 = vadd.f32 %v104, %v7944
  %v7946 = vpop.f32.mrf.mxu0
  %v7947 = vadd.f32 %v104, %v7946
  %7948 = vdwg.mxu0
  %7949 = vmax.xlane.f32.xlu0 %v7910
  %v7950 = vpop.xlane.xlu0 %7949
  %7951 = vmax.xlane.f32.xlu0 %v7912
  %v7952 = vpop.xlane.xlu0 %7951
  %7953 = vmax.xlane.f32.xlu0 %v7915
  %v7954 = vpop.xlane.xlu0 %7953
  %7955 = vmax.xlane.f32.xlu0 %v7917
  %v7956 = vpop.xlane.xlu0 %7955
  %7957 = vmax.xlane.f32.xlu0 %v7920
  %v7958 = vpop.xlane.xlu0 %7957
  %7959 = vmax.xlane.f32.xlu0 %v7922
  %v7960 = vpop.xlane.xlu0 %7959
  %7961 = vmax.xlane.f32.xlu0 %v7925
  %v7962 = vpop.xlane.xlu0 %7961
  %7963 = vmax.xlane.f32.xlu0 %v7927
  %v7964 = vpop.xlane.xlu0 %7963
  %7965 = vmax.xlane.f32.xlu0 %v7930
  %v7966 = vpop.xlane.xlu0 %7965
  %7967 = vmax.xlane.f32.xlu0 %v7932
  %v7968 = vpop.xlane.xlu0 %7967
  %7969 = vmax.xlane.f32.xlu0 %v7935
  %v7970 = vpop.xlane.xlu0 %7969
  %7971 = vmax.xlane.f32.xlu0 %v7937
  %v7972 = vpop.xlane.xlu0 %7971
  %7973 = vmax.xlane.f32.xlu0 %v7940
  %v7974 = vpop.xlane.xlu0 %7973
  %7975 = vmax.xlane.f32.xlu0 %v7942
  %v7976 = vpop.xlane.xlu0 %7975
  %7977 = vmax.xlane.f32.xlu0 %v7945
  %v7978 = vpop.xlane.xlu0 %7977
  %7979 = vmax.xlane.f32.xlu0 %v7947
  %v7980 = vpop.xlane.xlu0 %7979
  %v7981 = vsub.f32 %v7910, %v7950
  %v7982 = vsub.f32 %v7912, %v7952
  %v7983 = vsub.f32 %v7915, %v7954
  %v7984 = vsub.f32 %v7917, %v7956
  %v7985 = vsub.f32 %v7920, %v7958
  %v7986 = vsub.f32 %v7922, %v7960
  %v7987 = vsub.f32 %v7925, %v7962
  %v7988 = vsub.f32 %v7927, %v7964
  %v7989 = vsub.f32 %v7930, %v7966
  %v7990 = vsub.f32 %v7932, %v7968
  %v7991 = vsub.f32 %v7935, %v7970
  %v7992 = vsub.f32 %v7937, %v7972
  %v7993 = vsub.f32 %v7940, %v7974
  %v7994 = vsub.f32 %v7942, %v7976
  %v7995 = vsub.f32 %v7945, %v7978
  %v7996 = vsub.f32 %v7947, %v7980
  %v7997 = vmul.f32 %v7981, 1.442695
  %v7998 = vpow.pop %v7997
  %v7999 = vmul.f32 %v7982, 1.442695
  %v8000 = vpow.pop %v7999
  %v8001 = vmul.f32 %v7983, 1.442695
  %v8002 = vpow.pop %v8001
  %v8003 = vmul.f32 %v7984, 1.442695
  %v8004 = vpow.pop %v8003
  %v8005 = vmul.f32 %v7985, 1.442695
  %v8006 = vpow.pop %v8005
  %v8007 = vmul.f32 %v7986, 1.442695
  %v8008 = vpow.pop %v8007
  %v8009 = vmul.f32 %v7987, 1.442695
  %v8010 = vpow.pop %v8009
  %v8011 = vmul.f32 %v7988, 1.442695
  %v8012 = vpow.pop %v8011
  %v8013 = vmul.f32 %v7989, 1.442695
  %v8014 = vpow.pop %v8013
  %v8015 = vmul.f32 %v7990, 1.442695
  %v8016 = vpow.pop %v8015
  %v8017 = vmul.f32 %v7991, 1.442695
  %v8018 = vpow.pop %v8017
  %v8019 = vmul.f32 %v7992, 1.442695
  %v8020 = vpow.pop %v8019
  %v8021 = vmul.f32 %v7993, 1.442695
  %v8022 = vpow.pop %v8021
  %v8023 = vmul.f32 %v7994, 1.442695
  %v8024 = vpow.pop %v8023
  %v8025 = vmul.f32 %v7995, 1.442695
  %v8026 = vpow.pop %v8025
  %v8027 = vmul.f32 %v7996, 1.442695
  %v8028 = vpow.pop %v8027
  %8029 = vadd.xlane.f32.xlu0 %v7998
  %v8030 = vpop.xlane.xlu0 %8029
  %8031 = vadd.xlane.f32.xlu0 %v8000
  %v8032 = vpop.xlane.xlu0 %8031
  %8033 = vadd.xlane.f32.xlu0 %v8002
  %v8034 = vpop.xlane.xlu0 %8033
  %8035 = vadd.xlane.f32.xlu0 %v8004
  %v8036 = vpop.xlane.xlu0 %8035
  %8037 = vadd.xlane.f32.xlu0 %v8006
  %v8038 = vpop.xlane.xlu0 %8037
  %8039 = vadd.xlane.f32.xlu0 %v8008
  %v8040 = vpop.xlane.xlu0 %8039
  %8041 = vadd.xlane.f32.xlu0 %v8010
  %v8042 = vpop.xlane.xlu0 %8041
  %8043 = vadd.xlane.f32.xlu0 %v8012
  %v8044 = vpop.xlane.xlu0 %8043
  %8045 = vadd.xlane.f32.xlu0 %v8014
  %v8046 = vpop.xlane.xlu0 %8045
  %8047 = vadd.xlane.f32.xlu0 %v8016
  %v8048 = vpop.xlane.xlu0 %8047
  %8049 = vadd.xlane.f32.xlu0 %v8018
  %v8050 = vpop.xlane.xlu0 %8049
  %8051 = vadd.xlane.f32.xlu0 %v8020
  %v8052 = vpop.xlane.xlu0 %8051
  %8053 = vadd.xlane.f32.xlu0 %v8022
  %v8054 = vpop.xlane.xlu0 %8053
  %8055 = vadd.xlane.f32.xlu0 %v8024
  %v8056 = vpop.xlane.xlu0 %8055
  %8057 = vadd.xlane.f32.xlu0 %v8026
  %v8058 = vpop.xlane.xlu0 %8057
  %8059 = vadd.xlane.f32.xlu0 %v8028
  %v8060 = vpop.xlane.xlu0 %8059
  %v8061 = vrcp.pop %v8030
  %v8062 = vrcp.pop %v8032
  %v8063 = vrcp.pop %v8034
  %v8064 = vrcp.pop %v8036
  %v8065 = vrcp.pop %v8038
  %v8066 = vrcp.pop %v8040
  %v8067 = vrcp.pop %v8042
  %v8068 = vrcp.pop %v8044
  %v8069 = vrcp.pop %v8046
  %v8070 = vrcp.pop %v8048
  %v8071 = vrcp.pop %v8050
  %v8072 = vrcp.pop %v8052
  %v8073 = vrcp.pop %v8054
  %v8074 = vrcp.pop %v8056
  %v8075 = vrcp.pop %v8058
  %v8076 = vrcp.pop %v8060
  %v8077 = vmul.f32 %v7998, %v8061
  %v8078 = vmul.f32 %v8000, %v8062
  %v8079 = vmul.f32 %v8002, %v8063
  %v8080 = vmul.f32 %v8004, %v8064
  %v8081 = vmul.f32 %v8006, %v8065
  %v8082 = vmul.f32 %v8008, %v8066
  %v8083 = vmul.f32 %v8010, %v8067
  %v8084 = vmul.f32 %v8012, %v8068
  %v8085 = vmul.f32 %v8014, %v8069
  %v8086 = vmul.f32 %v8016, %v8070
  %v8087 = vmul.f32 %v8018, %v8071
  %v8088 = vmul.f32 %v8020, %v8072
  %v8089 = vmul.f32 %v8022, %v8073
  %v8090 = vmul.f32 %v8024, %v8074
  %v8091 = vmul.f32 %v8026, %v8075
  %v8092 = vmul.f32 %v8028, %v8076
  %v8093 = vpack.c.bf16 %v8078, %v8077
  %v8094 = vpack.c.bf16 %v8080, %v8079
  %v8095 = vpack.c.bf16 %v8082, %v8081
  %v8096 = vpack.c.bf16 %v8084, %v8083
  %v8097 = vpack.c.bf16 %v8086, %v8085
  %v8098 = vpack.c.bf16 %v8088, %v8087
  %v8099 = vpack.c.bf16 %v8090, %v8089
  %v8100 = vpack.c.bf16 %v8092, %v8091
  %v8117 = vunpack.c.l.b16 %v6003
  %v8118 = vunpack.c.l.b16 %v6004
  %v8119 = vunpack.c.l.b16 %v6005
  %v8120 = vunpack.c.l.b16 %v6006
  %v8121 = vunpack.c.l.b16 %v6007
  %v8122 = vunpack.c.l.b16 %v6008
  %v8123 = vunpack.c.l.b16 %v6009
  %v8124 = vunpack.c.l.b16 %v6010
  %v8125 = vunpack.c.l.b16 %v6011
  %v8126 = vunpack.c.l.b16 %v6012
  %v8127 = vunpack.c.l.b16 %v6013
  %v8128 = vunpack.c.l.b16 %v6014
  %v8129 = vunpack.c.l.b16 %v6015
  %v8130 = vunpack.c.l.b16 %v6016
  %v8131 = vunpack.c.l.b16 %v6017
  %v8132 = vunpack.c.l.b16 %v6018
  %v8133 = vpack.c.b16 %v8118, %v8117
  %v8134 = vpack.c.b16 %v8120, %v8119
  %v8135 = vpack.c.b16 %v8122, %v8121
  %v8136 = vpack.c.b16 %v8124, %v8123
  %v8137 = vpack.c.b16 %v8126, %v8125
  %v8138 = vpack.c.b16 %v8128, %v8127
  %v8139 = vpack.c.b16 %v8130, %v8129
  %v8140 = vpack.c.b16 %v8132, %v8131
  %8141 = vrot.lane.b32.xlu0 %v8133, 96
  %v8142 = vpop.permute.xlu0 %8141
  %8143 = vrot.lane.b32.xlu0 %v8134, 96
  %v8144 = vpop.permute.xlu0 %8143
  %8145 = vrot.lane.b32.xlu0 %v8135, 96
  %v8146 = vpop.permute.xlu0 %8145
  %8147 = vrot.lane.b32.xlu0 %v8136, 96
  %v8148 = vpop.permute.xlu0 %8147
  %8149 = vrot.lane.b32.xlu0 %v8137, 96
  %v8150 = vpop.permute.xlu0 %8149
  %8151 = vrot.lane.b32.xlu0 %v8138, 96
  %v8152 = vpop.permute.xlu0 %8151
  %8153 = vrot.lane.b32.xlu0 %v8139, 96
  %v8154 = vpop.permute.xlu0 %8153
  %8155 = vrot.lane.b32.xlu0 %v8140, 96
  %v8156 = vpop.permute.xlu0 %8155
  %8165 = vmatpush.bf16.msra.mxu0 %v8156
  %8166 = vmatpush.bf16.msra.mxu0 %v8154
  %8167 = vmatpush.bf16.msra.mxu0 %v8152
  %8168 = vmatpush.bf16.msra.mxu0 %v8150
  %8169 = vmatpush.bf16.msra.mxu0 %v8148
  %8170 = vmatpush.bf16.msra.mxu0 %v8146
  %8171 = vmatpush.bf16.msra.mxu0 %v8144
  %8172 = vmatpush.bf16.msra.mxu0 %v8142
  %8173 = vmatmul.bf16.gmra.mxu0 %v8093
  %v8174 = vpop.f32.mrf.mxu0
  %v8175 = vadd.f32 0.0, %v8174
  %v8176 = vpop.f32.mrf.mxu0
  %v8177 = vadd.f32 0.0, %v8176
  %8178 = vmatmul.bf16.gmra.mxu0 %v8094
  %v8179 = vpop.f32.mrf.mxu0
  %v8180 = vadd.f32 0.0, %v8179
  %v8181 = vpop.f32.mrf.mxu0
  %v8182 = vadd.f32 0.0, %v8181
  %8183 = vmatmul.bf16.gmra.mxu0 %v8095
  %v8184 = vpop.f32.mrf.mxu0
  %v8185 = vadd.f32 0.0, %v8184
  %v8186 = vpop.f32.mrf.mxu0
  %v8187 = vadd.f32 0.0, %v8186
  %8188 = vmatmul.bf16.gmra.mxu0 %v8096
  %v8189 = vpop.f32.mrf.mxu0
  %v8190 = vadd.f32 0.0, %v8189
  %v8191 = vpop.f32.mrf.mxu0
  %v8192 = vadd.f32 0.0, %v8191
  %8193 = vmatmul.bf16.gmra.mxu0 %v8097
  %v8194 = vpop.f32.mrf.mxu0
  %v8195 = vadd.f32 0.0, %v8194
  %v8196 = vpop.f32.mrf.mxu0
  %v8197 = vadd.f32 0.0, %v8196
  %8198 = vmatmul.bf16.gmra.mxu0 %v8098
  %v8199 = vpop.f32.mrf.mxu0
  %v8200 = vadd.f32 0.0, %v8199
  %v8201 = vpop.f32.mrf.mxu0
  %v8202 = vadd.f32 0.0, %v8201
  %8203 = vmatmul.bf16.gmra.mxu0 %v8099
  %v8204 = vpop.f32.mrf.mxu0
  %v8205 = vadd.f32 0.0, %v8204
  %v8206 = vpop.f32.mrf.mxu0
  %v8207 = vadd.f32 0.0, %v8206
  %8208 = vmatmul.bf16.gmra.mxu0 %v8100
  %v8209 = vpop.f32.mrf.mxu0
  %v8210 = vadd.f32 0.0, %v8209
  %v8211 = vpop.f32.mrf.mxu0
  %v8212 = vadd.f32 0.0, %v8211
  %8213 = vdwg.mxu0
  %8222 = vmatpush.bf16.msra.mxu0 %v8140
  %8223 = vmatpush.bf16.msra.mxu0 %v8139
  %8224 = vmatpush.bf16.msra.mxu0 %v8138
  %8225 = vmatpush.bf16.msra.mxu0 %v8137
  %8226 = vmatpush.bf16.msra.mxu0 %v8136
  %8227 = vmatpush.bf16.msra.mxu0 %v8135
  %8228 = vmatpush.bf16.msra.mxu0 %v8134
  %8229 = vmatpush.bf16.msra.mxu0 %v8133
  %8230 = vmatmul.bf16.gmra.mxu0 %v7812
  %v8231 = vpop.f32.mrf.mxu0
  %v8232 = vadd.f32 %v8175, %v8231
  %v8233 = vpop.f32.mrf.mxu0
  %v8234 = vadd.f32 %v8177, %v8233
  %8235 = vmatmul.bf16.gmra.mxu0 %v7813
  %v8236 = vpop.f32.mrf.mxu0
  %v8237 = vadd.f32 %v8180, %v8236
  %v8238 = vpop.f32.mrf.mxu0
  %v8239 = vadd.f32 %v8182, %v8238
  %8240 = vmatmul.bf16.gmra.mxu0 %v7814
  %v8241 = vpop.f32.mrf.mxu0
  %v8242 = vadd.f32 %v8185, %v8241
  %v8243 = vpop.f32.mrf.mxu0
  %v8244 = vadd.f32 %v8187, %v8243
  %8245 = vmatmul.bf16.gmra.mxu0 %v7815
  %v8246 = vpop.f32.mrf.mxu0
  %v8247 = vadd.f32 %v8190, %v8246
  %v8248 = vpop.f32.mrf.mxu0
  %v8249 = vadd.f32 %v8192, %v8248
  %8250 = vmatmul.bf16.gmra.mxu0 %v7816
  %v8251 = vpop.f32.mrf.mxu0
  %v8252 = vadd.f32 %v8195, %v8251
  %v8253 = vpop.f32.mrf.mxu0
  %v8254 = vadd.f32 %v8197, %v8253
  %8255 = vmatmul.bf16.gmra.mxu0 %v7817
  %v8256 = vpop.f32.mrf.mxu0
  %v8257 = vadd.f32 %v8200, %v8256
  %v8258 = vpop.f32.mrf.mxu0
  %v8259 = vadd.f32 %v8202, %v8258
  %8260 = vmatmul.bf16.gmra.mxu0 %v7818
  %v8261 = vpop.f32.mrf.mxu0
  %v8262 = vadd.f32 %v8205, %v8261
  %v8263 = vpop.f32.mrf.mxu0
  %v8264 = vadd.f32 %v8207, %v8263
  %8265 = vmatmul.bf16.gmra.mxu0 %v7819
  %v8266 = vpop.f32.mrf.mxu0
  %v8267 = vadd.f32 %v8210, %v8266
  %v8268 = vpop.f32.mrf.mxu0
  %v8269 = vadd.f32 %v8212, %v8268
  %8270 = vdwg.mxu0
  %8271 = vrot.lane.b32.xlu0 %v7547, 112
  %v8272 = vpop.permute.xlu0 %8271
  %8273 = vrot.lane.b32.xlu0 %v7548, 112
  %v8274 = vpop.permute.xlu0 %8273
  %8275 = vrot.lane.b32.xlu0 %v7549, 112
  %v8276 = vpop.permute.xlu0 %8275
  %8277 = vrot.lane.b32.xlu0 %v7550, 112
  %v8278 = vpop.permute.xlu0 %8277
  %8279 = vrot.lane.b32.xlu0 %v7551, 112
  %v8280 = vpop.permute.xlu0 %8279
  %8281 = vrot.lane.b32.xlu0 %v7552, 112
  %v8282 = vpop.permute.xlu0 %8281
  %8283 = vrot.lane.b32.xlu0 %v7553, 112
  %v8284 = vpop.permute.xlu0 %8283
  %8285 = vrot.lane.b32.xlu0 %v7554, 112
  %v8286 = vpop.permute.xlu0 %8285
  %8287 = vrot.lane.b32.xlu0 %v7547, 80
  %v8288 = vpop.permute.xlu0 %8287
  %8289 = vrot.lane.b32.xlu0 %v7548, 80
  %v8290 = vpop.permute.xlu0 %8289
  %8291 = vrot.lane.b32.xlu0 %v7549, 80
  %v8292 = vpop.permute.xlu0 %8291
  %8293 = vrot.lane.b32.xlu0 %v7550, 80
  %v8294 = vpop.permute.xlu0 %8293
  %8295 = vrot.lane.b32.xlu0 %v7551, 80
  %v8296 = vpop.permute.xlu0 %8295
  %8297 = vrot.lane.b32.xlu0 %v7552, 80
  %v8298 = vpop.permute.xlu0 %8297
  %8299 = vrot.lane.b32.xlu0 %v7553, 80
  %v8300 = vpop.permute.xlu0 %8299
  %8301 = vrot.lane.b32.xlu0 %v7554, 80
  %v8302 = vpop.permute.xlu0 %8301
  %v8304 = vsel %vm610, %v8272, 0
  %v8307 = vsel %vm610, %v8274, 0
  %v8310 = vsel %vm610, %v8276, 0
  %v8313 = vsel %vm610, %v8278, 0
  %v8316 = vsel %vm610, %v8280, 0
  %v8319 = vsel %vm610, %v8282, 0
  %v8322 = vsel %vm610, %v8284, 0
  %v8325 = vsel %vm610, %v8286, 0
  %v8328 = vsel %vm610, %v8288, 0
  %v8331 = vsel %vm610, %v8290, 0
  %v8334 = vsel %vm610, %v8292, 0
  %v8337 = vsel %vm610, %v8294, 0
  %v8340 = vsel %vm610, %v8296, 0
  %v8343 = vsel %vm610, %v8298, 0
  %v8346 = vsel %vm610, %v8300, 0
  %v8349 = vsel %vm610, %v8302, 0
  %8351 = vmatpush.bf16.xpose.msra.mxu0 %v8349
  %8352 = vmatpush.bf16.xpose.msra.mxu0 %v8346
  %8353 = vmatpush.bf16.xpose.msra.mxu0 %v8343
  %8354 = vmatpush.bf16.xpose.msra.mxu0 %v8340
  %8355 = vmatpush.bf16.xpose.msra.mxu0 %v8337
  %8356 = vmatpush.bf16.xpose.msra.mxu0 %v8334
  %8357 = vmatpush.bf16.xpose.msra.mxu0 %v8331
  %8358 = vmatpush.bf16.xpose.msra.mxu0 %v8328
  %8359 = vmatmul.bf16.gmra.mxu0 %v8304
  %v8360 = vpop.f32.mrf.mxu0
  %v8361 = vadd.f32 %v104, %v8360
  %v8362 = vpop.f32.mrf.mxu0
  %v8363 = vadd.f32 %v104, %v8362
  %8364 = vmatmul.bf16.gmra.mxu0 %v8307
  %v8365 = vpop.f32.mrf.mxu0
  %v8366 = vadd.f32 %v104, %v8365
  %v8367 = vpop.f32.mrf.mxu0
  %v8368 = vadd.f32 %v104, %v8367
  %8369 = vmatmul.bf16.gmra.mxu0 %v8310
  %v8370 = vpop.f32.mrf.mxu0
  %v8371 = vadd.f32 %v104, %v8370
  %v8372 = vpop.f32.mrf.mxu0
  %v8373 = vadd.f32 %v104, %v8372
  %8374 = vmatmul.bf16.gmra.mxu0 %v8313
  %v8375 = vpop.f32.mrf.mxu0
  %v8376 = vadd.f32 %v104, %v8375
  %v8377 = vpop.f32.mrf.mxu0
  %v8378 = vadd.f32 %v104, %v8377
  %8379 = vmatmul.bf16.gmra.mxu0 %v8316
  %v8380 = vpop.f32.mrf.mxu0
  %v8381 = vadd.f32 %v104, %v8380
  %v8382 = vpop.f32.mrf.mxu0
  %v8383 = vadd.f32 %v104, %v8382
  %8384 = vmatmul.bf16.gmra.mxu0 %v8319
  %v8385 = vpop.f32.mrf.mxu0
  %v8386 = vadd.f32 %v104, %v8385
  %v8387 = vpop.f32.mrf.mxu0
  %v8388 = vadd.f32 %v104, %v8387
  %8389 = vmatmul.bf16.gmra.mxu0 %v8322
  %v8390 = vpop.f32.mrf.mxu0
  %v8391 = vadd.f32 %v104, %v8390
  %v8392 = vpop.f32.mrf.mxu0
  %v8393 = vadd.f32 %v104, %v8392
  %8394 = vmatmul.bf16.gmra.mxu0 %v8325
  %v8395 = vpop.f32.mrf.mxu0
  %v8396 = vadd.f32 %v104, %v8395
  %v8397 = vpop.f32.mrf.mxu0
  %v8398 = vadd.f32 %v104, %v8397
  %8399 = vdwg.mxu0
  %8400 = vmax.xlane.f32.xlu0 %v8361
  %v8401 = vpop.xlane.xlu0 %8400
  %8402 = vmax.xlane.f32.xlu0 %v8363
  %v8403 = vpop.xlane.xlu0 %8402
  %8404 = vmax.xlane.f32.xlu0 %v8366
  %v8405 = vpop.xlane.xlu0 %8404
  %8406 = vmax.xlane.f32.xlu0 %v8368
  %v8407 = vpop.xlane.xlu0 %8406
  %8408 = vmax.xlane.f32.xlu0 %v8371
  %v8409 = vpop.xlane.xlu0 %8408
  %8410 = vmax.xlane.f32.xlu0 %v8373
  %v8411 = vpop.xlane.xlu0 %8410
  %8412 = vmax.xlane.f32.xlu0 %v8376
  %v8413 = vpop.xlane.xlu0 %8412
  %8414 = vmax.xlane.f32.xlu0 %v8378
  %v8415 = vpop.xlane.xlu0 %8414
  %8416 = vmax.xlane.f32.xlu0 %v8381
  %v8417 = vpop.xlane.xlu0 %8416
  %8418 = vmax.xlane.f32.xlu0 %v8383
  %v8419 = vpop.xlane.xlu0 %8418
  %8420 = vmax.xlane.f32.xlu0 %v8386
  %v8421 = vpop.xlane.xlu0 %8420
  %8422 = vmax.xlane.f32.xlu0 %v8388
  %v8423 = vpop.xlane.xlu0 %8422
  %8424 = vmax.xlane.f32.xlu0 %v8391
  %v8425 = vpop.xlane.xlu0 %8424
  %8426 = vmax.xlane.f32.xlu0 %v8393
  %v8427 = vpop.xlane.xlu0 %8426
  %8428 = vmax.xlane.f32.xlu0 %v8396
  %v8429 = vpop.xlane.xlu0 %8428
  %8430 = vmax.xlane.f32.xlu0 %v8398
  %v8431 = vpop.xlane.xlu0 %8430
  %v8432 = vsub.f32 %v8361, %v8401
  %v8433 = vsub.f32 %v8363, %v8403
  %v8434 = vsub.f32 %v8366, %v8405
  %v8435 = vsub.f32 %v8368, %v8407
  %v8436 = vsub.f32 %v8371, %v8409
  %v8437 = vsub.f32 %v8373, %v8411
  %v8438 = vsub.f32 %v8376, %v8413
  %v8439 = vsub.f32 %v8378, %v8415
  %v8440 = vsub.f32 %v8381, %v8417
  %v8441 = vsub.f32 %v8383, %v8419
  %v8442 = vsub.f32 %v8386, %v8421
  %v8443 = vsub.f32 %v8388, %v8423
  %v8444 = vsub.f32 %v8391, %v8425
  %v8445 = vsub.f32 %v8393, %v8427
  %v8446 = vsub.f32 %v8396, %v8429
  %v8447 = vsub.f32 %v8398, %v8431
  %v8448 = vmul.f32 %v8432, 1.442695
  %v8449 = vpow.pop %v8448
  %v8450 = vmul.f32 %v8433, 1.442695
  %v8451 = vpow.pop %v8450
  %v8452 = vmul.f32 %v8434, 1.442695
  %v8453 = vpow.pop %v8452
  %v8454 = vmul.f32 %v8435, 1.442695
  %v8455 = vpow.pop %v8454
  %v8456 = vmul.f32 %v8436, 1.442695
  %v8457 = vpow.pop %v8456
  %v8458 = vmul.f32 %v8437, 1.442695
  %v8459 = vpow.pop %v8458
  %v8460 = vmul.f32 %v8438, 1.442695
  %v8461 = vpow.pop %v8460
  %v8462 = vmul.f32 %v8439, 1.442695
  %v8463 = vpow.pop %v8462
  %v8464 = vmul.f32 %v8440, 1.442695
  %v8465 = vpow.pop %v8464
  %v8466 = vmul.f32 %v8441, 1.442695
  %v8467 = vpow.pop %v8466
  %v8468 = vmul.f32 %v8442, 1.442695
  %v8469 = vpow.pop %v8468
  %v8470 = vmul.f32 %v8443, 1.442695
  %v8471 = vpow.pop %v8470
  %v8472 = vmul.f32 %v8444, 1.442695
  %v8473 = vpow.pop %v8472
  %v8474 = vmul.f32 %v8445, 1.442695
  %v8475 = vpow.pop %v8474
  %v8476 = vmul.f32 %v8446, 1.442695
  %v8477 = vpow.pop %v8476
  %v8478 = vmul.f32 %v8447, 1.442695
  %v8479 = vpow.pop %v8478
  %8480 = vadd.xlane.f32.xlu0 %v8449
  %v8481 = vpop.xlane.xlu0 %8480
  %8482 = vadd.xlane.f32.xlu0 %v8451
  %v8483 = vpop.xlane.xlu0 %8482
  %8484 = vadd.xlane.f32.xlu0 %v8453
  %v8485 = vpop.xlane.xlu0 %8484
  %8486 = vadd.xlane.f32.xlu0 %v8455
  %v8487 = vpop.xlane.xlu0 %8486
  %8488 = vadd.xlane.f32.xlu0 %v8457
  %v8489 = vpop.xlane.xlu0 %8488
  %8490 = vadd.xlane.f32.xlu0 %v8459
  %v8491 = vpop.xlane.xlu0 %8490
  %8492 = vadd.xlane.f32.xlu0 %v8461
  %v8493 = vpop.xlane.xlu0 %8492
  %8494 = vadd.xlane.f32.xlu0 %v8463
  %v8495 = vpop.xlane.xlu0 %8494
  %8496 = vadd.xlane.f32.xlu0 %v8465
  %v8497 = vpop.xlane.xlu0 %8496
  %8498 = vadd.xlane.f32.xlu0 %v8467
  %v8499 = vpop.xlane.xlu0 %8498
  %8500 = vadd.xlane.f32.xlu0 %v8469
  %v8501 = vpop.xlane.xlu0 %8500
  %8502 = vadd.xlane.f32.xlu0 %v8471
  %v8503 = vpop.xlane.xlu0 %8502
  %8504 = vadd.xlane.f32.xlu0 %v8473
  %v8505 = vpop.xlane.xlu0 %8504
  %8506 = vadd.xlane.f32.xlu0 %v8475
  %v8507 = vpop.xlane.xlu0 %8506
  %8508 = vadd.xlane.f32.xlu0 %v8477
  %v8509 = vpop.xlane.xlu0 %8508
  %8510 = vadd.xlane.f32.xlu0 %v8479
  %v8511 = vpop.xlane.xlu0 %8510
  %v8512 = vrcp.pop %v8481
  %v8513 = vrcp.pop %v8483
  %v8514 = vrcp.pop %v8485
  %v8515 = vrcp.pop %v8487
  %v8516 = vrcp.pop %v8489
  %v8517 = vrcp.pop %v8491
  %v8518 = vrcp.pop %v8493
  %v8519 = vrcp.pop %v8495
  %v8520 = vrcp.pop %v8497
  %v8521 = vrcp.pop %v8499
  %v8522 = vrcp.pop %v8501
  %v8523 = vrcp.pop %v8503
  %v8524 = vrcp.pop %v8505
  %v8525 = vrcp.pop %v8507
  %v8526 = vrcp.pop %v8509
  %v8527 = vrcp.pop %v8511
  %v8528 = vmul.f32 %v8449, %v8512
  %v8529 = vmul.f32 %v8451, %v8513
  %v8530 = vmul.f32 %v8453, %v8514
  %v8531 = vmul.f32 %v8455, %v8515
  %v8532 = vmul.f32 %v8457, %v8516
  %v8533 = vmul.f32 %v8459, %v8517
  %v8534 = vmul.f32 %v8461, %v8518
  %v8535 = vmul.f32 %v8463, %v8519
  %v8536 = vmul.f32 %v8465, %v8520
  %v8537 = vmul.f32 %v8467, %v8521
  %v8538 = vmul.f32 %v8469, %v8522
  %v8539 = vmul.f32 %v8471, %v8523
  %v8540 = vmul.f32 %v8473, %v8524
  %v8541 = vmul.f32 %v8475, %v8525
  %v8542 = vmul.f32 %v8477, %v8526
  %v8543 = vmul.f32 %v8479, %v8527
  %v8544 = vpack.c.bf16 %v8529, %v8528
  %v8545 = vpack.c.bf16 %v8531, %v8530
  %v8546 = vpack.c.bf16 %v8533, %v8532
  %v8547 = vpack.c.bf16 %v8535, %v8534
  %v8548 = vpack.c.bf16 %v8537, %v8536
  %v8549 = vpack.c.bf16 %v8539, %v8538
  %v8550 = vpack.c.bf16 %v8541, %v8540
  %v8551 = vpack.c.bf16 %v8543, %v8542
  %8552 = vrot.lane.b32.xlu0 %v8133, 64
  %v8553 = vpop.permute.xlu0 %8552
  %8554 = vrot.lane.b32.xlu0 %v8134, 64
  %v8555 = vpop.permute.xlu0 %8554
  %8556 = vrot.lane.b32.xlu0 %v8135, 64
  %v8557 = vpop.permute.xlu0 %8556
  %8558 = vrot.lane.b32.xlu0 %v8136, 64
  %v8559 = vpop.permute.xlu0 %8558
  %8560 = vrot.lane.b32.xlu0 %v8137, 64
  %v8561 = vpop.permute.xlu0 %8560
  %8562 = vrot.lane.b32.xlu0 %v8138, 64
  %v8563 = vpop.permute.xlu0 %8562
  %8564 = vrot.lane.b32.xlu0 %v8139, 64
  %v8565 = vpop.permute.xlu0 %8564
  %8566 = vrot.lane.b32.xlu0 %v8140, 64
  %v8567 = vpop.permute.xlu0 %8566
  %8576 = vmatpush.bf16.msra.mxu0 %v8567
  %8577 = vmatpush.bf16.msra.mxu0 %v8565
  %8578 = vmatpush.bf16.msra.mxu0 %v8563
  %8579 = vmatpush.bf16.msra.mxu0 %v8561
  %8580 = vmatpush.bf16.msra.mxu0 %v8559
  %8581 = vmatpush.bf16.msra.mxu0 %v8557
  %8582 = vmatpush.bf16.msra.mxu0 %v8555
  %8583 = vmatpush.bf16.msra.mxu0 %v8553
  %8584 = vmatmul.bf16.gmra.mxu0 %v8544
  %v8585 = vpop.f32.mrf.mxu0
  %v8586 = vadd.f32 0.0, %v8585
  %v8587 = vpop.f32.mrf.mxu0
  %v8588 = vadd.f32 0.0, %v8587
  %8589 = vmatmul.bf16.gmra.mxu0 %v8545
  %v8590 = vpop.f32.mrf.mxu0
  %v8591 = vadd.f32 0.0, %v8590
  %v8592 = vpop.f32.mrf.mxu0
  %v8593 = vadd.f32 0.0, %v8592
  %8594 = vmatmul.bf16.gmra.mxu0 %v8546
  %v8595 = vpop.f32.mrf.mxu0
  %v8596 = vadd.f32 0.0, %v8595
  %v8597 = vpop.f32.mrf.mxu0
  %v8598 = vadd.f32 0.0, %v8597
  %8599 = vmatmul.bf16.gmra.mxu0 %v8547
  %v8600 = vpop.f32.mrf.mxu0
  %v8601 = vadd.f32 0.0, %v8600
  %v8602 = vpop.f32.mrf.mxu0
  %v8603 = vadd.f32 0.0, %v8602
  %8604 = vmatmul.bf16.gmra.mxu0 %v8548
  %v8605 = vpop.f32.mrf.mxu0
  %v8606 = vadd.f32 0.0, %v8605
  %v8607 = vpop.f32.mrf.mxu0
  %v8608 = vadd.f32 0.0, %v8607
  %8609 = vmatmul.bf16.gmra.mxu0 %v8549
  %v8610 = vpop.f32.mrf.mxu0
  %v8611 = vadd.f32 0.0, %v8610
  %v8612 = vpop.f32.mrf.mxu0
  %v8613 = vadd.f32 0.0, %v8612
  %8614 = vmatmul.bf16.gmra.mxu0 %v8550
  %v8615 = vpop.f32.mrf.mxu0
  %v8616 = vadd.f32 0.0, %v8615
  %v8617 = vpop.f32.mrf.mxu0
  %v8618 = vadd.f32 0.0, %v8617
  %8619 = vmatmul.bf16.gmra.mxu0 %v8551
  %v8620 = vpop.f32.mrf.mxu0
  %v8621 = vadd.f32 0.0, %v8620
  %v8622 = vpop.f32.mrf.mxu0
  %v8623 = vadd.f32 0.0, %v8622
  %8624 = vdwg.mxu0
  %v8625 = vadd.f32 %v8232, %v8586
  %v8626 = vadd.f32 %v8234, %v8588
  %v8627 = vadd.f32 %v8237, %v8591
  %v8628 = vadd.f32 %v8239, %v8593
  %v8629 = vadd.f32 %v8242, %v8596
  %v8630 = vadd.f32 %v8244, %v8598
  %v8631 = vadd.f32 %v8247, %v8601
  %v8632 = vadd.f32 %v8249, %v8603
  %v8633 = vadd.f32 %v8252, %v8606
  %v8634 = vadd.f32 %v8254, %v8608
  %v8635 = vadd.f32 %v8257, %v8611
  %v8636 = vadd.f32 %v8259, %v8613
  %v8637 = vadd.f32 %v8262, %v8616
  %v8638 = vadd.f32 %v8264, %v8618
  %v8639 = vadd.f32 %v8267, %v8621
  %v8640 = vadd.f32 %v8269, %v8623
  %8641 = vrot.lane.b32.xlu0 %v7547, 104
  %v8642 = vpop.permute.xlu0 %8641
  %8643 = vrot.lane.b32.xlu0 %v7548, 104
  %v8644 = vpop.permute.xlu0 %8643
  %8645 = vrot.lane.b32.xlu0 %v7549, 104
  %v8646 = vpop.permute.xlu0 %8645
  %8647 = vrot.lane.b32.xlu0 %v7550, 104
  %v8648 = vpop.permute.xlu0 %8647
  %8649 = vrot.lane.b32.xlu0 %v7551, 104
  %v8650 = vpop.permute.xlu0 %8649
  %8651 = vrot.lane.b32.xlu0 %v7552, 104
  %v8652 = vpop.permute.xlu0 %8651
  %8653 = vrot.lane.b32.xlu0 %v7553, 104
  %v8654 = vpop.permute.xlu0 %8653
  %8655 = vrot.lane.b32.xlu0 %v7554, 104
  %v8656 = vpop.permute.xlu0 %8655
  %8657 = vrot.lane.b32.xlu0 %v7547, 72
  %v8658 = vpop.permute.xlu0 %8657
  %8659 = vrot.lane.b32.xlu0 %v7548, 72
  %v8660 = vpop.permute.xlu0 %8659
  %8661 = vrot.lane.b32.xlu0 %v7549, 72
  %v8662 = vpop.permute.xlu0 %8661
  %8663 = vrot.lane.b32.xlu0 %v7550, 72
  %v8664 = vpop.permute.xlu0 %8663
  %8665 = vrot.lane.b32.xlu0 %v7551, 72
  %v8666 = vpop.permute.xlu0 %8665
  %8667 = vrot.lane.b32.xlu0 %v7552, 72
  %v8668 = vpop.permute.xlu0 %8667
  %8669 = vrot.lane.b32.xlu0 %v7553, 72
  %v8670 = vpop.permute.xlu0 %8669
  %8671 = vrot.lane.b32.xlu0 %v7554, 72
  %v8672 = vpop.permute.xlu0 %8671
  %v8674 = vsel %vm610, %v8642, 0
  %v8677 = vsel %vm610, %v8644, 0
  %v8680 = vsel %vm610, %v8646, 0
  %v8683 = vsel %vm610, %v8648, 0
  %v8686 = vsel %vm610, %v8650, 0
  %v8689 = vsel %vm610, %v8652, 0
  %v8692 = vsel %vm610, %v8654, 0
  %v8695 = vsel %vm610, %v8656, 0
  %v8698 = vsel %vm610, %v8658, 0
  %v8701 = vsel %vm610, %v8660, 0
  %v8704 = vsel %vm610, %v8662, 0
  %v8707 = vsel %vm610, %v8664, 0
  %v8710 = vsel %vm610, %v8666, 0
  %v8713 = vsel %vm610, %v8668, 0
  %v8716 = vsel %vm610, %v8670, 0
  %v8719 = vsel %vm610, %v8672, 0
  %8721 = vmatpush.bf16.xpose.msra.mxu0 %v8719
  %8722 = vmatpush.bf16.xpose.msra.mxu0 %v8716
  %8723 = vmatpush.bf16.xpose.msra.mxu0 %v8713
  %8724 = vmatpush.bf16.xpose.msra.mxu0 %v8710
  %8725 = vmatpush.bf16.xpose.msra.mxu0 %v8707
  %8726 = vmatpush.bf16.xpose.msra.mxu0 %v8704
  %8727 = vmatpush.bf16.xpose.msra.mxu0 %v8701
  %8728 = vmatpush.bf16.xpose.msra.mxu0 %v8698
  %8729 = vmatmul.bf16.gmra.mxu0 %v8674
  %v8730 = vpop.f32.mrf.mxu0
  %v8731 = vadd.f32 %v104, %v8730
  %v8732 = vpop.f32.mrf.mxu0
  %v8733 = vadd.f32 %v104, %v8732
  %8734 = vmatmul.bf16.gmra.mxu0 %v8677
  %v8735 = vpop.f32.mrf.mxu0
  %v8736 = vadd.f32 %v104, %v8735
  %v8737 = vpop.f32.mrf.mxu0
  %v8738 = vadd.f32 %v104, %v8737
  %8739 = vmatmul.bf16.gmra.mxu0 %v8680
  %v8740 = vpop.f32.mrf.mxu0
  %v8741 = vadd.f32 %v104, %v8740
  %v8742 = vpop.f32.mrf.mxu0
  %v8743 = vadd.f32 %v104, %v8742
  %8744 = vmatmul.bf16.gmra.mxu0 %v8683
  %v8745 = vpop.f32.mrf.mxu0
  %v8746 = vadd.f32 %v104, %v8745
  %v8747 = vpop.f32.mrf.mxu0
  %v8748 = vadd.f32 %v104, %v8747
  %8749 = vmatmul.bf16.gmra.mxu0 %v8686
  %v8750 = vpop.f32.mrf.mxu0
  %v8751 = vadd.f32 %v104, %v8750
  %v8752 = vpop.f32.mrf.mxu0
  %v8753 = vadd.f32 %v104, %v8752
  %8754 = vmatmul.bf16.gmra.mxu0 %v8689
  %v8755 = vpop.f32.mrf.mxu0
  %v8756 = vadd.f32 %v104, %v8755
  %v8757 = vpop.f32.mrf.mxu0
  %v8758 = vadd.f32 %v104, %v8757
  %8759 = vmatmul.bf16.gmra.mxu0 %v8692
  %v8760 = vpop.f32.mrf.mxu0
  %v8761 = vadd.f32 %v104, %v8760
  %v8762 = vpop.f32.mrf.mxu0
  %v8763 = vadd.f32 %v104, %v8762
  %8764 = vmatmul.bf16.gmra.mxu0 %v8695
  %v8765 = vpop.f32.mrf.mxu0
  %v8766 = vadd.f32 %v104, %v8765
  %v8767 = vpop.f32.mrf.mxu0
  %v8768 = vadd.f32 %v104, %v8767
  %8769 = vdwg.mxu0
  %8770 = vmax.xlane.f32.xlu0 %v8731
  %v8771 = vpop.xlane.xlu0 %8770
  %8772 = vmax.xlane.f32.xlu0 %v8733
  %v8773 = vpop.xlane.xlu0 %8772
  %8774 = vmax.xlane.f32.xlu0 %v8736
  %v8775 = vpop.xlane.xlu0 %8774
  %8776 = vmax.xlane.f32.xlu0 %v8738
  %v8777 = vpop.xlane.xlu0 %8776
  %8778 = vmax.xlane.f32.xlu0 %v8741
  %v8779 = vpop.xlane.xlu0 %8778
  %8780 = vmax.xlane.f32.xlu0 %v8743
  %v8781 = vpop.xlane.xlu0 %8780
  %8782 = vmax.xlane.f32.xlu0 %v8746
  %v8783 = vpop.xlane.xlu0 %8782
  %8784 = vmax.xlane.f32.xlu0 %v8748
  %v8785 = vpop.xlane.xlu0 %8784
  %8786 = vmax.xlane.f32.xlu0 %v8751
  %v8787 = vpop.xlane.xlu0 %8786
  %8788 = vmax.xlane.f32.xlu0 %v8753
  %v8789 = vpop.xlane.xlu0 %8788
  %8790 = vmax.xlane.f32.xlu0 %v8756
  %v8791 = vpop.xlane.xlu0 %8790
  %8792 = vmax.xlane.f32.xlu0 %v8758
  %v8793 = vpop.xlane.xlu0 %8792
  %8794 = vmax.xlane.f32.xlu0 %v8761
  %v8795 = vpop.xlane.xlu0 %8794
  %8796 = vmax.xlane.f32.xlu0 %v8763
  %v8797 = vpop.xlane.xlu0 %8796
  %8798 = vmax.xlane.f32.xlu0 %v8766
  %v8799 = vpop.xlane.xlu0 %8798
  %8800 = vmax.xlane.f32.xlu0 %v8768
  %v8801 = vpop.xlane.xlu0 %8800
  %v8802 = vsub.f32 %v8731, %v8771
  %v8803 = vsub.f32 %v8733, %v8773
  %v8804 = vsub.f32 %v8736, %v8775
  %v8805 = vsub.f32 %v8738, %v8777
  %v8806 = vsub.f32 %v8741, %v8779
  %v8807 = vsub.f32 %v8743, %v8781
  %v8808 = vsub.f32 %v8746, %v8783
  %v8809 = vsub.f32 %v8748, %v8785
  %v8810 = vsub.f32 %v8751, %v8787
  %v8811 = vsub.f32 %v8753, %v8789
  %v8812 = vsub.f32 %v8756, %v8791
  %v8813 = vsub.f32 %v8758, %v8793
  %v8814 = vsub.f32 %v8761, %v8795
  %v8815 = vsub.f32 %v8763, %v8797
  %v8816 = vsub.f32 %v8766, %v8799
  %v8817 = vsub.f32 %v8768, %v8801
  %v8818 = vmul.f32 %v8802, 1.442695
  %v8819 = vpow.pop %v8818
  %v8820 = vmul.f32 %v8803, 1.442695
  %v8821 = vpow.pop %v8820
  %v8822 = vmul.f32 %v8804, 1.442695
  %v8823 = vpow.pop %v8822
  %v8824 = vmul.f32 %v8805, 1.442695
  %v8825 = vpow.pop %v8824
  %v8826 = vmul.f32 %v8806, 1.442695
  %v8827 = vpow.pop %v8826
  %v8828 = vmul.f32 %v8807, 1.442695
  %v8829 = vpow.pop %v8828
  %v8830 = vmul.f32 %v8808, 1.442695
  %v8831 = vpow.pop %v8830
  %v8832 = vmul.f32 %v8809, 1.442695
  %v8833 = vpow.pop %v8832
  %v8834 = vmul.f32 %v8810, 1.442695
  %v8835 = vpow.pop %v8834
  %v8836 = vmul.f32 %v8811, 1.442695
  %v8837 = vpow.pop %v8836
  %v8838 = vmul.f32 %v8812, 1.442695
  %v8839 = vpow.pop %v8838
  %v8840 = vmul.f32 %v8813, 1.442695
  %v8841 = vpow.pop %v8840
  %v8842 = vmul.f32 %v8814, 1.442695
  %v8843 = vpow.pop %v8842
  %v8844 = vmul.f32 %v8815, 1.442695
  %v8845 = vpow.pop %v8844
  %v8846 = vmul.f32 %v8816, 1.442695
  %v8847 = vpow.pop %v8846
  %v8848 = vmul.f32 %v8817, 1.442695
  %v8849 = vpow.pop %v8848
  %8850 = vadd.xlane.f32.xlu0 %v8819
  %v8851 = vpop.xlane.xlu0 %8850
  %8852 = vadd.xlane.f32.xlu0 %v8821
  %v8853 = vpop.xlane.xlu0 %8852
  %8854 = vadd.xlane.f32.xlu0 %v8823
  %v8855 = vpop.xlane.xlu0 %8854
  %8856 = vadd.xlane.f32.xlu0 %v8825
  %v8857 = vpop.xlane.xlu0 %8856
  %8858 = vadd.xlane.f32.xlu0 %v8827
  %v8859 = vpop.xlane.xlu0 %8858
  %8860 = vadd.xlane.f32.xlu0 %v8829
  %v8861 = vpop.xlane.xlu0 %8860
  %8862 = vadd.xlane.f32.xlu0 %v8831
  %v8863 = vpop.xlane.xlu0 %8862
  %8864 = vadd.xlane.f32.xlu0 %v8833
  %v8865 = vpop.xlane.xlu0 %8864
  %8866 = vadd.xlane.f32.xlu0 %v8835
  %v8867 = vpop.xlane.xlu0 %8866
  %8868 = vadd.xlane.f32.xlu0 %v8837
  %v8869 = vpop.xlane.xlu0 %8868
  %8870 = vadd.xlane.f32.xlu0 %v8839
  %v8871 = vpop.xlane.xlu0 %8870
  %8872 = vadd.xlane.f32.xlu0 %v8841
  %v8873 = vpop.xlane.xlu0 %8872
  %8874 = vadd.xlane.f32.xlu0 %v8843
  %v8875 = vpop.xlane.xlu0 %8874
  %8876 = vadd.xlane.f32.xlu0 %v8845
  %v8877 = vpop.xlane.xlu0 %8876
  %8878 = vadd.xlane.f32.xlu0 %v8847
  %v8879 = vpop.xlane.xlu0 %8878
  %8880 = vadd.xlane.f32.xlu0 %v8849
  %v8881 = vpop.xlane.xlu0 %8880
  %v8882 = vrcp.pop %v8851
  %v8883 = vrcp.pop %v8853
  %v8884 = vrcp.pop %v8855
  %v8885 = vrcp.pop %v8857
  %v8886 = vrcp.pop %v8859
  %v8887 = vrcp.pop %v8861
  %v8888 = vrcp.pop %v8863
  %v8889 = vrcp.pop %v8865
  %v8890 = vrcp.pop %v8867
  %v8891 = vrcp.pop %v8869
  %v8892 = vrcp.pop %v8871
  %v8893 = vrcp.pop %v8873
  %v8894 = vrcp.pop %v8875
  %v8895 = vrcp.pop %v8877
  %v8896 = vrcp.pop %v8879
  %v8897 = vrcp.pop %v8881
  %v8898 = vmul.f32 %v8819, %v8882
  %v8899 = vmul.f32 %v8821, %v8883
  %v8900 = vmul.f32 %v8823, %v8884
  %v8901 = vmul.f32 %v8825, %v8885
  %v8902 = vmul.f32 %v8827, %v8886
  %v8903 = vmul.f32 %v8829, %v8887
  %v8904 = vmul.f32 %v8831, %v8888
  %v8905 = vmul.f32 %v8833, %v8889
  %v8906 = vmul.f32 %v8835, %v8890
  %v8907 = vmul.f32 %v8837, %v8891
  %v8908 = vmul.f32 %v8839, %v8892
  %v8909 = vmul.f32 %v8841, %v8893
  %v8910 = vmul.f32 %v8843, %v8894
  %v8911 = vmul.f32 %v8845, %v8895
  %v8912 = vmul.f32 %v8847, %v8896
  %v8913 = vmul.f32 %v8849, %v8897
  %v8914 = vpack.c.bf16 %v8899, %v8898
  %v8915 = vpack.c.bf16 %v8901, %v8900
  %v8916 = vpack.c.bf16 %v8903, %v8902
  %v8917 = vpack.c.bf16 %v8905, %v8904
  %v8918 = vpack.c.bf16 %v8907, %v8906
  %v8919 = vpack.c.bf16 %v8909, %v8908
  %v8920 = vpack.c.bf16 %v8911, %v8910
  %v8921 = vpack.c.bf16 %v8913, %v8912
  %8922 = vrot.lane.b32.xlu0 %v8133, 32
  %v8923 = vpop.permute.xlu0 %8922
  %8924 = vrot.lane.b32.xlu0 %v8134, 32
  %v8925 = vpop.permute.xlu0 %8924
  %8926 = vrot.lane.b32.xlu0 %v8135, 32
  %v8927 = vpop.permute.xlu0 %8926
  %8928 = vrot.lane.b32.xlu0 %v8136, 32
  %v8929 = vpop.permute.xlu0 %8928
  %8930 = vrot.lane.b32.xlu0 %v8137, 32
  %v8931 = vpop.permute.xlu0 %8930
  %8932 = vrot.lane.b32.xlu0 %v8138, 32
  %v8933 = vpop.permute.xlu0 %8932
  %8934 = vrot.lane.b32.xlu0 %v8139, 32
  %v8935 = vpop.permute.xlu0 %8934
  %8936 = vrot.lane.b32.xlu0 %v8140, 32
  %v8937 = vpop.permute.xlu0 %8936
  %8946 = vmatpush.bf16.msra.mxu0 %v8937
  %8947 = vmatpush.bf16.msra.mxu0 %v8935
  %8948 = vmatpush.bf16.msra.mxu0 %v8933
  %8949 = vmatpush.bf16.msra.mxu0 %v8931
  %8950 = vmatpush.bf16.msra.mxu0 %v8929
  %8951 = vmatpush.bf16.msra.mxu0 %v8927
  %8952 = vmatpush.bf16.msra.mxu0 %v8925
  %8953 = vmatpush.bf16.msra.mxu0 %v8923
  %8954 = vmatmul.bf16.gmra.mxu0 %v8914
  %v8955 = vpop.f32.mrf.mxu0
  %v8956 = vadd.f32 0.0, %v8955
  %v8957 = vpop.f32.mrf.mxu0
  %v8958 = vadd.f32 0.0, %v8957
  %8959 = vmatmul.bf16.gmra.mxu0 %v8915
  %v8960 = vpop.f32.mrf.mxu0
  %v8961 = vadd.f32 0.0, %v8960
  %v8962 = vpop.f32.mrf.mxu0
  %v8963 = vadd.f32 0.0, %v8962
  %8964 = vmatmul.bf16.gmra.mxu0 %v8916
  %v8965 = vpop.f32.mrf.mxu0
  %v8966 = vadd.f32 0.0, %v8965
  %v8967 = vpop.f32.mrf.mxu0
  %v8968 = vadd.f32 0.0, %v8967
  %8969 = vmatmul.bf16.gmra.mxu0 %v8917
  %v8970 = vpop.f32.mrf.mxu0
  %v8971 = vadd.f32 0.0, %v8970
  %v8972 = vpop.f32.mrf.mxu0
  %v8973 = vadd.f32 0.0, %v8972
  %8974 = vmatmul.bf16.gmra.mxu0 %v8918
  %v8975 = vpop.f32.mrf.mxu0
  %v8976 = vadd.f32 0.0, %v8975
  %v8977 = vpop.f32.mrf.mxu0
  %v8978 = vadd.f32 0.0, %v8977
  %8979 = vmatmul.bf16.gmra.mxu0 %v8919
  %v8980 = vpop.f32.mrf.mxu0
  %v8981 = vadd.f32 0.0, %v8980
  %v8982 = vpop.f32.mrf.mxu0
  %v8983 = vadd.f32 0.0, %v8982
  %8984 = vmatmul.bf16.gmra.mxu0 %v8920
  %v8985 = vpop.f32.mrf.mxu0
  %v8986 = vadd.f32 0.0, %v8985
  %v8987 = vpop.f32.mrf.mxu0
  %v8988 = vadd.f32 0.0, %v8987
  %8989 = vmatmul.bf16.gmra.mxu0 %v8921
  %v8990 = vpop.f32.mrf.mxu0
  %v8991 = vadd.f32 0.0, %v8990
  %v8992 = vpop.f32.mrf.mxu0
  %v8993 = vadd.f32 0.0, %v8992
  %8994 = vdwg.mxu0
  %v8995 = vadd.f32 %v8625, %v8956
  %v8996 = vadd.f32 %v8626, %v8958
  %v8997 = vadd.f32 %v8627, %v8961
  %v8998 = vadd.f32 %v8628, %v8963
  %v8999 = vadd.f32 %v8629, %v8966
  %v9000 = vadd.f32 %v8630, %v8968
  %v9001 = vadd.f32 %v8631, %v8971
  %v9002 = vadd.f32 %v8632, %v8973
  %v9003 = vadd.f32 %v8633, %v8976
  %v9004 = vadd.f32 %v8634, %v8978
  %v9005 = vadd.f32 %v8635, %v8981
  %v9006 = vadd.f32 %v8636, %v8983
  %v9007 = vadd.f32 %v8637, %v8986
  %v9008 = vadd.f32 %v8638, %v8988
  %v9009 = vadd.f32 %v8639, %v8991
  %v9010 = vadd.f32 %v8640, %v8993
  %v9011 = vperm.slane %v95, 1
  %v9012 = vadd.f32 %v7499, %v9011
  %v9013 = vadd.f32 %v7500, %v9011
  %v9014 = vadd.f32 %v7501, %v9011
  %v9015 = vadd.f32 %v7502, %v9011
  %v9016 = vadd.f32 %v7503, %v9011
  %v9017 = vadd.f32 %v7504, %v9011
  %v9018 = vadd.f32 %v7505, %v9011
  %v9019 = vadd.f32 %v7506, %v9011
  %v9020 = vadd.f32 %v7507, %v9011
  %v9021 = vadd.f32 %v7508, %v9011
  %v9022 = vadd.f32 %v7509, %v9011
  %v9023 = vadd.f32 %v7510, %v9011
  %v9024 = vadd.f32 %v7511, %v9011
  %v9025 = vadd.f32 %v7512, %v9011
  %v9026 = vadd.f32 %v7513, %v9011
  %v9027 = vadd.f32 %v7514, %v9011
  %v9028 = vadd.f32 %v8995, %v9011
  %v9029 = vadd.f32 %v8996, %v9011
  %v9030 = vadd.f32 %v8997, %v9011
  %v9031 = vadd.f32 %v8998, %v9011
  %v9032 = vadd.f32 %v8999, %v9011
  %v9033 = vadd.f32 %v9000, %v9011
  %v9034 = vadd.f32 %v9001, %v9011
  %v9035 = vadd.f32 %v9002, %v9011
  %v9036 = vadd.f32 %v9003, %v9011
  %v9037 = vadd.f32 %v9004, %v9011
  %v9038 = vadd.f32 %v9005, %v9011
  %v9039 = vadd.f32 %v9006, %v9011
  %v9040 = vadd.f32 %v9007, %v9011
  %v9041 = vadd.f32 %v9008, %v9011
  %v9042 = vadd.f32 %v9009, %v9011
  %v9043 = vadd.f32 %v9010, %v9011
  %v9044 = vadd.f32 %v5536, %v9012
  %v9045 = vadd.f32 %v5537, %v9013
  %v9046 = vadd.f32 %v5538, %v9014
  %v9047 = vadd.f32 %v5539, %v9015
  %v9048 = vadd.f32 %v5540, %v9016
  %v9049 = vadd.f32 %v5541, %v9017
  %v9050 = vadd.f32 %v5542, %v9018
  %v9051 = vadd.f32 %v5543, %v9019
  %v9052 = vadd.f32 %v5544, %v9020
  %v9053 = vadd.f32 %v5545, %v9021
  %v9054 = vadd.f32 %v5546, %v9022
  %v9055 = vadd.f32 %v5547, %v9023
  %v9056 = vadd.f32 %v5548, %v9024
  %v9057 = vadd.f32 %v5549, %v9025
  %v9058 = vadd.f32 %v5550, %v9026
  %v9059 = vadd.f32 %v5551, %v9027
  %v9060 = vadd.f32 %v5552, %v9028
  %v9061 = vadd.f32 %v5553, %v9029
  %v9062 = vadd.f32 %v5554, %v9030
  %v9063 = vadd.f32 %v5555, %v9031
  %v9064 = vadd.f32 %v5556, %v9032
  %v9065 = vadd.f32 %v5557, %v9033
  %v9066 = vadd.f32 %v5558, %v9034
  %v9067 = vadd.f32 %v5559, %v9035
  %v9068 = vadd.f32 %v5560, %v9036
  %v9069 = vadd.f32 %v5561, %v9037
  %v9070 = vadd.f32 %v5562, %v9038
  %v9071 = vadd.f32 %v5563, %v9039
  %v9072 = vadd.f32 %v5564, %v9040
  %v9073 = vadd.f32 %v5565, %v9041
  %v9074 = vadd.f32 %v5566, %v9042
  %v9075 = vadd.f32 %v5567, %v9043
  %v9076 = vsel %vm187, %v9044, 0.0
  %9077 = vadd.xlane.f32.xlu0 %v9076
  %v9078 = vpop.xlane.xlu0 %9077
  %v9079 = vsel %vm187, %v9045, 0.0
  %9080 = vadd.xlane.f32.xlu0 %v9079
  %v9081 = vpop.xlane.xlu0 %9080
  %v9082 = vsel %vm187, %v9046, 0.0
  %9083 = vadd.xlane.f32.xlu0 %v9082
  %v9084 = vpop.xlane.xlu0 %9083
  %v9085 = vsel %vm187, %v9047, 0.0
  %9086 = vadd.xlane.f32.xlu0 %v9085
  %v9087 = vpop.xlane.xlu0 %9086
  %v9088 = vsel %vm187, %v9048, 0.0
  %9089 = vadd.xlane.f32.xlu0 %v9088
  %v9090 = vpop.xlane.xlu0 %9089
  %v9091 = vsel %vm187, %v9049, 0.0
  %9092 = vadd.xlane.f32.xlu0 %v9091
  %v9093 = vpop.xlane.xlu0 %9092
  %v9094 = vsel %vm187, %v9050, 0.0
  %9095 = vadd.xlane.f32.xlu0 %v9094
  %v9096 = vpop.xlane.xlu0 %9095
  %v9097 = vsel %vm187, %v9051, 0.0
  %9098 = vadd.xlane.f32.xlu0 %v9097
  %v9099 = vpop.xlane.xlu0 %9098
  %v9100 = vsel %vm187, %v9052, 0.0
  %9101 = vadd.xlane.f32.xlu0 %v9100
  %v9102 = vpop.xlane.xlu0 %9101
  %v9103 = vsel %vm187, %v9053, 0.0
  %9104 = vadd.xlane.f32.xlu0 %v9103
  %v9105 = vpop.xlane.xlu0 %9104
  %v9106 = vsel %vm187, %v9054, 0.0
  %9107 = vadd.xlane.f32.xlu0 %v9106
  %v9108 = vpop.xlane.xlu0 %9107
  %v9109 = vsel %vm187, %v9055, 0.0
  %9110 = vadd.xlane.f32.xlu0 %v9109
  %v9111 = vpop.xlane.xlu0 %9110
  %v9112 = vsel %vm187, %v9056, 0.0
  %9113 = vadd.xlane.f32.xlu0 %v9112
  %v9114 = vpop.xlane.xlu0 %9113
  %v9115 = vsel %vm187, %v9057, 0.0
  %9116 = vadd.xlane.f32.xlu0 %v9115
  %v9117 = vpop.xlane.xlu0 %9116
  %v9118 = vsel %vm187, %v9058, 0.0
  %9119 = vadd.xlane.f32.xlu0 %v9118
  %v9120 = vpop.xlane.xlu0 %9119
  %v9121 = vsel %vm187, %v9059, 0.0
  %9122 = vadd.xlane.f32.xlu0 %v9121
  %v9123 = vpop.xlane.xlu0 %9122
  %v9124 = vsel %vm187, %v9060, 0.0
  %9125 = vadd.xlane.f32.xlu0 %v9124
  %v9126 = vpop.xlane.xlu0 %9125
  %v9127 = vsel %vm187, %v9061, 0.0
  %9128 = vadd.xlane.f32.xlu0 %v9127
  %v9129 = vpop.xlane.xlu0 %9128
  %v9130 = vsel %vm187, %v9062, 0.0
  %9131 = vadd.xlane.f32.xlu0 %v9130
  %v9132 = vpop.xlane.xlu0 %9131
  %v9133 = vsel %vm187, %v9063, 0.0
  %9134 = vadd.xlane.f32.xlu0 %v9133
  %v9135 = vpop.xlane.xlu0 %9134
  %v9136 = vsel %vm187, %v9064, 0.0
  %9137 = vadd.xlane.f32.xlu0 %v9136
  %v9138 = vpop.xlane.xlu0 %9137
  %v9139 = vsel %vm187, %v9065, 0.0
  %9140 = vadd.xlane.f32.xlu0 %v9139
  %v9141 = vpop.xlane.xlu0 %9140
  %v9142 = vsel %vm187, %v9066, 0.0
  %9143 = vadd.xlane.f32.xlu0 %v9142
  %v9144 = vpop.xlane.xlu0 %9143
  %v9145 = vsel %vm187, %v9067, 0.0
  %9146 = vadd.xlane.f32.xlu0 %v9145
  %v9147 = vpop.xlane.xlu0 %9146
  %v9148 = vsel %vm187, %v9068, 0.0
  %9149 = vadd.xlane.f32.xlu0 %v9148
  %v9150 = vpop.xlane.xlu0 %9149
  %v9151 = vsel %vm187, %v9069, 0.0
  %9152 = vadd.xlane.f32.xlu0 %v9151
  %v9153 = vpop.xlane.xlu0 %9152
  %v9154 = vsel %vm187, %v9070, 0.0
  %9155 = vadd.xlane.f32.xlu0 %v9154
  %v9156 = vpop.xlane.xlu0 %9155
  %v9157 = vsel %vm187, %v9071, 0.0
  %9158 = vadd.xlane.f32.xlu0 %v9157
  %v9159 = vpop.xlane.xlu0 %9158
  %v9160 = vsel %vm187, %v9072, 0.0
  %9161 = vadd.xlane.f32.xlu0 %v9160
  %v9162 = vpop.xlane.xlu0 %9161
  %v9163 = vsel %vm187, %v9073, 0.0
  %9164 = vadd.xlane.f32.xlu0 %v9163
  %v9165 = vpop.xlane.xlu0 %9164
  %v9166 = vsel %vm187, %v9074, 0.0
  %9167 = vadd.xlane.f32.xlu0 %v9166
  %v9168 = vpop.xlane.xlu0 %9167
  %v9169 = vsel %vm187, %v9075, 0.0
  %9170 = vadd.xlane.f32.xlu0 %v9169
  %v9171 = vpop.xlane.xlu0 %9170
  %v9172 = vmul.f32 %v9078, %v3714
  %v9173 = vmul.f32 %v9081, %v3714
  %v9174 = vmul.f32 %v9084, %v3714
  %v9175 = vmul.f32 %v9087, %v3714
  %v9176 = vmul.f32 %v9090, %v3714
  %v9177 = vmul.f32 %v9093, %v3714
  %v9178 = vmul.f32 %v9096, %v3714
  %v9179 = vmul.f32 %v9099, %v3714
  %v9180 = vmul.f32 %v9102, %v3714
  %v9181 = vmul.f32 %v9105, %v3714
  %v9182 = vmul.f32 %v9108, %v3714
  %v9183 = vmul.f32 %v9111, %v3714
  %v9184 = vmul.f32 %v9114, %v3714
  %v9185 = vmul.f32 %v9117, %v3714
  %v9186 = vmul.f32 %v9120, %v3714
  %v9187 = vmul.f32 %v9123, %v3714
  %v9188 = vmul.f32 %v9126, %v3714
  %v9189 = vmul.f32 %v9129, %v3714
  %v9190 = vmul.f32 %v9132, %v3714
  %v9191 = vmul.f32 %v9135, %v3714
  %v9192 = vmul.f32 %v9138, %v3714
  %v9193 = vmul.f32 %v9141, %v3714
  %v9194 = vmul.f32 %v9144, %v3714
  %v9195 = vmul.f32 %v9147, %v3714
  %v9196 = vmul.f32 %v9150, %v3714
  %v9197 = vmul.f32 %v9153, %v3714
  %v9198 = vmul.f32 %v9156, %v3714
  %v9199 = vmul.f32 %v9159, %v3714
  %v9200 = vmul.f32 %v9162, %v3714
  %v9201 = vmul.f32 %v9165, %v3714
  %v9202 = vmul.f32 %v9168, %v3714
  %v9203 = vmul.f32 %v9171, %v3714
  %v9204 = vsub.f32 %v9044, %v9172
  %v9205 = vsub.f32 %v9045, %v9173
  %v9206 = vsub.f32 %v9046, %v9174
  %v9207 = vsub.f32 %v9047, %v9175
  %v9208 = vsub.f32 %v9048, %v9176
  %v9209 = vsub.f32 %v9049, %v9177
  %v9210 = vsub.f32 %v9050, %v9178
  %v9211 = vsub.f32 %v9051, %v9179
  %v9212 = vsub.f32 %v9052, %v9180
  %v9213 = vsub.f32 %v9053, %v9181
  %v9214 = vsub.f32 %v9054, %v9182
  %v9215 = vsub.f32 %v9055, %v9183
  %v9216 = vsub.f32 %v9056, %v9184
  %v9217 = vsub.f32 %v9057, %v9185
  %v9218 = vsub.f32 %v9058, %v9186
  %v9219 = vsub.f32 %v9059, %v9187
  %v9220 = vsub.f32 %v9060, %v9188
  %v9221 = vsub.f32 %v9061, %v9189
  %v9222 = vsub.f32 %v9062, %v9190
  %v9223 = vsub.f32 %v9063, %v9191
  %v9224 = vsub.f32 %v9064, %v9192
  %v9225 = vsub.f32 %v9065, %v9193
  %v9226 = vsub.f32 %v9066, %v9194
  %v9227 = vsub.f32 %v9067, %v9195
  %v9228 = vsub.f32 %v9068, %v9196
  %v9229 = vsub.f32 %v9069, %v9197
  %v9230 = vsub.f32 %v9070, %v9198
  %v9231 = vsub.f32 %v9071, %v9199
  %v9232 = vsub.f32 %v9072, %v9200
  %v9233 = vsub.f32 %v9073, %v9201
  %v9234 = vsub.f32 %v9074, %v9202
  %v9235 = vsub.f32 %v9075, %v9203
  %v9236 = vmul.f32 %v9204, %v9204
  %v9237 = vmul.f32 %v9205, %v9205
  %v9238 = vmul.f32 %v9206, %v9206
  %v9239 = vmul.f32 %v9207, %v9207
  %v9240 = vmul.f32 %v9208, %v9208
  %v9241 = vmul.f32 %v9209, %v9209
  %v9242 = vmul.f32 %v9210, %v9210
  %v9243 = vmul.f32 %v9211, %v9211
  %v9244 = vmul.f32 %v9212, %v9212
  %v9245 = vmul.f32 %v9213, %v9213
  %v9246 = vmul.f32 %v9214, %v9214
  %v9247 = vmul.f32 %v9215, %v9215
  %v9248 = vmul.f32 %v9216, %v9216
  %v9249 = vmul.f32 %v9217, %v9217
  %v9250 = vmul.f32 %v9218, %v9218
  %v9251 = vmul.f32 %v9219, %v9219
  %v9252 = vmul.f32 %v9220, %v9220
  %v9253 = vmul.f32 %v9221, %v9221
  %v9254 = vmul.f32 %v9222, %v9222
  %v9255 = vmul.f32 %v9223, %v9223
  %v9256 = vmul.f32 %v9224, %v9224
  %v9257 = vmul.f32 %v9225, %v9225
  %v9258 = vmul.f32 %v9226, %v9226
  %v9259 = vmul.f32 %v9227, %v9227
  %v9260 = vmul.f32 %v9228, %v9228
  %v9261 = vmul.f32 %v9229, %v9229
  %v9262 = vmul.f32 %v9230, %v9230
  %v9263 = vmul.f32 %v9231, %v9231
  %v9264 = vmul.f32 %v9232, %v9232
  %v9265 = vmul.f32 %v9233, %v9233
  %v9266 = vmul.f32 %v9234, %v9234
  %v9267 = vmul.f32 %v9235, %v9235
  %v9268 = vsel %vm187, %v9236, 0.0
  %9269 = vadd.xlane.f32.xlu0 %v9268
  %v9270 = vpop.xlane.xlu0 %9269
  %v9271 = vsel %vm187, %v9237, 0.0
  %9272 = vadd.xlane.f32.xlu0 %v9271
  %v9273 = vpop.xlane.xlu0 %9272
  %v9274 = vsel %vm187, %v9238, 0.0
  %9275 = vadd.xlane.f32.xlu0 %v9274
  %v9276 = vpop.xlane.xlu0 %9275
  %v9277 = vsel %vm187, %v9239, 0.0
  %9278 = vadd.xlane.f32.xlu0 %v9277
  %v9279 = vpop.xlane.xlu0 %9278
  %v9280 = vsel %vm187, %v9240, 0.0
  %9281 = vadd.xlane.f32.xlu0 %v9280
  %v9282 = vpop.xlane.xlu0 %9281
  %v9283 = vsel %vm187, %v9241, 0.0
  %9284 = vadd.xlane.f32.xlu0 %v9283
  %v9285 = vpop.xlane.xlu0 %9284
  %v9286 = vsel %vm187, %v9242, 0.0
  %9287 = vadd.xlane.f32.xlu0 %v9286
  %v9288 = vpop.xlane.xlu0 %9287
  %v9289 = vsel %vm187, %v9243, 0.0
  %9290 = vadd.xlane.f32.xlu0 %v9289
  %v9291 = vpop.xlane.xlu0 %9290
  %v9292 = vsel %vm187, %v9244, 0.0
  %9293 = vadd.xlane.f32.xlu0 %v9292
  %v9294 = vpop.xlane.xlu0 %9293
  %v9295 = vsel %vm187, %v9245, 0.0
  %9296 = vadd.xlane.f32.xlu0 %v9295
  %v9297 = vpop.xlane.xlu0 %9296
  %v9298 = vsel %vm187, %v9246, 0.0
  %9299 = vadd.xlane.f32.xlu0 %v9298
  %v9300 = vpop.xlane.xlu0 %9299
  %v9301 = vsel %vm187, %v9247, 0.0
  %9302 = vadd.xlane.f32.xlu0 %v9301
  %v9303 = vpop.xlane.xlu0 %9302
  %v9304 = vsel %vm187, %v9248, 0.0
  %9305 = vadd.xlane.f32.xlu0 %v9304
  %v9306 = vpop.xlane.xlu0 %9305
  %v9307 = vsel %vm187, %v9249, 0.0
  %9308 = vadd.xlane.f32.xlu0 %v9307
  %v9309 = vpop.xlane.xlu0 %9308
  %v9310 = vsel %vm187, %v9250, 0.0
  %9311 = vadd.xlane.f32.xlu0 %v9310
  %v9312 = vpop.xlane.xlu0 %9311
  %v9313 = vsel %vm187, %v9251, 0.0
  %9314 = vadd.xlane.f32.xlu0 %v9313
  %v9315 = vpop.xlane.xlu0 %9314
  %v9316 = vsel %vm187, %v9252, 0.0
  %9317 = vadd.xlane.f32.xlu0 %v9316
  %v9318 = vpop.xlane.xlu0 %9317
  %v9319 = vsel %vm187, %v9253, 0.0
  %9320 = vadd.xlane.f32.xlu0 %v9319
  %v9321 = vpop.xlane.xlu0 %9320
  %v9322 = vsel %vm187, %v9254, 0.0
  %9323 = vadd.xlane.f32.xlu0 %v9322
  %v9324 = vpop.xlane.xlu0 %9323
  %v9325 = vsel %vm187, %v9255, 0.0
  %9326 = vadd.xlane.f32.xlu0 %v9325
  %v9327 = vpop.xlane.xlu0 %9326
  %v9328 = vsel %vm187, %v9256, 0.0
  %9329 = vadd.xlane.f32.xlu0 %v9328
  %v9330 = vpop.xlane.xlu0 %9329
  %v9331 = vsel %vm187, %v9257, 0.0
  %9332 = vadd.xlane.f32.xlu0 %v9331
  %v9333 = vpop.xlane.xlu0 %9332
  %v9334 = vsel %vm187, %v9258, 0.0
  %9335 = vadd.xlane.f32.xlu0 %v9334
  %v9336 = vpop.xlane.xlu0 %9335
  %v9337 = vsel %vm187, %v9259, 0.0
  %9338 = vadd.xlane.f32.xlu0 %v9337
  %v9339 = vpop.xlane.xlu0 %9338
  %v9340 = vsel %vm187, %v9260, 0.0
  %9341 = vadd.xlane.f32.xlu0 %v9340
  %v9342 = vpop.xlane.xlu0 %9341
  %v9343 = vsel %vm187, %v9261, 0.0
  %9344 = vadd.xlane.f32.xlu0 %v9343
  %v9345 = vpop.xlane.xlu0 %9344
  %v9346 = vsel %vm187, %v9262, 0.0
  %9347 = vadd.xlane.f32.xlu0 %v9346
  %v9348 = vpop.xlane.xlu0 %9347
  %v9349 = vsel %vm187, %v9263, 0.0
  %9350 = vadd.xlane.f32.xlu0 %v9349
  %v9351 = vpop.xlane.xlu0 %9350
  %v9352 = vsel %vm187, %v9264, 0.0
  %9353 = vadd.xlane.f32.xlu0 %v9352
  %v9354 = vpop.xlane.xlu0 %9353
  %v9355 = vsel %vm187, %v9265, 0.0
  %9356 = vadd.xlane.f32.xlu0 %v9355
  %v9357 = vpop.xlane.xlu0 %9356
  %v9358 = vsel %vm187, %v9266, 0.0
  %9359 = vadd.xlane.f32.xlu0 %v9358
  %v9360 = vpop.xlane.xlu0 %9359
  %v9361 = vsel %vm187, %v9267, 0.0
  %9362 = vadd.xlane.f32.xlu0 %v9361
  %v9363 = vpop.xlane.xlu0 %9362
  %v9364 = vmul.f32 %v9270, %v3714
  %v9365 = vmul.f32 %v9273, %v3714
  %v9366 = vmul.f32 %v9276, %v3714
  %v9367 = vmul.f32 %v9279, %v3714
  %v9368 = vmul.f32 %v9282, %v3714
  %v9369 = vmul.f32 %v9285, %v3714
  %v9370 = vmul.f32 %v9288, %v3714
  %v9371 = vmul.f32 %v9291, %v3714
  %v9372 = vmul.f32 %v9294, %v3714
  %v9373 = vmul.f32 %v9297, %v3714
  %v9374 = vmul.f32 %v9300, %v3714
  %v9375 = vmul.f32 %v9303, %v3714
  %v9376 = vmul.f32 %v9306, %v3714
  %v9377 = vmul.f32 %v9309, %v3714
  %v9378 = vmul.f32 %v9312, %v3714
  %v9379 = vmul.f32 %v9315, %v3714
  %v9380 = vmul.f32 %v9318, %v3714
  %v9381 = vmul.f32 %v9321, %v3714
  %v9382 = vmul.f32 %v9324, %v3714
  %v9383 = vmul.f32 %v9327, %v3714
  %v9384 = vmul.f32 %v9330, %v3714
  %v9385 = vmul.f32 %v9333, %v3714
  %v9386 = vmul.f32 %v9336, %v3714
  %v9387 = vmul.f32 %v9339, %v3714
  %v9388 = vmul.f32 %v9342, %v3714
  %v9389 = vmul.f32 %v9345, %v3714
  %v9390 = vmul.f32 %v9348, %v3714
  %v9391 = vmul.f32 %v9351, %v3714
  %v9392 = vmul.f32 %v9354, %v3714
  %v9393 = vmul.f32 %v9357, %v3714
  %v9394 = vmul.f32 %v9360, %v3714
  %v9395 = vmul.f32 %v9363, %v3714
  %v9396 = vadd.f32 %v9364, 1e-05
  %v9397 = vadd.f32 %v9365, 1e-05
  %v9398 = vadd.f32 %v9366, 1e-05
  %v9399 = vadd.f32 %v9367, 1e-05
  %v9400 = vadd.f32 %v9368, 1e-05
  %v9401 = vadd.f32 %v9369, 1e-05
  %v9402 = vadd.f32 %v9370, 1e-05
  %v9403 = vadd.f32 %v9371, 1e-05
  %v9404 = vadd.f32 %v9372, 1e-05
  %v9405 = vadd.f32 %v9373, 1e-05
  %v9406 = vadd.f32 %v9374, 1e-05
  %v9407 = vadd.f32 %v9375, 1e-05
  %v9408 = vadd.f32 %v9376, 1e-05
  %v9409 = vadd.f32 %v9377, 1e-05
  %v9410 = vadd.f32 %v9378, 1e-05
  %v9411 = vadd.f32 %v9379, 1e-05
  %v9412 = vadd.f32 %v9380, 1e-05
  %v9413 = vadd.f32 %v9381, 1e-05
  %v9414 = vadd.f32 %v9382, 1e-05
  %v9415 = vadd.f32 %v9383, 1e-05
  %v9416 = vadd.f32 %v9384, 1e-05
  %v9417 = vadd.f32 %v9385, 1e-05
  %v9418 = vadd.f32 %v9386, 1e-05
  %v9419 = vadd.f32 %v9387, 1e-05
  %v9420 = vadd.f32 %v9388, 1e-05
  %v9421 = vadd.f32 %v9389, 1e-05
  %v9422 = vadd.f32 %v9390, 1e-05
  %v9423 = vadd.f32 %v9391, 1e-05
  %v9424 = vadd.f32 %v9392, 1e-05
  %v9425 = vadd.f32 %v9393, 1e-05
  %v9426 = vadd.f32 %v9394, 1e-05
  %v9427 = vadd.f32 %v9395, 1e-05
  %v9428 = vrsqrt.pop %v9396
  %v9429 = vmul.f32 %v9428, %v9396
  %v9430 = vmul.f32 %v9429, %v9428
  %v9431 = vmul.f32 0.5, %v9430
  %v9432 = vsub.f32 1.5, %v9431
  %v9433 = vmul.f32 %v9428, %v9432
  %vm9434 = vweird.f32 %v9396
  %vm9435 = vweird.f32 %v9428
  %vm9436 = vmor %vm9434, %vm9435
  %v9437 = vsel %vm9436, %v9428, %v9433
  %v9438 = vrsqrt.pop %v9397
  %v9439 = vmul.f32 %v9438, %v9397
  %v9440 = vmul.f32 %v9439, %v9438
  %v9441 = vmul.f32 0.5, %v9440
  %v9442 = vsub.f32 1.5, %v9441
  %v9443 = vmul.f32 %v9438, %v9442
  %vm9444 = vweird.f32 %v9397
  %vm9445 = vweird.f32 %v9438
  %vm9446 = vmor %vm9444, %vm9445
  %v9447 = vsel %vm9446, %v9438, %v9443
  %v9448 = vrsqrt.pop %v9398
  %v9449 = vmul.f32 %v9448, %v9398
  %v9450 = vmul.f32 %v9449, %v9448
  %v9451 = vmul.f32 0.5, %v9450
  %v9452 = vsub.f32 1.5, %v9451
  %v9453 = vmul.f32 %v9448, %v9452
  %vm9454 = vweird.f32 %v9398
  %vm9455 = vweird.f32 %v9448
  %vm9456 = vmor %vm9454, %vm9455
  %v9457 = vsel %vm9456, %v9448, %v9453
  %v9458 = vrsqrt.pop %v9399
  %v9459 = vmul.f32 %v9458, %v9399
  %v9460 = vmul.f32 %v9459, %v9458
  %v9461 = vmul.f32 0.5, %v9460
  %v9462 = vsub.f32 1.5, %v9461
  %v9463 = vmul.f32 %v9458, %v9462
  %vm9464 = vweird.f32 %v9399
  %vm9465 = vweird.f32 %v9458
  %vm9466 = vmor %vm9464, %vm9465
  %v9467 = vsel %vm9466, %v9458, %v9463
  %v9468 = vrsqrt.pop %v9400
  %v9469 = vmul.f32 %v9468, %v9400
  %v9470 = vmul.f32 %v9469, %v9468
  %v9471 = vmul.f32 0.5, %v9470
  %v9472 = vsub.f32 1.5, %v9471
  %v9473 = vmul.f32 %v9468, %v9472
  %vm9474 = vweird.f32 %v9400
  %vm9475 = vweird.f32 %v9468
  %vm9476 = vmor %vm9474, %vm9475
  %v9477 = vsel %vm9476, %v9468, %v9473
  %v9478 = vrsqrt.pop %v9401
  %v9479 = vmul.f32 %v9478, %v9401
  %v9480 = vmul.f32 %v9479, %v9478
  %v9481 = vmul.f32 0.5, %v9480
  %v9482 = vsub.f32 1.5, %v9481
  %v9483 = vmul.f32 %v9478, %v9482
  %vm9484 = vweird.f32 %v9401
  %vm9485 = vweird.f32 %v9478
  %vm9486 = vmor %vm9484, %vm9485
  %v9487 = vsel %vm9486, %v9478, %v9483
  %v9488 = vrsqrt.pop %v9402
  %v9489 = vmul.f32 %v9488, %v9402
  %v9490 = vmul.f32 %v9489, %v9488
  %v9491 = vmul.f32 0.5, %v9490
  %v9492 = vsub.f32 1.5, %v9491
  %v9493 = vmul.f32 %v9488, %v9492
  %vm9494 = vweird.f32 %v9402
  %vm9495 = vweird.f32 %v9488
  %vm9496 = vmor %vm9494, %vm9495
  %v9497 = vsel %vm9496, %v9488, %v9493
  %v9498 = vrsqrt.pop %v9403
  %v9499 = vmul.f32 %v9498, %v9403
  %v9500 = vmul.f32 %v9499, %v9498
  %v9501 = vmul.f32 0.5, %v9500
  %v9502 = vsub.f32 1.5, %v9501
  %v9503 = vmul.f32 %v9498, %v9502
  %vm9504 = vweird.f32 %v9403
  %vm9505 = vweird.f32 %v9498
  %vm9506 = vmor %vm9504, %vm9505
  %v9507 = vsel %vm9506, %v9498, %v9503
  %v9508 = vrsqrt.pop %v9404
  %v9509 = vmul.f32 %v9508, %v9404
  %v9510 = vmul.f32 %v9509, %v9508
  %v9511 = vmul.f32 0.5, %v9510
  %v9512 = vsub.f32 1.5, %v9511
  %v9513 = vmul.f32 %v9508, %v9512
  %vm9514 = vweird.f32 %v9404
  %vm9515 = vweird.f32 %v9508
  %vm9516 = vmor %vm9514, %vm9515
  %v9517 = vsel %vm9516, %v9508, %v9513
  %v9518 = vrsqrt.pop %v9405
  %v9519 = vmul.f32 %v9518, %v9405
  %v9520 = vmul.f32 %v9519, %v9518
  %v9521 = vmul.f32 0.5, %v9520
  %v9522 = vsub.f32 1.5, %v9521
  %v9523 = vmul.f32 %v9518, %v9522
  %vm9524 = vweird.f32 %v9405
  %vm9525 = vweird.f32 %v9518
  %vm9526 = vmor %vm9524, %vm9525
  %v9527 = vsel %vm9526, %v9518, %v9523
  %v9528 = vrsqrt.pop %v9406
  %v9529 = vmul.f32 %v9528, %v9406
  %v9530 = vmul.f32 %v9529, %v9528
  %v9531 = vmul.f32 0.5, %v9530
  %v9532 = vsub.f32 1.5, %v9531
  %v9533 = vmul.f32 %v9528, %v9532
  %vm9534 = vweird.f32 %v9406
  %vm9535 = vweird.f32 %v9528
  %vm9536 = vmor %vm9534, %vm9535
  %v9537 = vsel %vm9536, %v9528, %v9533
  %v9538 = vrsqrt.pop %v9407
  %v9539 = vmul.f32 %v9538, %v9407
  %v9540 = vmul.f32 %v9539, %v9538
  %v9541 = vmul.f32 0.5, %v9540
  %v9542 = vsub.f32 1.5, %v9541
  %v9543 = vmul.f32 %v9538, %v9542
  %vm9544 = vweird.f32 %v9407
  %vm9545 = vweird.f32 %v9538
  %vm9546 = vmor %vm9544, %vm9545
  %v9547 = vsel %vm9546, %v9538, %v9543
  %v9548 = vrsqrt.pop %v9408
  %v9549 = vmul.f32 %v9548, %v9408
  %v9550 = vmul.f32 %v9549, %v9548
  %v9551 = vmul.f32 0.5, %v9550
  %v9552 = vsub.f32 1.5, %v9551
  %v9553 = vmul.f32 %v9548, %v9552
  %vm9554 = vweird.f32 %v9408
  %vm9555 = vweird.f32 %v9548
  %vm9556 = vmor %vm9554, %vm9555
  %v9557 = vsel %vm9556, %v9548, %v9553
  %v9558 = vrsqrt.pop %v9409
  %v9559 = vmul.f32 %v9558, %v9409
  %v9560 = vmul.f32 %v9559, %v9558
  %v9561 = vmul.f32 0.5, %v9560
  %v9562 = vsub.f32 1.5, %v9561
  %v9563 = vmul.f32 %v9558, %v9562
  %vm9564 = vweird.f32 %v9409
  %vm9565 = vweird.f32 %v9558
  %vm9566 = vmor %vm9564, %vm9565
  %v9567 = vsel %vm9566, %v9558, %v9563
  %v9568 = vrsqrt.pop %v9410
  %v9569 = vmul.f32 %v9568, %v9410
  %v9570 = vmul.f32 %v9569, %v9568
  %v9571 = vmul.f32 0.5, %v9570
  %v9572 = vsub.f32 1.5, %v9571
  %v9573 = vmul.f32 %v9568, %v9572
  %vm9574 = vweird.f32 %v9410
  %vm9575 = vweird.f32 %v9568
  %vm9576 = vmor %vm9574, %vm9575
  %v9577 = vsel %vm9576, %v9568, %v9573
  %v9578 = vrsqrt.pop %v9411
  %v9579 = vmul.f32 %v9578, %v9411
  %v9580 = vmul.f32 %v9579, %v9578
  %v9581 = vmul.f32 0.5, %v9580
  %v9582 = vsub.f32 1.5, %v9581
  %v9583 = vmul.f32 %v9578, %v9582
  %vm9584 = vweird.f32 %v9411
  %vm9585 = vweird.f32 %v9578
  %vm9586 = vmor %vm9584, %vm9585
  %v9587 = vsel %vm9586, %v9578, %v9583
  %v9588 = vrsqrt.pop %v9412
  %v9589 = vmul.f32 %v9588, %v9412
  %v9590 = vmul.f32 %v9589, %v9588
  %v9591 = vmul.f32 0.5, %v9590
  %v9592 = vsub.f32 1.5, %v9591
  %v9593 = vmul.f32 %v9588, %v9592
  %vm9594 = vweird.f32 %v9412
  %vm9595 = vweird.f32 %v9588
  %vm9596 = vmor %vm9594, %vm9595
  %v9597 = vsel %vm9596, %v9588, %v9593
  %v9598 = vrsqrt.pop %v9413
  %v9599 = vmul.f32 %v9598, %v9413
  %v9600 = vmul.f32 %v9599, %v9598
  %v9601 = vmul.f32 0.5, %v9600
  %v9602 = vsub.f32 1.5, %v9601
  %v9603 = vmul.f32 %v9598, %v9602
  %vm9604 = vweird.f32 %v9413
  %vm9605 = vweird.f32 %v9598
  %vm9606 = vmor %vm9604, %vm9605
  %v9607 = vsel %vm9606, %v9598, %v9603
  %v9608 = vrsqrt.pop %v9414
  %v9609 = vmul.f32 %v9608, %v9414
  %v9610 = vmul.f32 %v9609, %v9608
  %v9611 = vmul.f32 0.5, %v9610
  %v9612 = vsub.f32 1.5, %v9611
  %v9613 = vmul.f32 %v9608, %v9612
  %vm9614 = vweird.f32 %v9414
  %vm9615 = vweird.f32 %v9608
  %vm9616 = vmor %vm9614, %vm9615
  %v9617 = vsel %vm9616, %v9608, %v9613
  %v9618 = vrsqrt.pop %v9415
  %v9619 = vmul.f32 %v9618, %v9415
  %v9620 = vmul.f32 %v9619, %v9618
  %v9621 = vmul.f32 0.5, %v9620
  %v9622 = vsub.f32 1.5, %v9621
  %v9623 = vmul.f32 %v9618, %v9622
  %vm9624 = vweird.f32 %v9415
  %vm9625 = vweird.f32 %v9618
  %vm9626 = vmor %vm9624, %vm9625
  %v9627 = vsel %vm9626, %v9618, %v9623
  %v9628 = vrsqrt.pop %v9416
  %v9629 = vmul.f32 %v9628, %v9416
  %v9630 = vmul.f32 %v9629, %v9628
  %v9631 = vmul.f32 0.5, %v9630
  %v9632 = vsub.f32 1.5, %v9631
  %v9633 = vmul.f32 %v9628, %v9632
  %vm9634 = vweird.f32 %v9416
  %vm9635 = vweird.f32 %v9628
  %vm9636 = vmor %vm9634, %vm9635
  %v9637 = vsel %vm9636, %v9628, %v9633
  %v9638 = vrsqrt.pop %v9417
  %v9639 = vmul.f32 %v9638, %v9417
  %v9640 = vmul.f32 %v9639, %v9638
  %v9641 = vmul.f32 0.5, %v9640
  %v9642 = vsub.f32 1.5, %v9641
  %v9643 = vmul.f32 %v9638, %v9642
  %vm9644 = vweird.f32 %v9417
  %vm9645 = vweird.f32 %v9638
  %vm9646 = vmor %vm9644, %vm9645
  %v9647 = vsel %vm9646, %v9638, %v9643
  %v9648 = vrsqrt.pop %v9418
  %v9649 = vmul.f32 %v9648, %v9418
  %v9650 = vmul.f32 %v9649, %v9648
  %v9651 = vmul.f32 0.5, %v9650
  %v9652 = vsub.f32 1.5, %v9651
  %v9653 = vmul.f32 %v9648, %v9652
  %vm9654 = vweird.f32 %v9418
  %vm9655 = vweird.f32 %v9648
  %vm9656 = vmor %vm9654, %vm9655
  %v9657 = vsel %vm9656, %v9648, %v9653
  %v9658 = vrsqrt.pop %v9419
  %v9659 = vmul.f32 %v9658, %v9419
  %v9660 = vmul.f32 %v9659, %v9658
  %v9661 = vmul.f32 0.5, %v9660
  %v9662 = vsub.f32 1.5, %v9661
  %v9663 = vmul.f32 %v9658, %v9662
  %vm9664 = vweird.f32 %v9419
  %vm9665 = vweird.f32 %v9658
  %vm9666 = vmor %vm9664, %vm9665
  %v9667 = vsel %vm9666, %v9658, %v9663
  %v9668 = vrsqrt.pop %v9420
  %v9669 = vmul.f32 %v9668, %v9420
  %v9670 = vmul.f32 %v9669, %v9668
  %v9671 = vmul.f32 0.5, %v9670
  %v9672 = vsub.f32 1.5, %v9671
  %v9673 = vmul.f32 %v9668, %v9672
  %vm9674 = vweird.f32 %v9420
  %vm9675 = vweird.f32 %v9668
  %vm9676 = vmor %vm9674, %vm9675
  %v9677 = vsel %vm9676, %v9668, %v9673
  %v9678 = vrsqrt.pop %v9421
  %v9679 = vmul.f32 %v9678, %v9421
  %v9680 = vmul.f32 %v9679, %v9678
  %v9681 = vmul.f32 0.5, %v9680
  %v9682 = vsub.f32 1.5, %v9681
  %v9683 = vmul.f32 %v9678, %v9682
  %vm9684 = vweird.f32 %v9421
  %vm9685 = vweird.f32 %v9678
  %vm9686 = vmor %vm9684, %vm9685
  %v9687 = vsel %vm9686, %v9678, %v9683
  %v9688 = vrsqrt.pop %v9422
  %v9689 = vmul.f32 %v9688, %v9422
  %v9690 = vmul.f32 %v9689, %v9688
  %v9691 = vmul.f32 0.5, %v9690
  %v9692 = vsub.f32 1.5, %v9691
  %v9693 = vmul.f32 %v9688, %v9692
  %vm9694 = vweird.f32 %v9422
  %vm9695 = vweird.f32 %v9688
  %vm9696 = vmor %vm9694, %vm9695
  %v9697 = vsel %vm9696, %v9688, %v9693
  %v9698 = vrsqrt.pop %v9423
  %v9699 = vmul.f32 %v9698, %v9423
  %v9700 = vmul.f32 %v9699, %v9698
  %v9701 = vmul.f32 0.5, %v9700
  %v9702 = vsub.f32 1.5, %v9701
  %v9703 = vmul.f32 %v9698, %v9702
  %vm9704 = vweird.f32 %v9423
  %vm9705 = vweird.f32 %v9698
  %vm9706 = vmor %vm9704, %vm9705
  %v9707 = vsel %vm9706, %v9698, %v9703
  %v9708 = vrsqrt.pop %v9424
  %v9709 = vmul.f32 %v9708, %v9424
  %v9710 = vmul.f32 %v9709, %v9708
  %v9711 = vmul.f32 0.5, %v9710
  %v9712 = vsub.f32 1.5, %v9711
  %v9713 = vmul.f32 %v9708, %v9712
  %vm9714 = vweird.f32 %v9424
  %vm9715 = vweird.f32 %v9708
  %vm9716 = vmor %vm9714, %vm9715
  %v9717 = vsel %vm9716, %v9708, %v9713
  %v9718 = vrsqrt.pop %v9425
  %v9719 = vmul.f32 %v9718, %v9425
  %v9720 = vmul.f32 %v9719, %v9718
  %v9721 = vmul.f32 0.5, %v9720
  %v9722 = vsub.f32 1.5, %v9721
  %v9723 = vmul.f32 %v9718, %v9722
  %vm9724 = vweird.f32 %v9425
  %vm9725 = vweird.f32 %v9718
  %vm9726 = vmor %vm9724, %vm9725
  %v9727 = vsel %vm9726, %v9718, %v9723
  %v9728 = vrsqrt.pop %v9426
  %v9729 = vmul.f32 %v9728, %v9426
  %v9730 = vmul.f32 %v9729, %v9728
  %v9731 = vmul.f32 0.5, %v9730
  %v9732 = vsub.f32 1.5, %v9731
  %v9733 = vmul.f32 %v9728, %v9732
  %vm9734 = vweird.f32 %v9426
  %vm9735 = vweird.f32 %v9728
  %vm9736 = vmor %vm9734, %vm9735
  %v9737 = vsel %vm9736, %v9728, %v9733
  %v9738 = vrsqrt.pop %v9427
  %v9739 = vmul.f32 %v9738, %v9427
  %v9740 = vmul.f32 %v9739, %v9738
  %v9741 = vmul.f32 0.5, %v9740
  %v9742 = vsub.f32 1.5, %v9741
  %v9743 = vmul.f32 %v9738, %v9742
  %vm9744 = vweird.f32 %v9427
  %vm9745 = vweird.f32 %v9738
  %vm9746 = vmor %vm9744, %vm9745
  %v9747 = vsel %vm9746, %v9738, %v9743
  %v9748 = vmul.f32 %v9204, %v9437
  %v9749 = vmul.f32 %v9205, %v9447
  %v9750 = vmul.f32 %v9206, %v9457
  %v9751 = vmul.f32 %v9207, %v9467
  %v9752 = vmul.f32 %v9208, %v9477
  %v9753 = vmul.f32 %v9209, %v9487
  %v9754 = vmul.f32 %v9210, %v9497
  %v9755 = vmul.f32 %v9211, %v9507
  %v9756 = vmul.f32 %v9212, %v9517
  %v9757 = vmul.f32 %v9213, %v9527
  %v9758 = vmul.f32 %v9214, %v9537
  %v9759 = vmul.f32 %v9215, %v9547
  %v9760 = vmul.f32 %v9216, %v9557
  %v9761 = vmul.f32 %v9217, %v9567
  %v9762 = vmul.f32 %v9218, %v9577
  %v9763 = vmul.f32 %v9219, %v9587
  %v9764 = vmul.f32 %v9220, %v9597
  %v9765 = vmul.f32 %v9221, %v9607
  %v9766 = vmul.f32 %v9222, %v9617
  %v9767 = vmul.f32 %v9223, %v9627
  %v9768 = vmul.f32 %v9224, %v9637
  %v9769 = vmul.f32 %v9225, %v9647
  %v9770 = vmul.f32 %v9226, %v9657
  %v9771 = vmul.f32 %v9227, %v9667
  %v9772 = vmul.f32 %v9228, %v9677
  %v9773 = vmul.f32 %v9229, %v9687
  %v9774 = vmul.f32 %v9230, %v9697
  %v9775 = vmul.f32 %v9231, %v9707
  %v9776 = vmul.f32 %v9232, %v9717
  %v9777 = vmul.f32 %v9233, %v9727
  %v9778 = vmul.f32 %v9234, %v9737
  %v9779 = vmul.f32 %v9235, %v9747
  %v9780 = vperm.slane %v95, 2
  %v9781 = vmul.f32 %v9748, %v9780
  %v9782 = vmul.f32 %v9749, %v9780
  %v9783 = vmul.f32 %v9750, %v9780
  %v9784 = vmul.f32 %v9751, %v9780
  %v9785 = vmul.f32 %v9752, %v9780
  %v9786 = vmul.f32 %v9753, %v9780
  %v9787 = vmul.f32 %v9754, %v9780
  %v9788 = vmul.f32 %v9755, %v9780
  %v9789 = vmul.f32 %v9756, %v9780
  %v9790 = vmul.f32 %v9757, %v9780
  %v9791 = vmul.f32 %v9758, %v9780
  %v9792 = vmul.f32 %v9759, %v9780
  %v9793 = vmul.f32 %v9760, %v9780
  %v9794 = vmul.f32 %v9761, %v9780
  %v9795 = vmul.f32 %v9762, %v9780
  %v9796 = vmul.f32 %v9763, %v9780
  %v9797 = vmul.f32 %v9764, %v9780
  %v9798 = vmul.f32 %v9765, %v9780
  %v9799 = vmul.f32 %v9766, %v9780
  %v9800 = vmul.f32 %v9767, %v9780
  %v9801 = vmul.f32 %v9768, %v9780
  %v9802 = vmul.f32 %v9769, %v9780
  %v9803 = vmul.f32 %v9770, %v9780
  %v9804 = vmul.f32 %v9771, %v9780
  %v9805 = vmul.f32 %v9772, %v9780
  %v9806 = vmul.f32 %v9773, %v9780
  %v9807 = vmul.f32 %v9774, %v9780
  %v9808 = vmul.f32 %v9775, %v9780
  %v9809 = vmul.f32 %v9776, %v9780
  %v9810 = vmul.f32 %v9777, %v9780
  %v9811 = vmul.f32 %v9778, %v9780
  %v9812 = vmul.f32 %v9779, %v9780
  %v9813 = vperm.slane %v95, 3
  %v9814 = vadd.f32 %v9781, %v9813
  %v9815 = vadd.f32 %v9782, %v9813
  %v9816 = vadd.f32 %v9783, %v9813
  %v9817 = vadd.f32 %v9784, %v9813
  %v9818 = vadd.f32 %v9785, %v9813
  %v9819 = vadd.f32 %v9786, %v9813
  %v9820 = vadd.f32 %v9787, %v9813
  %v9821 = vadd.f32 %v9788, %v9813
  %v9822 = vadd.f32 %v9789, %v9813
  %v9823 = vadd.f32 %v9790, %v9813
  %v9824 = vadd.f32 %v9791, %v9813
  %v9825 = vadd.f32 %v9792, %v9813
  %v9826 = vadd.f32 %v9793, %v9813
  %v9827 = vadd.f32 %v9794, %v9813
  %v9828 = vadd.f32 %v9795, %v9813
  %v9829 = vadd.f32 %v9796, %v9813
  %v9830 = vadd.f32 %v9797, %v9813
  %v9831 = vadd.f32 %v9798, %v9813
  %v9832 = vadd.f32 %v9799, %v9813
  %v9833 = vadd.f32 %v9800, %v9813
  %v9834 = vadd.f32 %v9801, %v9813
  %v9835 = vadd.f32 %v9802, %v9813
  %v9836 = vadd.f32 %v9803, %v9813
  %v9837 = vadd.f32 %v9804, %v9813
  %v9838 = vadd.f32 %v9805, %v9813
  %v9839 = vadd.f32 %v9806, %v9813
  %v9840 = vadd.f32 %v9807, %v9813
  %v9841 = vadd.f32 %v9808, %v9813
  %v9842 = vadd.f32 %v9809, %v9813
  %v9843 = vadd.f32 %v9810, %v9813
  %v9844 = vadd.f32 %v9811, %v9813
  %v9845 = vadd.f32 %v9812, %v9813
  %v9846 = vpack.c.bf16 %v9815, %v9814
  %v9847 = vpack.c.bf16 %v9817, %v9816
  %v9848 = vpack.c.bf16 %v9819, %v9818
  %v9849 = vpack.c.bf16 %v9821, %v9820
  %v9850 = vpack.c.bf16 %v9823, %v9822
  %v9851 = vpack.c.bf16 %v9825, %v9824
  %v9852 = vpack.c.bf16 %v9827, %v9826
  %v9853 = vpack.c.bf16 %v9829, %v9828
  %v9854 = vpack.c.bf16 %v9831, %v9830
  %v9855 = vpack.c.bf16 %v9833, %v9832
  %v9856 = vpack.c.bf16 %v9835, %v9834
  %v9857 = vpack.c.bf16 %v9837, %v9836
  %v9858 = vpack.c.bf16 %v9839, %v9838
  %v9859 = vpack.c.bf16 %v9841, %v9840
  %v9860 = vpack.c.bf16 %v9843, %v9842
  %v9861 = vpack.c.bf16 %v9845, %v9844
  %v9862 = vperm.slane %v95, 4
  %v9867 = vunpack.c.l.b16 %v5579
  %v9868 = vunpack.c.l.b16 %v5580
  %v9869 = vunpack.c.l.b16 %v5581
  %v9870 = vunpack.c.l.b16 %v5582
  %v9871 = vpack.c.b16 %v9868, %v9867
  %v9872 = vpack.c.b16 %v9870, %v9869
  %v9876 = vsel %vm187, %v9846, 0
  %v9879 = vsel %vm187, %v9847, 0
  %v9882 = vsel %vm187, %v9848, 0
  %v9885 = vsel %vm187, %v9849, 0
  %v9888 = vsel %vm187, %v9850, 0
  %v9891 = vsel %vm187, %v9851, 0
  %v9894 = vsel %vm187, %v9852, 0
  %v9897 = vsel %vm187, %v9853, 0
  %v9900 = vsel %vm187, %v9854, 0
  %v9903 = vsel %vm187, %v9855, 0
  %v9906 = vsel %vm187, %v9856, 0
  %v9909 = vsel %vm187, %v9857, 0
  %v9912 = vsel %vm187, %v9858, 0
  %v9915 = vsel %vm187, %v9859, 0
  %v9918 = vsel %vm187, %v9860, 0
  %v9921 = vsel %vm187, %v9861, 0
  %9923 = vmatpush.bf16.msra.mxu0 0
  %9924 = vmatpush.bf16.msra.mxu0 0
  %9925 = vmatpush.bf16.msra.mxu0 0
  %9926 = vmatpush.bf16.msra.mxu0 0
  %9927 = vmatpush.bf16.msra.mxu0 0
  %9928 = vmatpush.bf16.msra.mxu0 0
  %9929 = vmatpush.bf16.msra.mxu0 %v9872
  %9930 = vmatpush.bf16.msra.mxu0 %v9871
  %9931 = vmatmul.bf16.gmra.mxu0 %v9876
  %v9932 = vpop.f32.mrf.mxu0
  %v9933 = vadd.f32 %v9862, %v9932
  %v9934 = vpop.f32.mrf.mxu0
  %v9935 = vadd.f32 %v9862, %v9934
  %9936 = vmatmul.bf16.gmra.mxu0 %v9879
  %v9937 = vpop.f32.mrf.mxu0
  %v9938 = vadd.f32 %v9862, %v9937
  %v9939 = vpop.f32.mrf.mxu0
  %v9940 = vadd.f32 %v9862, %v9939
  %9941 = vmatmul.bf16.gmra.mxu0 %v9882
  %v9942 = vpop.f32.mrf.mxu0
  %v9943 = vadd.f32 %v9862, %v9942
  %v9944 = vpop.f32.mrf.mxu0
  %v9945 = vadd.f32 %v9862, %v9944
  %9946 = vmatmul.bf16.gmra.mxu0 %v9885
  %v9947 = vpop.f32.mrf.mxu0
  %v9948 = vadd.f32 %v9862, %v9947
  %v9949 = vpop.f32.mrf.mxu0
  %v9950 = vadd.f32 %v9862, %v9949
  %9951 = vmatmul.bf16.gmra.mxu0 %v9888
  %v9952 = vpop.f32.mrf.mxu0
  %v9953 = vadd.f32 %v9862, %v9952
  %v9954 = vpop.f32.mrf.mxu0
  %v9955 = vadd.f32 %v9862, %v9954
  %9956 = vmatmul.bf16.gmra.mxu0 %v9891
  %v9957 = vpop.f32.mrf.mxu0
  %v9958 = vadd.f32 %v9862, %v9957
  %v9959 = vpop.f32.mrf.mxu0
  %v9960 = vadd.f32 %v9862, %v9959
  %9961 = vmatmul.bf16.gmra.mxu0 %v9894
  %v9962 = vpop.f32.mrf.mxu0
  %v9963 = vadd.f32 %v9862, %v9962
  %v9964 = vpop.f32.mrf.mxu0
  %v9965 = vadd.f32 %v9862, %v9964
  %9966 = vmatmul.bf16.gmra.mxu0 %v9897
  %v9967 = vpop.f32.mrf.mxu0
  %v9968 = vadd.f32 %v9862, %v9967
  %v9969 = vpop.f32.mrf.mxu0
  %v9970 = vadd.f32 %v9862, %v9969
  %9971 = vmatmul.bf16.gmra.mxu0 %v9900
  %v9972 = vpop.f32.mrf.mxu0
  %v9973 = vadd.f32 %v9862, %v9972
  %v9974 = vpop.f32.mrf.mxu0
  %v9975 = vadd.f32 %v9862, %v9974
  %9976 = vmatmul.bf16.gmra.mxu0 %v9903
  %v9977 = vpop.f32.mrf.mxu0
  %v9978 = vadd.f32 %v9862, %v9977
  %v9979 = vpop.f32.mrf.mxu0
  %v9980 = vadd.f32 %v9862, %v9979
  %9981 = vmatmul.bf16.gmra.mxu0 %v9906
  %v9982 = vpop.f32.mrf.mxu0
  %v9983 = vadd.f32 %v9862, %v9982
  %v9984 = vpop.f32.mrf.mxu0
  %v9985 = vadd.f32 %v9862, %v9984
  %9986 = vmatmul.bf16.gmra.mxu0 %v9909
  %v9987 = vpop.f32.mrf.mxu0
  %v9988 = vadd.f32 %v9862, %v9987
  %v9989 = vpop.f32.mrf.mxu0
  %v9990 = vadd.f32 %v9862, %v9989
  %9991 = vmatmul.bf16.gmra.mxu0 %v9912
  %v9992 = vpop.f32.mrf.mxu0
  %v9993 = vadd.f32 %v9862, %v9992
  %v9994 = vpop.f32.mrf.mxu0
  %v9995 = vadd.f32 %v9862, %v9994
  %9996 = vmatmul.bf16.gmra.mxu0 %v9915
  %v9997 = vpop.f32.mrf.mxu0
  %v9998 = vadd.f32 %v9862, %v9997
  %v9999 = vpop.f32.mrf.mxu0
  %v10000 = vadd.f32 %v9862, %v9999
  %10001 = vmatmul.bf16.gmra.mxu0 %v9918
  %v10002 = vpop.f32.mrf.mxu0
  %v10003 = vadd.f32 %v9862, %v10002
  %v10004 = vpop.f32.mrf.mxu0
  %v10005 = vadd.f32 %v9862, %v10004
  %10006 = vmatmul.bf16.gmra.mxu0 %v9921
  %v10007 = vpop.f32.mrf.mxu0
  %v10008 = vadd.f32 %v9862, %v10007
  %v10009 = vpop.f32.mrf.mxu0
  %v10010 = vadd.f32 %v9862, %v10009
  %10011 = vdwg.mxu0
  %v10012 = vmax.f32 %v9933, 0.0
  %v10013 = vmax.f32 %v9935, 0.0
  %v10014 = vmax.f32 %v9938, 0.0
  %v10015 = vmax.f32 %v9940, 0.0
  %v10016 = vmax.f32 %v9943, 0.0
  %v10017 = vmax.f32 %v9945, 0.0
  %v10018 = vmax.f32 %v9948, 0.0
  %v10019 = vmax.f32 %v9950, 0.0
  %v10020 = vmax.f32 %v9953, 0.0
  %v10021 = vmax.f32 %v9955, 0.0
  %v10022 = vmax.f32 %v9958, 0.0
  %v10023 = vmax.f32 %v9960, 0.0
  %v10024 = vmax.f32 %v9963, 0.0
  %v10025 = vmax.f32 %v9965, 0.0
  %v10026 = vmax.f32 %v9968, 0.0
  %v10027 = vmax.f32 %v9970, 0.0
  %v10028 = vmax.f32 %v9973, 0.0
  %v10029 = vmax.f32 %v9975, 0.0
  %v10030 = vmax.f32 %v9978, 0.0
  %v10031 = vmax.f32 %v9980, 0.0
  %v10032 = vmax.f32 %v9983, 0.0
  %v10033 = vmax.f32 %v9985, 0.0
  %v10034 = vmax.f32 %v9988, 0.0
  %v10035 = vmax.f32 %v9990, 0.0
  %v10036 = vmax.f32 %v9993, 0.0
  %v10037 = vmax.f32 %v9995, 0.0
  %v10038 = vmax.f32 %v9998, 0.0
  %v10039 = vmax.f32 %v10000, 0.0
  %v10040 = vmax.f32 %v10003, 0.0
  %v10041 = vmax.f32 %v10005, 0.0
  %v10042 = vmax.f32 %v10008, 0.0
  %v10043 = vmax.f32 %v10010, 0.0
  %v10044 = vpack.c.bf16 %v10013, %v10012
  %v10045 = vpack.c.bf16 %v10015, %v10014
  %v10046 = vpack.c.bf16 %v10017, %v10016
  %v10047 = vpack.c.bf16 %v10019, %v10018
  %v10048 = vpack.c.bf16 %v10021, %v10020
  %v10049 = vpack.c.bf16 %v10023, %v10022
  %v10050 = vpack.c.bf16 %v10025, %v10024
  %v10051 = vpack.c.bf16 %v10027, %v10026
  %v10052 = vpack.c.bf16 %v10029, %v10028
  %v10053 = vpack.c.bf16 %v10031, %v10030
  %v10054 = vpack.c.bf16 %v10033, %v10032
  %v10055 = vpack.c.bf16 %v10035, %v10034
  %v10056 = vpack.c.bf16 %v10037, %v10036
  %v10057 = vpack.c.bf16 %v10039, %v10038
  %v10058 = vpack.c.bf16 %v10041, %v10040
  %v10059 = vpack.c.bf16 %v10043, %v10042
  %v10060 = vperm.slane %v95, 5
  %v10069 = vunpack.c.l.b16 %v5584
  %v10070 = vunpack.c.l.b16 %v5585
  %v10071 = vunpack.c.l.b16 %v5586
  %v10072 = vunpack.c.l.b16 %v5587
  %v10073 = vunpack.c.l.b16 %v5588
  %v10074 = vunpack.c.l.b16 %v5589
  %v10075 = vunpack.c.l.b16 %v5590
  %v10076 = vunpack.c.l.b16 %v5591
  %v10077 = vpack.c.b16 %v10070, %v10069
  %v10078 = vpack.c.b16 %v10072, %v10071
  %v10079 = vpack.c.b16 %v10074, %v10073
  %v10080 = vpack.c.b16 %v10076, %v10075
  %v10086 = vsel %vm4628, %v10044, 0
  %v10089 = vsel %vm4628, %v10045, 0
  %v10092 = vsel %vm4628, %v10046, 0
  %v10095 = vsel %vm4628, %v10047, 0
  %v10098 = vsel %vm4628, %v10048, 0
  %v10101 = vsel %vm4628, %v10049, 0
  %v10104 = vsel %vm4628, %v10050, 0
  %v10107 = vsel %vm4628, %v10051, 0
  %v10110 = vsel %vm4628, %v10052, 0
  %v10113 = vsel %vm4628, %v10053, 0
  %v10116 = vsel %vm4628, %v10054, 0
  %v10119 = vsel %vm4628, %v10055, 0
  %v10122 = vsel %vm4628, %v10056, 0
  %v10125 = vsel %vm4628, %v10057, 0
  %v10128 = vsel %vm4628, %v10058, 0
  %v10131 = vsel %vm4628, %v10059, 0
  %10133 = vmatpush.bf16.msra.mxu0 0
  %10134 = vmatpush.bf16.msra.mxu0 0
  %10135 = vmatpush.bf16.msra.mxu0 0
  %10136 = vmatpush.bf16.msra.mxu0 0
  %10137 = vmatpush.bf16.msra.mxu0 %v10080
  %10138 = vmatpush.bf16.msra.mxu0 %v10079
  %10139 = vmatpush.bf16.msra.mxu0 %v10078
  %10140 = vmatpush.bf16.msra.mxu0 %v10077
  %10141 = vmatmul.bf16.gmra.mxu0 %v10086
  %v10142 = vpop.f32.mrf.mxu0
  %v10143 = vadd.f32 %v10060, %v10142
  %v10144 = vpop.f32.mrf.mxu0
  %v10145 = vadd.f32 %v10060, %v10144
  %10146 = vmatmul.bf16.gmra.mxu0 %v10089
  %v10147 = vpop.f32.mrf.mxu0
  %v10148 = vadd.f32 %v10060, %v10147
  %v10149 = vpop.f32.mrf.mxu0
  %v10150 = vadd.f32 %v10060, %v10149
  %10151 = vmatmul.bf16.gmra.mxu0 %v10092
  %v10152 = vpop.f32.mrf.mxu0
  %v10153 = vadd.f32 %v10060, %v10152
  %v10154 = vpop.f32.mrf.mxu0
  %v10155 = vadd.f32 %v10060, %v10154
  %10156 = vmatmul.bf16.gmra.mxu0 %v10095
  %v10157 = vpop.f32.mrf.mxu0
  %v10158 = vadd.f32 %v10060, %v10157
  %v10159 = vpop.f32.mrf.mxu0
  %v10160 = vadd.f32 %v10060, %v10159
  %10161 = vmatmul.bf16.gmra.mxu0 %v10098
  %v10162 = vpop.f32.mrf.mxu0
  %v10163 = vadd.f32 %v10060, %v10162
  %v10164 = vpop.f32.mrf.mxu0
  %v10165 = vadd.f32 %v10060, %v10164
  %10166 = vmatmul.bf16.gmra.mxu0 %v10101
  %v10167 = vpop.f32.mrf.mxu0
  %v10168 = vadd.f32 %v10060, %v10167
  %v10169 = vpop.f32.mrf.mxu0
  %v10170 = vadd.f32 %v10060, %v10169
  %10171 = vmatmul.bf16.gmra.mxu0 %v10104
  %v10172 = vpop.f32.mrf.mxu0
  %v10173 = vadd.f32 %v10060, %v10172
  %v10174 = vpop.f32.mrf.mxu0
  %v10175 = vadd.f32 %v10060, %v10174
  %10176 = vmatmul.bf16.gmra.mxu0 %v10107
  %v10177 = vpop.f32.mrf.mxu0
  %v10178 = vadd.f32 %v10060, %v10177
  %v10179 = vpop.f32.mrf.mxu0
  %v10180 = vadd.f32 %v10060, %v10179
  %10181 = vmatmul.bf16.gmra.mxu0 %v10110
  %v10182 = vpop.f32.mrf.mxu0
  %v10183 = vadd.f32 %v10060, %v10182
  %v10184 = vpop.f32.mrf.mxu0
  %v10185 = vadd.f32 %v10060, %v10184
  %10186 = vmatmul.bf16.gmra.mxu0 %v10113
  %v10187 = vpop.f32.mrf.mxu0
  %v10188 = vadd.f32 %v10060, %v10187
  %v10189 = vpop.f32.mrf.mxu0
  %v10190 = vadd.f32 %v10060, %v10189
  %10191 = vmatmul.bf16.gmra.mxu0 %v10116
  %v10192 = vpop.f32.mrf.mxu0
  %v10193 = vadd.f32 %v10060, %v10192
  %v10194 = vpop.f32.mrf.mxu0
  %v10195 = vadd.f32 %v10060, %v10194
  %10196 = vmatmul.bf16.gmra.mxu0 %v10119
  %v10197 = vpop.f32.mrf.mxu0
  %v10198 = vadd.f32 %v10060, %v10197
  %v10199 = vpop.f32.mrf.mxu0
  %v10200 = vadd.f32 %v10060, %v10199
  %10201 = vmatmul.bf16.gmra.mxu0 %v10122
  %v10202 = vpop.f32.mrf.mxu0
  %v10203 = vadd.f32 %v10060, %v10202
  %v10204 = vpop.f32.mrf.mxu0
  %v10205 = vadd.f32 %v10060, %v10204
  %10206 = vmatmul.bf16.gmra.mxu0 %v10125
  %v10207 = vpop.f32.mrf.mxu0
  %v10208 = vadd.f32 %v10060, %v10207
  %v10209 = vpop.f32.mrf.mxu0
  %v10210 = vadd.f32 %v10060, %v10209
  %10211 = vmatmul.bf16.gmra.mxu0 %v10128
  %v10212 = vpop.f32.mrf.mxu0
  %v10213 = vadd.f32 %v10060, %v10212
  %v10214 = vpop.f32.mrf.mxu0
  %v10215 = vadd.f32 %v10060, %v10214
  %10216 = vmatmul.bf16.gmra.mxu0 %v10131
  %v10217 = vpop.f32.mrf.mxu0
  %v10218 = vadd.f32 %v10060, %v10217
  %v10219 = vpop.f32.mrf.mxu0
  %v10220 = vadd.f32 %v10060, %v10219
  %10221 = vdwg.mxu0
  %v10222 = vadd.f32 %v9814, %v10143
  %v10223 = vadd.f32 %v9815, %v10145
  %v10224 = vadd.f32 %v9816, %v10148
  %v10225 = vadd.f32 %v9817, %v10150
  %v10226 = vadd.f32 %v9818, %v10153
  %v10227 = vadd.f32 %v9819, %v10155
  %v10228 = vadd.f32 %v9820, %v10158
  %v10229 = vadd.f32 %v9821, %v10160
  %v10230 = vadd.f32 %v9822, %v10163
  %v10231 = vadd.f32 %v9823, %v10165
  %v10232 = vadd.f32 %v9824, %v10168
  %v10233 = vadd.f32 %v9825, %v10170
  %v10234 = vadd.f32 %v9826, %v10173
  %v10235 = vadd.f32 %v9827, %v10175
  %v10236 = vadd.f32 %v9828, %v10178
  %v10237 = vadd.f32 %v9829, %v10180
  %v10238 = vadd.f32 %v9830, %v10183
  %v10239 = vadd.f32 %v9831, %v10185
  %v10240 = vadd.f32 %v9832, %v10188
  %v10241 = vadd.f32 %v9833, %v10190
  %v10242 = vadd.f32 %v9834, %v10193
  %v10243 = vadd.f32 %v9835, %v10195
  %v10244 = vadd.f32 %v9836, %v10198
  %v10245 = vadd.f32 %v9837, %v10200
  %v10246 = vadd.f32 %v9838, %v10203
  %v10247 = vadd.f32 %v9839, %v10205
  %v10248 = vadd.f32 %v9840, %v10208
  %v10249 = vadd.f32 %v9841, %v10210
  %v10250 = vadd.f32 %v9842, %v10213
  %v10251 = vadd.f32 %v9843, %v10215
  %v10252 = vadd.f32 %v9844, %v10218
  %v10253 = vadd.f32 %v9845, %v10220
  %v10254 = vsel %vm187, %v10222, 0.0
  %10255 = vadd.xlane.f32.xlu0 %v10254
  %v10256 = vpop.xlane.xlu0 %10255
  %v10257 = vsel %vm187, %v10223, 0.0
  %10258 = vadd.xlane.f32.xlu0 %v10257
  %v10259 = vpop.xlane.xlu0 %10258
  %v10260 = vsel %vm187, %v10224, 0.0
  %10261 = vadd.xlane.f32.xlu0 %v10260
  %v10262 = vpop.xlane.xlu0 %10261
  %v10263 = vsel %vm187, %v10225, 0.0
  %10264 = vadd.xlane.f32.xlu0 %v10263
  %v10265 = vpop.xlane.xlu0 %10264
  %v10266 = vsel %vm187, %v10226, 0.0
  %10267 = vadd.xlane.f32.xlu0 %v10266
  %v10268 = vpop.xlane.xlu0 %10267
  %v10269 = vsel %vm187, %v10227, 0.0
  %10270 = vadd.xlane.f32.xlu0 %v10269
  %v10271 = vpop.xlane.xlu0 %10270
  %v10272 = vsel %vm187, %v10228, 0.0
  %10273 = vadd.xlane.f32.xlu0 %v10272
  %v10274 = vpop.xlane.xlu0 %10273
  %v10275 = vsel %vm187, %v10229, 0.0
  %10276 = vadd.xlane.f32.xlu0 %v10275
  %v10277 = vpop.xlane.xlu0 %10276
  %v10278 = vsel %vm187, %v10230, 0.0
  %10279 = vadd.xlane.f32.xlu0 %v10278
  %v10280 = vpop.xlane.xlu0 %10279
  %v10281 = vsel %vm187, %v10231, 0.0
  %10282 = vadd.xlane.f32.xlu0 %v10281
  %v10283 = vpop.xlane.xlu0 %10282
  %v10284 = vsel %vm187, %v10232, 0.0
  %10285 = vadd.xlane.f32.xlu0 %v10284
  %v10286 = vpop.xlane.xlu0 %10285
  %v10287 = vsel %vm187, %v10233, 0.0
  %10288 = vadd.xlane.f32.xlu0 %v10287
  %v10289 = vpop.xlane.xlu0 %10288
  %v10290 = vsel %vm187, %v10234, 0.0
  %10291 = vadd.xlane.f32.xlu0 %v10290
  %v10292 = vpop.xlane.xlu0 %10291
  %v10293 = vsel %vm187, %v10235, 0.0
  %10294 = vadd.xlane.f32.xlu0 %v10293
  %v10295 = vpop.xlane.xlu0 %10294
  %v10296 = vsel %vm187, %v10236, 0.0
  %10297 = vadd.xlane.f32.xlu0 %v10296
  %v10298 = vpop.xlane.xlu0 %10297
  %v10299 = vsel %vm187, %v10237, 0.0
  %10300 = vadd.xlane.f32.xlu0 %v10299
  %v10301 = vpop.xlane.xlu0 %10300
  %v10302 = vsel %vm187, %v10238, 0.0
  %10303 = vadd.xlane.f32.xlu0 %v10302
  %v10304 = vpop.xlane.xlu0 %10303
  %v10305 = vsel %vm187, %v10239, 0.0
  %10306 = vadd.xlane.f32.xlu0 %v10305
  %v10307 = vpop.xlane.xlu0 %10306
  %v10308 = vsel %vm187, %v10240, 0.0
  %10309 = vadd.xlane.f32.xlu0 %v10308
  %v10310 = vpop.xlane.xlu0 %10309
  %v10311 = vsel %vm187, %v10241, 0.0
  %10312 = vadd.xlane.f32.xlu0 %v10311
  %v10313 = vpop.xlane.xlu0 %10312
  %v10314 = vsel %vm187, %v10242, 0.0
  %10315 = vadd.xlane.f32.xlu0 %v10314
  %v10316 = vpop.xlane.xlu0 %10315
  %v10317 = vsel %vm187, %v10243, 0.0
  %10318 = vadd.xlane.f32.xlu0 %v10317
  %v10319 = vpop.xlane.xlu0 %10318
  %v10320 = vsel %vm187, %v10244, 0.0
  %10321 = vadd.xlane.f32.xlu0 %v10320
  %v10322 = vpop.xlane.xlu0 %10321
  %v10323 = vsel %vm187, %v10245, 0.0
  %10324 = vadd.xlane.f32.xlu0 %v10323
  %v10325 = vpop.xlane.xlu0 %10324
  %v10326 = vsel %vm187, %v10246, 0.0
  %10327 = vadd.xlane.f32.xlu0 %v10326
  %v10328 = vpop.xlane.xlu0 %10327
  %v10329 = vsel %vm187, %v10247, 0.0
  %10330 = vadd.xlane.f32.xlu0 %v10329
  %v10331 = vpop.xlane.xlu0 %10330
  %v10332 = vsel %vm187, %v10248, 0.0
  %10333 = vadd.xlane.f32.xlu0 %v10332
  %v10334 = vpop.xlane.xlu0 %10333
  %v10335 = vsel %vm187, %v10249, 0.0
  %10336 = vadd.xlane.f32.xlu0 %v10335
  %v10337 = vpop.xlane.xlu0 %10336
  %v10338 = vsel %vm187, %v10250, 0.0
  %10339 = vadd.xlane.f32.xlu0 %v10338
  %v10340 = vpop.xlane.xlu0 %10339
  %v10341 = vsel %vm187, %v10251, 0.0
  %10342 = vadd.xlane.f32.xlu0 %v10341
  %v10343 = vpop.xlane.xlu0 %10342
  %v10344 = vsel %vm187, %v10252, 0.0
  %10345 = vadd.xlane.f32.xlu0 %v10344
  %v10346 = vpop.xlane.xlu0 %10345
  %v10347 = vsel %vm187, %v10253, 0.0
  %10348 = vadd.xlane.f32.xlu0 %v10347
  %v10349 = vpop.xlane.xlu0 %10348
  %v10350 = vmul.f32 %v10256, %v3714
  %v10351 = vmul.f32 %v10259, %v3714
  %v10352 = vmul.f32 %v10262, %v3714
  %v10353 = vmul.f32 %v10265, %v3714
  %v10354 = vmul.f32 %v10268, %v3714
  %v10355 = vmul.f32 %v10271, %v3714
  %v10356 = vmul.f32 %v10274, %v3714
  %v10357 = vmul.f32 %v10277, %v3714
  %v10358 = vmul.f32 %v10280, %v3714
  %v10359 = vmul.f32 %v10283, %v3714
  %v10360 = vmul.f32 %v10286, %v3714
  %v10361 = vmul.f32 %v10289, %v3714
  %v10362 = vmul.f32 %v10292, %v3714
  %v10363 = vmul.f32 %v10295, %v3714
  %v10364 = vmul.f32 %v10298, %v3714
  %v10365 = vmul.f32 %v10301, %v3714
  %v10366 = vmul.f32 %v10304, %v3714
  %v10367 = vmul.f32 %v10307, %v3714
  %v10368 = vmul.f32 %v10310, %v3714
  %v10369 = vmul.f32 %v10313, %v3714
  %v10370 = vmul.f32 %v10316, %v3714
  %v10371 = vmul.f32 %v10319, %v3714
  %v10372 = vmul.f32 %v10322, %v3714
  %v10373 = vmul.f32 %v10325, %v3714
  %v10374 = vmul.f32 %v10328, %v3714
  %v10375 = vmul.f32 %v10331, %v3714
  %v10376 = vmul.f32 %v10334, %v3714
  %v10377 = vmul.f32 %v10337, %v3714
  %v10378 = vmul.f32 %v10340, %v3714
  %v10379 = vmul.f32 %v10343, %v3714
  %v10380 = vmul.f32 %v10346, %v3714
  %v10381 = vmul.f32 %v10349, %v3714
  %v10382 = vsub.f32 %v10222, %v10350
  %v10383 = vsub.f32 %v10223, %v10351
  %v10384 = vsub.f32 %v10224, %v10352
  %v10385 = vsub.f32 %v10225, %v10353
  %v10386 = vsub.f32 %v10226, %v10354
  %v10387 = vsub.f32 %v10227, %v10355
  %v10388 = vsub.f32 %v10228, %v10356
  %v10389 = vsub.f32 %v10229, %v10357
  %v10390 = vsub.f32 %v10230, %v10358
  %v10391 = vsub.f32 %v10231, %v10359
  %v10392 = vsub.f32 %v10232, %v10360
  %v10393 = vsub.f32 %v10233, %v10361
  %v10394 = vsub.f32 %v10234, %v10362
  %v10395 = vsub.f32 %v10235, %v10363
  %v10396 = vsub.f32 %v10236, %v10364
  %v10397 = vsub.f32 %v10237, %v10365
  %v10398 = vsub.f32 %v10238, %v10366
  %v10399 = vsub.f32 %v10239, %v10367
  %v10400 = vsub.f32 %v10240, %v10368
  %v10401 = vsub.f32 %v10241, %v10369
  %v10402 = vsub.f32 %v10242, %v10370
  %v10403 = vsub.f32 %v10243, %v10371
  %v10404 = vsub.f32 %v10244, %v10372
  %v10405 = vsub.f32 %v10245, %v10373
  %v10406 = vsub.f32 %v10246, %v10374
  %v10407 = vsub.f32 %v10247, %v10375
  %v10408 = vsub.f32 %v10248, %v10376
  %v10409 = vsub.f32 %v10249, %v10377
  %v10410 = vsub.f32 %v10250, %v10378
  %v10411 = vsub.f32 %v10251, %v10379
  %v10412 = vsub.f32 %v10252, %v10380
  %v10413 = vsub.f32 %v10253, %v10381
  %v10414 = vmul.f32 %v10382, %v10382
  %v10415 = vmul.f32 %v10383, %v10383
  %v10416 = vmul.f32 %v10384, %v10384
  %v10417 = vmul.f32 %v10385, %v10385
  %v10418 = vmul.f32 %v10386, %v10386
  %v10419 = vmul.f32 %v10387, %v10387
  %v10420 = vmul.f32 %v10388, %v10388
  %v10421 = vmul.f32 %v10389, %v10389
  %v10422 = vmul.f32 %v10390, %v10390
  %v10423 = vmul.f32 %v10391, %v10391
  %v10424 = vmul.f32 %v10392, %v10392
  %v10425 = vmul.f32 %v10393, %v10393
  %v10426 = vmul.f32 %v10394, %v10394
  %v10427 = vmul.f32 %v10395, %v10395
  %v10428 = vmul.f32 %v10396, %v10396
  %v10429 = vmul.f32 %v10397, %v10397
  %v10430 = vmul.f32 %v10398, %v10398
  %v10431 = vmul.f32 %v10399, %v10399
  %v10432 = vmul.f32 %v10400, %v10400
  %v10433 = vmul.f32 %v10401, %v10401
  %v10434 = vmul.f32 %v10402, %v10402
  %v10435 = vmul.f32 %v10403, %v10403
  %v10436 = vmul.f32 %v10404, %v10404
  %v10437 = vmul.f32 %v10405, %v10405
  %v10438 = vmul.f32 %v10406, %v10406
  %v10439 = vmul.f32 %v10407, %v10407
  %v10440 = vmul.f32 %v10408, %v10408
  %v10441 = vmul.f32 %v10409, %v10409
  %v10442 = vmul.f32 %v10410, %v10410
  %v10443 = vmul.f32 %v10411, %v10411
  %v10444 = vmul.f32 %v10412, %v10412
  %v10445 = vmul.f32 %v10413, %v10413
  %v10446 = vsel %vm187, %v10414, 0.0
  %10447 = vadd.xlane.f32.xlu0 %v10446
  %v10448 = vpop.xlane.xlu0 %10447
  %v10449 = vsel %vm187, %v10415, 0.0
  %10450 = vadd.xlane.f32.xlu0 %v10449
  %v10451 = vpop.xlane.xlu0 %10450
  %v10452 = vsel %vm187, %v10416, 0.0
  %10453 = vadd.xlane.f32.xlu0 %v10452
  %v10454 = vpop.xlane.xlu0 %10453
  %v10455 = vsel %vm187, %v10417, 0.0
  %10456 = vadd.xlane.f32.xlu0 %v10455
  %v10457 = vpop.xlane.xlu0 %10456
  %v10458 = vsel %vm187, %v10418, 0.0
  %10459 = vadd.xlane.f32.xlu0 %v10458
  %v10460 = vpop.xlane.xlu0 %10459
  %v10461 = vsel %vm187, %v10419, 0.0
  %10462 = vadd.xlane.f32.xlu0 %v10461
  %v10463 = vpop.xlane.xlu0 %10462
  %v10464 = vsel %vm187, %v10420, 0.0
  %10465 = vadd.xlane.f32.xlu0 %v10464
  %v10466 = vpop.xlane.xlu0 %10465
  %v10467 = vsel %vm187, %v10421, 0.0
  %10468 = vadd.xlane.f32.xlu0 %v10467
  %v10469 = vpop.xlane.xlu0 %10468
  %v10470 = vsel %vm187, %v10422, 0.0
  %10471 = vadd.xlane.f32.xlu0 %v10470
  %v10472 = vpop.xlane.xlu0 %10471
  %v10473 = vsel %vm187, %v10423, 0.0
  %10474 = vadd.xlane.f32.xlu0 %v10473
  %v10475 = vpop.xlane.xlu0 %10474
  %v10476 = vsel %vm187, %v10424, 0.0
  %10477 = vadd.xlane.f32.xlu0 %v10476
  %v10478 = vpop.xlane.xlu0 %10477
  %v10479 = vsel %vm187, %v10425, 0.0
  %10480 = vadd.xlane.f32.xlu0 %v10479
  %v10481 = vpop.xlane.xlu0 %10480
  %v10482 = vsel %vm187, %v10426, 0.0
  %10483 = vadd.xlane.f32.xlu0 %v10482
  %v10484 = vpop.xlane.xlu0 %10483
  %v10485 = vsel %vm187, %v10427, 0.0
  %10486 = vadd.xlane.f32.xlu0 %v10485
  %v10487 = vpop.xlane.xlu0 %10486
  %v10488 = vsel %vm187, %v10428, 0.0
  %10489 = vadd.xlane.f32.xlu0 %v10488
  %v10490 = vpop.xlane.xlu0 %10489
  %v10491 = vsel %vm187, %v10429, 0.0
  %10492 = vadd.xlane.f32.xlu0 %v10491
  %v10493 = vpop.xlane.xlu0 %10492
  %v10494 = vsel %vm187, %v10430, 0.0
  %10495 = vadd.xlane.f32.xlu0 %v10494
  %v10496 = vpop.xlane.xlu0 %10495
  %v10497 = vsel %vm187, %v10431, 0.0
  %10498 = vadd.xlane.f32.xlu0 %v10497
  %v10499 = vpop.xlane.xlu0 %10498
  %v10500 = vsel %vm187, %v10432, 0.0
  %10501 = vadd.xlane.f32.xlu0 %v10500
  %v10502 = vpop.xlane.xlu0 %10501
  %v10503 = vsel %vm187, %v10433, 0.0
  %10504 = vadd.xlane.f32.xlu0 %v10503
  %v10505 = vpop.xlane.xlu0 %10504
  %v10506 = vsel %vm187, %v10434, 0.0
  %10507 = vadd.xlane.f32.xlu0 %v10506
  %v10508 = vpop.xlane.xlu0 %10507
  %v10509 = vsel %vm187, %v10435, 0.0
  %10510 = vadd.xlane.f32.xlu0 %v10509
  %v10511 = vpop.xlane.xlu0 %10510
  %v10512 = vsel %vm187, %v10436, 0.0
  %10513 = vadd.xlane.f32.xlu0 %v10512
  %v10514 = vpop.xlane.xlu0 %10513
  %v10515 = vsel %vm187, %v10437, 0.0
  %10516 = vadd.xlane.f32.xlu0 %v10515
  %v10517 = vpop.xlane.xlu0 %10516
  %v10518 = vsel %vm187, %v10438, 0.0
  %10519 = vadd.xlane.f32.xlu0 %v10518
  %v10520 = vpop.xlane.xlu0 %10519
  %v10521 = vsel %vm187, %v10439, 0.0
  %10522 = vadd.xlane.f32.xlu0 %v10521
  %v10523 = vpop.xlane.xlu0 %10522
  %v10524 = vsel %vm187, %v10440, 0.0
  %10525 = vadd.xlane.f32.xlu0 %v10524
  %v10526 = vpop.xlane.xlu0 %10525
  %v10527 = vsel %vm187, %v10441, 0.0
  %10528 = vadd.xlane.f32.xlu0 %v10527
  %v10529 = vpop.xlane.xlu0 %10528
  %v10530 = vsel %vm187, %v10442, 0.0
  %10531 = vadd.xlane.f32.xlu0 %v10530
  %v10532 = vpop.xlane.xlu0 %10531
  %v10533 = vsel %vm187, %v10443, 0.0
  %10534 = vadd.xlane.f32.xlu0 %v10533
  %v10535 = vpop.xlane.xlu0 %10534
  %v10536 = vsel %vm187, %v10444, 0.0
  %10537 = vadd.xlane.f32.xlu0 %v10536
  %v10538 = vpop.xlane.xlu0 %10537
  %v10539 = vsel %vm187, %v10445, 0.0
  %10540 = vadd.xlane.f32.xlu0 %v10539
  %v10541 = vpop.xlane.xlu0 %10540
  %v10542 = vmul.f32 %v10448, %v3714
  %v10543 = vmul.f32 %v10451, %v3714
  %v10544 = vmul.f32 %v10454, %v3714
  %v10545 = vmul.f32 %v10457, %v3714
  %v10546 = vmul.f32 %v10460, %v3714
  %v10547 = vmul.f32 %v10463, %v3714
  %v10548 = vmul.f32 %v10466, %v3714
  %v10549 = vmul.f32 %v10469, %v3714
  %v10550 = vmul.f32 %v10472, %v3714
  %v10551 = vmul.f32 %v10475, %v3714
  %v10552 = vmul.f32 %v10478, %v3714
  %v10553 = vmul.f32 %v10481, %v3714
  %v10554 = vmul.f32 %v10484, %v3714
  %v10555 = vmul.f32 %v10487, %v3714
  %v10556 = vmul.f32 %v10490, %v3714
  %v10557 = vmul.f32 %v10493, %v3714
  %v10558 = vmul.f32 %v10496, %v3714
  %v10559 = vmul.f32 %v10499, %v3714
  %v10560 = vmul.f32 %v10502, %v3714
  %v10561 = vmul.f32 %v10505, %v3714
  %v10562 = vmul.f32 %v10508, %v3714
  %v10563 = vmul.f32 %v10511, %v3714
  %v10564 = vmul.f32 %v10514, %v3714
  %v10565 = vmul.f32 %v10517, %v3714
  %v10566 = vmul.f32 %v10520, %v3714
  %v10567 = vmul.f32 %v10523, %v3714
  %v10568 = vmul.f32 %v10526, %v3714
  %v10569 = vmul.f32 %v10529, %v3714
  %v10570 = vmul.f32 %v10532, %v3714
  %v10571 = vmul.f32 %v10535, %v3714
  %v10572 = vmul.f32 %v10538, %v3714
  %v10573 = vmul.f32 %v10541, %v3714
  %v10574 = vadd.f32 %v10542, 1e-05
  %v10575 = vadd.f32 %v10543, 1e-05
  %v10576 = vadd.f32 %v10544, 1e-05
  %v10577 = vadd.f32 %v10545, 1e-05
  %v10578 = vadd.f32 %v10546, 1e-05
  %v10579 = vadd.f32 %v10547, 1e-05
  %v10580 = vadd.f32 %v10548, 1e-05
  %v10581 = vadd.f32 %v10549, 1e-05
  %v10582 = vadd.f32 %v10550, 1e-05
  %v10583 = vadd.f32 %v10551, 1e-05
  %v10584 = vadd.f32 %v10552, 1e-05
  %v10585 = vadd.f32 %v10553, 1e-05
  %v10586 = vadd.f32 %v10554, 1e-05
  %v10587 = vadd.f32 %v10555, 1e-05
  %v10588 = vadd.f32 %v10556, 1e-05
  %v10589 = vadd.f32 %v10557, 1e-05
  %v10590 = vadd.f32 %v10558, 1e-05
  %v10591 = vadd.f32 %v10559, 1e-05
  %v10592 = vadd.f32 %v10560, 1e-05
  %v10593 = vadd.f32 %v10561, 1e-05
  %v10594 = vadd.f32 %v10562, 1e-05
  %v10595 = vadd.f32 %v10563, 1e-05
  %v10596 = vadd.f32 %v10564, 1e-05
  %v10597 = vadd.f32 %v10565, 1e-05
  %v10598 = vadd.f32 %v10566, 1e-05
  %v10599 = vadd.f32 %v10567, 1e-05
  %v10600 = vadd.f32 %v10568, 1e-05
  %v10601 = vadd.f32 %v10569, 1e-05
  %v10602 = vadd.f32 %v10570, 1e-05
  %v10603 = vadd.f32 %v10571, 1e-05
  %v10604 = vadd.f32 %v10572, 1e-05
  %v10605 = vadd.f32 %v10573, 1e-05
  %v10606 = vrsqrt.pop %v10574
  %v10607 = vmul.f32 %v10606, %v10574
  %v10608 = vmul.f32 %v10607, %v10606
  %v10609 = vmul.f32 0.5, %v10608
  %v10610 = vsub.f32 1.5, %v10609
  %v10611 = vmul.f32 %v10606, %v10610
  %vm10612 = vweird.f32 %v10574
  %vm10613 = vweird.f32 %v10606
  %vm10614 = vmor %vm10612, %vm10613
  %v10615 = vsel %vm10614, %v10606, %v10611
  %v10616 = vrsqrt.pop %v10575
  %v10617 = vmul.f32 %v10616, %v10575
  %v10618 = vmul.f32 %v10617, %v10616
  %v10619 = vmul.f32 0.5, %v10618
  %v10620 = vsub.f32 1.5, %v10619
  %v10621 = vmul.f32 %v10616, %v10620
  %vm10622 = vweird.f32 %v10575
  %vm10623 = vweird.f32 %v10616
  %vm10624 = vmor %vm10622, %vm10623
  %v10625 = vsel %vm10624, %v10616, %v10621
  %v10626 = vrsqrt.pop %v10576
  %v10627 = vmul.f32 %v10626, %v10576
  %v10628 = vmul.f32 %v10627, %v10626
  %v10629 = vmul.f32 0.5, %v10628
  %v10630 = vsub.f32 1.5, %v10629
  %v10631 = vmul.f32 %v10626, %v10630
  %vm10632 = vweird.f32 %v10576
  %vm10633 = vweird.f32 %v10626
  %vm10634 = vmor %vm10632, %vm10633
  %v10635 = vsel %vm10634, %v10626, %v10631
  %v10636 = vrsqrt.pop %v10577
  %v10637 = vmul.f32 %v10636, %v10577
  %v10638 = vmul.f32 %v10637, %v10636
  %v10639 = vmul.f32 0.5, %v10638
  %v10640 = vsub.f32 1.5, %v10639
  %v10641 = vmul.f32 %v10636, %v10640
  %vm10642 = vweird.f32 %v10577
  %vm10643 = vweird.f32 %v10636
  %vm10644 = vmor %vm10642, %vm10643
  %v10645 = vsel %vm10644, %v10636, %v10641
  %v10646 = vrsqrt.pop %v10578
  %v10647 = vmul.f32 %v10646, %v10578
  %v10648 = vmul.f32 %v10647, %v10646
  %v10649 = vmul.f32 0.5, %v10648
  %v10650 = vsub.f32 1.5, %v10649
  %v10651 = vmul.f32 %v10646, %v10650
  %vm10652 = vweird.f32 %v10578
  %vm10653 = vweird.f32 %v10646
  %vm10654 = vmor %vm10652, %vm10653
  %v10655 = vsel %vm10654, %v10646, %v10651
  %v10656 = vrsqrt.pop %v10579
  %v10657 = vmul.f32 %v10656, %v10579
  %v10658 = vmul.f32 %v10657, %v10656
  %v10659 = vmul.f32 0.5, %v10658
  %v10660 = vsub.f32 1.5, %v10659
  %v10661 = vmul.f32 %v10656, %v10660
  %vm10662 = vweird.f32 %v10579
  %vm10663 = vweird.f32 %v10656
  %vm10664 = vmor %vm10662, %vm10663
  %v10665 = vsel %vm10664, %v10656, %v10661
  %v10666 = vrsqrt.pop %v10580
  %v10667 = vmul.f32 %v10666, %v10580
  %v10668 = vmul.f32 %v10667, %v10666
  %v10669 = vmul.f32 0.5, %v10668
  %v10670 = vsub.f32 1.5, %v10669
  %v10671 = vmul.f32 %v10666, %v10670
  %vm10672 = vweird.f32 %v10580
  %vm10673 = vweird.f32 %v10666
  %vm10674 = vmor %vm10672, %vm10673
  %v10675 = vsel %vm10674, %v10666, %v10671
  %v10676 = vrsqrt.pop %v10581
  %v10677 = vmul.f32 %v10676, %v10581
  %v10678 = vmul.f32 %v10677, %v10676
  %v10679 = vmul.f32 0.5, %v10678
  %v10680 = vsub.f32 1.5, %v10679
  %v10681 = vmul.f32 %v10676, %v10680
  %vm10682 = vweird.f32 %v10581
  %vm10683 = vweird.f32 %v10676
  %vm10684 = vmor %vm10682, %vm10683
  %v10685 = vsel %vm10684, %v10676, %v10681
  %v10686 = vrsqrt.pop %v10582
  %v10687 = vmul.f32 %v10686, %v10582
  %v10688 = vmul.f32 %v10687, %v10686
  %v10689 = vmul.f32 0.5, %v10688
  %v10690 = vsub.f32 1.5, %v10689
  %v10691 = vmul.f32 %v10686, %v10690
  %vm10692 = vweird.f32 %v10582
  %vm10693 = vweird.f32 %v10686
  %vm10694 = vmor %vm10692, %vm10693
  %v10695 = vsel %vm10694, %v10686, %v10691
  %v10696 = vrsqrt.pop %v10583
  %v10697 = vmul.f32 %v10696, %v10583
  %v10698 = vmul.f32 %v10697, %v10696
  %v10699 = vmul.f32 0.5, %v10698
  %v10700 = vsub.f32 1.5, %v10699
  %v10701 = vmul.f32 %v10696, %v10700
  %vm10702 = vweird.f32 %v10583
  %vm10703 = vweird.f32 %v10696
  %vm10704 = vmor %vm10702, %vm10703
  %v10705 = vsel %vm10704, %v10696, %v10701
  %v10706 = vrsqrt.pop %v10584
  %v10707 = vmul.f32 %v10706, %v10584
  %v10708 = vmul.f32 %v10707, %v10706
  %v10709 = vmul.f32 0.5, %v10708
  %v10710 = vsub.f32 1.5, %v10709
  %v10711 = vmul.f32 %v10706, %v10710
  %vm10712 = vweird.f32 %v10584
  %vm10713 = vweird.f32 %v10706
  %vm10714 = vmor %vm10712, %vm10713
  %v10715 = vsel %vm10714, %v10706, %v10711
  %v10716 = vrsqrt.pop %v10585
  %v10717 = vmul.f32 %v10716, %v10585
  %v10718 = vmul.f32 %v10717, %v10716
  %v10719 = vmul.f32 0.5, %v10718
  %v10720 = vsub.f32 1.5, %v10719
  %v10721 = vmul.f32 %v10716, %v10720
  %vm10722 = vweird.f32 %v10585
  %vm10723 = vweird.f32 %v10716
  %vm10724 = vmor %vm10722, %vm10723
  %v10725 = vsel %vm10724, %v10716, %v10721
  %v10726 = vrsqrt.pop %v10586
  %v10727 = vmul.f32 %v10726, %v10586
  %v10728 = vmul.f32 %v10727, %v10726
  %v10729 = vmul.f32 0.5, %v10728
  %v10730 = vsub.f32 1.5, %v10729
  %v10731 = vmul.f32 %v10726, %v10730
  %vm10732 = vweird.f32 %v10586
  %vm10733 = vweird.f32 %v10726
  %vm10734 = vmor %vm10732, %vm10733
  %v10735 = vsel %vm10734, %v10726, %v10731
  %v10736 = vrsqrt.pop %v10587
  %v10737 = vmul.f32 %v10736, %v10587
  %v10738 = vmul.f32 %v10737, %v10736
  %v10739 = vmul.f32 0.5, %v10738
  %v10740 = vsub.f32 1.5, %v10739
  %v10741 = vmul.f32 %v10736, %v10740
  %vm10742 = vweird.f32 %v10587
  %vm10743 = vweird.f32 %v10736
  %vm10744 = vmor %vm10742, %vm10743
  %v10745 = vsel %vm10744, %v10736, %v10741
  %v10746 = vrsqrt.pop %v10588
  %v10747 = vmul.f32 %v10746, %v10588
  %v10748 = vmul.f32 %v10747, %v10746
  %v10749 = vmul.f32 0.5, %v10748
  %v10750 = vsub.f32 1.5, %v10749
  %v10751 = vmul.f32 %v10746, %v10750
  %vm10752 = vweird.f32 %v10588
  %vm10753 = vweird.f32 %v10746
  %vm10754 = vmor %vm10752, %vm10753
  %v10755 = vsel %vm10754, %v10746, %v10751
  %v10756 = vrsqrt.pop %v10589
  %v10757 = vmul.f32 %v10756, %v10589
  %v10758 = vmul.f32 %v10757, %v10756
  %v10759 = vmul.f32 0.5, %v10758
  %v10760 = vsub.f32 1.5, %v10759
  %v10761 = vmul.f32 %v10756, %v10760
  %vm10762 = vweird.f32 %v10589
  %vm10763 = vweird.f32 %v10756
  %vm10764 = vmor %vm10762, %vm10763
  %v10765 = vsel %vm10764, %v10756, %v10761
  %v10766 = vrsqrt.pop %v10590
  %v10767 = vmul.f32 %v10766, %v10590
  %v10768 = vmul.f32 %v10767, %v10766
  %v10769 = vmul.f32 0.5, %v10768
  %v10770 = vsub.f32 1.5, %v10769
  %v10771 = vmul.f32 %v10766, %v10770
  %vm10772 = vweird.f32 %v10590
  %vm10773 = vweird.f32 %v10766
  %vm10774 = vmor %vm10772, %vm10773
  %v10775 = vsel %vm10774, %v10766, %v10771
  %v10776 = vrsqrt.pop %v10591
  %v10777 = vmul.f32 %v10776, %v10591
  %v10778 = vmul.f32 %v10777, %v10776
  %v10779 = vmul.f32 0.5, %v10778
  %v10780 = vsub.f32 1.5, %v10779
  %v10781 = vmul.f32 %v10776, %v10780
  %vm10782 = vweird.f32 %v10591
  %vm10783 = vweird.f32 %v10776
  %vm10784 = vmor %vm10782, %vm10783
  %v10785 = vsel %vm10784, %v10776, %v10781
  %v10786 = vrsqrt.pop %v10592
  %v10787 = vmul.f32 %v10786, %v10592
  %v10788 = vmul.f32 %v10787, %v10786
  %v10789 = vmul.f32 0.5, %v10788
  %v10790 = vsub.f32 1.5, %v10789
  %v10791 = vmul.f32 %v10786, %v10790
  %vm10792 = vweird.f32 %v10592
  %vm10793 = vweird.f32 %v10786
  %vm10794 = vmor %vm10792, %vm10793
  %v10795 = vsel %vm10794, %v10786, %v10791
  %v10796 = vrsqrt.pop %v10593
  %v10797 = vmul.f32 %v10796, %v10593
  %v10798 = vmul.f32 %v10797, %v10796
  %v10799 = vmul.f32 0.5, %v10798
  %v10800 = vsub.f32 1.5, %v10799
  %v10801 = vmul.f32 %v10796, %v10800
  %vm10802 = vweird.f32 %v10593
  %vm10803 = vweird.f32 %v10796
  %vm10804 = vmor %vm10802, %vm10803
  %v10805 = vsel %vm10804, %v10796, %v10801
  %v10806 = vrsqrt.pop %v10594
  %v10807 = vmul.f32 %v10806, %v10594
  %v10808 = vmul.f32 %v10807, %v10806
  %v10809 = vmul.f32 0.5, %v10808
  %v10810 = vsub.f32 1.5, %v10809
  %v10811 = vmul.f32 %v10806, %v10810
  %vm10812 = vweird.f32 %v10594
  %vm10813 = vweird.f32 %v10806
  %vm10814 = vmor %vm10812, %vm10813
  %v10815 = vsel %vm10814, %v10806, %v10811
  %v10816 = vrsqrt.pop %v10595
  %v10817 = vmul.f32 %v10816, %v10595
  %v10818 = vmul.f32 %v10817, %v10816
  %v10819 = vmul.f32 0.5, %v10818
  %v10820 = vsub.f32 1.5, %v10819
  %v10821 = vmul.f32 %v10816, %v10820
  %vm10822 = vweird.f32 %v10595
  %vm10823 = vweird.f32 %v10816
  %vm10824 = vmor %vm10822, %vm10823
  %v10825 = vsel %vm10824, %v10816, %v10821
  %v10826 = vrsqrt.pop %v10596
  %v10827 = vmul.f32 %v10826, %v10596
  %v10828 = vmul.f32 %v10827, %v10826
  %v10829 = vmul.f32 0.5, %v10828
  %v10830 = vsub.f32 1.5, %v10829
  %v10831 = vmul.f32 %v10826, %v10830
  %vm10832 = vweird.f32 %v10596
  %vm10833 = vweird.f32 %v10826
  %vm10834 = vmor %vm10832, %vm10833
  %v10835 = vsel %vm10834, %v10826, %v10831
  %v10836 = vrsqrt.pop %v10597
  %v10837 = vmul.f32 %v10836, %v10597
  %v10838 = vmul.f32 %v10837, %v10836
  %v10839 = vmul.f32 0.5, %v10838
  %v10840 = vsub.f32 1.5, %v10839
  %v10841 = vmul.f32 %v10836, %v10840
  %vm10842 = vweird.f32 %v10597
  %vm10843 = vweird.f32 %v10836
  %vm10844 = vmor %vm10842, %vm10843
  %v10845 = vsel %vm10844, %v10836, %v10841
  %v10846 = vrsqrt.pop %v10598
  %v10847 = vmul.f32 %v10846, %v10598
  %v10848 = vmul.f32 %v10847, %v10846
  %v10849 = vmul.f32 0.5, %v10848
  %v10850 = vsub.f32 1.5, %v10849
  %v10851 = vmul.f32 %v10846, %v10850
  %vm10852 = vweird.f32 %v10598
  %vm10853 = vweird.f32 %v10846
  %vm10854 = vmor %vm10852, %vm10853
  %v10855 = vsel %vm10854, %v10846, %v10851
  %v10856 = vrsqrt.pop %v10599
  %v10857 = vmul.f32 %v10856, %v10599
  %v10858 = vmul.f32 %v10857, %v10856
  %v10859 = vmul.f32 0.5, %v10858
  %v10860 = vsub.f32 1.5, %v10859
  %v10861 = vmul.f32 %v10856, %v10860
  %vm10862 = vweird.f32 %v10599
  %vm10863 = vweird.f32 %v10856
  %vm10864 = vmor %vm10862, %vm10863
  %v10865 = vsel %vm10864, %v10856, %v10861
  %v10866 = vrsqrt.pop %v10600
  %v10867 = vmul.f32 %v10866, %v10600
  %v10868 = vmul.f32 %v10867, %v10866
  %v10869 = vmul.f32 0.5, %v10868
  %v10870 = vsub.f32 1.5, %v10869
  %v10871 = vmul.f32 %v10866, %v10870
  %vm10872 = vweird.f32 %v10600
  %vm10873 = vweird.f32 %v10866
  %vm10874 = vmor %vm10872, %vm10873
  %v10875 = vsel %vm10874, %v10866, %v10871
  %v10876 = vrsqrt.pop %v10601
  %v10877 = vmul.f32 %v10876, %v10601
  %v10878 = vmul.f32 %v10877, %v10876
  %v10879 = vmul.f32 0.5, %v10878
  %v10880 = vsub.f32 1.5, %v10879
  %v10881 = vmul.f32 %v10876, %v10880
  %vm10882 = vweird.f32 %v10601
  %vm10883 = vweird.f32 %v10876
  %vm10884 = vmor %vm10882, %vm10883
  %v10885 = vsel %vm10884, %v10876, %v10881
  %v10886 = vrsqrt.pop %v10602
  %v10887 = vmul.f32 %v10886, %v10602
  %v10888 = vmul.f32 %v10887, %v10886
  %v10889 = vmul.f32 0.5, %v10888
  %v10890 = vsub.f32 1.5, %v10889
  %v10891 = vmul.f32 %v10886, %v10890
  %vm10892 = vweird.f32 %v10602
  %vm10893 = vweird.f32 %v10886
  %vm10894 = vmor %vm10892, %vm10893
  %v10895 = vsel %vm10894, %v10886, %v10891
  %v10896 = vrsqrt.pop %v10603
  %v10897 = vmul.f32 %v10896, %v10603
  %v10898 = vmul.f32 %v10897, %v10896
  %v10899 = vmul.f32 0.5, %v10898
  %v10900 = vsub.f32 1.5, %v10899
  %v10901 = vmul.f32 %v10896, %v10900
  %vm10902 = vweird.f32 %v10603
  %vm10903 = vweird.f32 %v10896
  %vm10904 = vmor %vm10902, %vm10903
  %v10905 = vsel %vm10904, %v10896, %v10901
  %v10906 = vrsqrt.pop %v10604
  %v10907 = vmul.f32 %v10906, %v10604
  %v10908 = vmul.f32 %v10907, %v10906
  %v10909 = vmul.f32 0.5, %v10908
  %v10910 = vsub.f32 1.5, %v10909
  %v10911 = vmul.f32 %v10906, %v10910
  %vm10912 = vweird.f32 %v10604
  %vm10913 = vweird.f32 %v10906
  %vm10914 = vmor %vm10912, %vm10913
  %v10915 = vsel %vm10914, %v10906, %v10911
  %v10916 = vrsqrt.pop %v10605
  %v10917 = vmul.f32 %v10916, %v10605
  %v10918 = vmul.f32 %v10917, %v10916
  %v10919 = vmul.f32 0.5, %v10918
  %v10920 = vsub.f32 1.5, %v10919
  %v10921 = vmul.f32 %v10916, %v10920
  %vm10922 = vweird.f32 %v10605
  %vm10923 = vweird.f32 %v10916
  %vm10924 = vmor %vm10922, %vm10923
  %v10925 = vsel %vm10924, %v10916, %v10921
  %v10926 = vmul.f32 %v10382, %v10615
  %v10927 = vmul.f32 %v10383, %v10625
  %v10928 = vmul.f32 %v10384, %v10635
  %v10929 = vmul.f32 %v10385, %v10645
  %v10930 = vmul.f32 %v10386, %v10655
  %v10931 = vmul.f32 %v10387, %v10665
  %v10932 = vmul.f32 %v10388, %v10675
  %v10933 = vmul.f32 %v10389, %v10685
  %v10934 = vmul.f32 %v10390, %v10695
  %v10935 = vmul.f32 %v10391, %v10705
  %v10936 = vmul.f32 %v10392, %v10715
  %v10937 = vmul.f32 %v10393, %v10725
  %v10938 = vmul.f32 %v10394, %v10735
  %v10939 = vmul.f32 %v10395, %v10745
  %v10940 = vmul.f32 %v10396, %v10755
  %v10941 = vmul.f32 %v10397, %v10765
  %v10942 = vmul.f32 %v10398, %v10775
  %v10943 = vmul.f32 %v10399, %v10785
  %v10944 = vmul.f32 %v10400, %v10795
  %v10945 = vmul.f32 %v10401, %v10805
  %v10946 = vmul.f32 %v10402, %v10815
  %v10947 = vmul.f32 %v10403, %v10825
  %v10948 = vmul.f32 %v10404, %v10835
  %v10949 = vmul.f32 %v10405, %v10845
  %v10950 = vmul.f32 %v10406, %v10855
  %v10951 = vmul.f32 %v10407, %v10865
  %v10952 = vmul.f32 %v10408, %v10875
  %v10953 = vmul.f32 %v10409, %v10885
  %v10954 = vmul.f32 %v10410, %v10895
  %v10955 = vmul.f32 %v10411, %v10905
  %v10956 = vmul.f32 %v10412, %v10915
  %v10957 = vmul.f32 %v10413, %v10925
  %v10958 = vperm.slane %v95, 6
  %v10959 = vmul.f32 %v10926, %v10958
  %v10960 = vmul.f32 %v10927, %v10958
  %v10961 = vmul.f32 %v10928, %v10958
  %v10962 = vmul.f32 %v10929, %v10958
  %v10963 = vmul.f32 %v10930, %v10958
  %v10964 = vmul.f32 %v10931, %v10958
  %v10965 = vmul.f32 %v10932, %v10958
  %v10966 = vmul.f32 %v10933, %v10958
  %v10967 = vmul.f32 %v10934, %v10958
  %v10968 = vmul.f32 %v10935, %v10958
  %v10969 = vmul.f32 %v10936, %v10958
  %v10970 = vmul.f32 %v10937, %v10958
  %v10971 = vmul.f32 %v10938, %v10958
  %v10972 = vmul.f32 %v10939, %v10958
  %v10973 = vmul.f32 %v10940, %v10958
  %v10974 = vmul.f32 %v10941, %v10958
  %v10975 = vmul.f32 %v10942, %v10958
  %v10976 = vmul.f32 %v10943, %v10958
  %v10977 = vmul.f32 %v10944, %v10958
  %v10978 = vmul.f32 %v10945, %v10958
  %v10979 = vmul.f32 %v10946, %v10958
  %v10980 = vmul.f32 %v10947, %v10958
  %v10981 = vmul.f32 %v10948, %v10958
  %v10982 = vmul.f32 %v10949, %v10958
  %v10983 = vmul.f32 %v10950, %v10958
  %v10984 = vmul.f32 %v10951, %v10958
  %v10985 = vmul.f32 %v10952, %v10958
  %v10986 = vmul.f32 %v10953, %v10958
  %v10987 = vmul.f32 %v10954, %v10958
  %v10988 = vmul.f32 %v10955, %v10958
  %v10989 = vmul.f32 %v10956, %v10958
  %v10990 = vmul.f32 %v10957, %v10958
  %v10991 = vperm.slane %v95, 7
  %v10992 = vadd.f32 %v10959, %v10991
  %v10993 = vadd.f32 %v10960, %v10991
  %v10994 = vadd.f32 %v10961, %v10991
  %v10995 = vadd.f32 %v10962, %v10991
  %v10996 = vadd.f32 %v10963, %v10991
  %v10997 = vadd.f32 %v10964, %v10991
  %v10998 = vadd.f32 %v10965, %v10991
  %v10999 = vadd.f32 %v10966, %v10991
  %v11000 = vadd.f32 %v10967, %v10991
  %v11001 = vadd.f32 %v10968, %v10991
  %v11002 = vadd.f32 %v10969, %v10991
  %v11003 = vadd.f32 %v10970, %v10991
  %v11004 = vadd.f32 %v10971, %v10991
  %v11005 = vadd.f32 %v10972, %v10991
  %v11006 = vadd.f32 %v10973, %v10991
  %v11007 = vadd.f32 %v10974, %v10991
  %v11008 = vadd.f32 %v10975, %v10991
  %v11009 = vadd.f32 %v10976, %v10991
  %v11010 = vadd.f32 %v10977, %v10991
  %v11011 = vadd.f32 %v10978, %v10991
  %v11012 = vadd.f32 %v10979, %v10991
  %v11013 = vadd.f32 %v10980, %v10991
  %v11014 = vadd.f32 %v10981, %v10991
  %v11015 = vadd.f32 %v10982, %v10991
  %v11016 = vadd.f32 %v10983, %v10991
  %v11017 = vadd.f32 %v10984, %v10991
  %v11018 = vadd.f32 %v10985, %v10991
  %v11019 = vadd.f32 %v10986, %v10991
  %v11020 = vadd.f32 %v10987, %v10991
  %v11021 = vadd.f32 %v10988, %v10991
  %v11022 = vadd.f32 %v10989, %v10991
  %v11023 = vadd.f32 %v10990, %v10991
  %v11024 = vsel %vm187, %v10992, 0.0
  %11025 = vadd.xlane.f32.xlu0 %v11024
  %v11026 = vpop.xlane.xlu0 %11025
  %v11027 = vsel %vm187, %v10993, 0.0
  %11028 = vadd.xlane.f32.xlu0 %v11027
  %v11029 = vpop.xlane.xlu0 %11028
  %v11030 = vsel %vm187, %v10994, 0.0
  %11031 = vadd.xlane.f32.xlu0 %v11030
  %v11032 = vpop.xlane.xlu0 %11031
  %v11033 = vsel %vm187, %v10995, 0.0
  %11034 = vadd.xlane.f32.xlu0 %v11033
  %v11035 = vpop.xlane.xlu0 %11034
  %v11036 = vsel %vm187, %v10996, 0.0
  %11037 = vadd.xlane.f32.xlu0 %v11036
  %v11038 = vpop.xlane.xlu0 %11037
  %v11039 = vsel %vm187, %v10997, 0.0
  %11040 = vadd.xlane.f32.xlu0 %v11039
  %v11041 = vpop.xlane.xlu0 %11040
  %v11042 = vsel %vm187, %v10998, 0.0
  %11043 = vadd.xlane.f32.xlu0 %v11042
  %v11044 = vpop.xlane.xlu0 %11043
  %v11045 = vsel %vm187, %v10999, 0.0
  %11046 = vadd.xlane.f32.xlu0 %v11045
  %v11047 = vpop.xlane.xlu0 %11046
  %v11048 = vsel %vm187, %v11000, 0.0
  %11049 = vadd.xlane.f32.xlu0 %v11048
  %v11050 = vpop.xlane.xlu0 %11049
  %v11051 = vsel %vm187, %v11001, 0.0
  %11052 = vadd.xlane.f32.xlu0 %v11051
  %v11053 = vpop.xlane.xlu0 %11052
  %v11054 = vsel %vm187, %v11002, 0.0
  %11055 = vadd.xlane.f32.xlu0 %v11054
  %v11056 = vpop.xlane.xlu0 %11055
  %v11057 = vsel %vm187, %v11003, 0.0
  %11058 = vadd.xlane.f32.xlu0 %v11057
  %v11059 = vpop.xlane.xlu0 %11058
  %v11060 = vsel %vm187, %v11004, 0.0
  %11061 = vadd.xlane.f32.xlu0 %v11060
  %v11062 = vpop.xlane.xlu0 %11061
  %v11063 = vsel %vm187, %v11005, 0.0
  %11064 = vadd.xlane.f32.xlu0 %v11063
  %v11065 = vpop.xlane.xlu0 %11064
  %v11066 = vsel %vm187, %v11006, 0.0
  %11067 = vadd.xlane.f32.xlu0 %v11066
  %v11068 = vpop.xlane.xlu0 %11067
  %v11069 = vsel %vm187, %v11007, 0.0
  %11070 = vadd.xlane.f32.xlu0 %v11069
  %v11071 = vpop.xlane.xlu0 %11070
  %v11072 = vsel %vm187, %v11008, 0.0
  %11073 = vadd.xlane.f32.xlu0 %v11072
  %v11074 = vpop.xlane.xlu0 %11073
  %v11075 = vsel %vm187, %v11009, 0.0
  %11076 = vadd.xlane.f32.xlu0 %v11075
  %v11077 = vpop.xlane.xlu0 %11076
  %v11078 = vsel %vm187, %v11010, 0.0
  %11079 = vadd.xlane.f32.xlu0 %v11078
  %v11080 = vpop.xlane.xlu0 %11079
  %v11081 = vsel %vm187, %v11011, 0.0
  %11082 = vadd.xlane.f32.xlu0 %v11081
  %v11083 = vpop.xlane.xlu0 %11082
  %v11084 = vsel %vm187, %v11012, 0.0
  %11085 = vadd.xlane.f32.xlu0 %v11084
  %v11086 = vpop.xlane.xlu0 %11085
  %v11087 = vsel %vm187, %v11013, 0.0
  %11088 = vadd.xlane.f32.xlu0 %v11087
  %v11089 = vpop.xlane.xlu0 %11088
  %v11090 = vsel %vm187, %v11014, 0.0
  %11091 = vadd.xlane.f32.xlu0 %v11090
  %v11092 = vpop.xlane.xlu0 %11091
  %v11093 = vsel %vm187, %v11015, 0.0
  %11094 = vadd.xlane.f32.xlu0 %v11093
  %v11095 = vpop.xlane.xlu0 %11094
  %v11096 = vsel %vm187, %v11016, 0.0
  %11097 = vadd.xlane.f32.xlu0 %v11096
  %v11098 = vpop.xlane.xlu0 %11097
  %v11099 = vsel %vm187, %v11017, 0.0
  %11100 = vadd.xlane.f32.xlu0 %v11099
  %v11101 = vpop.xlane.xlu0 %11100
  %v11102 = vsel %vm187, %v11018, 0.0
  %11103 = vadd.xlane.f32.xlu0 %v11102
  %v11104 = vpop.xlane.xlu0 %11103
  %v11105 = vsel %vm187, %v11019, 0.0
  %11106 = vadd.xlane.f32.xlu0 %v11105
  %v11107 = vpop.xlane.xlu0 %11106
  %v11108 = vsel %vm187, %v11020, 0.0
  %11109 = vadd.xlane.f32.xlu0 %v11108
  %v11110 = vpop.xlane.xlu0 %11109
  %v11111 = vsel %vm187, %v11021, 0.0
  %11112 = vadd.xlane.f32.xlu0 %v11111
  %v11113 = vpop.xlane.xlu0 %11112
  %v11114 = vsel %vm187, %v11022, 0.0
  %11115 = vadd.xlane.f32.xlu0 %v11114
  %v11116 = vpop.xlane.xlu0 %11115
  %v11117 = vsel %vm187, %v11023, 0.0
  %11118 = vadd.xlane.f32.xlu0 %v11117
  %v11119 = vpop.xlane.xlu0 %11118
  %v11120 = vmul.f32 %v11026, %v3714
  %v11121 = vmul.f32 %v11029, %v3714
  %v11122 = vmul.f32 %v11032, %v3714
  %v11123 = vmul.f32 %v11035, %v3714
  %v11124 = vmul.f32 %v11038, %v3714
  %v11125 = vmul.f32 %v11041, %v3714
  %v11126 = vmul.f32 %v11044, %v3714
  %v11127 = vmul.f32 %v11047, %v3714
  %v11128 = vmul.f32 %v11050, %v3714
  %v11129 = vmul.f32 %v11053, %v3714
  %v11130 = vmul.f32 %v11056, %v3714
  %v11131 = vmul.f32 %v11059, %v3714
  %v11132 = vmul.f32 %v11062, %v3714
  %v11133 = vmul.f32 %v11065, %v3714
  %v11134 = vmul.f32 %v11068, %v3714
  %v11135 = vmul.f32 %v11071, %v3714
  %v11136 = vmul.f32 %v11074, %v3714
  %v11137 = vmul.f32 %v11077, %v3714
  %v11138 = vmul.f32 %v11080, %v3714
  %v11139 = vmul.f32 %v11083, %v3714
  %v11140 = vmul.f32 %v11086, %v3714
  %v11141 = vmul.f32 %v11089, %v3714
  %v11142 = vmul.f32 %v11092, %v3714
  %v11143 = vmul.f32 %v11095, %v3714
  %v11144 = vmul.f32 %v11098, %v3714
  %v11145 = vmul.f32 %v11101, %v3714
  %v11146 = vmul.f32 %v11104, %v3714
  %v11147 = vmul.f32 %v11107, %v3714
  %v11148 = vmul.f32 %v11110, %v3714
  %v11149 = vmul.f32 %v11113, %v3714
  %v11150 = vmul.f32 %v11116, %v3714
  %v11151 = vmul.f32 %v11119, %v3714
  %v11152 = vsub.f32 %v10992, %v11120
  %v11153 = vsub.f32 %v10993, %v11121
  %v11154 = vsub.f32 %v10994, %v11122
  %v11155 = vsub.f32 %v10995, %v11123
  %v11156 = vsub.f32 %v10996, %v11124
  %v11157 = vsub.f32 %v10997, %v11125
  %v11158 = vsub.f32 %v10998, %v11126
  %v11159 = vsub.f32 %v10999, %v11127
  %v11160 = vsub.f32 %v11000, %v11128
  %v11161 = vsub.f32 %v11001, %v11129
  %v11162 = vsub.f32 %v11002, %v11130
  %v11163 = vsub.f32 %v11003, %v11131
  %v11164 = vsub.f32 %v11004, %v11132
  %v11165 = vsub.f32 %v11005, %v11133
  %v11166 = vsub.f32 %v11006, %v11134
  %v11167 = vsub.f32 %v11007, %v11135
  %v11168 = vsub.f32 %v11008, %v11136
  %v11169 = vsub.f32 %v11009, %v11137
  %v11170 = vsub.f32 %v11010, %v11138
  %v11171 = vsub.f32 %v11011, %v11139
  %v11172 = vsub.f32 %v11012, %v11140
  %v11173 = vsub.f32 %v11013, %v11141
  %v11174 = vsub.f32 %v11014, %v11142
  %v11175 = vsub.f32 %v11015, %v11143
  %v11176 = vsub.f32 %v11016, %v11144
  %v11177 = vsub.f32 %v11017, %v11145
  %v11178 = vsub.f32 %v11018, %v11146
  %v11179 = vsub.f32 %v11019, %v11147
  %v11180 = vsub.f32 %v11020, %v11148
  %v11181 = vsub.f32 %v11021, %v11149
  %v11182 = vsub.f32 %v11022, %v11150
  %v11183 = vsub.f32 %v11023, %v11151
  %v11184 = vmul.f32 %v11152, %v11152
  %v11185 = vmul.f32 %v11153, %v11153
  %v11186 = vmul.f32 %v11154, %v11154
  %v11187 = vmul.f32 %v11155, %v11155
  %v11188 = vmul.f32 %v11156, %v11156
  %v11189 = vmul.f32 %v11157, %v11157
  %v11190 = vmul.f32 %v11158, %v11158
  %v11191 = vmul.f32 %v11159, %v11159
  %v11192 = vmul.f32 %v11160, %v11160
  %v11193 = vmul.f32 %v11161, %v11161
  %v11194 = vmul.f32 %v11162, %v11162
  %v11195 = vmul.f32 %v11163, %v11163
  %v11196 = vmul.f32 %v11164, %v11164
  %v11197 = vmul.f32 %v11165, %v11165
  %v11198 = vmul.f32 %v11166, %v11166
  %v11199 = vmul.f32 %v11167, %v11167
  %v11200 = vmul.f32 %v11168, %v11168
  %v11201 = vmul.f32 %v11169, %v11169
  %v11202 = vmul.f32 %v11170, %v11170
  %v11203 = vmul.f32 %v11171, %v11171
  %v11204 = vmul.f32 %v11172, %v11172
  %v11205 = vmul.f32 %v11173, %v11173
  %v11206 = vmul.f32 %v11174, %v11174
  %v11207 = vmul.f32 %v11175, %v11175
  %v11208 = vmul.f32 %v11176, %v11176
  %v11209 = vmul.f32 %v11177, %v11177
  %v11210 = vmul.f32 %v11178, %v11178
  %v11211 = vmul.f32 %v11179, %v11179
  %v11212 = vmul.f32 %v11180, %v11180
  %v11213 = vmul.f32 %v11181, %v11181
  %v11214 = vmul.f32 %v11182, %v11182
  %v11215 = vmul.f32 %v11183, %v11183
  %v11216 = vsel %vm187, %v11184, 0.0
  %11217 = vadd.xlane.f32.xlu0 %v11216
  %v11218 = vpop.xlane.xlu0 %11217
  %v11219 = vsel %vm187, %v11185, 0.0
  %11220 = vadd.xlane.f32.xlu0 %v11219
  %v11221 = vpop.xlane.xlu0 %11220
  %v11222 = vsel %vm187, %v11186, 0.0
  %11223 = vadd.xlane.f32.xlu0 %v11222
  %v11224 = vpop.xlane.xlu0 %11223
  %v11225 = vsel %vm187, %v11187, 0.0
  %11226 = vadd.xlane.f32.xlu0 %v11225
  %v11227 = vpop.xlane.xlu0 %11226
  %v11228 = vsel %vm187, %v11188, 0.0
  %11229 = vadd.xlane.f32.xlu0 %v11228
  %v11230 = vpop.xlane.xlu0 %11229
  %v11231 = vsel %vm187, %v11189, 0.0
  %11232 = vadd.xlane.f32.xlu0 %v11231
  %v11233 = vpop.xlane.xlu0 %11232
  %v11234 = vsel %vm187, %v11190, 0.0
  %11235 = vadd.xlane.f32.xlu0 %v11234
  %v11236 = vpop.xlane.xlu0 %11235
  %v11237 = vsel %vm187, %v11191, 0.0
  %11238 = vadd.xlane.f32.xlu0 %v11237
  %v11239 = vpop.xlane.xlu0 %11238
  %v11240 = vsel %vm187, %v11192, 0.0
  %11241 = vadd.xlane.f32.xlu0 %v11240
  %v11242 = vpop.xlane.xlu0 %11241
  %v11243 = vsel %vm187, %v11193, 0.0
  %11244 = vadd.xlane.f32.xlu0 %v11243
  %v11245 = vpop.xlane.xlu0 %11244
  %v11246 = vsel %vm187, %v11194, 0.0
  %11247 = vadd.xlane.f32.xlu0 %v11246
  %v11248 = vpop.xlane.xlu0 %11247
  %v11249 = vsel %vm187, %v11195, 0.0
  %11250 = vadd.xlane.f32.xlu0 %v11249
  %v11251 = vpop.xlane.xlu0 %11250
  %v11252 = vsel %vm187, %v11196, 0.0
  %11253 = vadd.xlane.f32.xlu0 %v11252
  %v11254 = vpop.xlane.xlu0 %11253
  %v11255 = vsel %vm187, %v11197, 0.0
  %11256 = vadd.xlane.f32.xlu0 %v11255
  %v11257 = vpop.xlane.xlu0 %11256
  %v11258 = vsel %vm187, %v11198, 0.0
  %11259 = vadd.xlane.f32.xlu0 %v11258
  %v11260 = vpop.xlane.xlu0 %11259
  %v11261 = vsel %vm187, %v11199, 0.0
  %11262 = vadd.xlane.f32.xlu0 %v11261
  %v11263 = vpop.xlane.xlu0 %11262
  %v11264 = vsel %vm187, %v11200, 0.0
  %11265 = vadd.xlane.f32.xlu0 %v11264
  %v11266 = vpop.xlane.xlu0 %11265
  %v11267 = vsel %vm187, %v11201, 0.0
  %11268 = vadd.xlane.f32.xlu0 %v11267
  %v11269 = vpop.xlane.xlu0 %11268
  %v11270 = vsel %vm187, %v11202, 0.0
  %11271 = vadd.xlane.f32.xlu0 %v11270
  %v11272 = vpop.xlane.xlu0 %11271
  %v11273 = vsel %vm187, %v11203, 0.0
  %11274 = vadd.xlane.f32.xlu0 %v11273
  %v11275 = vpop.xlane.xlu0 %11274
  %v11276 = vsel %vm187, %v11204, 0.0
  %11277 = vadd.xlane.f32.xlu0 %v11276
  %v11278 = vpop.xlane.xlu0 %11277
  %v11279 = vsel %vm187, %v11205, 0.0
  %11280 = vadd.xlane.f32.xlu0 %v11279
  %v11281 = vpop.xlane.xlu0 %11280
  %v11282 = vsel %vm187, %v11206, 0.0
  %11283 = vadd.xlane.f32.xlu0 %v11282
  %v11284 = vpop.xlane.xlu0 %11283
  %v11285 = vsel %vm187, %v11207, 0.0
  %11286 = vadd.xlane.f32.xlu0 %v11285
  %v11287 = vpop.xlane.xlu0 %11286
  %v11288 = vsel %vm187, %v11208, 0.0
  %11289 = vadd.xlane.f32.xlu0 %v11288
  %v11290 = vpop.xlane.xlu0 %11289
  %v11291 = vsel %vm187, %v11209, 0.0
  %11292 = vadd.xlane.f32.xlu0 %v11291
  %v11293 = vpop.xlane.xlu0 %11292
  %v11294 = vsel %vm187, %v11210, 0.0
  %11295 = vadd.xlane.f32.xlu0 %v11294
  %v11296 = vpop.xlane.xlu0 %11295
  %v11297 = vsel %vm187, %v11211, 0.0
  %11298 = vadd.xlane.f32.xlu0 %v11297
  %v11299 = vpop.xlane.xlu0 %11298
  %v11300 = vsel %vm187, %v11212, 0.0
  %11301 = vadd.xlane.f32.xlu0 %v11300
  %v11302 = vpop.xlane.xlu0 %11301
  %v11303 = vsel %vm187, %v11213, 0.0
  %11304 = vadd.xlane.f32.xlu0 %v11303
  %v11305 = vpop.xlane.xlu0 %11304
  %v11306 = vsel %vm187, %v11214, 0.0
  %11307 = vadd.xlane.f32.xlu0 %v11306
  %v11308 = vpop.xlane.xlu0 %11307
  %v11309 = vsel %vm187, %v11215, 0.0
  %11310 = vadd.xlane.f32.xlu0 %v11309
  %v11311 = vpop.xlane.xlu0 %11310
  %v11312 = vmul.f32 %v11218, %v3714
  %v11313 = vmul.f32 %v11221, %v3714
  %v11314 = vmul.f32 %v11224, %v3714
  %v11315 = vmul.f32 %v11227, %v3714
  %v11316 = vmul.f32 %v11230, %v3714
  %v11317 = vmul.f32 %v11233, %v3714
  %v11318 = vmul.f32 %v11236, %v3714
  %v11319 = vmul.f32 %v11239, %v3714
  %v11320 = vmul.f32 %v11242, %v3714
  %v11321 = vmul.f32 %v11245, %v3714
  %v11322 = vmul.f32 %v11248, %v3714
  %v11323 = vmul.f32 %v11251, %v3714
  %v11324 = vmul.f32 %v11254, %v3714
  %v11325 = vmul.f32 %v11257, %v3714
  %v11326 = vmul.f32 %v11260, %v3714
  %v11327 = vmul.f32 %v11263, %v3714
  %v11328 = vmul.f32 %v11266, %v3714
  %v11329 = vmul.f32 %v11269, %v3714
  %v11330 = vmul.f32 %v11272, %v3714
  %v11331 = vmul.f32 %v11275, %v3714
  %v11332 = vmul.f32 %v11278, %v3714
  %v11333 = vmul.f32 %v11281, %v3714
  %v11334 = vmul.f32 %v11284, %v3714
  %v11335 = vmul.f32 %v11287, %v3714
  %v11336 = vmul.f32 %v11290, %v3714
  %v11337 = vmul.f32 %v11293, %v3714
  %v11338 = vmul.f32 %v11296, %v3714
  %v11339 = vmul.f32 %v11299, %v3714
  %v11340 = vmul.f32 %v11302, %v3714
  %v11341 = vmul.f32 %v11305, %v3714
  %v11342 = vmul.f32 %v11308, %v3714
  %v11343 = vmul.f32 %v11311, %v3714
  %v11344 = vadd.f32 %v11312, 1e-05
  %v11345 = vadd.f32 %v11313, 1e-05
  %v11346 = vadd.f32 %v11314, 1e-05
  %v11347 = vadd.f32 %v11315, 1e-05
  %v11348 = vadd.f32 %v11316, 1e-05
  %v11349 = vadd.f32 %v11317, 1e-05
  %v11350 = vadd.f32 %v11318, 1e-05
  %v11351 = vadd.f32 %v11319, 1e-05
  %v11352 = vadd.f32 %v11320, 1e-05
  %v11353 = vadd.f32 %v11321, 1e-05
  %v11354 = vadd.f32 %v11322, 1e-05
  %v11355 = vadd.f32 %v11323, 1e-05
  %v11356 = vadd.f32 %v11324, 1e-05
  %v11357 = vadd.f32 %v11325, 1e-05
  %v11358 = vadd.f32 %v11326, 1e-05
  %v11359 = vadd.f32 %v11327, 1e-05
  %v11360 = vadd.f32 %v11328, 1e-05
  %v11361 = vadd.f32 %v11329, 1e-05
  %v11362 = vadd.f32 %v11330, 1e-05
  %v11363 = vadd.f32 %v11331, 1e-05
  %v11364 = vadd.f32 %v11332, 1e-05
  %v11365 = vadd.f32 %v11333, 1e-05
  %v11366 = vadd.f32 %v11334, 1e-05
  %v11367 = vadd.f32 %v11335, 1e-05
  %v11368 = vadd.f32 %v11336, 1e-05
  %v11369 = vadd.f32 %v11337, 1e-05
  %v11370 = vadd.f32 %v11338, 1e-05
  %v11371 = vadd.f32 %v11339, 1e-05
  %v11372 = vadd.f32 %v11340, 1e-05
  %v11373 = vadd.f32 %v11341, 1e-05
  %v11374 = vadd.f32 %v11342, 1e-05
  %v11375 = vadd.f32 %v11343, 1e-05
  %v11376 = vrsqrt.pop %v11344
  %v11377 = vmul.f32 %v11376, %v11344
  %v11378 = vmul.f32 %v11377, %v11376
  %v11379 = vmul.f32 0.5, %v11378
  %v11380 = vsub.f32 1.5, %v11379
  %v11381 = vmul.f32 %v11376, %v11380
  %vm11382 = vweird.f32 %v11344
  %vm11383 = vweird.f32 %v11376
  %vm11384 = vmor %vm11382, %vm11383
  %v11385 = vsel %vm11384, %v11376, %v11381
  %v11386 = vrsqrt.pop %v11345
  %v11387 = vmul.f32 %v11386, %v11345
  %v11388 = vmul.f32 %v11387, %v11386
  %v11389 = vmul.f32 0.5, %v11388
  %v11390 = vsub.f32 1.5, %v11389
  %v11391 = vmul.f32 %v11386, %v11390
  %vm11392 = vweird.f32 %v11345
  %vm11393 = vweird.f32 %v11386
  %vm11394 = vmor %vm11392, %vm11393
  %v11395 = vsel %vm11394, %v11386, %v11391
  %v11396 = vrsqrt.pop %v11346
  %v11397 = vmul.f32 %v11396, %v11346
  %v11398 = vmul.f32 %v11397, %v11396
  %v11399 = vmul.f32 0.5, %v11398
  %v11400 = vsub.f32 1.5, %v11399
  %v11401 = vmul.f32 %v11396, %v11400
  %vm11402 = vweird.f32 %v11346
  %vm11403 = vweird.f32 %v11396
  %vm11404 = vmor %vm11402, %vm11403
  %v11405 = vsel %vm11404, %v11396, %v11401
  %v11406 = vrsqrt.pop %v11347
  %v11407 = vmul.f32 %v11406, %v11347
  %v11408 = vmul.f32 %v11407, %v11406
  %v11409 = vmul.f32 0.5, %v11408
  %v11410 = vsub.f32 1.5, %v11409
  %v11411 = vmul.f32 %v11406, %v11410
  %vm11412 = vweird.f32 %v11347
  %vm11413 = vweird.f32 %v11406
  %vm11414 = vmor %vm11412, %vm11413
  %v11415 = vsel %vm11414, %v11406, %v11411
  %v11416 = vrsqrt.pop %v11348
  %v11417 = vmul.f32 %v11416, %v11348
  %v11418 = vmul.f32 %v11417, %v11416
  %v11419 = vmul.f32 0.5, %v11418
  %v11420 = vsub.f32 1.5, %v11419
  %v11421 = vmul.f32 %v11416, %v11420
  %vm11422 = vweird.f32 %v11348
  %vm11423 = vweird.f32 %v11416
  %vm11424 = vmor %vm11422, %vm11423
  %v11425 = vsel %vm11424, %v11416, %v11421
  %v11426 = vrsqrt.pop %v11349
  %v11427 = vmul.f32 %v11426, %v11349
  %v11428 = vmul.f32 %v11427, %v11426
  %v11429 = vmul.f32 0.5, %v11428
  %v11430 = vsub.f32 1.5, %v11429
  %v11431 = vmul.f32 %v11426, %v11430
  %vm11432 = vweird.f32 %v11349
  %vm11433 = vweird.f32 %v11426
  %vm11434 = vmor %vm11432, %vm11433
  %v11435 = vsel %vm11434, %v11426, %v11431
  %v11436 = vrsqrt.pop %v11350
  %v11437 = vmul.f32 %v11436, %v11350
  %v11438 = vmul.f32 %v11437, %v11436
  %v11439 = vmul.f32 0.5, %v11438
  %v11440 = vsub.f32 1.5, %v11439
  %v11441 = vmul.f32 %v11436, %v11440
  %vm11442 = vweird.f32 %v11350
  %vm11443 = vweird.f32 %v11436
  %vm11444 = vmor %vm11442, %vm11443
  %v11445 = vsel %vm11444, %v11436, %v11441
  %v11446 = vrsqrt.pop %v11351
  %v11447 = vmul.f32 %v11446, %v11351
  %v11448 = vmul.f32 %v11447, %v11446
  %v11449 = vmul.f32 0.5, %v11448
  %v11450 = vsub.f32 1.5, %v11449
  %v11451 = vmul.f32 %v11446, %v11450
  %vm11452 = vweird.f32 %v11351
  %vm11453 = vweird.f32 %v11446
  %vm11454 = vmor %vm11452, %vm11453
  %v11455 = vsel %vm11454, %v11446, %v11451
  %v11456 = vrsqrt.pop %v11352
  %v11457 = vmul.f32 %v11456, %v11352
  %v11458 = vmul.f32 %v11457, %v11456
  %v11459 = vmul.f32 0.5, %v11458
  %v11460 = vsub.f32 1.5, %v11459
  %v11461 = vmul.f32 %v11456, %v11460
  %vm11462 = vweird.f32 %v11352
  %vm11463 = vweird.f32 %v11456
  %vm11464 = vmor %vm11462, %vm11463
  %v11465 = vsel %vm11464, %v11456, %v11461
  %v11466 = vrsqrt.pop %v11353
  %v11467 = vmul.f32 %v11466, %v11353
  %v11468 = vmul.f32 %v11467, %v11466
  %v11469 = vmul.f32 0.5, %v11468
  %v11470 = vsub.f32 1.5, %v11469
  %v11471 = vmul.f32 %v11466, %v11470
  %vm11472 = vweird.f32 %v11353
  %vm11473 = vweird.f32 %v11466
  %vm11474 = vmor %vm11472, %vm11473
  %v11475 = vsel %vm11474, %v11466, %v11471
  %v11476 = vrsqrt.pop %v11354
  %v11477 = vmul.f32 %v11476, %v11354
  %v11478 = vmul.f32 %v11477, %v11476
  %v11479 = vmul.f32 0.5, %v11478
  %v11480 = vsub.f32 1.5, %v11479
  %v11481 = vmul.f32 %v11476, %v11480
  %vm11482 = vweird.f32 %v11354
  %vm11483 = vweird.f32 %v11476
  %vm11484 = vmor %vm11482, %vm11483
  %v11485 = vsel %vm11484, %v11476, %v11481
  %v11486 = vrsqrt.pop %v11355
  %v11487 = vmul.f32 %v11486, %v11355
  %v11488 = vmul.f32 %v11487, %v11486
  %v11489 = vmul.f32 0.5, %v11488
  %v11490 = vsub.f32 1.5, %v11489
  %v11491 = vmul.f32 %v11486, %v11490
  %vm11492 = vweird.f32 %v11355
  %vm11493 = vweird.f32 %v11486
  %vm11494 = vmor %vm11492, %vm11493
  %v11495 = vsel %vm11494, %v11486, %v11491
  %v11496 = vrsqrt.pop %v11356
  %v11497 = vmul.f32 %v11496, %v11356
  %v11498 = vmul.f32 %v11497, %v11496
  %v11499 = vmul.f32 0.5, %v11498
  %v11500 = vsub.f32 1.5, %v11499
  %v11501 = vmul.f32 %v11496, %v11500
  %vm11502 = vweird.f32 %v11356
  %vm11503 = vweird.f32 %v11496
  %vm11504 = vmor %vm11502, %vm11503
  %v11505 = vsel %vm11504, %v11496, %v11501
  %v11506 = vrsqrt.pop %v11357
  %v11507 = vmul.f32 %v11506, %v11357
  %v11508 = vmul.f32 %v11507, %v11506
  %v11509 = vmul.f32 0.5, %v11508
  %v11510 = vsub.f32 1.5, %v11509
  %v11511 = vmul.f32 %v11506, %v11510
  %vm11512 = vweird.f32 %v11357
  %vm11513 = vweird.f32 %v11506
  %vm11514 = vmor %vm11512, %vm11513
  %v11515 = vsel %vm11514, %v11506, %v11511
  %v11516 = vrsqrt.pop %v11358
  %v11517 = vmul.f32 %v11516, %v11358
  %v11518 = vmul.f32 %v11517, %v11516
  %v11519 = vmul.f32 0.5, %v11518
  %v11520 = vsub.f32 1.5, %v11519
  %v11521 = vmul.f32 %v11516, %v11520
  %vm11522 = vweird.f32 %v11358
  %vm11523 = vweird.f32 %v11516
  %vm11524 = vmor %vm11522, %vm11523
  %v11525 = vsel %vm11524, %v11516, %v11521
  %v11526 = vrsqrt.pop %v11359
  %v11527 = vmul.f32 %v11526, %v11359
  %v11528 = vmul.f32 %v11527, %v11526
  %v11529 = vmul.f32 0.5, %v11528
  %v11530 = vsub.f32 1.5, %v11529
  %v11531 = vmul.f32 %v11526, %v11530
  %vm11532 = vweird.f32 %v11359
  %vm11533 = vweird.f32 %v11526
  %vm11534 = vmor %vm11532, %vm11533
  %v11535 = vsel %vm11534, %v11526, %v11531
  %v11536 = vrsqrt.pop %v11360
  %v11537 = vmul.f32 %v11536, %v11360
  %v11538 = vmul.f32 %v11537, %v11536
  %v11539 = vmul.f32 0.5, %v11538
  %v11540 = vsub.f32 1.5, %v11539
  %v11541 = vmul.f32 %v11536, %v11540
  %vm11542 = vweird.f32 %v11360
  %vm11543 = vweird.f32 %v11536
  %vm11544 = vmor %vm11542, %vm11543
  %v11545 = vsel %vm11544, %v11536, %v11541
  %v11546 = vrsqrt.pop %v11361
  %v11547 = vmul.f32 %v11546, %v11361
  %v11548 = vmul.f32 %v11547, %v11546
  %v11549 = vmul.f32 0.5, %v11548
  %v11550 = vsub.f32 1.5, %v11549
  %v11551 = vmul.f32 %v11546, %v11550
  %vm11552 = vweird.f32 %v11361
  %vm11553 = vweird.f32 %v11546
  %vm11554 = vmor %vm11552, %vm11553
  %v11555 = vsel %vm11554, %v11546, %v11551
  %v11556 = vrsqrt.pop %v11362
  %v11557 = vmul.f32 %v11556, %v11362
  %v11558 = vmul.f32 %v11557, %v11556
  %v11559 = vmul.f32 0.5, %v11558
  %v11560 = vsub.f32 1.5, %v11559
  %v11561 = vmul.f32 %v11556, %v11560
  %vm11562 = vweird.f32 %v11362
  %vm11563 = vweird.f32 %v11556
  %vm11564 = vmor %vm11562, %vm11563
  %v11565 = vsel %vm11564, %v11556, %v11561
  %v11566 = vrsqrt.pop %v11363
  %v11567 = vmul.f32 %v11566, %v11363
  %v11568 = vmul.f32 %v11567, %v11566
  %v11569 = vmul.f32 0.5, %v11568
  %v11570 = vsub.f32 1.5, %v11569
  %v11571 = vmul.f32 %v11566, %v11570
  %vm11572 = vweird.f32 %v11363
  %vm11573 = vweird.f32 %v11566
  %vm11574 = vmor %vm11572, %vm11573
  %v11575 = vsel %vm11574, %v11566, %v11571
  %v11576 = vrsqrt.pop %v11364
  %v11577 = vmul.f32 %v11576, %v11364
  %v11578 = vmul.f32 %v11577, %v11576
  %v11579 = vmul.f32 0.5, %v11578
  %v11580 = vsub.f32 1.5, %v11579
  %v11581 = vmul.f32 %v11576, %v11580
  %vm11582 = vweird.f32 %v11364
  %vm11583 = vweird.f32 %v11576
  %vm11584 = vmor %vm11582, %vm11583
  %v11585 = vsel %vm11584, %v11576, %v11581
  %v11586 = vrsqrt.pop %v11365
  %v11587 = vmul.f32 %v11586, %v11365
  %v11588 = vmul.f32 %v11587, %v11586
  %v11589 = vmul.f32 0.5, %v11588
  %v11590 = vsub.f32 1.5, %v11589
  %v11591 = vmul.f32 %v11586, %v11590
  %vm11592 = vweird.f32 %v11365
  %vm11593 = vweird.f32 %v11586
  %vm11594 = vmor %vm11592, %vm11593
  %v11595 = vsel %vm11594, %v11586, %v11591
  %v11596 = vrsqrt.pop %v11366
  %v11597 = vmul.f32 %v11596, %v11366
  %v11598 = vmul.f32 %v11597, %v11596
  %v11599 = vmul.f32 0.5, %v11598
  %v11600 = vsub.f32 1.5, %v11599
  %v11601 = vmul.f32 %v11596, %v11600
  %vm11602 = vweird.f32 %v11366
  %vm11603 = vweird.f32 %v11596
  %vm11604 = vmor %vm11602, %vm11603
  %v11605 = vsel %vm11604, %v11596, %v11601
  %v11606 = vrsqrt.pop %v11367
  %v11607 = vmul.f32 %v11606, %v11367
  %v11608 = vmul.f32 %v11607, %v11606
  %v11609 = vmul.f32 0.5, %v11608
  %v11610 = vsub.f32 1.5, %v11609
  %v11611 = vmul.f32 %v11606, %v11610
  %vm11612 = vweird.f32 %v11367
  %vm11613 = vweird.f32 %v11606
  %vm11614 = vmor %vm11612, %vm11613
  %v11615 = vsel %vm11614, %v11606, %v11611
  %v11616 = vrsqrt.pop %v11368
  %v11617 = vmul.f32 %v11616, %v11368
  %v11618 = vmul.f32 %v11617, %v11616
  %v11619 = vmul.f32 0.5, %v11618
  %v11620 = vsub.f32 1.5, %v11619
  %v11621 = vmul.f32 %v11616, %v11620
  %vm11622 = vweird.f32 %v11368
  %vm11623 = vweird.f32 %v11616
  %vm11624 = vmor %vm11622, %vm11623
  %v11625 = vsel %vm11624, %v11616, %v11621
  %v11626 = vrsqrt.pop %v11369
  %v11627 = vmul.f32 %v11626, %v11369
  %v11628 = vmul.f32 %v11627, %v11626
  %v11629 = vmul.f32 0.5, %v11628
  %v11630 = vsub.f32 1.5, %v11629
  %v11631 = vmul.f32 %v11626, %v11630
  %vm11632 = vweird.f32 %v11369
  %vm11633 = vweird.f32 %v11626
  %vm11634 = vmor %vm11632, %vm11633
  %v11635 = vsel %vm11634, %v11626, %v11631
  %v11636 = vrsqrt.pop %v11370
  %v11637 = vmul.f32 %v11636, %v11370
  %v11638 = vmul.f32 %v11637, %v11636
  %v11639 = vmul.f32 0.5, %v11638
  %v11640 = vsub.f32 1.5, %v11639
  %v11641 = vmul.f32 %v11636, %v11640
  %vm11642 = vweird.f32 %v11370
  %vm11643 = vweird.f32 %v11636
  %vm11644 = vmor %vm11642, %vm11643
  %v11645 = vsel %vm11644, %v11636, %v11641
  %v11646 = vrsqrt.pop %v11371
  %v11647 = vmul.f32 %v11646, %v11371
  %v11648 = vmul.f32 %v11647, %v11646
  %v11649 = vmul.f32 0.5, %v11648
  %v11650 = vsub.f32 1.5, %v11649
  %v11651 = vmul.f32 %v11646, %v11650
  %vm11652 = vweird.f32 %v11371
  %vm11653 = vweird.f32 %v11646
  %vm11654 = vmor %vm11652, %vm11653
  %v11655 = vsel %vm11654, %v11646, %v11651
  %v11656 = vrsqrt.pop %v11372
  %v11657 = vmul.f32 %v11656, %v11372
  %v11658 = vmul.f32 %v11657, %v11656
  %v11659 = vmul.f32 0.5, %v11658
  %v11660 = vsub.f32 1.5, %v11659
  %v11661 = vmul.f32 %v11656, %v11660
  %vm11662 = vweird.f32 %v11372
  %vm11663 = vweird.f32 %v11656
  %vm11664 = vmor %vm11662, %vm11663
  %v11665 = vsel %vm11664, %v11656, %v11661
  %v11666 = vrsqrt.pop %v11373
  %v11667 = vmul.f32 %v11666, %v11373
  %v11668 = vmul.f32 %v11667, %v11666
  %v11669 = vmul.f32 0.5, %v11668
  %v11670 = vsub.f32 1.5, %v11669
  %v11671 = vmul.f32 %v11666, %v11670
  %vm11672 = vweird.f32 %v11373
  %vm11673 = vweird.f32 %v11666
  %vm11674 = vmor %vm11672, %vm11673
  %v11675 = vsel %vm11674, %v11666, %v11671
  %v11676 = vrsqrt.pop %v11374
  %v11677 = vmul.f32 %v11676, %v11374
  %v11678 = vmul.f32 %v11677, %v11676
  %v11679 = vmul.f32 0.5, %v11678
  %v11680 = vsub.f32 1.5, %v11679
  %v11681 = vmul.f32 %v11676, %v11680
  %vm11682 = vweird.f32 %v11374
  %vm11683 = vweird.f32 %v11676
  %vm11684 = vmor %vm11682, %vm11683
  %v11685 = vsel %vm11684, %v11676, %v11681
  %v11686 = vrsqrt.pop %v11375
  %v11687 = vmul.f32 %v11686, %v11375
  %v11688 = vmul.f32 %v11687, %v11686
  %v11689 = vmul.f32 0.5, %v11688
  %v11690 = vsub.f32 1.5, %v11689
  %v11691 = vmul.f32 %v11686, %v11690
  %vm11692 = vweird.f32 %v11375
  %vm11693 = vweird.f32 %v11686
  %vm11694 = vmor %vm11692, %vm11693
  %v11695 = vsel %vm11694, %v11686, %v11691
  %v11696 = vmul.f32 %v11152, %v11385
  %v11697 = vmul.f32 %v11153, %v11395
  %v11698 = vmul.f32 %v11154, %v11405
  %v11699 = vmul.f32 %v11155, %v11415
  %v11700 = vmul.f32 %v11156, %v11425
  %v11701 = vmul.f32 %v11157, %v11435
  %v11702 = vmul.f32 %v11158, %v11445
  %v11703 = vmul.f32 %v11159, %v11455
  %v11704 = vmul.f32 %v11160, %v11465
  %v11705 = vmul.f32 %v11161, %v11475
  %v11706 = vmul.f32 %v11162, %v11485
  %v11707 = vmul.f32 %v11163, %v11495
  %v11708 = vmul.f32 %v11164, %v11505
  %v11709 = vmul.f32 %v11165, %v11515
  %v11710 = vmul.f32 %v11166, %v11525
  %v11711 = vmul.f32 %v11167, %v11535
  %v11712 = vmul.f32 %v11168, %v11545
  %v11713 = vmul.f32 %v11169, %v11555
  %v11714 = vmul.f32 %v11170, %v11565
  %v11715 = vmul.f32 %v11171, %v11575
  %v11716 = vmul.f32 %v11172, %v11585
  %v11717 = vmul.f32 %v11173, %v11595
  %v11718 = vmul.f32 %v11174, %v11605
  %v11719 = vmul.f32 %v11175, %v11615
  %v11720 = vmul.f32 %v11176, %v11625
  %v11721 = vmul.f32 %v11177, %v11635
  %v11722 = vmul.f32 %v11178, %v11645
  %v11723 = vmul.f32 %v11179, %v11655
  %v11724 = vmul.f32 %v11180, %v11665
  %v11725 = vmul.f32 %v11181, %v11675
  %v11726 = vmul.f32 %v11182, %v11685
  %v11727 = vmul.f32 %v11183, %v11695
  %v11728 = vperm.slane %v96, 0
  %v11729 = vmul.f32 %v11696, %v11728
  %v11730 = vmul.f32 %v11697, %v11728
  %v11731 = vmul.f32 %v11698, %v11728
  %v11732 = vmul.f32 %v11699, %v11728
  %v11733 = vmul.f32 %v11700, %v11728
  %v11734 = vmul.f32 %v11701, %v11728
  %v11735 = vmul.f32 %v11702, %v11728
  %v11736 = vmul.f32 %v11703, %v11728
  %v11737 = vmul.f32 %v11704, %v11728
  %v11738 = vmul.f32 %v11705, %v11728
  %v11739 = vmul.f32 %v11706, %v11728
  %v11740 = vmul.f32 %v11707, %v11728
  %v11741 = vmul.f32 %v11708, %v11728
  %v11742 = vmul.f32 %v11709, %v11728
  %v11743 = vmul.f32 %v11710, %v11728
  %v11744 = vmul.f32 %v11711, %v11728
  %v11745 = vmul.f32 %v11712, %v11728
  %v11746 = vmul.f32 %v11713, %v11728
  %v11747 = vmul.f32 %v11714, %v11728
  %v11748 = vmul.f32 %v11715, %v11728
  %v11749 = vmul.f32 %v11716, %v11728
  %v11750 = vmul.f32 %v11717, %v11728
  %v11751 = vmul.f32 %v11718, %v11728
  %v11752 = vmul.f32 %v11719, %v11728
  %v11753 = vmul.f32 %v11720, %v11728
  %v11754 = vmul.f32 %v11721, %v11728
  %v11755 = vmul.f32 %v11722, %v11728
  %v11756 = vmul.f32 %v11723, %v11728
  %v11757 = vmul.f32 %v11724, %v11728
  %v11758 = vmul.f32 %v11725, %v11728
  %v11759 = vmul.f32 %v11726, %v11728
  %v11760 = vmul.f32 %v11727, %v11728
  %v11761 = vperm.slane %v96, 1
  %v11762 = vadd.f32 %v11729, %v11761
  %v11763 = vadd.f32 %v11730, %v11761
  %v11764 = vadd.f32 %v11731, %v11761
  %v11765 = vadd.f32 %v11732, %v11761
  %v11766 = vadd.f32 %v11733, %v11761
  %v11767 = vadd.f32 %v11734, %v11761
  %v11768 = vadd.f32 %v11735, %v11761
  %v11769 = vadd.f32 %v11736, %v11761
  %v11770 = vadd.f32 %v11737, %v11761
  %v11771 = vadd.f32 %v11738, %v11761
  %v11772 = vadd.f32 %v11739, %v11761
  %v11773 = vadd.f32 %v11740, %v11761
  %v11774 = vadd.f32 %v11741, %v11761
  %v11775 = vadd.f32 %v11742, %v11761
  %v11776 = vadd.f32 %v11743, %v11761
  %v11777 = vadd.f32 %v11744, %v11761
  %v11778 = vadd.f32 %v11745, %v11761
  %v11779 = vadd.f32 %v11746, %v11761
  %v11780 = vadd.f32 %v11747, %v11761
  %v11781 = vadd.f32 %v11748, %v11761
  %v11782 = vadd.f32 %v11749, %v11761
  %v11783 = vadd.f32 %v11750, %v11761
  %v11784 = vadd.f32 %v11751, %v11761
  %v11785 = vadd.f32 %v11752, %v11761
  %v11786 = vadd.f32 %v11753, %v11761
  %v11787 = vadd.f32 %v11754, %v11761
  %v11788 = vadd.f32 %v11755, %v11761
  %v11789 = vadd.f32 %v11756, %v11761
  %v11790 = vadd.f32 %v11757, %v11761
  %v11791 = vadd.f32 %v11758, %v11761
  %v11792 = vadd.f32 %v11759, %v11761
  %v11793 = vadd.f32 %v11760, %v11761
  %11794 = vst.msk [vmem:[%s8] sm:$0xff] %vm187, %v11762
  %11795 = vst.msk [vmem:[%s8 + $0x8] sm:$0xff] %vm187, %v11763
  %11796 = vst.msk [vmem:[%s8 + $0x10] sm:$0xff] %vm187, %v11764
  %11797 = vst.msk [vmem:[%s8 + $0x18] sm:$0xff] %vm187, %v11765
  %11798 = vst.msk [vmem:[%s8 + $0x20] sm:$0xff] %vm187, %v11766
  %11799 = vst.msk [vmem:[%s8 + $0x28] sm:$0xff] %vm187, %v11767
  %11800 = vst.msk [vmem:[%s8 + $0x30] sm:$0xff] %vm187, %v11768
  %11801 = vst.msk [vmem:[%s8 + $0x38] sm:$0xff] %vm187, %v11769
  %11802 = vst.msk [vmem:[%s8 + $0x40] sm:$0xff] %vm187, %v11770
  %11803 = vst.msk [vmem:[%s8 + $0x48] sm:$0xff] %vm187, %v11771
  %11804 = vst.msk [vmem:[%s8 + $0x50] sm:$0xff] %vm187, %v11772
  %11805 = vst.msk [vmem:[%s8 + $0x58] sm:$0xff] %vm187, %v11773
  %11806 = vst.msk [vmem:[%s8 + $0x60] sm:$0xff] %vm187, %v11774
  %11807 = vst.msk [vmem:[%s8 + $0x68] sm:$0xff] %vm187, %v11775
  %11808 = vst.msk [vmem:[%s8 + $0x70] sm:$0xff] %vm187, %v11776
  %11809 = vst.msk [vmem:[%s8 + $0x78] sm:$0xff] %vm187, %v11777
  %11810 = vst.msk [vmem:[%s8 + $0x80] sm:$0xff] %vm187, %v11778
  %11811 = vst.msk [vmem:[%s8 + $0x88] sm:$0xff] %vm187, %v11779
  %11812 = vst.msk [vmem:[%s8 + $0x90] sm:$0xff] %vm187, %v11780
  %11813 = vst.msk [vmem:[%s8 + $0x98] sm:$0xff] %vm187, %v11781
  %11814 = vst.msk [vmem:[%s8 + $0xa0] sm:$0xff] %vm187, %v11782
  %11815 = vst.msk [vmem:[%s8 + $0xa8] sm:$0xff] %vm187, %v11783
  %11816 = vst.msk [vmem:[%s8 + $0xb0] sm:$0xff] %vm187, %v11784
  %11817 = vst.msk [vmem:[%s8 + $0xb8] sm:$0xff] %vm187, %v11785
  %11818 = vst.msk [vmem:[%s8 + $0xc0] sm:$0xff] %vm187, %v11786
  %11819 = vst.msk [vmem:[%s8 + $0xc8] sm:$0xff] %vm187, %v11787
  %11820 = vst.msk [vmem:[%s8 + $0xd0] sm:$0xff] %vm187, %v11788
  %11821 = vst.msk [vmem:[%s8 + $0xd8] sm:$0xff] %vm187, %v11789
  %11822 = vst.msk [vmem:[%s8 + $0xe0] sm:$0xff] %vm187, %v11790
  %11823 = vst.msk [vmem:[%s8 + $0xe8] sm:$0xff] %vm187, %v11791
  %11824 = vst.msk [vmem:[%s8 + $0xf0] sm:$0xff] %vm187, %v11792
  %11825 = vst.msk [vmem:[%s8 + $0xf8] sm:$0xff] %vm187, %v11793
  // Predicated region
  $region34: #{transformer_encoder_forward.1} parent=0 // pred_check
    _
  $region35: #{transformer_encoder_forward.1} parent=0 // pred_check_branch
    %11827 = sbr.rel (0) target = $region37
  $region36: #{transformer_encoder_forward.1} parent=0 // pred_region
    _
  $region37: #{transformer_encoder_forward.1} parent=0 // pred_fallthru
    _
  // Predicated region
  $region38: #{transformer_encoder_forward.1} parent=0 // pred_check
    _
  $region39: #{transformer_encoder_forward.1} parent=0 // pred_check_branch
    %11829 = sbr.rel (0) target = $region41
  $region40: #{transformer_encoder_forward.1} parent=0 // pred_region
    _
  $region41: #{transformer_encoder_forward.1} parent=0 // pred_fallthru
    _

</llo_original>
